<compile_context>
chip_gen: v7x
topology: tpu7x:2x2x1
jax: 0.10.0
libtpu: 0.0.40
codegen_flags: <defaults>
</compile_context>

<pallas_src>
import jax
import jax.numpy as jnp
from jax import lax
from jax.experimental import pallas as pl
from jax.experimental.pallas import tpu as pltpu

KERNEL = 12
STRIDE = KERNEL // 2           # 6
PAD = (KERNEL - STRIDE) // 2   # 3
LN_EPS = 1e-5                  # nn.LayerNorm default


def _out_len(l):
    return (l + 2 * PAD - KERNEL) // STRIDE + 1


# ------------------------------ in-kernel helpers ------------------------------

def _relu_ln(y, ln_ref):
    """ReLU + LayerNorm over the last dim + affine.  y: (C, L) f32, ln_ref: (2, L)."""
    g = ln_ref[0:1, :]
    b = ln_ref[1:2, :]
    y = jnp.maximum(y, 0.0)
    mu = jnp.mean(y, axis=-1, keepdims=True)
    var = jnp.mean(jnp.square(y - mu), axis=-1, keepdims=True)
    return (y - mu) * lax.rsqrt(var + LN_EPS) * g + b


def _phases_strided(z, l_next):
    """Exact stride-6 polyphase gather of z (Cin, L) via a one-hot MXU matmul.

    Returns ph of shape (6*Cin, l_next+1) with ph[j*Cin + c, u] = z_pad[c, 6u + j],
    where z_pad is z with 3 zeros on each side.  The one-hot matrix is generated
    in-kernel from iota compares (no HBM constant).
    """
    cin, l = z.shape
    m = l_next + 1
    klen = STRIDE * m - (STRIDE - 1)
    pad_r = STRIDE * m - l - PAD
    z_pad = jnp.concatenate(
        [jnp.zeros((cin, PAD), jnp.float32), z,
         jnp.zeros((cin, pad_r), jnp.float32)], axis=1)              # (Cin, 6*m)
    shifted = jnp.concatenate([z_pad[:, j:j + klen] for j in range(STRIDE)], axis=0)
    prow = lax.broadcasted_iota(jnp.int32, (klen, m), 0)
    tcol = lax.broadcasted_iota(jnp.int32, (klen, m), 1)
    d = (prow == STRIDE * tcol).astype(jnp.float32)                  # exact selection
    return jnp.dot(shifted, d, preferred_element_type=jnp.float32)   # (6*Cin, m)


def _conv_relu_ln_strided(z, w_ref, ln_ref, l_next):
    """Conv1d(k=12,s=6,p=3) + ReLU + LN using the polyphase gather above.

    Weight is split per tap half (taps 0..5 / 6..11) so the doubled patch matrix
    is never materialized.
    """
    cin = z.shape[0]
    ph = _phases_strided(z, l_next)                                  # (6*Cin, l_next+1)
    h = cin * STRIDE                                                 # folded-weight split
    y = (jnp.dot(w_ref[:, 0:h], ph[:, 0:l_next], preferred_element_type=jnp.float32)
         + jnp.dot(w_ref[:, h:], ph[:, 1:l_next + 1], preferred_element_type=jnp.float32))
    return _relu_ln(y, ln_ref)


# ----------------------------------- kernel ------------------------------------

def _time_encoder_kernel(p_ref, w1_ref, w2_ref, w3_ref, w4_ref,
                         ln1_ref, ln2_ref, ln3_ref, ln4_ref,
                         emb_ref, mean_ref):
    l2 = ln2_ref.shape[1]      # 480  (== per-phase width of the layer-1 output)
    l3 = ln3_ref.shape[1]      # 80
    l4 = ln4_ref.shape[1]      # 13

    # ---------- layer 1: output produced directly in 6-phase-major column order ----------
    # Host slab: p_ref[0, j*Cp + c, u] = x_pad[c, 36u + j]  (j in 0..35, Cp = padded Cin).
    # Output column phi*l2 + t  <->  original conv position tau = 6t + phi.
    kc1 = w1_ref.shape[1]      # 12 * Cp (= 192)
    half1 = kc1 // 2           # 6 * Cp  (= 96), sublane-aligned
    blocks = []
    for phi in range(STRIDE - 1):                                   # phi = 0..4
        blocks.append(jnp.dot(
            w1_ref[...], p_ref[0, half1 * phi: half1 * phi + kc1, 0:l2],
            preferred_element_type=jnp.float32))
    # phi = 5: taps 0..5 come from rows [5*half1, 6*half1), taps 6..11 wrap to rows
    # [0, half1) at super-column u+1.
    blocks.append(
        jnp.dot(w1_ref[:, 0:half1],
                p_ref[0, half1 * (STRIDE - 1): half1 * STRIDE, 0:l2],
                preferred_element_type=jnp.float32)
        + jnp.dot(w1_ref[:, half1:],
                  p_ref[0, 0:half1, 1:l2 + 1],
                  preferred_element_type=jnp.float32))
    y1 = jnp.concatenate(blocks, axis=1)                            # (32, 2880) phase-major
    z1 = _relu_ln(y1, ln1_ref)                                      # gamma/beta permuted on host

    # ---------- layer 2: im2col = lane/sublane slices of the phase-major z1 ----------
    c1 = w1_ref.shape[0]                                            # 32
    # zp[(phi*c1 + c), u] = z1_orig[c, 6u + phi]
    zp = jnp.concatenate([z1[:, phi * l2:(phi + 1) * l2] for phi in range(STRIDE)], axis=0)
    zeros_col = jnp.zeros((3 * c1, 1), jnp.float32)
    op_a = jnp.concatenate([zeros_col, zp[3 * c1:, 0:l2 - 1]], axis=1)   # taps 0..2 (t-1, left pad)
    op_c = jnp.concatenate([zp[0:3 * c1, 1:l2], zeros_col], axis=1)      # taps 9..11 (t+1, right pad)
    y2 = (jnp.dot(w2_ref[:, 0:3 * c1], op_a, preferred_element_type=jnp.float32)
          + jnp.dot(w2_ref[:, 3 * c1:9 * c1], zp, preferred_element_type=jnp.float32)
          + jnp.dot(w2_ref[:, 9 * c1:], op_c, preferred_element_type=jnp.float32))
    z2 = _relu_ln(y2, ln2_ref)                                      # (64, 480), normal order

    # ---------- layers 3 & 4: small exact one-hot polyphase gather + conv ----------
    z3 = _conv_relu_ln_strided(z2, w3_ref, ln3_ref, l3)             # (128, 80)
    z4 = _conv_relu_ln_strided(z3, w4_ref, ln4_ref, l4)             # (128, 13)

    emb_ref[0] = z4                                                 # module layout (128, 13)

    # fused embedded.mean(-1), emitted lane-dense as (1, 128)
    ones_row = jnp.ones((1, l4), jnp.float32)
    s = lax.dot_general(ones_row, z4, (((1,), (1,)), ((), ())),
                        preferred_element_type=jnp.float32)          # (1, 128)
    mean_ref[0] = s * (1.0 / l4)


# ------------------------------- host-side glue --------------------------------

def _fold_weight(w, c_pad=None):
    """(Cout, Cin, K) -> (Cout, K*Cin_p) f32 with column index k*Cin_p + c."""
    c_out, c_in, _ = w.shape
    if c_pad is not None and c_pad > c_in:
        w = jnp.pad(w, ((0, 0), (0, c_pad - c_in), (0, 0)))
    return jnp.transpose(w, (0, 2, 1)).reshape(c_out, -1).astype(jnp.float32)


def _phase_permute(v, lp):
    """v[6t + phi] -> out[phi*lp + t]  (layer-1 LN params follow the phase-major columns)."""
    return v.reshape(lp, STRIDE).T.reshape(-1)


def time_encoder_forward(params, active_logs, active_mask=None):
    # active_logs: (1, A, T, 15); active_mask is unused by the PyTorch forward.
    del active_mask
    _, a, t, c_in = active_logs.shape
    l1 = _out_len(t)          # 2880
    l2 = _out_len(l1)         # 480
    l3 = _out_len(l2)         # 80
    l4 = _out_len(l3)         # 13
    c_out4 = params["w4"].shape[0]
    c_pad = ((c_in + 7) // 8) * 8          # 15 -> 16 (sublane-aligned polyphase rows)
    u_cols = l2 + 1                        # 481
    phases36 = STRIDE * STRIDE             # 36

    # permute(0,3,1,2).permute(0,2,1,3).squeeze(0) == (A, 15, T)
    x = jnp.transpose(active_logs[0], (0, 2, 1)).astype(jnp.float32)
    x = jnp.pad(x, ((0, 0), (0, c_pad - c_in), (0, 0)))                       # channel pad
    x = jnp.pad(x, ((0, 0), (0, 0), (PAD, phases36 * u_cols - t - PAD)))      # conv + tail pad
    # p2d[a, j*c_pad + c, u] = x_pad[a, c, 36u + j]   (36-phase polyphase slab, ~1.1 MB/sample)
    p2d = (x.reshape(a, c_pad, u_cols, phases36)
            .transpose(0, 3, 1, 2)
            .reshape(a, phases36 * c_pad, u_cols))

    w1 = _fold_weight(params["w1"], c_pad)     # (32, 192)
    w2 = _fold_weight(params["w2"])            # (64, 384)
    w3 = _fold_weight(params["w3"])            # (128, 768)
    w4 = _fold_weight(params["w4"])            # (128, 1536)
    ln1 = jnp.stack([_phase_permute(params["g1"], l2),
                     _phase_permute(params["b1"], l2)]).astype(jnp.float32)   # permuted
    ln2 = jnp.stack([params["g2"], params["b2"]]).astype(jnp.float32)
    ln3 = jnp.stack([params["g3"], params["b3"]]).astype(jnp.float32)
    ln4 = jnp.stack([params["g4"], params["b4"]]).astype(jnp.float32)

    def _const(arr):  # full-array block, identical for every grid step
        return pl.BlockSpec(arr.shape, lambda n: (0, 0))

    grid_spec = pltpu.PrefetchScalarGridSpec(
        num_scalar_prefetch=0,
        grid=(a,),
        in_specs=[
            pl.BlockSpec((1, phases36 * c_pad, u_cols), lambda n: (n, 0, 0)),
            _const(w1), _const(w2), _const(w3), _const(w4),
            _const(ln1), _const(ln2), _const(ln3), _const(ln4),
        ],
        out_specs=(
            pl.BlockSpec((1, c_out4, l4), lambda n: (n, 0, 0)),
            pl.BlockSpec((1, 1, c_out4), lambda n: (n, 0, 0)),
        ),
    )

    embedded, emb_mean = pl.pallas_call(
        _time_encoder_kernel,
        out_shape=(jax.ShapeDtypeStruct((a, c_out4, l4), jnp.float32),
                   jax.ShapeDtypeStruct((a, 1, c_out4), jnp.float32)),
        grid_spec=grid_spec,
        compiler_params=pltpu.CompilerParams(
            dimension_semantics=("parallel",),
            vmem_limit_bytes=24 * 1024 * 1024,
        ),
    )(p2d, w1, w2, w3, w4, ln1, ln2, ln3, ln4)

    reshape_embedded = emb_mean.reshape(1, a * c_out4)
    return reshape_embedded, embedded, None


# --------------------------- parameters & reference ----------------------------

def init_params(key):
    ks = jax.random.split(key, 12)

    def conv_w(k, cout, cin):
        return jax.random.normal(k, (cout, cin, KERNEL), jnp.float32) * 0.05

    def ln(kg, kb, n):
        g = 1.0 + 0.1 * jax.random.normal(kg, (n,), jnp.float32)
        b = 0.1 * jax.random.normal(kb, (n,), jnp.float32)
        return g, b

    g1, b1 = ln(ks[4], ks[5], 2880)
    g2, b2 = ln(ks[6], ks[7], 480)
    g3, b3 = ln(ks[8], ks[9], 80)
    g4, b4 = ln(ks[10], ks[11], 13)
    # TODO(synk): self.encoder (LSTM) and dropout are constructed in __init__ but never
    # used in forward(); their parameters are intentionally omitted.
    return {
        "w1": conv_w(ks[0], 32, 15),   "g1": g1, "b1": b1,
        "w2": conv_w(ks[1], 64, 32),   "g2": g2, "b2": b2,
        "w3": conv_w(ks[2], 128, 64),  "g3": g3, "b3": b3,
        "w4": conv_w(ks[3], 128, 128), "g4": g4, "b4": b4,
    }


def reference_forward(params, active_logs):
    x = jnp.transpose(active_logs, (0, 3, 1, 2))
    x = jnp.transpose(x, (0, 2, 1, 3))[0]

    def layer(h, w, g, b):
        y = lax.conv_general_dilated(h, w, window_strides=(STRIDE,),
                                     padding=[(PAD, PAD)],
                                     dimension_numbers=("NCH", "OIH", "NCH"),
                                     precision=lax.Precision.HIGHEST)
        y = jnp.maximum(y, 0.0)
        mu = jnp.mean(y, axis=-1, keepdims=True)
        var = jnp.mean((y - mu) ** 2, axis=-1, keepdims=True)
        y = (y - mu) / jnp.sqrt(var + LN_EPS)
        return y * g + b

    h = layer(x, params["w1"], params["g1"], params["b1"])
    h = layer(h, params["w2"], params["g2"], params["b2"])
    h = layer(h, params["w3"], params["g3"], params["b3"])
    emb = layer(h, params["w4"], params["g4"], params["b4"])
    return emb.mean(axis=-1).reshape(1, -1), emb


# ----------------------------------- main ---------------------------------------

if __name__ == "__main__":
    key = jax.random.PRNGKey(0)
    k_params, k_logs = jax.random.split(key)
    params = init_params(k_params)

    A, T, C = 2, 17280, 15                  # T=17280 is fixed by LayerNorm([2880]) in the module
    active_logs = jax.random.normal(k_logs, (1, A, T, C), jnp.float32)
    active_mask = jnp.ones((1, A, T), jnp.bool_)   # unused by forward

    fwd = jax.jit(time_encoder_forward)
    reshape_embedded, embedded, none_out = fwd(params, active_logs, active_mask)
    jax.block_until_ready((reshape_embedded, embedded))

    assert reshape_embedded.shape == (1, A * 128)
    assert embedded.shape == (A, 128, 13)
    assert none_out is None

    ref_mean, ref_emb = reference_forward(params, active_logs)
    jax.block_until_ready((ref_mean, ref_emb))

    assert bool(jnp.all(jnp.isfinite(embedded)))
    # Kernel is f32 end-to-end (MXU with f32 accumulation), so it tracks the HIGHEST-precision
    # f32 reference closely; 1e-2 leaves margin for MXU multi-pass rounding on hardware.
    assert jnp.allclose(embedded, ref_emb, atol=1e-2, rtol=1e-2), (
        "max |diff| = %g" % float(jnp.max(jnp.abs(embedded - ref_emb))))
    assert jnp.allclose(reshape_embedded, ref_mean, atol=1e-2, rtol=1e-2)

    print("KERNEL_OK")
</pallas_src>

<mosaic_0001>
module attributes {stable_mosaic.version = 11 : i64} {
  func.func @_time_encoder_kernel(%arg0: i32, %arg1: memref<1x576x481xf32, #tpu.memory_space<vmem>>, %arg2: memref<32x192xf32, #tpu.memory_space<vmem>>, %arg3: memref<64x384xf32, #tpu.memory_space<vmem>>, %arg4: memref<128x768xf32, #tpu.memory_space<vmem>>, %arg5: memref<128x1536xf32, #tpu.memory_space<vmem>>, %arg6: memref<2x2880xf32, #tpu.memory_space<vmem>>, %arg7: memref<2x480xf32, #tpu.memory_space<vmem>>, %arg8: memref<2x80xf32, #tpu.memory_space<vmem>>, %arg9: memref<2x13xf32, #tpu.memory_space<vmem>>, %arg10: memref<1x128x13xf32, #tpu.memory_space<vmem>>, %arg11: memref<1x1x128xf32, #tpu.memory_space<vmem>>) attributes {dimension_semantics = [#tpu.dimension_semantics<parallel>], iteration_bounds = array<i64: 2>, scalar_prefetch = 0 : i64, scratch_operands = 0 : i64, tpu.core_type = #tpu.core_type<tc>, window_params = [{transform_indices = @transform_0, window_bounds = array<i64: 1, 576, 481>}, {pipeline_mode = #tpu.pipeline_mode<synchronous>, transform_indices = @transform_1, window_bounds = array<i64: 32, 192>}, {pipeline_mode = #tpu.pipeline_mode<synchronous>, transform_indices = @transform_2, window_bounds = array<i64: 64, 384>}, {pipeline_mode = #tpu.pipeline_mode<synchronous>, transform_indices = @transform_3, window_bounds = array<i64: 128, 768>}, {pipeline_mode = #tpu.pipeline_mode<synchronous>, transform_indices = @transform_4, window_bounds = array<i64: 128, 1536>}, {pipeline_mode = #tpu.pipeline_mode<synchronous>, transform_indices = @transform_5, window_bounds = array<i64: 2, 2880>}, {pipeline_mode = #tpu.pipeline_mode<synchronous>, transform_indices = @transform_6, window_bounds = array<i64: 2, 480>}, {pipeline_mode = #tpu.pipeline_mode<synchronous>, transform_indices = @transform_7, window_bounds = array<i64: 2, 80>}, {pipeline_mode = #tpu.pipeline_mode<synchronous>, transform_indices = @transform_8, window_bounds = array<i64: 2, 13>}, {transform_indices = @transform_9, window_bounds = array<i64: 1, 128, 13>}, {transform_indices = @transform_10, window_bounds = array<i64: 1, 1, 128>}]} {
    %c0 = arith.constant 0 : index
    %c0_0 = arith.constant 0 : index
    %0 = vector.load %arg2[%c0, %c0_0] : memref<32x192xf32, #tpu.memory_space<vmem>>, vector<32x192xf32>
    %c0_1 = arith.constant 0 : index
    %c0_2 = arith.constant 0 : index
    %c0_3 = arith.constant 0 : index
    %1 = vector.load %arg1[%c0_1, %c0_2, %c0_3] : memref<1x576x481xf32, #tpu.memory_space<vmem>>, vector<1x192x480xf32>
    %2 = vector.shape_cast %1 : vector<1x192x480xf32> to vector<192x480xf32>
    %cst = arith.constant dense<0.000000e+00> : vector<32x480xf32>
    %3 = tpu.matmul %0, %2, %cst {dimension_numbers = #tpu.dot_dimension_numbers<[1], [0], [0], [1], [0, 0, 1, 1], [], []>} : vector<32x192xf32>, vector<192x480xf32>, vector<32x480xf32> -> vector<32x480xf32>
    %c0_4 = arith.constant 0 : index
    %c0_5 = arith.constant 0 : index
    %4 = vector.load %arg2[%c0_4, %c0_5] : memref<32x192xf32, #tpu.memory_space<vmem>>, vector<32x192xf32>
    %c0_6 = arith.constant 0 : index
    %c96 = arith.constant 96 : index
    %c0_7 = arith.constant 0 : index
    %5 = vector.load %arg1[%c0_6, %c96, %c0_7] : memref<1x576x481xf32, #tpu.memory_space<vmem>>, vector<1x192x480xf32>
    %6 = vector.shape_cast %5 : vector<1x192x480xf32> to vector<192x480xf32>
    %cst_8 = arith.constant dense<0.000000e+00> : vector<32x480xf32>
    %7 = tpu.matmul %4, %6, %cst_8 {dimension_numbers = #tpu.dot_dimension_numbers<[1], [0], [0], [1], [0, 0, 1, 1], [], []>} : vector<32x192xf32>, vector<192x480xf32>, vector<32x480xf32> -> vector<32x480xf32>
    %c0_9 = arith.constant 0 : index
    %c0_10 = arith.constant 0 : index
    %8 = vector.load %arg2[%c0_9, %c0_10] : memref<32x192xf32, #tpu.memory_space<vmem>>, vector<32x192xf32>
    %c0_11 = arith.constant 0 : index
    %c192 = arith.constant 192 : index
    %c0_12 = arith.constant 0 : index
    %9 = vector.load %arg1[%c0_11, %c192, %c0_12] : memref<1x576x481xf32, #tpu.memory_space<vmem>>, vector<1x192x480xf32>
    %10 = vector.shape_cast %9 : vector<1x192x480xf32> to vector<192x480xf32>
    %cst_13 = arith.constant dense<0.000000e+00> : vector<32x480xf32>
    %11 = tpu.matmul %8, %10, %cst_13 {dimension_numbers = #tpu.dot_dimension_numbers<[1], [0], [0], [1], [0, 0, 1, 1], [], []>} : vector<32x192xf32>, vector<192x480xf32>, vector<32x480xf32> -> vector<32x480xf32>
    %c0_14 = arith.constant 0 : index
    %c0_15 = arith.constant 0 : index
    %12 = vector.load %arg2[%c0_14, %c0_15] : memref<32x192xf32, #tpu.memory_space<vmem>>, vector<32x192xf32>
    %c0_16 = arith.constant 0 : index
    %c288 = arith.constant 288 : index
    %c0_17 = arith.constant 0 : index
    %13 = vector.load %arg1[%c0_16, %c288, %c0_17] : memref<1x576x481xf32, #tpu.memory_space<vmem>>, vector<1x192x480xf32>
    %14 = vector.shape_cast %13 : vector<1x192x480xf32> to vector<192x480xf32>
    %cst_18 = arith.constant dense<0.000000e+00> : vector<32x480xf32>
    %15 = tpu.matmul %12, %14, %cst_18 {dimension_numbers = #tpu.dot_dimension_numbers<[1], [0], [0], [1], [0, 0, 1, 1], [], []>} : vector<32x192xf32>, vector<192x480xf32>, vector<32x480xf32> -> vector<32x480xf32>
    %c0_19 = arith.constant 0 : index
    %c0_20 = arith.constant 0 : index
    %16 = vector.load %arg2[%c0_19, %c0_20] : memref<32x192xf32, #tpu.memory_space<vmem>>, vector<32x192xf32>
    %c0_21 = arith.constant 0 : index
    %c384 = arith.constant 384 : index
    %c0_22 = arith.constant 0 : index
    %17 = vector.load %arg1[%c0_21, %c384, %c0_22] : memref<1x576x481xf32, #tpu.memory_space<vmem>>, vector<1x192x480xf32>
    %18 = vector.shape_cast %17 : vector<1x192x480xf32> to vector<192x480xf32>
    %cst_23 = arith.constant dense<0.000000e+00> : vector<32x480xf32>
    %19 = tpu.matmul %16, %18, %cst_23 {dimension_numbers = #tpu.dot_dimension_numbers<[1], [0], [0], [1], [0, 0, 1, 1], [], []>} : vector<32x192xf32>, vector<192x480xf32>, vector<32x480xf32> -> vector<32x480xf32>
    %c0_24 = arith.constant 0 : index
    %c0_25 = arith.constant 0 : index
    %20 = vector.load %arg2[%c0_24, %c0_25] : memref<32x192xf32, #tpu.memory_space<vmem>>, vector<32x96xf32>
    %c0_26 = arith.constant 0 : index
    %c480 = arith.constant 480 : index
    %c0_27 = arith.constant 0 : index
    %21 = vector.load %arg1[%c0_26, %c480, %c0_27] : memref<1x576x481xf32, #tpu.memory_space<vmem>>, vector<1x96x480xf32>
    %22 = vector.shape_cast %21 : vector<1x96x480xf32> to vector<96x480xf32>
    %cst_28 = arith.constant dense<0.000000e+00> : vector<32x480xf32>
    %23 = tpu.matmul %20, %22, %cst_28 {dimension_numbers = #tpu.dot_dimension_numbers<[1], [0], [0], [1], [0, 0, 1, 1], [], []>} : vector<32x96xf32>, vector<96x480xf32>, vector<32x480xf32> -> vector<32x480xf32>
    %c0_29 = arith.constant 0 : index
    %c96_30 = arith.constant 96 : index
    %24 = vector.load %arg2[%c0_29, %c96_30] : memref<32x192xf32, #tpu.memory_space<vmem>>, vector<32x96xf32>
    %c0_31 = arith.constant 0 : index
    %c0_32 = arith.constant 0 : index
    %c1 = arith.constant 1 : index
    %25 = vector.load %arg1[%c0_31, %c0_32, %c1] : memref<1x576x481xf32, #tpu.memory_space<vmem>>, vector<1x96x480xf32>
    %26 = vector.shape_cast %25 : vector<1x96x480xf32> to vector<96x480xf32>
    %cst_33 = arith.constant dense<0.000000e+00> : vector<32x480xf32>
    %27 = tpu.matmul %24, %26, %cst_33 {dimension_numbers = #tpu.dot_dimension_numbers<[1], [0], [0], [1], [0, 0, 1, 1], [], []>} : vector<32x96xf32>, vector<96x480xf32>, vector<32x480xf32> -> vector<32x480xf32>
    %28 = arith.addf %23, %27 : vector<32x480xf32>
    %29 = tpu.concatenate %3, %7, %11, %15, %19, %28 in 1 : vector<32x480xf32>, vector<32x480xf32>, vector<32x480xf32>, vector<32x480xf32>, vector<32x480xf32>, vector<32x480xf32> -> vector<32x2880xf32>
    %c0_34 = arith.constant 0 : index
    %c0_35 = arith.constant 0 : index
    %30 = vector.load %arg6[%c0_34, %c0_35] : memref<2x2880xf32, #tpu.memory_space<vmem>>, vector<1x2880xf32>
    %c1_36 = arith.constant 1 : index
    %c0_37 = arith.constant 0 : index
    %31 = vector.load %arg6[%c1_36, %c0_37] : memref<2x2880xf32, #tpu.memory_space<vmem>>, vector<1x2880xf32>
    %cst_38 = arith.constant 0.000000e+00 : f32
    %32 = vector.broadcast %cst_38 : f32 to vector<32x2880xf32>
    %33 = arith.maximumf %29, %32 : vector<32x2880xf32>
    %cst_39 = arith.constant dense<0.000000e+00> : vector<32xf32>
    %34 = vector.multi_reduction <add>, %33, %cst_39 [1] : vector<32x2880xf32> to vector<32xf32>
    %35 = vector.shape_cast %34 : vector<32xf32> to vector<32x1xf32>
    %cst_40 = arith.constant 2.880000e+03 : f32
    %36 = vector.broadcast %cst_40 : f32 to vector<32x1xf32>
    %37 = arith.divf %35, %36 : vector<32x1xf32>
    %38 = vector.broadcast %37 : vector<32x1xf32> to vector<32x2880xf32>
    %39 = arith.subf %33, %38 : vector<32x2880xf32>
    %40 = arith.mulf %39, %39 : vector<32x2880xf32>
    %cst_41 = arith.constant dense<0.000000e+00> : vector<32xf32>
    %41 = vector.multi_reduction <add>, %40, %cst_41 [1] : vector<32x2880xf32> to vector<32xf32>
    %42 = vector.shape_cast %41 : vector<32xf32> to vector<32x1xf32>
    %cst_42 = arith.constant 2.880000e+03 : f32
    %43 = vector.broadcast %cst_42 : f32 to vector<32x1xf32>
    %44 = arith.divf %42, %43 : vector<32x1xf32>
    %45 = vector.broadcast %37 : vector<32x1xf32> to vector<32x2880xf32>
    %46 = arith.subf %33, %45 : vector<32x2880xf32>
    %cst_43 = arith.constant 9.99999974E-6 : f32
    %47 = vector.broadcast %cst_43 : f32 to vector<32x1xf32>
    %48 = arith.addf %44, %47 : vector<32x1xf32>
    %49 = math.rsqrt %48 : vector<32x1xf32>
    %50 = vector.broadcast %49 : vector<32x1xf32> to vector<32x2880xf32>
    %51 = arith.mulf %46, %50 : vector<32x2880xf32>
    %52 = vector.broadcast %30 : vector<1x2880xf32> to vector<32x2880xf32>
    %53 = arith.mulf %51, %52 : vector<32x2880xf32>
    %54 = vector.broadcast %31 : vector<1x2880xf32> to vector<32x2880xf32>
    %55 = arith.addf %53, %54 : vector<32x2880xf32>
    %56 = vector.extract_strided_slice %55 {offsets = [0, 0], sizes = [32, 480], strides = [1, 1]} : vector<32x2880xf32> to vector<32x480xf32>
    %57 = vector.extract_strided_slice %55 {offsets = [0, 480], sizes = [32, 480], strides = [1, 1]} : vector<32x2880xf32> to vector<32x480xf32>
    %58 = vector.extract_strided_slice %55 {offsets = [0, 960], sizes = [32, 480], strides = [1, 1]} : vector<32x2880xf32> to vector<32x480xf32>
    %59 = vector.extract_strided_slice %55 {offsets = [0, 1440], sizes = [32, 480], strides = [1, 1]} : vector<32x2880xf32> to vector<32x480xf32>
    %60 = vector.extract_strided_slice %55 {offsets = [0, 1920], sizes = [32, 480], strides = [1, 1]} : vector<32x2880xf32> to vector<32x480xf32>
    %61 = vector.extract_strided_slice %55 {offsets = [0, 2400], sizes = [32, 480], strides = [1, 1]} : vector<32x2880xf32> to vector<32x480xf32>
    %62 = tpu.concatenate %56, %57, %58, %59, %60, %61 in 0 : vector<32x480xf32>, vector<32x480xf32>, vector<32x480xf32>, vector<32x480xf32>, vector<32x480xf32>, vector<32x480xf32> -> vector<192x480xf32>
    %cst_44 = arith.constant 0.000000e+00 : f32
    %63 = vector.broadcast %cst_44 : f32 to vector<96x1xf32>
    %64 = vector.extract_strided_slice %62 {offsets = [96, 0], sizes = [96, 479], strides = [1, 1]} : vector<192x480xf32> to vector<96x479xf32>
    %65 = tpu.concatenate %63, %64 in 1 : vector<96x1xf32>, vector<96x479xf32> -> vector<96x480xf32>
    %66 = vector.extract_strided_slice %62 {offsets = [0, 1], sizes = [96, 479], strides = [1, 1]} : vector<192x480xf32> to vector<96x479xf32>
    %67 = tpu.concatenate %66, %63 in 1 : vector<96x479xf32>, vector<96x1xf32> -> vector<96x480xf32>
    %c0_45 = arith.constant 0 : index
    %c0_46 = arith.constant 0 : index
    %68 = vector.load %arg3[%c0_45, %c0_46] : memref<64x384xf32, #tpu.memory_space<vmem>>, vector<64x96xf32>
    %cst_47 = arith.constant dense<0.000000e+00> : vector<64x480xf32>
    %69 = tpu.matmul %68, %65, %cst_47 {dimension_numbers = #tpu.dot_dimension_numbers<[1], [0], [0], [1], [0, 0, 1, 1], [], []>} : vector<64x96xf32>, vector<96x480xf32>, vector<64x480xf32> -> vector<64x480xf32>
    %c0_48 = arith.constant 0 : index
    %c96_49 = arith.constant 96 : index
    %70 = vector.load %arg3[%c0_48, %c96_49] : memref<64x384xf32, #tpu.memory_space<vmem>>, vector<64x192xf32>
    %cst_50 = arith.constant dense<0.000000e+00> : vector<64x480xf32>
    %71 = tpu.matmul %70, %62, %cst_50 {dimension_numbers = #tpu.dot_dimension_numbers<[1], [0], [0], [1], [0, 0, 1, 1], [], []>} : vector<64x192xf32>, vector<192x480xf32>, vector<64x480xf32> -> vector<64x480xf32>
    %72 = arith.addf %69, %71 : vector<64x480xf32>
    %c0_51 = arith.constant 0 : index
    %c288_52 = arith.constant 288 : index
    %73 = vector.load %arg3[%c0_51, %c288_52] : memref<64x384xf32, #tpu.memory_space<vmem>>, vector<64x96xf32>
    %cst_53 = arith.constant dense<0.000000e+00> : vector<64x480xf32>
    %74 = tpu.matmul %73, %67, %cst_53 {dimension_numbers = #tpu.dot_dimension_numbers<[1], [0], [0], [1], [0, 0, 1, 1], [], []>} : vector<64x96xf32>, vector<96x480xf32>, vector<64x480xf32> -> vector<64x480xf32>
    %75 = arith.addf %72, %74 : vector<64x480xf32>
    %c0_54 = arith.constant 0 : index
    %c0_55 = arith.constant 0 : index
    %76 = vector.load %arg7[%c0_54, %c0_55] : memref<2x480xf32, #tpu.memory_space<vmem>>, vector<1x480xf32>
    %c1_56 = arith.constant 1 : index
    %c0_57 = arith.constant 0 : index
    %77 = vector.load %arg7[%c1_56, %c0_57] : memref<2x480xf32, #tpu.memory_space<vmem>>, vector<1x480xf32>
    %cst_58 = arith.constant 0.000000e+00 : f32
    %78 = vector.broadcast %cst_58 : f32 to vector<64x480xf32>
    %79 = arith.maximumf %75, %78 : vector<64x480xf32>
    %cst_59 = arith.constant dense<0.000000e+00> : vector<64xf32>
    %80 = vector.multi_reduction <add>, %79, %cst_59 [1] : vector<64x480xf32> to vector<64xf32>
    %81 = vector.shape_cast %80 : vector<64xf32> to vector<64x1xf32>
    %cst_60 = arith.constant 4.800000e+02 : f32
    %82 = vector.broadcast %cst_60 : f32 to vector<64x1xf32>
    %83 = arith.divf %81, %82 : vector<64x1xf32>
    %84 = vector.broadcast %83 : vector<64x1xf32> to vector<64x480xf32>
    %85 = arith.subf %79, %84 : vector<64x480xf32>
    %86 = arith.mulf %85, %85 : vector<64x480xf32>
    %cst_61 = arith.constant dense<0.000000e+00> : vector<64xf32>
    %87 = vector.multi_reduction <add>, %86, %cst_61 [1] : vector<64x480xf32> to vector<64xf32>
    %88 = vector.shape_cast %87 : vector<64xf32> to vector<64x1xf32>
    %cst_62 = arith.constant 4.800000e+02 : f32
    %89 = vector.broadcast %cst_62 : f32 to vector<64x1xf32>
    %90 = arith.divf %88, %89 : vector<64x1xf32>
    %91 = vector.broadcast %83 : vector<64x1xf32> to vector<64x480xf32>
    %92 = arith.subf %79, %91 : vector<64x480xf32>
    %cst_63 = arith.constant 9.99999974E-6 : f32
    %93 = vector.broadcast %cst_63 : f32 to vector<64x1xf32>
    %94 = arith.addf %90, %93 : vector<64x1xf32>
    %95 = math.rsqrt %94 : vector<64x1xf32>
    %96 = vector.broadcast %95 : vector<64x1xf32> to vector<64x480xf32>
    %97 = arith.mulf %92, %96 : vector<64x480xf32>
    %98 = vector.broadcast %76 : vector<1x480xf32> to vector<64x480xf32>
    %99 = arith.mulf %97, %98 : vector<64x480xf32>
    %100 = vector.broadcast %77 : vector<1x480xf32> to vector<64x480xf32>
    %101 = arith.addf %99, %100 : vector<64x480xf32>
    %cst_64 = arith.constant 0.000000e+00 : f32
    %102 = vector.broadcast %cst_64 : f32 to vector<64x3xf32>
    %cst_65 = arith.constant 0.000000e+00 : f32
    %103 = vector.broadcast %cst_65 : f32 to vector<64x3xf32>
    %104 = tpu.concatenate %102, %101, %103 in 1 : vector<64x3xf32>, vector<64x480xf32>, vector<64x3xf32> -> vector<64x486xf32>
    %105 = vector.extract_strided_slice %104 {offsets = [0, 0], sizes = [64, 481], strides = [1, 1]} : vector<64x486xf32> to vector<64x481xf32>
    %106 = vector.extract_strided_slice %104 {offsets = [0, 1], sizes = [64, 481], strides = [1, 1]} : vector<64x486xf32> to vector<64x481xf32>
    %107 = vector.extract_strided_slice %104 {offsets = [0, 2], sizes = [64, 481], strides = [1, 1]} : vector<64x486xf32> to vector<64x481xf32>
    %108 = vector.extract_strided_slice %104 {offsets = [0, 3], sizes = [64, 481], strides = [1, 1]} : vector<64x486xf32> to vector<64x481xf32>
    %109 = vector.extract_strided_slice %104 {offsets = [0, 4], sizes = [64, 481], strides = [1, 1]} : vector<64x486xf32> to vector<64x481xf32>
    %110 = vector.extract_strided_slice %104 {offsets = [0, 5], sizes = [64, 481], strides = [1, 1]} : vector<64x486xf32> to vector<64x481xf32>
    %111 = tpu.concatenate %105, %106, %107, %108, %109, %110 in 0 : vector<64x481xf32>, vector<64x481xf32>, vector<64x481xf32>, vector<64x481xf32>, vector<64x481xf32>, vector<64x481xf32> -> vector<384x481xf32>
    %112 = tpu.iota {dimensions = array<i32: 0>} : vector<481x81xi32>
    %113 = tpu.iota {dimensions = array<i32: 1>} : vector<481x81xi32>
    %c6_i32 = arith.constant 6 : i32
    %114 = vector.broadcast %c6_i32 : i32 to vector<481x81xi32>
    %115 = arith.muli %114, %113 : vector<481x81xi32>
    %116 = arith.cmpi eq, %112, %115 : vector<481x81xi32>
    %117 = arith.extui %116 : vector<481x81xi1> to vector<481x81xi32>
    %118 = arith.sitofp %117 : vector<481x81xi32> to vector<481x81xf32>
    %cst_66 = arith.constant dense<0.000000e+00> : vector<384x81xf32>
    %119 = tpu.matmul %111, %118, %cst_66 {dimension_numbers = #tpu.dot_dimension_numbers<[1], [0], [0], [1], [0, 0, 1, 1], [], []>} : vector<384x481xf32>, vector<481x81xf32>, vector<384x81xf32> -> vector<384x81xf32>
    %c0_67 = arith.constant 0 : index
    %c0_68 = arith.constant 0 : index
    %120 = vector.load %arg4[%c0_67, %c0_68] : memref<128x768xf32, #tpu.memory_space<vmem>>, vector<128x384xf32>
    %121 = vector.extract_strided_slice %119 {offsets = [0, 0], sizes = [384, 80], strides = [1, 1]} : vector<384x81xf32> to vector<384x80xf32>
    %cst_69 = arith.constant dense<0.000000e+00> : vector<128x80xf32>
    %122 = tpu.matmul %120, %121, %cst_69 {dimension_numbers = #tpu.dot_dimension_numbers<[1], [0], [0], [1], [0, 0, 1, 1], [], []>} : vector<128x384xf32>, vector<384x80xf32>, vector<128x80xf32> -> vector<128x80xf32>
    %c0_70 = arith.constant 0 : index
    %c384_71 = arith.constant 384 : index
    %123 = vector.load %arg4[%c0_70, %c384_71] : memref<128x768xf32, #tpu.memory_space<vmem>>, vector<128x384xf32>
    %124 = vector.extract_strided_slice %119 {offsets = [0, 1], sizes = [384, 80], strides = [1, 1]} : vector<384x81xf32> to vector<384x80xf32>
    %cst_72 = arith.constant dense<0.000000e+00> : vector<128x80xf32>
    %125 = tpu.matmul %123, %124, %cst_72 {dimension_numbers = #tpu.dot_dimension_numbers<[1], [0], [0], [1], [0, 0, 1, 1], [], []>} : vector<128x384xf32>, vector<384x80xf32>, vector<128x80xf32> -> vector<128x80xf32>
    %126 = arith.addf %122, %125 : vector<128x80xf32>
    %c0_73 = arith.constant 0 : index
    %c0_74 = arith.constant 0 : index
    %127 = vector.load %arg8[%c0_73, %c0_74] : memref<2x80xf32, #tpu.memory_space<vmem>>, vector<1x80xf32>
    %c1_75 = arith.constant 1 : index
    %c0_76 = arith.constant 0 : index
    %128 = vector.load %arg8[%c1_75, %c0_76] : memref<2x80xf32, #tpu.memory_space<vmem>>, vector<1x80xf32>
    %cst_77 = arith.constant 0.000000e+00 : f32
    %129 = vector.broadcast %cst_77 : f32 to vector<128x80xf32>
    %130 = arith.maximumf %126, %129 : vector<128x80xf32>
    %cst_78 = arith.constant dense<0.000000e+00> : vector<128xf32>
    %131 = vector.multi_reduction <add>, %130, %cst_78 [1] : vector<128x80xf32> to vector<128xf32>
    %132 = vector.shape_cast %131 : vector<128xf32> to vector<128x1xf32>
    %cst_79 = arith.constant 8.000000e+01 : f32
    %133 = vector.broadcast %cst_79 : f32 to vector<128x1xf32>
    %134 = arith.divf %132, %133 : vector<128x1xf32>
    %135 = vector.broadcast %134 : vector<128x1xf32> to vector<128x80xf32>
    %136 = arith.subf %130, %135 : vector<128x80xf32>
    %137 = arith.mulf %136, %136 : vector<128x80xf32>
    %cst_80 = arith.constant dense<0.000000e+00> : vector<128xf32>
    %138 = vector.multi_reduction <add>, %137, %cst_80 [1] : vector<128x80xf32> to vector<128xf32>
    %139 = vector.shape_cast %138 : vector<128xf32> to vector<128x1xf32>
    %cst_81 = arith.constant 8.000000e+01 : f32
    %140 = vector.broadcast %cst_81 : f32 to vector<128x1xf32>
    %141 = arith.divf %139, %140 : vector<128x1xf32>
    %142 = vector.broadcast %134 : vector<128x1xf32> to vector<128x80xf32>
    %143 = arith.subf %130, %142 : vector<128x80xf32>
    %cst_82 = arith.constant 9.99999974E-6 : f32
    %144 = vector.broadcast %cst_82 : f32 to vector<128x1xf32>
    %145 = arith.addf %141, %144 : vector<128x1xf32>
    %146 = math.rsqrt %145 : vector<128x1xf32>
    %147 = vector.broadcast %146 : vector<128x1xf32> to vector<128x80xf32>
    %148 = arith.mulf %143, %147 : vector<128x80xf32>
    %149 = vector.broadcast %127 : vector<1x80xf32> to vector<128x80xf32>
    %150 = arith.mulf %148, %149 : vector<128x80xf32>
    %151 = vector.broadcast %128 : vector<1x80xf32> to vector<128x80xf32>
    %152 = arith.addf %150, %151 : vector<128x80xf32>
    %cst_83 = arith.constant 0.000000e+00 : f32
    %153 = vector.broadcast %cst_83 : f32 to vector<128x3xf32>
    %cst_84 = arith.constant 0.000000e+00 : f32
    %154 = vector.broadcast %cst_84 : f32 to vector<128x1xf32>
    %155 = tpu.concatenate %153, %152, %154 in 1 : vector<128x3xf32>, vector<128x80xf32>, vector<128x1xf32> -> vector<128x84xf32>
    %156 = vector.extract_strided_slice %155 {offsets = [0, 0], sizes = [128, 79], strides = [1, 1]} : vector<128x84xf32> to vector<128x79xf32>
    %157 = vector.extract_strided_slice %155 {offsets = [0, 1], sizes = [128, 79], strides = [1, 1]} : vector<128x84xf32> to vector<128x79xf32>
    %158 = vector.extract_strided_slice %155 {offsets = [0, 2], sizes = [128, 79], strides = [1, 1]} : vector<128x84xf32> to vector<128x79xf32>
    %159 = vector.extract_strided_slice %155 {offsets = [0, 3], sizes = [128, 79], strides = [1, 1]} : vector<128x84xf32> to vector<128x79xf32>
    %160 = vector.extract_strided_slice %155 {offsets = [0, 4], sizes = [128, 79], strides = [1, 1]} : vector<128x84xf32> to vector<128x79xf32>
    %161 = vector.extract_strided_slice %155 {offsets = [0, 5], sizes = [128, 79], strides = [1, 1]} : vector<128x84xf32> to vector<128x79xf32>
    %162 = tpu.concatenate %156, %157, %158, %159, %160, %161 in 0 : vector<128x79xf32>, vector<128x79xf32>, vector<128x79xf32>, vector<128x79xf32>, vector<128x79xf32>, vector<128x79xf32> -> vector<768x79xf32>
    %163 = tpu.iota {dimensions = array<i32: 0>} : vector<79x14xi32>
    %164 = tpu.iota {dimensions = array<i32: 1>} : vector<79x14xi32>
    %c6_i32_85 = arith.constant 6 : i32
    %165 = vector.broadcast %c6_i32_85 : i32 to vector<79x14xi32>
    %166 = arith.muli %165, %164 : vector<79x14xi32>
    %167 = arith.cmpi eq, %163, %166 : vector<79x14xi32>
    %168 = arith.extui %167 : vector<79x14xi1> to vector<79x14xi32>
    %169 = arith.sitofp %168 : vector<79x14xi32> to vector<79x14xf32>
    %cst_86 = arith.constant dense<0.000000e+00> : vector<768x14xf32>
    %170 = tpu.matmul %162, %169, %cst_86 {dimension_numbers = #tpu.dot_dimension_numbers<[1], [0], [0], [1], [0, 0, 1, 1], [], []>} : vector<768x79xf32>, vector<79x14xf32>, vector<768x14xf32> -> vector<768x14xf32>
    %c0_87 = arith.constant 0 : index
    %c0_88 = arith.constant 0 : index
    %171 = vector.load %arg5[%c0_87, %c0_88] : memref<128x1536xf32, #tpu.memory_space<vmem>>, vector<128x768xf32>
    %172 = vector.extract_strided_slice %170 {offsets = [0, 0], sizes = [768, 13], strides = [1, 1]} : vector<768x14xf32> to vector<768x13xf32>
    %cst_89 = arith.constant dense<0.000000e+00> : vector<128x13xf32>
    %173 = tpu.matmul %171, %172, %cst_89 {dimension_numbers = #tpu.dot_dimension_numbers<[1], [0], [0], [1], [0, 0, 1, 1], [], []>} : vector<128x768xf32>, vector<768x13xf32>, vector<128x13xf32> -> vector<128x13xf32>
    %c0_90 = arith.constant 0 : index
    %c768 = arith.constant 768 : index
    %174 = vector.load %arg5[%c0_90, %c768] : memref<128x1536xf32, #tpu.memory_space<vmem>>, vector<128x768xf32>
    %175 = vector.extract_strided_slice %170 {offsets = [0, 1], sizes = [768, 13], strides = [1, 1]} : vector<768x14xf32> to vector<768x13xf32>
    %cst_91 = arith.constant dense<0.000000e+00> : vector<128x13xf32>
    %176 = tpu.matmul %174, %175, %cst_91 {dimension_numbers = #tpu.dot_dimension_numbers<[1], [0], [0], [1], [0, 0, 1, 1], [], []>} : vector<128x768xf32>, vector<768x13xf32>, vector<128x13xf32> -> vector<128x13xf32>
    %177 = arith.addf %173, %176 : vector<128x13xf32>
    %c0_92 = arith.constant 0 : index
    %c0_93 = arith.constant 0 : index
    %178 = vector.load %arg9[%c0_92, %c0_93] : memref<2x13xf32, #tpu.memory_space<vmem>>, vector<1x13xf32>
    %c1_94 = arith.constant 1 : index
    %c0_95 = arith.constant 0 : index
    %179 = vector.load %arg9[%c1_94, %c0_95] : memref<2x13xf32, #tpu.memory_space<vmem>>, vector<1x13xf32>
    %cst_96 = arith.constant 0.000000e+00 : f32
    %180 = vector.broadcast %cst_96 : f32 to vector<128x13xf32>
    %181 = arith.maximumf %177, %180 : vector<128x13xf32>
    %cst_97 = arith.constant dense<0.000000e+00> : vector<128xf32>
    %182 = vector.multi_reduction <add>, %181, %cst_97 [1] : vector<128x13xf32> to vector<128xf32>
    %183 = vector.shape_cast %182 : vector<128xf32> to vector<128x1xf32>
    %cst_98 = arith.constant 1.300000e+01 : f32
    %184 = vector.broadcast %cst_98 : f32 to vector<128x1xf32>
    %185 = arith.divf %183, %184 : vector<128x1xf32>
    %186 = vector.broadcast %185 : vector<128x1xf32> to vector<128x13xf32>
    %187 = arith.subf %181, %186 : vector<128x13xf32>
    %188 = arith.mulf %187, %187 : vector<128x13xf32>
    %cst_99 = arith.constant dense<0.000000e+00> : vector<128xf32>
    %189 = vector.multi_reduction <add>, %188, %cst_99 [1] : vector<128x13xf32> to vector<128xf32>
    %190 = vector.shape_cast %189 : vector<128xf32> to vector<128x1xf32>
    %cst_100 = arith.constant 1.300000e+01 : f32
    %191 = vector.broadcast %cst_100 : f32 to vector<128x1xf32>
    %192 = arith.divf %190, %191 : vector<128x1xf32>
    %193 = vector.broadcast %185 : vector<128x1xf32> to vector<128x13xf32>
    %194 = arith.subf %181, %193 : vector<128x13xf32>
    %cst_101 = arith.constant 9.99999974E-6 : f32
    %195 = vector.broadcast %cst_101 : f32 to vector<128x1xf32>
    %196 = arith.addf %192, %195 : vector<128x1xf32>
    %197 = math.rsqrt %196 : vector<128x1xf32>
    %198 = vector.broadcast %197 : vector<128x1xf32> to vector<128x13xf32>
    %199 = arith.mulf %194, %198 : vector<128x13xf32>
    %200 = vector.broadcast %178 : vector<1x13xf32> to vector<128x13xf32>
    %201 = arith.mulf %199, %200 : vector<128x13xf32>
    %202 = vector.broadcast %179 : vector<1x13xf32> to vector<128x13xf32>
    %203 = arith.addf %201, %202 : vector<128x13xf32>
    %c0_102 = arith.constant 0 : index
    %c0_103 = arith.constant 0 : index
    %c0_104 = arith.constant 0 : index
    %204 = vector.load %arg10[%c0_102, %c0_103, %c0_104] : memref<1x128x13xf32, #tpu.memory_space<vmem>>, vector<1x128x13xf32>
    %205 = vector.shape_cast %204 : vector<1x128x13xf32> to vector<128x13xf32>
    %206 = vector.shape_cast %203 : vector<128x13xf32> to vector<1x128x13xf32>
    tpu.vector_store %arg10[%c0_102, %c0_103, %c0_104], %206 {strides = array<i32>} : memref<1x128x13xf32, #tpu.memory_space<vmem>>, vector<1x128x13xf32>,
    %cst_105 = arith.constant 1.000000e+00 : f32
    %207 = vector.broadcast %cst_105 : f32 to vector<1x13xf32>
    %cst_106 = arith.constant dense<0.000000e+00> : vector<1x128xf32>
    %208 = tpu.matmul %207, %203, %cst_106 {dimension_numbers = #tpu.dot_dimension_numbers<[1], [1], [0], [0], [0, 0, 1, 0], [], []>} : vector<1x13xf32>, vector<128x13xf32>, vector<1x128xf32> -> vector<1x128xf32>
    %cst_107 = arith.constant 0.0769230798 : f32
    %209 = vector.broadcast %cst_107 : f32 to vector<1x128xf32>
    %210 = arith.mulf %208, %209 : vector<1x128xf32>
    %c0_108 = arith.constant 0 : index
    %c0_109 = arith.constant 0 : index
    %c0_110 = arith.constant 0 : index
    %211 = vector.load %arg11[%c0_108, %c0_109, %c0_110] : memref<1x1x128xf32, #tpu.memory_space<vmem>>, vector<1x1x128xf32>
    %212 = vector.shape_cast %211 : vector<1x1x128xf32> to vector<1x128xf32>
    %213 = vector.shape_cast %210 : vector<1x128xf32> to vector<1x1x128xf32>
    tpu.vector_store %arg11[%c0_108, %c0_109, %c0_110], %213 {strides = array<i32>} : memref<1x1x128xf32, #tpu.memory_space<vmem>>, vector<1x1x128xf32>,
    return
  }
  func.func @transform_0(%arg0: i32) -> (i32, i32, i32) {
    %c0_i32 = arith.constant 0 : i32
    %c0_i32_0 = arith.constant 0 : i32
    %c0_i32_1 = arith.constant 0 : i32
    return %arg0, %c0_i32, %c0_i32_0 : i32, i32, i32
  }
  func.func @transform_1(%arg0: i32) -> (i32, i32) {
    %c0_i32 = arith.constant 0 : i32
    %c0_i32_0 = arith.constant 0 : i32
    %c0_i32_1 = arith.constant 0 : i32
    return %c0_i32, %c0_i32_0 : i32, i32
  }
  func.func @transform_2(%arg0: i32) -> (i32, i32) {
    %c0_i32 = arith.constant 0 : i32
    %c0_i32_0 = arith.constant 0 : i32
    %c0_i32_1 = arith.constant 0 : i32
    return %c0_i32, %c0_i32_0 : i32, i32
  }
  func.func @transform_3(%arg0: i32) -> (i32, i32) {
    %c0_i32 = arith.constant 0 : i32
    %c0_i32_0 = arith.constant 0 : i32
    %c0_i32_1 = arith.constant 0 : i32
    return %c0_i32, %c0_i32_0 : i32, i32
  }
  func.func @transform_4(%arg0: i32) -> (i32, i32) {
    %c0_i32 = arith.constant 0 : i32
    %c0_i32_0 = arith.constant 0 : i32
    %c0_i32_1 = arith.constant 0 : i32
    return %c0_i32, %c0_i32_0 : i32, i32
  }
  func.func @transform_5(%arg0: i32) -> (i32, i32) {
    %c0_i32 = arith.constant 0 : i32
    %c0_i32_0 = arith.constant 0 : i32
    %c0_i32_1 = arith.constant 0 : i32
    return %c0_i32, %c0_i32_0 : i32, i32
  }
  func.func @transform_6(%arg0: i32) -> (i32, i32) {
    %c0_i32 = arith.constant 0 : i32
    %c0_i32_0 = arith.constant 0 : i32
    %c0_i32_1 = arith.constant 0 : i32
    return %c0_i32, %c0_i32_0 : i32, i32
  }
  func.func @transform_7(%arg0: i32) -> (i32, i32) {
    %c0_i32 = arith.constant 0 : i32
    %c0_i32_0 = arith.constant 0 : i32
    %c0_i32_1 = arith.constant 0 : i32
    return %c0_i32, %c0_i32_0 : i32, i32
  }
  func.func @transform_8(%arg0: i32) -> (i32, i32) {
    %c0_i32 = arith.constant 0 : i32
    %c0_i32_0 = arith.constant 0 : i32
    %c0_i32_1 = arith.constant 0 : i32
    return %c0_i32, %c0_i32_0 : i32, i32
  }
  func.func @transform_9(%arg0: i32) -> (i32, i32, i32) {
    %c0_i32 = arith.constant 0 : i32
    %c0_i32_0 = arith.constant 0 : i32
    %c0_i32_1 = arith.constant 0 : i32
    return %arg0, %c0_i32, %c0_i32_0 : i32, i32, i32
  }
  func.func @transform_10(%arg0: i32) -> (i32, i32, i32) {
    %c0_i32 = arith.constant 0 : i32
    %c0_i32_0 = arith.constant 0 : i32
    %c0_i32_1 = arith.constant 0 : i32
    return %arg0, %c0_i32, %c0_i32_0 : i32, i32, i32
  }
}

</mosaic_0001>

<llo_original>
// kernel: time_encoder_forward.1
$region0: #{time_encoder_forward.1}
  #allocation0 [shape = 'u32[]', space=smem, size = 0x4, offset = 0x4, fixed_abs, tag = 'smem constant byte address 0x4 - core index']
  #allocation1 [shape = 'u32[144,128]{1,0:T(1,128)}', space=vmem, size = 0x12000, scoped, tag = 'internal scratch']
  %s0 = inlined_call_operand.vmem [shape: f32[2,576,481], index: 0, kind: input, shape index: {}]
  %s1 = inlined_call_operand.vmem [shape: f32[32,192], index: 1, kind: input, shape index: {}]
  %s2 = inlined_call_operand.vmem [shape: f32[64,384], index: 2, kind: input, shape index: {}]
  %s3 = inlined_call_operand.vmem [shape: f32[128,768], index: 3, kind: input, shape index: {}]
  %s4 = inlined_call_operand.vmem [shape: f32[128,1536], index: 4, kind: input, shape index: {}]
  %s5 = inlined_call_operand.vmem [shape: f32[2,2880], index: 5, kind: input, shape index: {}]
  %s6 = inlined_call_operand.vmem [shape: f32[2,480], index: 6, kind: input, shape index: {}]
  %s7 = inlined_call_operand.vmem [shape: f32[2,80], index: 7, kind: input, shape index: {}]
  %s8 = inlined_call_operand.vmem [shape: f32[2,13], index: 8, kind: input, shape index: {}]
  %s9 = inlined_call_operand.vmem [shape: f32[2,128,13], index: 9, kind: output, shape index: {0}]
  %s10 = inlined_call_operand.hbm [shape: f32[2,1,128], index: 10, kind: output, shape index: {1}]
  %11 = xla_tuple %s9, %s10
  %s12 = sld [smem:[#allocation0]]
  $region77: #{time_encoder_forward.1} parent=0
    _
  %s14 = ssub.s32 1, %s12
  %s15 = scalar_select 0, %s14, %s12
  $region1: #{time_encoder_forward.1} parent=0
    #allocation2 [shape = 'u8[1024]{0}', space=vmem, size = 0x400, scoped, tag = 'output window, operand 1']
    #allocation3 [shape = 's32[2]{0}', space=sflag, size = 0x8, scoped, tag = 'scoped memory for time_encoder_forward.1']
    %16 = vsyncpa [#allocation3], 0
    %s17 = scalar_lea.sflag [#allocation3], 1
    %18 = vsyncpa %s17, 0
    loop: start=0, step=1, limit=4
    $region2: #{time_encoder_forward.1} parent=1 // loop_pre_header
      _
    $region3: #{time_encoder_forward.1} parent=1 // loop_header
      %s20 = sphi 0, %s24
      %p21 = scmp.ge.s32.totalorder %s20, 4
      %s30 = sphi 0, %s32
      %s33 = sphi 0, %s30
      %s34 = sphi 0, %s33
      %s50 = sphi 0, %s34
      %s54 = sphi 0, %s54
      %s56 = sphi 0, %s54
      %s57 = sphi 0, %s56
      %s71 = sphi 0, %s57
      %s75 = sphi 0, %s75
      %s77 = sphi 0, %s75
      %s78 = sphi 0, %s77
      %s92 = sphi 0, %s78
      %s96 = sphi 0, %s96
      %s98 = sphi 0, %s96
      %s99 = sphi 0, %s98
      %s113 = sphi 0, %s99
      %s117 = sphi 0, %s117
      %s119 = sphi 0, %s117
      %s120 = sphi 0, %s119
      %s134 = sphi 0, %s120
      %s138 = sphi 0, %s138
      %s140 = sphi 0, %s138
      %s141 = sphi 0, %s140
      %s155 = sphi 0, %s141
      %s159 = sphi 0, %s159
      %s161 = sphi 0, %s159
      %s162 = sphi 0, %s161
      %s176 = sphi 0, %s162
      %s180 = sphi 0, %s180
      %s182 = sphi 0, %s180
      %s183 = sphi 0, %s182
      %s197 = sphi 0, %s183
      %s201 = sphi 0, %s201
      %s203 = sphi 0, %s201
      %s204 = sphi 0, %s203
      %s218 = sphi 0, %s204
      %s224 = sphi 0, %s226
      %s227 = sphi 0, %s224
      %s228 = sphi 0, %s227
      %s244 = sphi 0, %s228
      %s250 = sphi 0, %s252
      %s253 = sphi 0, %s250
      %s254 = sphi 0, %s253
      %s270 = sphi 0, %s254
    $region4: #{time_encoder_forward.1} parent=1 // loop_header_branch
      %23 = sbr.rel (%p21) target = $region8
    $region5: #{time_encoder_forward.1} parent=1 // loop_body
      %s25 = ssub.s32 %s20, 1
      %s26 = ssub.s32 %s20, 2
      %s27 = sadd.s32 %s20, 1
      %s28 = ssub.s32 %s20, %s27
      %p29 = scmp.eq.s32.totalorder %s28, 0
      %s31 = sadd.s32 %s30, 1
      %s32 = scalar_select %p29, %s30, %s31
      %p35 = pneg %p29
      %p36 = scmp.eq.s32.totalorder %s20, 1
      %p37 = por %p35, %p36
      %p38 = scmp.ne.s32.totalorder %s30, %s33
      %p39 = scmp.eq.s32.totalorder %s20, 0
      %p40 = por %p38, %p39
      %p41 = scmp.ne.s32.totalorder %s30, %s33
      %p42 = scmp.eq.s32.totalorder %s25, 1
      %p43 = por %p41, %p42
      %p44 = scmp.ne.s32.totalorder %s33, %s34
      %p45 = scmp.eq.s32.totalorder %s25, 0
      %p46 = por %p44, %p45
      %p47 = scmp.ne.s32.totalorder %s33, %s34
      %p48 = scmp.eq.s32.totalorder %s26, 1
      %p49 = por %p47, %p48
      %p51 = scmp.ne.s32.totalorder %s34, %s50
      %p52 = scmp.eq.s32.totalorder %s26, 0
      %p53 = por %p51, %p52
      %s55 = sadd.s32 %s54, 1
      %p58 = scmp.eq.s32.totalorder %s20, 1
      %p59 = scmp.ne.s32.totalorder %s54, %s56
      %p60 = scmp.eq.s32.totalorder %s20, 0
      %p61 = por %p59, %p60
      %p62 = scmp.ne.s32.totalorder %s54, %s56
      %p63 = scmp.eq.s32.totalorder %s25, 1
      %p64 = por %p62, %p63
      %p65 = scmp.ne.s32.totalorder %s56, %s57
      %p66 = scmp.eq.s32.totalorder %s25, 0
      %p67 = por %p65, %p66
      %p68 = scmp.ne.s32.totalorder %s56, %s57
      %p69 = scmp.eq.s32.totalorder %s26, 1
      %p70 = por %p68, %p69
      %p72 = scmp.ne.s32.totalorder %s57, %s71
      %p73 = scmp.eq.s32.totalorder %s26, 0
      %p74 = por %p72, %p73
      %s76 = sadd.s32 %s75, 1
      %p79 = scmp.eq.s32.totalorder %s20, 1
      %p80 = scmp.ne.s32.totalorder %s75, %s77
      %p81 = scmp.eq.s32.totalorder %s20, 0
      %p82 = por %p80, %p81
      %p83 = scmp.ne.s32.totalorder %s75, %s77
      %p84 = scmp.eq.s32.totalorder %s25, 1
      %p85 = por %p83, %p84
      %p86 = scmp.ne.s32.totalorder %s77, %s78
      %p87 = scmp.eq.s32.totalorder %s25, 0
      %p88 = por %p86, %p87
      %p89 = scmp.ne.s32.totalorder %s77, %s78
      %p90 = scmp.eq.s32.totalorder %s26, 1
      %p91 = por %p89, %p90
      %p93 = scmp.ne.s32.totalorder %s78, %s92
      %p94 = scmp.eq.s32.totalorder %s26, 0
      %p95 = por %p93, %p94
      %s97 = sadd.s32 %s96, 1
      %p100 = scmp.eq.s32.totalorder %s20, 1
      %p101 = scmp.ne.s32.totalorder %s96, %s98
      %p102 = scmp.eq.s32.totalorder %s20, 0
      %p103 = por %p101, %p102
      %p104 = scmp.ne.s32.totalorder %s96, %s98
      %p105 = scmp.eq.s32.totalorder %s25, 1
      %p106 = por %p104, %p105
      %p107 = scmp.ne.s32.totalorder %s98, %s99
      %p108 = scmp.eq.s32.totalorder %s25, 0
      %p109 = por %p107, %p108
      %p110 = scmp.ne.s32.totalorder %s98, %s99
      %p111 = scmp.eq.s32.totalorder %s26, 1
      %p112 = por %p110, %p111
      %p114 = scmp.ne.s32.totalorder %s99, %s113
      %p115 = scmp.eq.s32.totalorder %s26, 0
      %p116 = por %p114, %p115
      %s118 = sadd.s32 %s117, 1
      %p121 = scmp.eq.s32.totalorder %s20, 1
      %p122 = scmp.ne.s32.totalorder %s117, %s119
      %p123 = scmp.eq.s32.totalorder %s20, 0
      %p124 = por %p122, %p123
      %p125 = scmp.ne.s32.totalorder %s117, %s119
      %p126 = scmp.eq.s32.totalorder %s25, 1
      %p127 = por %p125, %p126
      %p128 = scmp.ne.s32.totalorder %s119, %s120
      %p129 = scmp.eq.s32.totalorder %s25, 0
      %p130 = por %p128, %p129
      %p131 = scmp.ne.s32.totalorder %s119, %s120
      %p132 = scmp.eq.s32.totalorder %s26, 1
      %p133 = por %p131, %p132
      %p135 = scmp.ne.s32.totalorder %s120, %s134
      %p136 = scmp.eq.s32.totalorder %s26, 0
      %p137 = por %p135, %p136
      %s139 = sadd.s32 %s138, 1
      %p142 = scmp.eq.s32.totalorder %s20, 1
      %p143 = scmp.ne.s32.totalorder %s138, %s140
      %p144 = scmp.eq.s32.totalorder %s20, 0
      %p145 = por %p143, %p144
      %p146 = scmp.ne.s32.totalorder %s138, %s140
      %p147 = scmp.eq.s32.totalorder %s25, 1
      %p148 = por %p146, %p147
      %p149 = scmp.ne.s32.totalorder %s140, %s141
      %p150 = scmp.eq.s32.totalorder %s25, 0
      %p151 = por %p149, %p150
      %p152 = scmp.ne.s32.totalorder %s140, %s141
      %p153 = scmp.eq.s32.totalorder %s26, 1
      %p154 = por %p152, %p153
      %p156 = scmp.ne.s32.totalorder %s141, %s155
      %p157 = scmp.eq.s32.totalorder %s26, 0
      %p158 = por %p156, %p157
      %s160 = sadd.s32 %s159, 1
      %p163 = scmp.eq.s32.totalorder %s20, 1
      %p164 = scmp.ne.s32.totalorder %s159, %s161
      %p165 = scmp.eq.s32.totalorder %s20, 0
      %p166 = por %p164, %p165
      %p167 = scmp.ne.s32.totalorder %s159, %s161
      %p168 = scmp.eq.s32.totalorder %s25, 1
      %p169 = por %p167, %p168
      %p170 = scmp.ne.s32.totalorder %s161, %s162
      %p171 = scmp.eq.s32.totalorder %s25, 0
      %p172 = por %p170, %p171
      %p173 = scmp.ne.s32.totalorder %s161, %s162
      %p174 = scmp.eq.s32.totalorder %s26, 1
      %p175 = por %p173, %p174
      %p177 = scmp.ne.s32.totalorder %s162, %s176
      %p178 = scmp.eq.s32.totalorder %s26, 0
      %p179 = por %p177, %p178
      %s181 = sadd.s32 %s180, 1
      %p184 = scmp.eq.s32.totalorder %s20, 1
      %p185 = scmp.ne.s32.totalorder %s180, %s182
      %p186 = scmp.eq.s32.totalorder %s20, 0
      %p187 = por %p185, %p186
      %p188 = scmp.ne.s32.totalorder %s180, %s182
      %p189 = scmp.eq.s32.totalorder %s25, 1
      %p190 = por %p188, %p189
      %p191 = scmp.ne.s32.totalorder %s182, %s183
      %p192 = scmp.eq.s32.totalorder %s25, 0
      %p193 = por %p191, %p192
      %p194 = scmp.ne.s32.totalorder %s182, %s183
      %p195 = scmp.eq.s32.totalorder %s26, 1
      %p196 = por %p194, %p195
      %p198 = scmp.ne.s32.totalorder %s183, %s197
      %p199 = scmp.eq.s32.totalorder %s26, 0
      %p200 = por %p198, %p199
      %s202 = sadd.s32 %s201, 1
      %p205 = scmp.eq.s32.totalorder %s20, 1
      %p206 = scmp.ne.s32.totalorder %s201, %s203
      %p207 = scmp.eq.s32.totalorder %s20, 0
      %p208 = por %p206, %p207
      %p209 = scmp.ne.s32.totalorder %s201, %s203
      %p210 = scmp.eq.s32.totalorder %s25, 1
      %p211 = por %p209, %p210
      %p212 = scmp.ne.s32.totalorder %s203, %s204
      %p213 = scmp.eq.s32.totalorder %s25, 0
      %p214 = por %p212, %p213
      %p215 = scmp.ne.s32.totalorder %s203, %s204
      %p216 = scmp.eq.s32.totalorder %s26, 1
      %p217 = por %p215, %p216
      %p219 = scmp.ne.s32.totalorder %s204, %s218
      %p220 = scmp.eq.s32.totalorder %s26, 0
      %p221 = por %p219, %p220
      %s222 = ssub.s32 %s20, %s27
      %p223 = scmp.eq.s32.totalorder %s222, 0
      %s225 = sadd.s32 %s224, 1
      %s226 = scalar_select %p223, %s224, %s225
      %p229 = pneg %p223
      %p230 = scmp.eq.s32.totalorder %s20, 1
      %p231 = por %p229, %p230
      %p232 = scmp.ne.s32.totalorder %s224, %s227
      %p233 = scmp.eq.s32.totalorder %s20, 0
      %p234 = por %p232, %p233
      %p235 = scmp.ne.s32.totalorder %s224, %s227
      %p236 = scmp.eq.s32.totalorder %s25, 1
      %p237 = por %p235, %p236
      %p238 = scmp.ne.s32.totalorder %s227, %s228
      %p239 = scmp.eq.s32.totalorder %s25, 0
      %p240 = por %p238, %p239
      %p241 = scmp.ne.s32.totalorder %s227, %s228
      %p242 = scmp.eq.s32.totalorder %s26, 1
      %p243 = por %p241, %p242
      %p245 = scmp.ne.s32.totalorder %s228, %s244
      %p246 = scmp.eq.s32.totalorder %s26, 0
      %p247 = por %p245, %p246
      %s248 = ssub.s32 %s20, %s27
      %p249 = scmp.eq.s32.totalorder %s248, 0
      %s251 = sadd.s32 %s250, 1
      %s252 = scalar_select %p249, %s250, %s251
      %p255 = pneg %p249
      %p256 = scmp.eq.s32.totalorder %s20, 1
      %p257 = por %p255, %p256
      %p258 = scmp.ne.s32.totalorder %s250, %s253
      %p259 = scmp.eq.s32.totalorder %s20, 0
      %p260 = por %p258, %p259
      %p261 = scmp.ne.s32.totalorder %s250, %s253
      %p262 = scmp.eq.s32.totalorder %s25, 1
      %p263 = por %p261, %p262
      %p264 = scmp.ne.s32.totalorder %s253, %s254
      %p265 = scmp.eq.s32.totalorder %s25, 0
      %p266 = por %p264, %p265
      %p267 = scmp.ne.s32.totalorder %s253, %s254
      %p268 = scmp.eq.s32.totalorder %s26, 1
      %p269 = por %p267, %p268
      %p271 = scmp.ne.s32.totalorder %s254, %s270
      %p272 = scmp.eq.s32.totalorder %s26, 0
      %p273 = por %p271, %p272
      %p274 = scmp.le.s32.totalorder 1, %s20
      %p275 = scmp.lt.s32.totalorder %s20, 3
      %p276 = pnand %p274, %p275
      %p277 = pneg %p276
      // Predicated region
      $region9: #{time_encoder_forward.1} parent=5 // pred_check
        _
      $region10: #{time_encoder_forward.1} parent=5 // pred_check_branch
        %279 = sbr.rel (%p276) target = $region12
      $region11: #{time_encoder_forward.1} parent=5 // pred_region
        %s280 = ssub.s32 %s20, 1
        // Predicated region
        $region13: #{time_encoder_forward.1} parent=11 // pred_check
          %p281 = pneg %p67
        $region14: #{time_encoder_forward.1} parent=11 // pred_check_branch
          %283 = sbr.rel (%p281) target = $region16
        $region15: #{time_encoder_forward.1} parent=11 // pred_region
          _
        $region16: #{time_encoder_forward.1} parent=11 // pred_fallthru
          _
        // Predicated region
        $region17: #{time_encoder_forward.1} parent=11 // pred_check
          %p284 = pneg %p88
        $region18: #{time_encoder_forward.1} parent=11 // pred_check_branch
          %286 = sbr.rel (%p284) target = $region20
        $region19: #{time_encoder_forward.1} parent=11 // pred_region
          _
        $region20: #{time_encoder_forward.1} parent=11 // pred_fallthru
          _
        // Predicated region
        $region21: #{time_encoder_forward.1} parent=11 // pred_check
          %p287 = pneg %p109
        $region22: #{time_encoder_forward.1} parent=11 // pred_check_branch
          %289 = sbr.rel (%p287) target = $region24
        $region23: #{time_encoder_forward.1} parent=11 // pred_region
          _
        $region24: #{time_encoder_forward.1} parent=11 // pred_fallthru
          _
        // Predicated region
        $region25: #{time_encoder_forward.1} parent=11 // pred_check
          %p290 = pneg %p130
        $region26: #{time_encoder_forward.1} parent=11 // pred_check_branch
          %292 = sbr.rel (%p290) target = $region28
        $region27: #{time_encoder_forward.1} parent=11 // pred_region
          _
        $region28: #{time_encoder_forward.1} parent=11 // pred_fallthru
          _
        // Predicated region
        $region29: #{time_encoder_forward.1} parent=11 // pred_check
          %p293 = pneg %p151
        $region30: #{time_encoder_forward.1} parent=11 // pred_check_branch
          %295 = sbr.rel (%p293) target = $region32
        $region31: #{time_encoder_forward.1} parent=11 // pred_region
          _
        $region32: #{time_encoder_forward.1} parent=11 // pred_fallthru
          _
        // Predicated region
        $region33: #{time_encoder_forward.1} parent=11 // pred_check
          %p296 = pneg %p172
        $region34: #{time_encoder_forward.1} parent=11 // pred_check_branch
          %298 = sbr.rel (%p296) target = $region36
        $region35: #{time_encoder_forward.1} parent=11 // pred_region
          _
        $region36: #{time_encoder_forward.1} parent=11 // pred_fallthru
          _
        // Predicated region
        $region37: #{time_encoder_forward.1} parent=11 // pred_check
          %p299 = pneg %p193
        $region38: #{time_encoder_forward.1} parent=11 // pred_check_branch
          %301 = sbr.rel (%p299) target = $region40
        $region39: #{time_encoder_forward.1} parent=11 // pred_region
          _
        $region40: #{time_encoder_forward.1} parent=11 // pred_fallthru
          _
        // Predicated region
        $region41: #{time_encoder_forward.1} parent=11 // pred_check
          %p302 = pneg %p214
        $region42: #{time_encoder_forward.1} parent=11 // pred_check_branch
          %304 = sbr.rel (%p302) target = $region44
        $region43: #{time_encoder_forward.1} parent=11 // pred_region
          _
        $region44: #{time_encoder_forward.1} parent=11 // pred_fallthru
          _
      $region12: #{time_encoder_forward.1} parent=5 // pred_fallthru
        _
      %p305 = scmp.lt.s32.totalorder %s20, 2
      // Predicated region
      $region45: #{time_encoder_forward.1} parent=5 // pred_check
        %p306 = pneg %p305
      $region46: #{time_encoder_forward.1} parent=5 // pred_check_branch
        %308 = sbr.rel (%p306) target = $region48
      $region47: #{time_encoder_forward.1} parent=5 // pred_region
        // Predicated region
        $region49: #{time_encoder_forward.1} parent=47 // pred_check
          %p309 = pneg %p40
        $region50: #{time_encoder_forward.1} parent=47 // pred_check_branch
          %311 = sbr.rel (%p309) target = $region52
        $region51: #{time_encoder_forward.1} parent=47 // pred_region
          %p312 = scmp.lt.s32.totalorder %s20, 1
          %s313 = scalar_select %p312, %s20, 1
          %s314 = smul.addr %s313, 288
          %s315 = smul.addr %s314, 8
          %s316 = scalar_lea.vmem %s0, %s315
        $region52: #{time_encoder_forward.1} parent=47 // pred_fallthru
          _
      $region48: #{time_encoder_forward.1} parent=5 // pred_fallthru
        _
      %p317 = scmp.le.s32.totalorder 1, %s20
      %p318 = scmp.lt.s32.totalorder %s20, 3
      %p319 = pnand %p317, %p318
      %p320 = pneg %p319
      // Predicated region
      $region53: #{time_encoder_forward.1} parent=5 // pred_check
        _
      $region54: #{time_encoder_forward.1} parent=5 // pred_check_branch
        %322 = sbr.rel (%p319) target = $region56
      $region55: #{time_encoder_forward.1} parent=5 // pred_region
        %s323 = ssub.s32 %s20, 1
        %p324 = scmp.lt.s32.totalorder %s25, 1
        %s325 = scalar_select %p324, %s25, 1
        %s326 = smul.addr %s325, 288
        %s327 = smul.addr %s326, 8
        %s328 = scalar_lea.vmem %s0, %s327
        %p329 = pneg %p46
        %p330 = pneg %p43
        %p331 = pneg %p67
        %p332 = pneg %p64
        %p333 = pneg %p88
        %p334 = pneg %p85
        %p335 = pneg %p109
        %p336 = pneg %p106
        %p337 = pneg %p130
        %p338 = pneg %p127
        %p339 = pneg %p151
        %p340 = pneg %p148
        %p341 = pneg %p172
        %p342 = pneg %p169
        %p343 = pneg %p193
        %p344 = pneg %p190
        %p345 = pneg %p214
        %p346 = pneg %p211
        %p347 = pneg %p240
        %p348 = pneg %p237
        %p349 = scmp.lt.s32.totalorder %s25, 1
        %s350 = scalar_select %p349, %s25, 1
        %s351 = smul.addr %s350, 16
        %s352 = smul.addr %s351, 8
        %s353 = scalar_lea.vmem %s9, %s352
        %p354 = pneg %p266
        %p355 = pneg %p263
        %s356 = sand.u32 %s253, 1
        %s357 = scalar_lea.sflag [#allocation3], %s356
        %s358 = sand.u32 %s253, 1
        %s359 = scalar_lea.vmem [#allocation2], %s358
        %p360 = scmp.lt.s32.totalorder %s25, 1
        %s361 = scalar_select %p360, %s25, 1
        %s362 = smul.addr %s361, 288
        %s363 = smul.addr %s362, 8
        %s364 = scalar_lea.vmem %s0, %s363
        %p365 = scmp.lt.s32.totalorder %s25, 1
        %s366 = scalar_select %p365, %s25, 1
        %s367 = smul.addr %s366, 16
        %s368 = smul.addr %s367, 8
        %s369 = scalar_lea.vmem %s9, %s368
        %v370 = vld [vmem:[%s1] sm:$0xff]
        %v371 = vld [vmem:[%s1 + $0x8] sm:$0xff]
        %v372 = vld [vmem:[%s1 + $0x10] sm:$0xff]
        %v373 = vld [vmem:[%s1 + $0x18] sm:$0xff]
        %v374 = vld [vmem:[%s1 + $0x20] sm:$0xff]
        %v375 = vld [vmem:[%s1 + $0x28] sm:$0xff]
        %v376 = vld [vmem:[%s1 + $0x30] sm:$0xff]
        %v377 = vld [vmem:[%s1 + $0x38] sm:$0xff]
        %v378 = vld [vmem:[%s364] sm:$0xff]
        %v379 = vld [vmem:[%s364 + $0x8] sm:$0xff]
        %v380 = vld [vmem:[%s364 + $0x10] sm:$0xff]
        %v381 = vld [vmem:[%s364 + $0x18] sm:$0xff]
        %v382 = vld [vmem:[%s364 + $0x20] sm:$0xff]
        %v383 = vld [vmem:[%s364 + $0x28] sm:$0xff]
        %v384 = vld [vmem:[%s364 + $0x30] sm:$0xff]
        %v385 = vld [vmem:[%s364 + $0x38] sm:$0xff]
        %v386 = vld [vmem:[%s364 + $0x40] sm:$0xff]
        %v387 = vld [vmem:[%s364 + $0x48] sm:$0xff]
        %v388 = vld [vmem:[%s364 + $0x50] sm:$0xff]
        %v389 = vld [vmem:[%s364 + $0x58] sm:$0xff]
        %v390 = vld [vmem:[%s364 + $0x60] sm:$0xff]
        %v391 = vld [vmem:[%s364 + $0x68] sm:$0xff]
        %v392 = vld [vmem:[%s364 + $0x70] sm:$0xff]
        %v393 = vld [vmem:[%s364 + $0x78] sm:$0xff]
        %v394 = vld [vmem:[%s364 + $0x80] sm:$0xff]
        %v395 = vld [vmem:[%s364 + $0x88] sm:$0xff]
        %v396 = vld [vmem:[%s364 + $0x90] sm:$0xff]
        %v397 = vld [vmem:[%s364 + $0x98] sm:$0xff]
        %v398 = vld [vmem:[%s364 + $0xa0] sm:$0xff]
        %v399 = vld [vmem:[%s364 + $0xa8] sm:$0xff]
        %v400 = vld [vmem:[%s364 + $0xb0] sm:$0xff]
        %v401 = vld [vmem:[%s364 + $0xb8] sm:$0xff]
        %v402 = vld [vmem:[%s364 + $0xc0] sm:$0xff]
        %v403 = vld [vmem:[%s364 + $0xc8] sm:$0xff]
        %v404 = vld [vmem:[%s364 + $0xd0] sm:$0xff]
        %v405 = vld [vmem:[%s364 + $0xd8] sm:$0xff]
        %v406 = vld [vmem:[%s364 + $0xe0] sm:$0xff]
        %v407 = vld [vmem:[%s364 + $0xe8] sm:$0xff]
        %v408 = vld [vmem:[%s364 + $0xf0] sm:$0xff]
        %v409 = vld [vmem:[%s364 + $0xf8] sm:$0xff]
        %v410 = vld [vmem:[%s364 + $0x100] sm:$0xff]
        %v411 = vld [vmem:[%s364 + $0x108] sm:$0xff]
        %v412 = vld [vmem:[%s364 + $0x110] sm:$0xff]
        %v413 = vld [vmem:[%s364 + $0x118] sm:$0xff]
        %v414 = vld [vmem:[%s364 + $0x120] sm:$0xff]
        %v415 = vld [vmem:[%s364 + $0x128] sm:$0xff]
        %v416 = vld [vmem:[%s364 + $0x130] sm:$0xff]
        %v417 = vld [vmem:[%s364 + $0x138] sm:$0xff]
        %v418 = vld [vmem:[%s364 + $0x140] sm:$0xff]
        %v419 = vld [vmem:[%s364 + $0x148] sm:$0xff]
        %v420 = vld [vmem:[%s364 + $0x150] sm:$0xff]
        %v421 = vld [vmem:[%s364 + $0x158] sm:$0xff]
        %v422 = vld [vmem:[%s364 + $0x160] sm:$0xff]
        %v423 = vld [vmem:[%s364 + $0x168] sm:$0xff]
        %v424 = vld [vmem:[%s364 + $0x170] sm:$0xff]
        %v425 = vld [vmem:[%s364 + $0x178] sm:$0xff]
        %v426 = vld [vmem:[%s364 + $0x180] sm:$0xff]
        %v427 = vld [vmem:[%s364 + $0x188] sm:$0xff]
        %v428 = vld [vmem:[%s364 + $0x190] sm:$0xff]
        %v429 = vld [vmem:[%s364 + $0x198] sm:$0xff]
        %v430 = vld [vmem:[%s364 + $0x1a0] sm:$0xff]
        %v431 = vld [vmem:[%s364 + $0x1a8] sm:$0xff]
        %v432 = vld [vmem:[%s364 + $0x1b0] sm:$0xff]
        %v433 = vld [vmem:[%s364 + $0x1b8] sm:$0xff]
        %v434 = vld [vmem:[%s364 + $0x1c0] sm:$0xff]
        %v435 = vld [vmem:[%s364 + $0x1c8] sm:$0xff]
        %v436 = vld [vmem:[%s364 + $0x1d0] sm:$0xff]
        %v437 = vld [vmem:[%s364 + $0x1d8] sm:$0xff]
        %v438 = vld [vmem:[%s364 + $0x1e0] sm:$0xff]
        %v439 = vld [vmem:[%s364 + $0x1e8] sm:$0xff]
        %v440 = vld [vmem:[%s364 + $0x1f0] sm:$0xff]
        %v441 = vld [vmem:[%s364 + $0x1f8] sm:$0xff]
        %v442 = vld [vmem:[%s364 + $0x200] sm:$0xff]
        %v443 = vld [vmem:[%s364 + $0x208] sm:$0xff]
        %v444 = vld [vmem:[%s364 + $0x210] sm:$0xff]
        %v445 = vld [vmem:[%s364 + $0x218] sm:$0xff]
        %v446 = vld [vmem:[%s364 + $0x220] sm:$0xff]
        %v447 = vld [vmem:[%s364 + $0x228] sm:$0xff]
        %v448 = vld [vmem:[%s364 + $0x230] sm:$0xff]
        %v449 = vld [vmem:[%s364 + $0x238] sm:$0xff]
        %v450 = vld [vmem:[%s364 + $0x240] sm:$0xff]
        %v451 = vld [vmem:[%s364 + $0x248] sm:$0xff]
        %v452 = vld [vmem:[%s364 + $0x250] sm:$0xff]
        %v453 = vld [vmem:[%s364 + $0x258] sm:$0xff]
        %v454 = vld [vmem:[%s364 + $0x260] sm:$0xff]
        %v455 = vld [vmem:[%s364 + $0x268] sm:$0xff]
        %v456 = vld [vmem:[%s364 + $0x270] sm:$0xff]
        %v457 = vld [vmem:[%s364 + $0x278] sm:$0xff]
        %v458 = vld [vmem:[%s364 + $0x280] sm:$0xff]
        %v459 = vld [vmem:[%s364 + $0x288] sm:$0xff]
        %v460 = vld [vmem:[%s364 + $0x290] sm:$0xff]
        %v461 = vld [vmem:[%s364 + $0x298] sm:$0xff]
        %v462 = vld [vmem:[%s364 + $0x2a0] sm:$0xff]
        %v463 = vld [vmem:[%s364 + $0x2a8] sm:$0xff]
        %v464 = vld [vmem:[%s364 + $0x2b0] sm:$0xff]
        %v465 = vld [vmem:[%s364 + $0x2b8] sm:$0xff]
        %v466 = vld [vmem:[%s364 + $0x2c0] sm:$0xff]
        %v467 = vld [vmem:[%s364 + $0x2c8] sm:$0xff]
        %v468 = vld [vmem:[%s364 + $0x2d0] sm:$0xff]
        %v469 = vld [vmem:[%s364 + $0x2d8] sm:$0xff]
        %v470 = vld [vmem:[%s364 + $0x2e0] sm:$0xff]
        %v471 = vld [vmem:[%s364 + $0x2e8] sm:$0xff]
        %v472 = vld [vmem:[%s364 + $0x2f0] sm:$0xff]
        %v473 = vld [vmem:[%s364 + $0x2f8] sm:$0xff]
        %vm474 = vcmask 523264
        %v476 = vsel %vm474, %v371, 0
        %v479 = vsel %vm474, %v373, 0
        %v482 = vsel %vm474, %v375, 0
        %v485 = vsel %vm474, %v377, 0
        %487 = vmatprep.subr.mxu0 %v379
        %488 = vmatpush1.msra.mxu0 %v378
        %489 = vmatprep.subr.mxu0 %v383
        %490 = vmatpush1.msra.mxu0 %v382
        %491 = vmatprep.subr.mxu0 %v387
        %492 = vmatpush1.msra.mxu0 %v386
        %493 = vmatprep.subr.mxu0 %v391
        %494 = vmatpush1.msra.mxu0 %v390
        %495 = vmatprep.subr.mxu0 %v395
        %496 = vmatpush1.msra.mxu0 %v394
        %497 = vmatprep.subr.mxu0 %v399
        %498 = vmatpush1.msra.mxu0 %v398
        %499 = vmatprep.subr.mxu0 %v403
        %500 = vmatpush1.msra.mxu0 %v402
        %501 = vmatprep.subr.mxu0 %v407
        %502 = vmatpush1.msra.mxu0 %v406
        %503 = vmatprep.subr.mxu0 %v411
        %504 = vmatpush1.msra.mxu0 %v410
        %505 = vmatprep.subr.mxu0 %v415
        %506 = vmatpush1.msra.mxu0 %v414
        %507 = vmatprep.subr.mxu0 %v419
        %508 = vmatpush1.msra.mxu0 %v418
        %509 = vmatprep.subr.mxu0 %v423
        %510 = vmatpush1.msra.mxu0 %v422
        %511 = vmatprep.subr.mxu0 %v427
        %512 = vmatpush1.msra.mxu0 %v426
        %513 = vmatprep.subr.mxu0 %v431
        %514 = vmatpush1.msra.mxu0 %v430
        %515 = vmatprep.subr.mxu0 %v435
        %516 = vmatpush1.msra.mxu0 %v434
        %517 = vmatprep.subr.mxu0 %v439
        %518 = vmatpush1.msra.mxu0 %v438
        %519 = vmatprep.subr.mxu0 %v443
        %520 = vmatpush1.msra.mxu0 %v442
        %521 = vmatprep.subr.mxu0 %v447
        %522 = vmatpush1.msra.mxu0 %v446
        %523 = vmatprep.subr.mxu0 %v451
        %524 = vmatpush1.msra.mxu0 %v450
        %525 = vmatprep.subr.mxu0 %v455
        %526 = vmatpush1.msra.mxu0 %v454
        %527 = vmatprep.subr.mxu0 %v459
        %528 = vmatpush1.msra.mxu0 %v458
        %529 = vmatprep.subr.mxu0 %v463
        %530 = vmatpush1.msra.mxu0 %v462
        %531 = vmatprep.subr.mxu0 %v467
        %532 = vmatpush1.msra.mxu0 %v466
        %533 = vmatprep.subr.mxu0 %v471
        %534 = vmatpush1.msra.mxu0 %v470
        %535 = vmatprep.subr.mxu0 0.0
        %536 = vmatpush1.msra.mxu0 0.0
        %537 = vmatprep.subr.mxu0 0.0
        %538 = vmatpush1.msra.mxu0 0.0
        %539 = vmatprep.subr.mxu0 0.0
        %540 = vmatpush1.msra.mxu0 0.0
        %541 = vmatprep.subr.mxu0 0.0
        %542 = vmatpush1.msra.mxu0 0.0
        %543 = vmatprep.subr.mxu0 0.0
        %544 = vmatpush1.msra.mxu0 0.0
        %545 = vmatprep.subr.mxu0 0.0
        %546 = vmatpush1.msra.mxu0 0.0
        %547 = vmatprep.subr.mxu0 0.0
        %548 = vmatpush1.msra.mxu0 0.0
        %549 = vmatprep.subr.mxu0 0.0
        %550 = vmatpush1.msra.mxu0 0.0
        %551 = vmatprep.mubr.f32.mxu0 %v476
        %552 = vmatmul.mubr.f32.gmra.mrb[0].mxu0 %v370
        %v553 = vpop.f32.mrb[0].mxu0
        %v554 = vadd.f32 0.0, %v553
        %v555 = vpop.f32.mrb[0].mxu0
        %v556 = vadd.f32 0.0, %v555
        %557 = vmatprep.mubr.f32.mxu0 %v479
        %558 = vmatmul.mubr.f32.gmra.mrb[0].mxu0 %v372
        %v559 = vpop.f32.mrb[0].mxu0
        %v560 = vadd.f32 0.0, %v559
        %v561 = vpop.f32.mrb[0].mxu0
        %v562 = vadd.f32 0.0, %v561
        %563 = vmatprep.mubr.f32.mxu0 %v482
        %564 = vmatmul.mubr.f32.gmra.mrb[0].mxu0 %v374
        %v565 = vpop.f32.mrb[0].mxu0
        %v566 = vadd.f32 0.0, %v565
        %v567 = vpop.f32.mrb[0].mxu0
        %v568 = vadd.f32 0.0, %v567
        %569 = vmatprep.mubr.f32.mxu0 %v485
        %570 = vmatmul.mubr.f32.gmra.mrb[0].mxu0 %v376
        %v571 = vpop.f32.mrb[0].mxu0
        %v572 = vadd.f32 0.0, %v571
        %v573 = vpop.f32.mrb[0].mxu0
        %v574 = vadd.f32 0.0, %v573
        %575 = vdwg.mxu0
        %576 = vmatprep.subr.mxu0 %v381
        %577 = vmatpush1.msra.mxu0 %v380
        %578 = vmatprep.subr.mxu0 %v385
        %579 = vmatpush1.msra.mxu0 %v384
        %580 = vmatprep.subr.mxu0 %v389
        %581 = vmatpush1.msra.mxu0 %v388
        %582 = vmatprep.subr.mxu0 %v393
        %583 = vmatpush1.msra.mxu0 %v392
        %584 = vmatprep.subr.mxu0 %v397
        %585 = vmatpush1.msra.mxu0 %v396
        %586 = vmatprep.subr.mxu0 %v401
        %587 = vmatpush1.msra.mxu0 %v400
        %588 = vmatprep.subr.mxu0 %v405
        %589 = vmatpush1.msra.mxu0 %v404
        %590 = vmatprep.subr.mxu0 %v409
        %591 = vmatpush1.msra.mxu0 %v408
        %592 = vmatprep.subr.mxu0 %v413
        %593 = vmatpush1.msra.mxu0 %v412
        %594 = vmatprep.subr.mxu0 %v417
        %595 = vmatpush1.msra.mxu0 %v416
        %596 = vmatprep.subr.mxu0 %v421
        %597 = vmatpush1.msra.mxu0 %v420
        %598 = vmatprep.subr.mxu0 %v425
        %599 = vmatpush1.msra.mxu0 %v424
        %600 = vmatprep.subr.mxu0 %v429
        %601 = vmatpush1.msra.mxu0 %v428
        %602 = vmatprep.subr.mxu0 %v433
        %603 = vmatpush1.msra.mxu0 %v432
        %604 = vmatprep.subr.mxu0 %v437
        %605 = vmatpush1.msra.mxu0 %v436
        %606 = vmatprep.subr.mxu0 %v441
        %607 = vmatpush1.msra.mxu0 %v440
        %608 = vmatprep.subr.mxu0 %v445
        %609 = vmatpush1.msra.mxu0 %v444
        %610 = vmatprep.subr.mxu0 %v449
        %611 = vmatpush1.msra.mxu0 %v448
        %612 = vmatprep.subr.mxu0 %v453
        %613 = vmatpush1.msra.mxu0 %v452
        %614 = vmatprep.subr.mxu0 %v457
        %615 = vmatpush1.msra.mxu0 %v456
        %616 = vmatprep.subr.mxu0 %v461
        %617 = vmatpush1.msra.mxu0 %v460
        %618 = vmatprep.subr.mxu0 %v465
        %619 = vmatpush1.msra.mxu0 %v464
        %620 = vmatprep.subr.mxu0 %v469
        %621 = vmatpush1.msra.mxu0 %v468
        %622 = vmatprep.subr.mxu0 %v473
        %623 = vmatpush1.msra.mxu0 %v472
        %624 = vmatprep.subr.mxu0 0.0
        %625 = vmatpush1.msra.mxu0 0.0
        %626 = vmatprep.subr.mxu0 0.0
        %627 = vmatpush1.msra.mxu0 0.0
        %628 = vmatprep.subr.mxu0 0.0
        %629 = vmatpush1.msra.mxu0 0.0
        %630 = vmatprep.subr.mxu0 0.0
        %631 = vmatpush1.msra.mxu0 0.0
        %632 = vmatprep.subr.mxu0 0.0
        %633 = vmatpush1.msra.mxu0 0.0
        %634 = vmatprep.subr.mxu0 0.0
        %635 = vmatpush1.msra.mxu0 0.0
        %636 = vmatprep.subr.mxu0 0.0
        %637 = vmatpush1.msra.mxu0 0.0
        %638 = vmatprep.subr.mxu0 0.0
        %639 = vmatpush1.msra.mxu0 0.0
        %640 = vmatprep.mubr.f32.mxu0 %v476
        %641 = vmatmul.mubr.f32.gmra.mrb[0].mxu0 %v370
        %v642 = vpop.f32.mrb[0].mxu0
        %v643 = vadd.f32 0.0, %v642
        %v644 = vpop.f32.mrb[0].mxu0
        %v645 = vadd.f32 0.0, %v644
        %646 = vmatprep.mubr.f32.mxu0 %v479
        %647 = vmatmul.mubr.f32.gmra.mrb[0].mxu0 %v372
        %v648 = vpop.f32.mrb[0].mxu0
        %v649 = vadd.f32 0.0, %v648
        %v650 = vpop.f32.mrb[0].mxu0
        %v651 = vadd.f32 0.0, %v650
        %652 = vmatprep.mubr.f32.mxu0 %v482
        %653 = vmatmul.mubr.f32.gmra.mrb[0].mxu0 %v374
        %v654 = vpop.f32.mrb[0].mxu0
        %v655 = vadd.f32 0.0, %v654
        %v656 = vpop.f32.mrb[0].mxu0
        %v657 = vadd.f32 0.0, %v656
        %658 = vmatprep.mubr.f32.mxu0 %v485
        %659 = vmatmul.mubr.f32.gmra.mrb[0].mxu0 %v376
        %v660 = vpop.f32.mrb[0].mxu0
        %v661 = vadd.f32 0.0, %v660
        %v662 = vpop.f32.mrb[0].mxu0
        %v663 = vadd.f32 0.0, %v662
        %664 = vdwg.mxu0
        %v665 = vld [vmem:[%s364 + $0x180] sm:$0xff]
        %v666 = vld [vmem:[%s364 + $0x188] sm:$0xff]
        %v667 = vld [vmem:[%s364 + $0x190] sm:$0xff]
        %v668 = vld [vmem:[%s364 + $0x198] sm:$0xff]
        %v669 = vld [vmem:[%s364 + $0x1a0] sm:$0xff]
        %v670 = vld [vmem:[%s364 + $0x1a8] sm:$0xff]
        %v671 = vld [vmem:[%s364 + $0x1b0] sm:$0xff]
        %v672 = vld [vmem:[%s364 + $0x1b8] sm:$0xff]
        %v673 = vld [vmem:[%s364 + $0x1c0] sm:$0xff]
        %v674 = vld [vmem:[%s364 + $0x1c8] sm:$0xff]
        %v675 = vld [vmem:[%s364 + $0x1d0] sm:$0xff]
        %v676 = vld [vmem:[%s364 + $0x1d8] sm:$0xff]
        %v677 = vld [vmem:[%s364 + $0x1e0] sm:$0xff]
        %v678 = vld [vmem:[%s364 + $0x1e8] sm:$0xff]
        %v679 = vld [vmem:[%s364 + $0x1f0] sm:$0xff]
        %v680 = vld [vmem:[%s364 + $0x1f8] sm:$0xff]
        %v681 = vld [vmem:[%s364 + $0x200] sm:$0xff]
        %v682 = vld [vmem:[%s364 + $0x208] sm:$0xff]
        %v683 = vld [vmem:[%s364 + $0x210] sm:$0xff]
        %v684 = vld [vmem:[%s364 + $0x218] sm:$0xff]
        %v685 = vld [vmem:[%s364 + $0x220] sm:$0xff]
        %v686 = vld [vmem:[%s364 + $0x228] sm:$0xff]
        %v687 = vld [vmem:[%s364 + $0x230] sm:$0xff]
        %v688 = vld [vmem:[%s364 + $0x238] sm:$0xff]
        %v689 = vld [vmem:[%s364 + $0x240] sm:$0xff]
        %v690 = vld [vmem:[%s364 + $0x248] sm:$0xff]
        %v691 = vld [vmem:[%s364 + $0x250] sm:$0xff]
        %v692 = vld [vmem:[%s364 + $0x258] sm:$0xff]
        %v693 = vld [vmem:[%s364 + $0x260] sm:$0xff]
        %v694 = vld [vmem:[%s364 + $0x268] sm:$0xff]
        %v695 = vld [vmem:[%s364 + $0x270] sm:$0xff]
        %v696 = vld [vmem:[%s364 + $0x278] sm:$0xff]
        %v697 = vld [vmem:[%s364 + $0x280] sm:$0xff]
        %v698 = vld [vmem:[%s364 + $0x288] sm:$0xff]
        %v699 = vld [vmem:[%s364 + $0x290] sm:$0xff]
        %v700 = vld [vmem:[%s364 + $0x298] sm:$0xff]
        %v701 = vld [vmem:[%s364 + $0x2a0] sm:$0xff]
        %v702 = vld [vmem:[%s364 + $0x2a8] sm:$0xff]
        %v703 = vld [vmem:[%s364 + $0x2b0] sm:$0xff]
        %v704 = vld [vmem:[%s364 + $0x2b8] sm:$0xff]
        %v705 = vld [vmem:[%s364 + $0x2c0] sm:$0xff]
        %v706 = vld [vmem:[%s364 + $0x2c8] sm:$0xff]
        %v707 = vld [vmem:[%s364 + $0x2d0] sm:$0xff]
        %v708 = vld [vmem:[%s364 + $0x2d8] sm:$0xff]
        %v709 = vld [vmem:[%s364 + $0x2e0] sm:$0xff]
        %v710 = vld [vmem:[%s364 + $0x2e8] sm:$0xff]
        %v711 = vld [vmem:[%s364 + $0x2f0] sm:$0xff]
        %v712 = vld [vmem:[%s364 + $0x2f8] sm:$0xff]
        %v713 = vld [vmem:[%s364 + $0x300] sm:$0xff]
        %v714 = vld [vmem:[%s364 + $0x308] sm:$0xff]
        %v715 = vld [vmem:[%s364 + $0x310] sm:$0xff]
        %v716 = vld [vmem:[%s364 + $0x318] sm:$0xff]
        %v717 = vld [vmem:[%s364 + $0x320] sm:$0xff]
        %v718 = vld [vmem:[%s364 + $0x328] sm:$0xff]
        %v719 = vld [vmem:[%s364 + $0x330] sm:$0xff]
        %v720 = vld [vmem:[%s364 + $0x338] sm:$0xff]
        %v721 = vld [vmem:[%s364 + $0x340] sm:$0xff]
        %v722 = vld [vmem:[%s364 + $0x348] sm:$0xff]
        %v723 = vld [vmem:[%s364 + $0x350] sm:$0xff]
        %v724 = vld [vmem:[%s364 + $0x358] sm:$0xff]
        %v725 = vld [vmem:[%s364 + $0x360] sm:$0xff]
        %v726 = vld [vmem:[%s364 + $0x368] sm:$0xff]
        %v727 = vld [vmem:[%s364 + $0x370] sm:$0xff]
        %v728 = vld [vmem:[%s364 + $0x378] sm:$0xff]
        %v729 = vld [vmem:[%s364 + $0x380] sm:$0xff]
        %v730 = vld [vmem:[%s364 + $0x388] sm:$0xff]
        %v731 = vld [vmem:[%s364 + $0x390] sm:$0xff]
        %v732 = vld [vmem:[%s364 + $0x398] sm:$0xff]
        %v733 = vld [vmem:[%s364 + $0x3a0] sm:$0xff]
        %v734 = vld [vmem:[%s364 + $0x3a8] sm:$0xff]
        %v735 = vld [vmem:[%s364 + $0x3b0] sm:$0xff]
        %v736 = vld [vmem:[%s364 + $0x3b8] sm:$0xff]
        %v737 = vld [vmem:[%s364 + $0x3c0] sm:$0xff]
        %v738 = vld [vmem:[%s364 + $0x3c8] sm:$0xff]
        %v739 = vld [vmem:[%s364 + $0x3d0] sm:$0xff]
        %v740 = vld [vmem:[%s364 + $0x3d8] sm:$0xff]
        %v741 = vld [vmem:[%s364 + $0x3e0] sm:$0xff]
        %v742 = vld [vmem:[%s364 + $0x3e8] sm:$0xff]
        %v743 = vld [vmem:[%s364 + $0x3f0] sm:$0xff]
        %v744 = vld [vmem:[%s364 + $0x3f8] sm:$0xff]
        %v745 = vld [vmem:[%s364 + $0x400] sm:$0xff]
        %v746 = vld [vmem:[%s364 + $0x408] sm:$0xff]
        %v747 = vld [vmem:[%s364 + $0x410] sm:$0xff]
        %v748 = vld [vmem:[%s364 + $0x418] sm:$0xff]
        %v749 = vld [vmem:[%s364 + $0x420] sm:$0xff]
        %v750 = vld [vmem:[%s364 + $0x428] sm:$0xff]
        %v751 = vld [vmem:[%s364 + $0x430] sm:$0xff]
        %v752 = vld [vmem:[%s364 + $0x438] sm:$0xff]
        %v753 = vld [vmem:[%s364 + $0x440] sm:$0xff]
        %v754 = vld [vmem:[%s364 + $0x448] sm:$0xff]
        %v755 = vld [vmem:[%s364 + $0x450] sm:$0xff]
        %v756 = vld [vmem:[%s364 + $0x458] sm:$0xff]
        %v757 = vld [vmem:[%s364 + $0x460] sm:$0xff]
        %v758 = vld [vmem:[%s364 + $0x468] sm:$0xff]
        %v759 = vld [vmem:[%s364 + $0x470] sm:$0xff]
        %v760 = vld [vmem:[%s364 + $0x478] sm:$0xff]
        %761 = vmatprep.subr.mxu0 %v666
        %762 = vmatpush1.msra.mxu0 %v665
        %763 = vmatprep.subr.mxu0 %v670
        %764 = vmatpush1.msra.mxu0 %v669
        %765 = vmatprep.subr.mxu0 %v674
        %766 = vmatpush1.msra.mxu0 %v673
        %767 = vmatprep.subr.mxu0 %v678
        %768 = vmatpush1.msra.mxu0 %v677
        %769 = vmatprep.subr.mxu0 %v682
        %770 = vmatpush1.msra.mxu0 %v681
        %771 = vmatprep.subr.mxu0 %v686
        %772 = vmatpush1.msra.mxu0 %v685
        %773 = vmatprep.subr.mxu0 %v690
        %774 = vmatpush1.msra.mxu0 %v689
        %775 = vmatprep.subr.mxu0 %v694
        %776 = vmatpush1.msra.mxu0 %v693
        %777 = vmatprep.subr.mxu0 %v698
        %778 = vmatpush1.msra.mxu0 %v697
        %779 = vmatprep.subr.mxu0 %v702
        %780 = vmatpush1.msra.mxu0 %v701
        %781 = vmatprep.subr.mxu0 %v706
        %782 = vmatpush1.msra.mxu0 %v705
        %783 = vmatprep.subr.mxu0 %v710
        %784 = vmatpush1.msra.mxu0 %v709
        %785 = vmatprep.subr.mxu0 %v714
        %786 = vmatpush1.msra.mxu0 %v713
        %787 = vmatprep.subr.mxu0 %v718
        %788 = vmatpush1.msra.mxu0 %v717
        %789 = vmatprep.subr.mxu0 %v722
        %790 = vmatpush1.msra.mxu0 %v721
        %791 = vmatprep.subr.mxu0 %v726
        %792 = vmatpush1.msra.mxu0 %v725
        %793 = vmatprep.subr.mxu0 %v730
        %794 = vmatpush1.msra.mxu0 %v729
        %795 = vmatprep.subr.mxu0 %v734
        %796 = vmatpush1.msra.mxu0 %v733
        %797 = vmatprep.subr.mxu0 %v738
        %798 = vmatpush1.msra.mxu0 %v737
        %799 = vmatprep.subr.mxu0 %v742
        %800 = vmatpush1.msra.mxu0 %v741
        %801 = vmatprep.subr.mxu0 %v746
        %802 = vmatpush1.msra.mxu0 %v745
        %803 = vmatprep.subr.mxu0 %v750
        %804 = vmatpush1.msra.mxu0 %v749
        %805 = vmatprep.subr.mxu0 %v754
        %806 = vmatpush1.msra.mxu0 %v753
        %807 = vmatprep.subr.mxu0 %v758
        %808 = vmatpush1.msra.mxu0 %v757
        %809 = vmatprep.subr.mxu0 0.0
        %810 = vmatpush1.msra.mxu0 0.0
        %811 = vmatprep.subr.mxu0 0.0
        %812 = vmatpush1.msra.mxu0 0.0
        %813 = vmatprep.subr.mxu0 0.0
        %814 = vmatpush1.msra.mxu0 0.0
        %815 = vmatprep.subr.mxu0 0.0
        %816 = vmatpush1.msra.mxu0 0.0
        %817 = vmatprep.subr.mxu0 0.0
        %818 = vmatpush1.msra.mxu0 0.0
        %819 = vmatprep.subr.mxu0 0.0
        %820 = vmatpush1.msra.mxu0 0.0
        %821 = vmatprep.subr.mxu0 0.0
        %822 = vmatpush1.msra.mxu0 0.0
        %823 = vmatprep.subr.mxu0 0.0
        %824 = vmatpush1.msra.mxu0 0.0
        %825 = vmatprep.mubr.f32.mxu0 %v476
        %826 = vmatmul.mubr.f32.gmra.mrb[0].mxu0 %v370
        %v827 = vpop.f32.mrb[0].mxu0
        %v828 = vadd.f32 0.0, %v827
        %v829 = vpop.f32.mrb[0].mxu0
        %v830 = vadd.f32 0.0, %v829
        %831 = vmatprep.mubr.f32.mxu0 %v479
        %832 = vmatmul.mubr.f32.gmra.mrb[0].mxu0 %v372
        %v833 = vpop.f32.mrb[0].mxu0
        %v834 = vadd.f32 0.0, %v833
        %v835 = vpop.f32.mrb[0].mxu0
        %v836 = vadd.f32 0.0, %v835
        %837 = vmatprep.mubr.f32.mxu0 %v482
        %838 = vmatmul.mubr.f32.gmra.mrb[0].mxu0 %v374
        %v839 = vpop.f32.mrb[0].mxu0
        %v840 = vadd.f32 0.0, %v839
        %v841 = vpop.f32.mrb[0].mxu0
        %v842 = vadd.f32 0.0, %v841
        %843 = vmatprep.mubr.f32.mxu0 %v485
        %844 = vmatmul.mubr.f32.gmra.mrb[0].mxu0 %v376
        %v845 = vpop.f32.mrb[0].mxu0
        %v846 = vadd.f32 0.0, %v845
        %v847 = vpop.f32.mrb[0].mxu0
        %v848 = vadd.f32 0.0, %v847
        %849 = vdwg.mxu0
        %850 = vmatprep.subr.mxu0 %v668
        %851 = vmatpush1.msra.mxu0 %v667
        %852 = vmatprep.subr.mxu0 %v672
        %853 = vmatpush1.msra.mxu0 %v671
        %854 = vmatprep.subr.mxu0 %v676
        %855 = vmatpush1.msra.mxu0 %v675
        %856 = vmatprep.subr.mxu0 %v680
        %857 = vmatpush1.msra.mxu0 %v679
        %858 = vmatprep.subr.mxu0 %v684
        %859 = vmatpush1.msra.mxu0 %v683
        %860 = vmatprep.subr.mxu0 %v688
        %861 = vmatpush1.msra.mxu0 %v687
        %862 = vmatprep.subr.mxu0 %v692
        %863 = vmatpush1.msra.mxu0 %v691
        %864 = vmatprep.subr.mxu0 %v696
        %865 = vmatpush1.msra.mxu0 %v695
        %866 = vmatprep.subr.mxu0 %v700
        %867 = vmatpush1.msra.mxu0 %v699
        %868 = vmatprep.subr.mxu0 %v704
        %869 = vmatpush1.msra.mxu0 %v703
        %870 = vmatprep.subr.mxu0 %v708
        %871 = vmatpush1.msra.mxu0 %v707
        %872 = vmatprep.subr.mxu0 %v712
        %873 = vmatpush1.msra.mxu0 %v711
        %874 = vmatprep.subr.mxu0 %v716
        %875 = vmatpush1.msra.mxu0 %v715
        %876 = vmatprep.subr.mxu0 %v720
        %877 = vmatpush1.msra.mxu0 %v719
        %878 = vmatprep.subr.mxu0 %v724
        %879 = vmatpush1.msra.mxu0 %v723
        %880 = vmatprep.subr.mxu0 %v728
        %881 = vmatpush1.msra.mxu0 %v727
        %882 = vmatprep.subr.mxu0 %v732
        %883 = vmatpush1.msra.mxu0 %v731
        %884 = vmatprep.subr.mxu0 %v736
        %885 = vmatpush1.msra.mxu0 %v735
        %886 = vmatprep.subr.mxu0 %v740
        %887 = vmatpush1.msra.mxu0 %v739
        %888 = vmatprep.subr.mxu0 %v744
        %889 = vmatpush1.msra.mxu0 %v743
        %890 = vmatprep.subr.mxu0 %v748
        %891 = vmatpush1.msra.mxu0 %v747
        %892 = vmatprep.subr.mxu0 %v752
        %893 = vmatpush1.msra.mxu0 %v751
        %894 = vmatprep.subr.mxu0 %v756
        %895 = vmatpush1.msra.mxu0 %v755
        %896 = vmatprep.subr.mxu0 %v760
        %897 = vmatpush1.msra.mxu0 %v759
        %898 = vmatprep.subr.mxu0 0.0
        %899 = vmatpush1.msra.mxu0 0.0
        %900 = vmatprep.subr.mxu0 0.0
        %901 = vmatpush1.msra.mxu0 0.0
        %902 = vmatprep.subr.mxu0 0.0
        %903 = vmatpush1.msra.mxu0 0.0
        %904 = vmatprep.subr.mxu0 0.0
        %905 = vmatpush1.msra.mxu0 0.0
        %906 = vmatprep.subr.mxu0 0.0
        %907 = vmatpush1.msra.mxu0 0.0
        %908 = vmatprep.subr.mxu0 0.0
        %909 = vmatpush1.msra.mxu0 0.0
        %910 = vmatprep.subr.mxu0 0.0
        %911 = vmatpush1.msra.mxu0 0.0
        %912 = vmatprep.subr.mxu0 0.0
        %913 = vmatpush1.msra.mxu0 0.0
        %914 = vmatprep.mubr.f32.mxu0 %v476
        %915 = vmatmul.mubr.f32.gmra.mrb[0].mxu0 %v370
        %v916 = vpop.f32.mrb[0].mxu0
        %v917 = vadd.f32 0.0, %v916
        %v918 = vpop.f32.mrb[0].mxu0
        %v919 = vadd.f32 0.0, %v918
        %920 = vmatprep.mubr.f32.mxu0 %v479
        %921 = vmatmul.mubr.f32.gmra.mrb[0].mxu0 %v372
        %v922 = vpop.f32.mrb[0].mxu0
        %v923 = vadd.f32 0.0, %v922
        %v924 = vpop.f32.mrb[0].mxu0
        %v925 = vadd.f32 0.0, %v924
        %926 = vmatprep.mubr.f32.mxu0 %v482
        %927 = vmatmul.mubr.f32.gmra.mrb[0].mxu0 %v374
        %v928 = vpop.f32.mrb[0].mxu0
        %v929 = vadd.f32 0.0, %v928
        %v930 = vpop.f32.mrb[0].mxu0
        %v931 = vadd.f32 0.0, %v930
        %932 = vmatprep.mubr.f32.mxu0 %v485
        %933 = vmatmul.mubr.f32.gmra.mrb[0].mxu0 %v376
        %v934 = vpop.f32.mrb[0].mxu0
        %v935 = vadd.f32 0.0, %v934
        %v936 = vpop.f32.mrb[0].mxu0
        %v937 = vadd.f32 0.0, %v936
        %938 = vdwg.mxu0
        %v939 = vld [vmem:[%s364 + $0x300] sm:$0xff]
        %v940 = vld [vmem:[%s364 + $0x308] sm:$0xff]
        %v941 = vld [vmem:[%s364 + $0x310] sm:$0xff]
        %v942 = vld [vmem:[%s364 + $0x318] sm:$0xff]
        %v943 = vld [vmem:[%s364 + $0x320] sm:$0xff]
        %v944 = vld [vmem:[%s364 + $0x328] sm:$0xff]
        %v945 = vld [vmem:[%s364 + $0x330] sm:$0xff]
        %v946 = vld [vmem:[%s364 + $0x338] sm:$0xff]
        %v947 = vld [vmem:[%s364 + $0x340] sm:$0xff]
        %v948 = vld [vmem:[%s364 + $0x348] sm:$0xff]
        %v949 = vld [vmem:[%s364 + $0x350] sm:$0xff]
        %v950 = vld [vmem:[%s364 + $0x358] sm:$0xff]
        %v951 = vld [vmem:[%s364 + $0x360] sm:$0xff]
        %v952 = vld [vmem:[%s364 + $0x368] sm:$0xff]
        %v953 = vld [vmem:[%s364 + $0x370] sm:$0xff]
        %v954 = vld [vmem:[%s364 + $0x378] sm:$0xff]
        %v955 = vld [vmem:[%s364 + $0x380] sm:$0xff]
        %v956 = vld [vmem:[%s364 + $0x388] sm:$0xff]
        %v957 = vld [vmem:[%s364 + $0x390] sm:$0xff]
        %v958 = vld [vmem:[%s364 + $0x398] sm:$0xff]
        %v959 = vld [vmem:[%s364 + $0x3a0] sm:$0xff]
        %v960 = vld [vmem:[%s364 + $0x3a8] sm:$0xff]
        %v961 = vld [vmem:[%s364 + $0x3b0] sm:$0xff]
        %v962 = vld [vmem:[%s364 + $0x3b8] sm:$0xff]
        %v963 = vld [vmem:[%s364 + $0x3c0] sm:$0xff]
        %v964 = vld [vmem:[%s364 + $0x3c8] sm:$0xff]
        %v965 = vld [vmem:[%s364 + $0x3d0] sm:$0xff]
        %v966 = vld [vmem:[%s364 + $0x3d8] sm:$0xff]
        %v967 = vld [vmem:[%s364 + $0x3e0] sm:$0xff]
        %v968 = vld [vmem:[%s364 + $0x3e8] sm:$0xff]
        %v969 = vld [vmem:[%s364 + $0x3f0] sm:$0xff]
        %v970 = vld [vmem:[%s364 + $0x3f8] sm:$0xff]
        %v971 = vld [vmem:[%s364 + $0x400] sm:$0xff]
        %v972 = vld [vmem:[%s364 + $0x408] sm:$0xff]
        %v973 = vld [vmem:[%s364 + $0x410] sm:$0xff]
        %v974 = vld [vmem:[%s364 + $0x418] sm:$0xff]
        %v975 = vld [vmem:[%s364 + $0x420] sm:$0xff]
        %v976 = vld [vmem:[%s364 + $0x428] sm:$0xff]
        %v977 = vld [vmem:[%s364 + $0x430] sm:$0xff]
        %v978 = vld [vmem:[%s364 + $0x438] sm:$0xff]
        %v979 = vld [vmem:[%s364 + $0x440] sm:$0xff]
        %v980 = vld [vmem:[%s364 + $0x448] sm:$0xff]
        %v981 = vld [vmem:[%s364 + $0x450] sm:$0xff]
        %v982 = vld [vmem:[%s364 + $0x458] sm:$0xff]
        %v983 = vld [vmem:[%s364 + $0x460] sm:$0xff]
        %v984 = vld [vmem:[%s364 + $0x468] sm:$0xff]
        %v985 = vld [vmem:[%s364 + $0x470] sm:$0xff]
        %v986 = vld [vmem:[%s364 + $0x478] sm:$0xff]
        %v987 = vld [vmem:[%s364 + $0x480] sm:$0xff]
        %v988 = vld [vmem:[%s364 + $0x488] sm:$0xff]
        %v989 = vld [vmem:[%s364 + $0x490] sm:$0xff]
        %v990 = vld [vmem:[%s364 + $0x498] sm:$0xff]
        %v991 = vld [vmem:[%s364 + $0x4a0] sm:$0xff]
        %v992 = vld [vmem:[%s364 + $0x4a8] sm:$0xff]
        %v993 = vld [vmem:[%s364 + $0x4b0] sm:$0xff]
        %v994 = vld [vmem:[%s364 + $0x4b8] sm:$0xff]
        %v995 = vld [vmem:[%s364 + $0x4c0] sm:$0xff]
        %v996 = vld [vmem:[%s364 + $0x4c8] sm:$0xff]
        %v997 = vld [vmem:[%s364 + $0x4d0] sm:$0xff]
        %v998 = vld [vmem:[%s364 + $0x4d8] sm:$0xff]
        %v999 = vld [vmem:[%s364 + $0x4e0] sm:$0xff]
        %v1000 = vld [vmem:[%s364 + $0x4e8] sm:$0xff]
        %v1001 = vld [vmem:[%s364 + $0x4f0] sm:$0xff]
        %v1002 = vld [vmem:[%s364 + $0x4f8] sm:$0xff]
        %v1003 = vld [vmem:[%s364 + $0x500] sm:$0xff]
        %v1004 = vld [vmem:[%s364 + $0x508] sm:$0xff]
        %v1005 = vld [vmem:[%s364 + $0x510] sm:$0xff]
        %v1006 = vld [vmem:[%s364 + $0x518] sm:$0xff]
        %v1007 = vld [vmem:[%s364 + $0x520] sm:$0xff]
        %v1008 = vld [vmem:[%s364 + $0x528] sm:$0xff]
        %v1009 = vld [vmem:[%s364 + $0x530] sm:$0xff]
        %v1010 = vld [vmem:[%s364 + $0x538] sm:$0xff]
        %v1011 = vld [vmem:[%s364 + $0x540] sm:$0xff]
        %v1012 = vld [vmem:[%s364 + $0x548] sm:$0xff]
        %v1013 = vld [vmem:[%s364 + $0x550] sm:$0xff]
        %v1014 = vld [vmem:[%s364 + $0x558] sm:$0xff]
        %v1015 = vld [vmem:[%s364 + $0x560] sm:$0xff]
        %v1016 = vld [vmem:[%s364 + $0x568] sm:$0xff]
        %v1017 = vld [vmem:[%s364 + $0x570] sm:$0xff]
        %v1018 = vld [vmem:[%s364 + $0x578] sm:$0xff]
        %v1019 = vld [vmem:[%s364 + $0x580] sm:$0xff]
        %v1020 = vld [vmem:[%s364 + $0x588] sm:$0xff]
        %v1021 = vld [vmem:[%s364 + $0x590] sm:$0xff]
        %v1022 = vld [vmem:[%s364 + $0x598] sm:$0xff]
        %v1023 = vld [vmem:[%s364 + $0x5a0] sm:$0xff]
        %v1024 = vld [vmem:[%s364 + $0x5a8] sm:$0xff]
        %v1025 = vld [vmem:[%s364 + $0x5b0] sm:$0xff]
        %v1026 = vld [vmem:[%s364 + $0x5b8] sm:$0xff]
        %v1027 = vld [vmem:[%s364 + $0x5c0] sm:$0xff]
        %v1028 = vld [vmem:[%s364 + $0x5c8] sm:$0xff]
        %v1029 = vld [vmem:[%s364 + $0x5d0] sm:$0xff]
        %v1030 = vld [vmem:[%s364 + $0x5d8] sm:$0xff]
        %v1031 = vld [vmem:[%s364 + $0x5e0] sm:$0xff]
        %v1032 = vld [vmem:[%s364 + $0x5e8] sm:$0xff]
        %v1033 = vld [vmem:[%s364 + $0x5f0] sm:$0xff]
        %v1034 = vld [vmem:[%s364 + $0x5f8] sm:$0xff]
        %1035 = vmatprep.subr.mxu0 %v940
        %1036 = vmatpush1.msra.mxu0 %v939
        %1037 = vmatprep.subr.mxu0 %v944
        %1038 = vmatpush1.msra.mxu0 %v943
        %1039 = vmatprep.subr.mxu0 %v948
        %1040 = vmatpush1.msra.mxu0 %v947
        %1041 = vmatprep.subr.mxu0 %v952
        %1042 = vmatpush1.msra.mxu0 %v951
        %1043 = vmatprep.subr.mxu0 %v956
        %1044 = vmatpush1.msra.mxu0 %v955
        %1045 = vmatprep.subr.mxu0 %v960
        %1046 = vmatpush1.msra.mxu0 %v959
        %1047 = vmatprep.subr.mxu0 %v964
        %1048 = vmatpush1.msra.mxu0 %v963
        %1049 = vmatprep.subr.mxu0 %v968
        %1050 = vmatpush1.msra.mxu0 %v967
        %1051 = vmatprep.subr.mxu0 %v972
        %1052 = vmatpush1.msra.mxu0 %v971
        %1053 = vmatprep.subr.mxu0 %v976
        %1054 = vmatpush1.msra.mxu0 %v975
        %1055 = vmatprep.subr.mxu0 %v980
        %1056 = vmatpush1.msra.mxu0 %v979
        %1057 = vmatprep.subr.mxu0 %v984
        %1058 = vmatpush1.msra.mxu0 %v983
        %1059 = vmatprep.subr.mxu0 %v988
        %1060 = vmatpush1.msra.mxu0 %v987
        %1061 = vmatprep.subr.mxu0 %v992
        %1062 = vmatpush1.msra.mxu0 %v991
        %1063 = vmatprep.subr.mxu0 %v996
        %1064 = vmatpush1.msra.mxu0 %v995
        %1065 = vmatprep.subr.mxu0 %v1000
        %1066 = vmatpush1.msra.mxu0 %v999
        %1067 = vmatprep.subr.mxu0 %v1004
        %1068 = vmatpush1.msra.mxu0 %v1003
        %1069 = vmatprep.subr.mxu0 %v1008
        %1070 = vmatpush1.msra.mxu0 %v1007
        %1071 = vmatprep.subr.mxu0 %v1012
        %1072 = vmatpush1.msra.mxu0 %v1011
        %1073 = vmatprep.subr.mxu0 %v1016
        %1074 = vmatpush1.msra.mxu0 %v1015
        %1075 = vmatprep.subr.mxu0 %v1020
        %1076 = vmatpush1.msra.mxu0 %v1019
        %1077 = vmatprep.subr.mxu0 %v1024
        %1078 = vmatpush1.msra.mxu0 %v1023
        %1079 = vmatprep.subr.mxu0 %v1028
        %1080 = vmatpush1.msra.mxu0 %v1027
        %1081 = vmatprep.subr.mxu0 %v1032
        %1082 = vmatpush1.msra.mxu0 %v1031
        %1083 = vmatprep.subr.mxu0 0.0
        %1084 = vmatpush1.msra.mxu0 0.0
        %1085 = vmatprep.subr.mxu0 0.0
        %1086 = vmatpush1.msra.mxu0 0.0
        %1087 = vmatprep.subr.mxu0 0.0
        %1088 = vmatpush1.msra.mxu0 0.0
        %1089 = vmatprep.subr.mxu0 0.0
        %1090 = vmatpush1.msra.mxu0 0.0
        %1091 = vmatprep.subr.mxu0 0.0
        %1092 = vmatpush1.msra.mxu0 0.0
        %1093 = vmatprep.subr.mxu0 0.0
        %1094 = vmatpush1.msra.mxu0 0.0
        %1095 = vmatprep.subr.mxu0 0.0
        %1096 = vmatpush1.msra.mxu0 0.0
        %1097 = vmatprep.subr.mxu0 0.0
        %1098 = vmatpush1.msra.mxu0 0.0
        %1099 = vmatprep.mubr.f32.mxu0 %v476
        %1100 = vmatmul.mubr.f32.gmra.mrb[0].mxu0 %v370
        %v1101 = vpop.f32.mrb[0].mxu0
        %v1102 = vadd.f32 0.0, %v1101
        %v1103 = vpop.f32.mrb[0].mxu0
        %v1104 = vadd.f32 0.0, %v1103
        %1105 = vmatprep.mubr.f32.mxu0 %v479
        %1106 = vmatmul.mubr.f32.gmra.mrb[0].mxu0 %v372
        %v1107 = vpop.f32.mrb[0].mxu0
        %v1108 = vadd.f32 0.0, %v1107
        %v1109 = vpop.f32.mrb[0].mxu0
        %v1110 = vadd.f32 0.0, %v1109
        %1111 = vmatprep.mubr.f32.mxu0 %v482
        %1112 = vmatmul.mubr.f32.gmra.mrb[0].mxu0 %v374
        %v1113 = vpop.f32.mrb[0].mxu0
        %v1114 = vadd.f32 0.0, %v1113
        %v1115 = vpop.f32.mrb[0].mxu0
        %v1116 = vadd.f32 0.0, %v1115
        %1117 = vmatprep.mubr.f32.mxu0 %v485
        %1118 = vmatmul.mubr.f32.gmra.mrb[0].mxu0 %v376
        %v1119 = vpop.f32.mrb[0].mxu0
        %v1120 = vadd.f32 0.0, %v1119
        %v1121 = vpop.f32.mrb[0].mxu0
        %v1122 = vadd.f32 0.0, %v1121
        %1123 = vdwg.mxu0
        %1124 = vmatprep.subr.mxu0 %v942
        %1125 = vmatpush1.msra.mxu0 %v941
        %1126 = vmatprep.subr.mxu0 %v946
        %1127 = vmatpush1.msra.mxu0 %v945
        %1128 = vmatprep.subr.mxu0 %v950
        %1129 = vmatpush1.msra.mxu0 %v949
        %1130 = vmatprep.subr.mxu0 %v954
        %1131 = vmatpush1.msra.mxu0 %v953
        %1132 = vmatprep.subr.mxu0 %v958
        %1133 = vmatpush1.msra.mxu0 %v957
        %1134 = vmatprep.subr.mxu0 %v962
        %1135 = vmatpush1.msra.mxu0 %v961
        %1136 = vmatprep.subr.mxu0 %v966
        %1137 = vmatpush1.msra.mxu0 %v965
        %1138 = vmatprep.subr.mxu0 %v970
        %1139 = vmatpush1.msra.mxu0 %v969
        %1140 = vmatprep.subr.mxu0 %v974
        %1141 = vmatpush1.msra.mxu0 %v973
        %1142 = vmatprep.subr.mxu0 %v978
        %1143 = vmatpush1.msra.mxu0 %v977
        %1144 = vmatprep.subr.mxu0 %v982
        %1145 = vmatpush1.msra.mxu0 %v981
        %1146 = vmatprep.subr.mxu0 %v986
        %1147 = vmatpush1.msra.mxu0 %v985
        %1148 = vmatprep.subr.mxu0 %v990
        %1149 = vmatpush1.msra.mxu0 %v989
        %1150 = vmatprep.subr.mxu0 %v994
        %1151 = vmatpush1.msra.mxu0 %v993
        %1152 = vmatprep.subr.mxu0 %v998
        %1153 = vmatpush1.msra.mxu0 %v997
        %1154 = vmatprep.subr.mxu0 %v1002
        %1155 = vmatpush1.msra.mxu0 %v1001
        %1156 = vmatprep.subr.mxu0 %v1006
        %1157 = vmatpush1.msra.mxu0 %v1005
        %1158 = vmatprep.subr.mxu0 %v1010
        %1159 = vmatpush1.msra.mxu0 %v1009
        %1160 = vmatprep.subr.mxu0 %v1014
        %1161 = vmatpush1.msra.mxu0 %v1013
        %1162 = vmatprep.subr.mxu0 %v1018
        %1163 = vmatpush1.msra.mxu0 %v1017
        %1164 = vmatprep.subr.mxu0 %v1022
        %1165 = vmatpush1.msra.mxu0 %v1021
        %1166 = vmatprep.subr.mxu0 %v1026
        %1167 = vmatpush1.msra.mxu0 %v1025
        %1168 = vmatprep.subr.mxu0 %v1030
        %1169 = vmatpush1.msra.mxu0 %v1029
        %1170 = vmatprep.subr.mxu0 %v1034
        %1171 = vmatpush1.msra.mxu0 %v1033
        %1172 = vmatprep.subr.mxu0 0.0
        %1173 = vmatpush1.msra.mxu0 0.0
        %1174 = vmatprep.subr.mxu0 0.0
        %1175 = vmatpush1.msra.mxu0 0.0
        %1176 = vmatprep.subr.mxu0 0.0
        %1177 = vmatpush1.msra.mxu0 0.0
        %1178 = vmatprep.subr.mxu0 0.0
        %1179 = vmatpush1.msra.mxu0 0.0
        %1180 = vmatprep.subr.mxu0 0.0
        %1181 = vmatpush1.msra.mxu0 0.0
        %1182 = vmatprep.subr.mxu0 0.0
        %1183 = vmatpush1.msra.mxu0 0.0
        %1184 = vmatprep.subr.mxu0 0.0
        %1185 = vmatpush1.msra.mxu0 0.0
        %1186 = vmatprep.subr.mxu0 0.0
        %1187 = vmatpush1.msra.mxu0 0.0
        %1188 = vmatprep.mubr.f32.mxu0 %v476
        %1189 = vmatmul.mubr.f32.gmra.mrb[0].mxu0 %v370
        %v1190 = vpop.f32.mrb[0].mxu0
        %v1191 = vadd.f32 0.0, %v1190
        %v1192 = vpop.f32.mrb[0].mxu0
        %v1193 = vadd.f32 0.0, %v1192
        %1194 = vmatprep.mubr.f32.mxu0 %v479
        %1195 = vmatmul.mubr.f32.gmra.mrb[0].mxu0 %v372
        %v1196 = vpop.f32.mrb[0].mxu0
        %v1197 = vadd.f32 0.0, %v1196
        %v1198 = vpop.f32.mrb[0].mxu0
        %v1199 = vadd.f32 0.0, %v1198
        %1200 = vmatprep.mubr.f32.mxu0 %v482
        %1201 = vmatmul.mubr.f32.gmra.mrb[0].mxu0 %v374
        %v1202 = vpop.f32.mrb[0].mxu0
        %v1203 = vadd.f32 0.0, %v1202
        %v1204 = vpop.f32.mrb[0].mxu0
        %v1205 = vadd.f32 0.0, %v1204
        %1206 = vmatprep.mubr.f32.mxu0 %v485
        %1207 = vmatmul.mubr.f32.gmra.mrb[0].mxu0 %v376
        %v1208 = vpop.f32.mrb[0].mxu0
        %v1209 = vadd.f32 0.0, %v1208
        %v1210 = vpop.f32.mrb[0].mxu0
        %v1211 = vadd.f32 0.0, %v1210
        %1212 = vdwg.mxu0
        %v1213 = vld [vmem:[%s364 + $0x480] sm:$0xff]
        %v1214 = vld [vmem:[%s364 + $0x488] sm:$0xff]
        %v1215 = vld [vmem:[%s364 + $0x490] sm:$0xff]
        %v1216 = vld [vmem:[%s364 + $0x498] sm:$0xff]
        %v1217 = vld [vmem:[%s364 + $0x4a0] sm:$0xff]
        %v1218 = vld [vmem:[%s364 + $0x4a8] sm:$0xff]
        %v1219 = vld [vmem:[%s364 + $0x4b0] sm:$0xff]
        %v1220 = vld [vmem:[%s364 + $0x4b8] sm:$0xff]
        %v1221 = vld [vmem:[%s364 + $0x4c0] sm:$0xff]
        %v1222 = vld [vmem:[%s364 + $0x4c8] sm:$0xff]
        %v1223 = vld [vmem:[%s364 + $0x4d0] sm:$0xff]
        %v1224 = vld [vmem:[%s364 + $0x4d8] sm:$0xff]
        %v1225 = vld [vmem:[%s364 + $0x4e0] sm:$0xff]
        %v1226 = vld [vmem:[%s364 + $0x4e8] sm:$0xff]
        %v1227 = vld [vmem:[%s364 + $0x4f0] sm:$0xff]
        %v1228 = vld [vmem:[%s364 + $0x4f8] sm:$0xff]
        %v1229 = vld [vmem:[%s364 + $0x500] sm:$0xff]
        %v1230 = vld [vmem:[%s364 + $0x508] sm:$0xff]
        %v1231 = vld [vmem:[%s364 + $0x510] sm:$0xff]
        %v1232 = vld [vmem:[%s364 + $0x518] sm:$0xff]
        %v1233 = vld [vmem:[%s364 + $0x520] sm:$0xff]
        %v1234 = vld [vmem:[%s364 + $0x528] sm:$0xff]
        %v1235 = vld [vmem:[%s364 + $0x530] sm:$0xff]
        %v1236 = vld [vmem:[%s364 + $0x538] sm:$0xff]
        %v1237 = vld [vmem:[%s364 + $0x540] sm:$0xff]
        %v1238 = vld [vmem:[%s364 + $0x548] sm:$0xff]
        %v1239 = vld [vmem:[%s364 + $0x550] sm:$0xff]
        %v1240 = vld [vmem:[%s364 + $0x558] sm:$0xff]
        %v1241 = vld [vmem:[%s364 + $0x560] sm:$0xff]
        %v1242 = vld [vmem:[%s364 + $0x568] sm:$0xff]
        %v1243 = vld [vmem:[%s364 + $0x570] sm:$0xff]
        %v1244 = vld [vmem:[%s364 + $0x578] sm:$0xff]
        %v1245 = vld [vmem:[%s364 + $0x580] sm:$0xff]
        %v1246 = vld [vmem:[%s364 + $0x588] sm:$0xff]
        %v1247 = vld [vmem:[%s364 + $0x590] sm:$0xff]
        %v1248 = vld [vmem:[%s364 + $0x598] sm:$0xff]
        %v1249 = vld [vmem:[%s364 + $0x5a0] sm:$0xff]
        %v1250 = vld [vmem:[%s364 + $0x5a8] sm:$0xff]
        %v1251 = vld [vmem:[%s364 + $0x5b0] sm:$0xff]
        %v1252 = vld [vmem:[%s364 + $0x5b8] sm:$0xff]
        %v1253 = vld [vmem:[%s364 + $0x5c0] sm:$0xff]
        %v1254 = vld [vmem:[%s364 + $0x5c8] sm:$0xff]
        %v1255 = vld [vmem:[%s364 + $0x5d0] sm:$0xff]
        %v1256 = vld [vmem:[%s364 + $0x5d8] sm:$0xff]
        %v1257 = vld [vmem:[%s364 + $0x5e0] sm:$0xff]
        %v1258 = vld [vmem:[%s364 + $0x5e8] sm:$0xff]
        %v1259 = vld [vmem:[%s364 + $0x5f0] sm:$0xff]
        %v1260 = vld [vmem:[%s364 + $0x5f8] sm:$0xff]
        %v1261 = vld [vmem:[%s364 + $0x600] sm:$0xff]
        %v1262 = vld [vmem:[%s364 + $0x608] sm:$0xff]
        %v1263 = vld [vmem:[%s364 + $0x610] sm:$0xff]
        %v1264 = vld [vmem:[%s364 + $0x618] sm:$0xff]
        %v1265 = vld [vmem:[%s364 + $0x620] sm:$0xff]
        %v1266 = vld [vmem:[%s364 + $0x628] sm:$0xff]
        %v1267 = vld [vmem:[%s364 + $0x630] sm:$0xff]
        %v1268 = vld [vmem:[%s364 + $0x638] sm:$0xff]
        %v1269 = vld [vmem:[%s364 + $0x640] sm:$0xff]
        %v1270 = vld [vmem:[%s364 + $0x648] sm:$0xff]
        %v1271 = vld [vmem:[%s364 + $0x650] sm:$0xff]
        %v1272 = vld [vmem:[%s364 + $0x658] sm:$0xff]
        %v1273 = vld [vmem:[%s364 + $0x660] sm:$0xff]
        %v1274 = vld [vmem:[%s364 + $0x668] sm:$0xff]
        %v1275 = vld [vmem:[%s364 + $0x670] sm:$0xff]
        %v1276 = vld [vmem:[%s364 + $0x678] sm:$0xff]
        %v1277 = vld [vmem:[%s364 + $0x680] sm:$0xff]
        %v1278 = vld [vmem:[%s364 + $0x688] sm:$0xff]
        %v1279 = vld [vmem:[%s364 + $0x690] sm:$0xff]
        %v1280 = vld [vmem:[%s364 + $0x698] sm:$0xff]
        %v1281 = vld [vmem:[%s364 + $0x6a0] sm:$0xff]
        %v1282 = vld [vmem:[%s364 + $0x6a8] sm:$0xff]
        %v1283 = vld [vmem:[%s364 + $0x6b0] sm:$0xff]
        %v1284 = vld [vmem:[%s364 + $0x6b8] sm:$0xff]
        %v1285 = vld [vmem:[%s364 + $0x6c0] sm:$0xff]
        %v1286 = vld [vmem:[%s364 + $0x6c8] sm:$0xff]
        %v1287 = vld [vmem:[%s364 + $0x6d0] sm:$0xff]
        %v1288 = vld [vmem:[%s364 + $0x6d8] sm:$0xff]
        %v1289 = vld [vmem:[%s364 + $0x6e0] sm:$0xff]
        %v1290 = vld [vmem:[%s364 + $0x6e8] sm:$0xff]
        %v1291 = vld [vmem:[%s364 + $0x6f0] sm:$0xff]
        %v1292 = vld [vmem:[%s364 + $0x6f8] sm:$0xff]
        %v1293 = vld [vmem:[%s364 + $0x700] sm:$0xff]
        %v1294 = vld [vmem:[%s364 + $0x708] sm:$0xff]
        %v1295 = vld [vmem:[%s364 + $0x710] sm:$0xff]
        %v1296 = vld [vmem:[%s364 + $0x718] sm:$0xff]
        %v1297 = vld [vmem:[%s364 + $0x720] sm:$0xff]
        %v1298 = vld [vmem:[%s364 + $0x728] sm:$0xff]
        %v1299 = vld [vmem:[%s364 + $0x730] sm:$0xff]
        %v1300 = vld [vmem:[%s364 + $0x738] sm:$0xff]
        %v1301 = vld [vmem:[%s364 + $0x740] sm:$0xff]
        %v1302 = vld [vmem:[%s364 + $0x748] sm:$0xff]
        %v1303 = vld [vmem:[%s364 + $0x750] sm:$0xff]
        %v1304 = vld [vmem:[%s364 + $0x758] sm:$0xff]
        %v1305 = vld [vmem:[%s364 + $0x760] sm:$0xff]
        %v1306 = vld [vmem:[%s364 + $0x768] sm:$0xff]
        %v1307 = vld [vmem:[%s364 + $0x770] sm:$0xff]
        %v1308 = vld [vmem:[%s364 + $0x778] sm:$0xff]
        %1309 = vmatprep.subr.mxu0 %v1214
        %1310 = vmatpush1.msra.mxu0 %v1213
        %1311 = vmatprep.subr.mxu0 %v1218
        %1312 = vmatpush1.msra.mxu0 %v1217
        %1313 = vmatprep.subr.mxu0 %v1222
        %1314 = vmatpush1.msra.mxu0 %v1221
        %1315 = vmatprep.subr.mxu0 %v1226
        %1316 = vmatpush1.msra.mxu0 %v1225
        %1317 = vmatprep.subr.mxu0 %v1230
        %1318 = vmatpush1.msra.mxu0 %v1229
        %1319 = vmatprep.subr.mxu0 %v1234
        %1320 = vmatpush1.msra.mxu0 %v1233
        %1321 = vmatprep.subr.mxu0 %v1238
        %1322 = vmatpush1.msra.mxu0 %v1237
        %1323 = vmatprep.subr.mxu0 %v1242
        %1324 = vmatpush1.msra.mxu0 %v1241
        %1325 = vmatprep.subr.mxu0 %v1246
        %1326 = vmatpush1.msra.mxu0 %v1245
        %1327 = vmatprep.subr.mxu0 %v1250
        %1328 = vmatpush1.msra.mxu0 %v1249
        %1329 = vmatprep.subr.mxu0 %v1254
        %1330 = vmatpush1.msra.mxu0 %v1253
        %1331 = vmatprep.subr.mxu0 %v1258
        %1332 = vmatpush1.msra.mxu0 %v1257
        %1333 = vmatprep.subr.mxu0 %v1262
        %1334 = vmatpush1.msra.mxu0 %v1261
        %1335 = vmatprep.subr.mxu0 %v1266
        %1336 = vmatpush1.msra.mxu0 %v1265
        %1337 = vmatprep.subr.mxu0 %v1270
        %1338 = vmatpush1.msra.mxu0 %v1269
        %1339 = vmatprep.subr.mxu0 %v1274
        %1340 = vmatpush1.msra.mxu0 %v1273
        %1341 = vmatprep.subr.mxu0 %v1278
        %1342 = vmatpush1.msra.mxu0 %v1277
        %1343 = vmatprep.subr.mxu0 %v1282
        %1344 = vmatpush1.msra.mxu0 %v1281
        %1345 = vmatprep.subr.mxu0 %v1286
        %1346 = vmatpush1.msra.mxu0 %v1285
        %1347 = vmatprep.subr.mxu0 %v1290
        %1348 = vmatpush1.msra.mxu0 %v1289
        %1349 = vmatprep.subr.mxu0 %v1294
        %1350 = vmatpush1.msra.mxu0 %v1293
        %1351 = vmatprep.subr.mxu0 %v1298
        %1352 = vmatpush1.msra.mxu0 %v1297
        %1353 = vmatprep.subr.mxu0 %v1302
        %1354 = vmatpush1.msra.mxu0 %v1301
        %1355 = vmatprep.subr.mxu0 %v1306
        %1356 = vmatpush1.msra.mxu0 %v1305
        %1357 = vmatprep.subr.mxu0 0.0
        %1358 = vmatpush1.msra.mxu0 0.0
        %1359 = vmatprep.subr.mxu0 0.0
        %1360 = vmatpush1.msra.mxu0 0.0
        %1361 = vmatprep.subr.mxu0 0.0
        %1362 = vmatpush1.msra.mxu0 0.0
        %1363 = vmatprep.subr.mxu0 0.0
        %1364 = vmatpush1.msra.mxu0 0.0
        %1365 = vmatprep.subr.mxu0 0.0
        %1366 = vmatpush1.msra.mxu0 0.0
        %1367 = vmatprep.subr.mxu0 0.0
        %1368 = vmatpush1.msra.mxu0 0.0
        %1369 = vmatprep.subr.mxu0 0.0
        %1370 = vmatpush1.msra.mxu0 0.0
        %1371 = vmatprep.subr.mxu0 0.0
        %1372 = vmatpush1.msra.mxu0 0.0
        %1373 = vmatprep.mubr.f32.mxu0 %v476
        %1374 = vmatmul.mubr.f32.gmra.mrb[0].mxu0 %v370
        %v1375 = vpop.f32.mrb[0].mxu0
        %v1376 = vadd.f32 0.0, %v1375
        %v1377 = vpop.f32.mrb[0].mxu0
        %v1378 = vadd.f32 0.0, %v1377
        %1379 = vmatprep.mubr.f32.mxu0 %v479
        %1380 = vmatmul.mubr.f32.gmra.mrb[0].mxu0 %v372
        %v1381 = vpop.f32.mrb[0].mxu0
        %v1382 = vadd.f32 0.0, %v1381
        %v1383 = vpop.f32.mrb[0].mxu0
        %v1384 = vadd.f32 0.0, %v1383
        %1385 = vmatprep.mubr.f32.mxu0 %v482
        %1386 = vmatmul.mubr.f32.gmra.mrb[0].mxu0 %v374
        %v1387 = vpop.f32.mrb[0].mxu0
        %v1388 = vadd.f32 0.0, %v1387
        %v1389 = vpop.f32.mrb[0].mxu0
        %v1390 = vadd.f32 0.0, %v1389
        %1391 = vmatprep.mubr.f32.mxu0 %v485
        %1392 = vmatmul.mubr.f32.gmra.mrb[0].mxu0 %v376
        %v1393 = vpop.f32.mrb[0].mxu0
        %v1394 = vadd.f32 0.0, %v1393
        %v1395 = vpop.f32.mrb[0].mxu0
        %v1396 = vadd.f32 0.0, %v1395
        %1397 = vdwg.mxu0
        %1398 = vmatprep.subr.mxu0 %v1216
        %1399 = vmatpush1.msra.mxu0 %v1215
        %1400 = vmatprep.subr.mxu0 %v1220
        %1401 = vmatpush1.msra.mxu0 %v1219
        %1402 = vmatprep.subr.mxu0 %v1224
        %1403 = vmatpush1.msra.mxu0 %v1223
        %1404 = vmatprep.subr.mxu0 %v1228
        %1405 = vmatpush1.msra.mxu0 %v1227
        %1406 = vmatprep.subr.mxu0 %v1232
        %1407 = vmatpush1.msra.mxu0 %v1231
        %1408 = vmatprep.subr.mxu0 %v1236
        %1409 = vmatpush1.msra.mxu0 %v1235
        %1410 = vmatprep.subr.mxu0 %v1240
        %1411 = vmatpush1.msra.mxu0 %v1239
        %1412 = vmatprep.subr.mxu0 %v1244
        %1413 = vmatpush1.msra.mxu0 %v1243
        %1414 = vmatprep.subr.mxu0 %v1248
        %1415 = vmatpush1.msra.mxu0 %v1247
        %1416 = vmatprep.subr.mxu0 %v1252
        %1417 = vmatpush1.msra.mxu0 %v1251
        %1418 = vmatprep.subr.mxu0 %v1256
        %1419 = vmatpush1.msra.mxu0 %v1255
        %1420 = vmatprep.subr.mxu0 %v1260
        %1421 = vmatpush1.msra.mxu0 %v1259
        %1422 = vmatprep.subr.mxu0 %v1264
        %1423 = vmatpush1.msra.mxu0 %v1263
        %1424 = vmatprep.subr.mxu0 %v1268
        %1425 = vmatpush1.msra.mxu0 %v1267
        %1426 = vmatprep.subr.mxu0 %v1272
        %1427 = vmatpush1.msra.mxu0 %v1271
        %1428 = vmatprep.subr.mxu0 %v1276
        %1429 = vmatpush1.msra.mxu0 %v1275
        %1430 = vmatprep.subr.mxu0 %v1280
        %1431 = vmatpush1.msra.mxu0 %v1279
        %1432 = vmatprep.subr.mxu0 %v1284
        %1433 = vmatpush1.msra.mxu0 %v1283
        %1434 = vmatprep.subr.mxu0 %v1288
        %1435 = vmatpush1.msra.mxu0 %v1287
        %1436 = vmatprep.subr.mxu0 %v1292
        %1437 = vmatpush1.msra.mxu0 %v1291
        %1438 = vmatprep.subr.mxu0 %v1296
        %1439 = vmatpush1.msra.mxu0 %v1295
        %1440 = vmatprep.subr.mxu0 %v1300
        %1441 = vmatpush1.msra.mxu0 %v1299
        %1442 = vmatprep.subr.mxu0 %v1304
        %1443 = vmatpush1.msra.mxu0 %v1303
        %1444 = vmatprep.subr.mxu0 %v1308
        %1445 = vmatpush1.msra.mxu0 %v1307
        %1446 = vmatprep.subr.mxu0 0.0
        %1447 = vmatpush1.msra.mxu0 0.0
        %1448 = vmatprep.subr.mxu0 0.0
        %1449 = vmatpush1.msra.mxu0 0.0
        %1450 = vmatprep.subr.mxu0 0.0
        %1451 = vmatpush1.msra.mxu0 0.0
        %1452 = vmatprep.subr.mxu0 0.0
        %1453 = vmatpush1.msra.mxu0 0.0
        %1454 = vmatprep.subr.mxu0 0.0
        %1455 = vmatpush1.msra.mxu0 0.0
        %1456 = vmatprep.subr.mxu0 0.0
        %1457 = vmatpush1.msra.mxu0 0.0
        %1458 = vmatprep.subr.mxu0 0.0
        %1459 = vmatpush1.msra.mxu0 0.0
        %1460 = vmatprep.subr.mxu0 0.0
        %1461 = vmatpush1.msra.mxu0 0.0
        %1462 = vmatprep.mubr.f32.mxu0 %v476
        %1463 = vmatmul.mubr.f32.gmra.mrb[0].mxu0 %v370
        %v1464 = vpop.f32.mrb[0].mxu0
        %v1465 = vadd.f32 0.0, %v1464
        %v1466 = vpop.f32.mrb[0].mxu0
        %v1467 = vadd.f32 0.0, %v1466
        %1468 = vmatprep.mubr.f32.mxu0 %v479
        %1469 = vmatmul.mubr.f32.gmra.mrb[0].mxu0 %v372
        %v1470 = vpop.f32.mrb[0].mxu0
        %v1471 = vadd.f32 0.0, %v1470
        %v1472 = vpop.f32.mrb[0].mxu0
        %v1473 = vadd.f32 0.0, %v1472
        %1474 = vmatprep.mubr.f32.mxu0 %v482
        %1475 = vmatmul.mubr.f32.gmra.mrb[0].mxu0 %v374
        %v1476 = vpop.f32.mrb[0].mxu0
        %v1477 = vadd.f32 0.0, %v1476
        %v1478 = vpop.f32.mrb[0].mxu0
        %v1479 = vadd.f32 0.0, %v1478
        %1480 = vmatprep.mubr.f32.mxu0 %v485
        %1481 = vmatmul.mubr.f32.gmra.mrb[0].mxu0 %v376
        %v1482 = vpop.f32.mrb[0].mxu0
        %v1483 = vadd.f32 0.0, %v1482
        %v1484 = vpop.f32.mrb[0].mxu0
        %v1485 = vadd.f32 0.0, %v1484
        %1486 = vdwg.mxu0
        %v1487 = vld [vmem:[%s364 + $0x600] sm:$0xff]
        %v1488 = vld [vmem:[%s364 + $0x608] sm:$0xff]
        %v1489 = vld [vmem:[%s364 + $0x610] sm:$0xff]
        %v1490 = vld [vmem:[%s364 + $0x618] sm:$0xff]
        %v1491 = vld [vmem:[%s364 + $0x620] sm:$0xff]
        %v1492 = vld [vmem:[%s364 + $0x628] sm:$0xff]
        %v1493 = vld [vmem:[%s364 + $0x630] sm:$0xff]
        %v1494 = vld [vmem:[%s364 + $0x638] sm:$0xff]
        %v1495 = vld [vmem:[%s364 + $0x640] sm:$0xff]
        %v1496 = vld [vmem:[%s364 + $0x648] sm:$0xff]
        %v1497 = vld [vmem:[%s364 + $0x650] sm:$0xff]
        %v1498 = vld [vmem:[%s364 + $0x658] sm:$0xff]
        %v1499 = vld [vmem:[%s364 + $0x660] sm:$0xff]
        %v1500 = vld [vmem:[%s364 + $0x668] sm:$0xff]
        %v1501 = vld [vmem:[%s364 + $0x670] sm:$0xff]
        %v1502 = vld [vmem:[%s364 + $0x678] sm:$0xff]
        %v1503 = vld [vmem:[%s364 + $0x680] sm:$0xff]
        %v1504 = vld [vmem:[%s364 + $0x688] sm:$0xff]
        %v1505 = vld [vmem:[%s364 + $0x690] sm:$0xff]
        %v1506 = vld [vmem:[%s364 + $0x698] sm:$0xff]
        %v1507 = vld [vmem:[%s364 + $0x6a0] sm:$0xff]
        %v1508 = vld [vmem:[%s364 + $0x6a8] sm:$0xff]
        %v1509 = vld [vmem:[%s364 + $0x6b0] sm:$0xff]
        %v1510 = vld [vmem:[%s364 + $0x6b8] sm:$0xff]
        %v1511 = vld [vmem:[%s364 + $0x6c0] sm:$0xff]
        %v1512 = vld [vmem:[%s364 + $0x6c8] sm:$0xff]
        %v1513 = vld [vmem:[%s364 + $0x6d0] sm:$0xff]
        %v1514 = vld [vmem:[%s364 + $0x6d8] sm:$0xff]
        %v1515 = vld [vmem:[%s364 + $0x6e0] sm:$0xff]
        %v1516 = vld [vmem:[%s364 + $0x6e8] sm:$0xff]
        %v1517 = vld [vmem:[%s364 + $0x6f0] sm:$0xff]
        %v1518 = vld [vmem:[%s364 + $0x6f8] sm:$0xff]
        %v1519 = vld [vmem:[%s364 + $0x700] sm:$0xff]
        %v1520 = vld [vmem:[%s364 + $0x708] sm:$0xff]
        %v1521 = vld [vmem:[%s364 + $0x710] sm:$0xff]
        %v1522 = vld [vmem:[%s364 + $0x718] sm:$0xff]
        %v1523 = vld [vmem:[%s364 + $0x720] sm:$0xff]
        %v1524 = vld [vmem:[%s364 + $0x728] sm:$0xff]
        %v1525 = vld [vmem:[%s364 + $0x730] sm:$0xff]
        %v1526 = vld [vmem:[%s364 + $0x738] sm:$0xff]
        %v1527 = vld [vmem:[%s364 + $0x740] sm:$0xff]
        %v1528 = vld [vmem:[%s364 + $0x748] sm:$0xff]
        %v1529 = vld [vmem:[%s364 + $0x750] sm:$0xff]
        %v1530 = vld [vmem:[%s364 + $0x758] sm:$0xff]
        %v1531 = vld [vmem:[%s364 + $0x760] sm:$0xff]
        %v1532 = vld [vmem:[%s364 + $0x768] sm:$0xff]
        %v1533 = vld [vmem:[%s364 + $0x770] sm:$0xff]
        %v1534 = vld [vmem:[%s364 + $0x778] sm:$0xff]
        %v1535 = vld [vmem:[%s364 + $0x780] sm:$0xff]
        %v1536 = vld [vmem:[%s364 + $0x788] sm:$0xff]
        %v1537 = vld [vmem:[%s364 + $0x790] sm:$0xff]
        %v1538 = vld [vmem:[%s364 + $0x798] sm:$0xff]
        %v1539 = vld [vmem:[%s364 + $0x7a0] sm:$0xff]
        %v1540 = vld [vmem:[%s364 + $0x7a8] sm:$0xff]
        %v1541 = vld [vmem:[%s364 + $0x7b0] sm:$0xff]
        %v1542 = vld [vmem:[%s364 + $0x7b8] sm:$0xff]
        %v1543 = vld [vmem:[%s364 + $0x7c0] sm:$0xff]
        %v1544 = vld [vmem:[%s364 + $0x7c8] sm:$0xff]
        %v1545 = vld [vmem:[%s364 + $0x7d0] sm:$0xff]
        %v1546 = vld [vmem:[%s364 + $0x7d8] sm:$0xff]
        %v1547 = vld [vmem:[%s364 + $0x7e0] sm:$0xff]
        %v1548 = vld [vmem:[%s364 + $0x7e8] sm:$0xff]
        %v1549 = vld [vmem:[%s364 + $0x7f0] sm:$0xff]
        %v1550 = vld [vmem:[%s364 + $0x7f8] sm:$0xff]
        %v1551 = vld [vmem:[%s364 + $0x800] sm:$0xff]
        %v1552 = vld [vmem:[%s364 + $0x808] sm:$0xff]
        %v1553 = vld [vmem:[%s364 + $0x810] sm:$0xff]
        %v1554 = vld [vmem:[%s364 + $0x818] sm:$0xff]
        %v1555 = vld [vmem:[%s364 + $0x820] sm:$0xff]
        %v1556 = vld [vmem:[%s364 + $0x828] sm:$0xff]
        %v1557 = vld [vmem:[%s364 + $0x830] sm:$0xff]
        %v1558 = vld [vmem:[%s364 + $0x838] sm:$0xff]
        %v1559 = vld [vmem:[%s364 + $0x840] sm:$0xff]
        %v1560 = vld [vmem:[%s364 + $0x848] sm:$0xff]
        %v1561 = vld [vmem:[%s364 + $0x850] sm:$0xff]
        %v1562 = vld [vmem:[%s364 + $0x858] sm:$0xff]
        %v1563 = vld [vmem:[%s364 + $0x860] sm:$0xff]
        %v1564 = vld [vmem:[%s364 + $0x868] sm:$0xff]
        %v1565 = vld [vmem:[%s364 + $0x870] sm:$0xff]
        %v1566 = vld [vmem:[%s364 + $0x878] sm:$0xff]
        %v1567 = vld [vmem:[%s364 + $0x880] sm:$0xff]
        %v1568 = vld [vmem:[%s364 + $0x888] sm:$0xff]
        %v1569 = vld [vmem:[%s364 + $0x890] sm:$0xff]
        %v1570 = vld [vmem:[%s364 + $0x898] sm:$0xff]
        %v1571 = vld [vmem:[%s364 + $0x8a0] sm:$0xff]
        %v1572 = vld [vmem:[%s364 + $0x8a8] sm:$0xff]
        %v1573 = vld [vmem:[%s364 + $0x8b0] sm:$0xff]
        %v1574 = vld [vmem:[%s364 + $0x8b8] sm:$0xff]
        %v1575 = vld [vmem:[%s364 + $0x8c0] sm:$0xff]
        %v1576 = vld [vmem:[%s364 + $0x8c8] sm:$0xff]
        %v1577 = vld [vmem:[%s364 + $0x8d0] sm:$0xff]
        %v1578 = vld [vmem:[%s364 + $0x8d8] sm:$0xff]
        %v1579 = vld [vmem:[%s364 + $0x8e0] sm:$0xff]
        %v1580 = vld [vmem:[%s364 + $0x8e8] sm:$0xff]
        %v1581 = vld [vmem:[%s364 + $0x8f0] sm:$0xff]
        %v1582 = vld [vmem:[%s364 + $0x8f8] sm:$0xff]
        %1583 = vmatprep.subr.mxu0 %v1488
        %1584 = vmatpush1.msra.mxu0 %v1487
        %1585 = vmatprep.subr.mxu0 %v1492
        %1586 = vmatpush1.msra.mxu0 %v1491
        %1587 = vmatprep.subr.mxu0 %v1496
        %1588 = vmatpush1.msra.mxu0 %v1495
        %1589 = vmatprep.subr.mxu0 %v1500
        %1590 = vmatpush1.msra.mxu0 %v1499
        %1591 = vmatprep.subr.mxu0 %v1504
        %1592 = vmatpush1.msra.mxu0 %v1503
        %1593 = vmatprep.subr.mxu0 %v1508
        %1594 = vmatpush1.msra.mxu0 %v1507
        %1595 = vmatprep.subr.mxu0 %v1512
        %1596 = vmatpush1.msra.mxu0 %v1511
        %1597 = vmatprep.subr.mxu0 %v1516
        %1598 = vmatpush1.msra.mxu0 %v1515
        %1599 = vmatprep.subr.mxu0 %v1520
        %1600 = vmatpush1.msra.mxu0 %v1519
        %1601 = vmatprep.subr.mxu0 %v1524
        %1602 = vmatpush1.msra.mxu0 %v1523
        %1603 = vmatprep.subr.mxu0 %v1528
        %1604 = vmatpush1.msra.mxu0 %v1527
        %1605 = vmatprep.subr.mxu0 %v1532
        %1606 = vmatpush1.msra.mxu0 %v1531
        %1607 = vmatprep.subr.mxu0 %v1536
        %1608 = vmatpush1.msra.mxu0 %v1535
        %1609 = vmatprep.subr.mxu0 %v1540
        %1610 = vmatpush1.msra.mxu0 %v1539
        %1611 = vmatprep.subr.mxu0 %v1544
        %1612 = vmatpush1.msra.mxu0 %v1543
        %1613 = vmatprep.subr.mxu0 %v1548
        %1614 = vmatpush1.msra.mxu0 %v1547
        %1615 = vmatprep.subr.mxu0 %v1552
        %1616 = vmatpush1.msra.mxu0 %v1551
        %1617 = vmatprep.subr.mxu0 %v1556
        %1618 = vmatpush1.msra.mxu0 %v1555
        %1619 = vmatprep.subr.mxu0 %v1560
        %1620 = vmatpush1.msra.mxu0 %v1559
        %1621 = vmatprep.subr.mxu0 %v1564
        %1622 = vmatpush1.msra.mxu0 %v1563
        %1623 = vmatprep.subr.mxu0 %v1568
        %1624 = vmatpush1.msra.mxu0 %v1567
        %1625 = vmatprep.subr.mxu0 %v1572
        %1626 = vmatpush1.msra.mxu0 %v1571
        %1627 = vmatprep.subr.mxu0 %v1576
        %1628 = vmatpush1.msra.mxu0 %v1575
        %1629 = vmatprep.subr.mxu0 %v1580
        %1630 = vmatpush1.msra.mxu0 %v1579
        %1631 = vmatprep.subr.mxu0 0.0
        %1632 = vmatpush1.msra.mxu0 0.0
        %1633 = vmatprep.subr.mxu0 0.0
        %1634 = vmatpush1.msra.mxu0 0.0
        %1635 = vmatprep.subr.mxu0 0.0
        %1636 = vmatpush1.msra.mxu0 0.0
        %1637 = vmatprep.subr.mxu0 0.0
        %1638 = vmatpush1.msra.mxu0 0.0
        %1639 = vmatprep.subr.mxu0 0.0
        %1640 = vmatpush1.msra.mxu0 0.0
        %1641 = vmatprep.subr.mxu0 0.0
        %1642 = vmatpush1.msra.mxu0 0.0
        %1643 = vmatprep.subr.mxu0 0.0
        %1644 = vmatpush1.msra.mxu0 0.0
        %1645 = vmatprep.subr.mxu0 0.0
        %1646 = vmatpush1.msra.mxu0 0.0
        %1647 = vmatprep.mubr.f32.mxu0 %v476
        %1648 = vmatmul.mubr.f32.gmra.mrb[0].mxu0 %v370
        %v1649 = vpop.f32.mrb[0].mxu0
        %v1650 = vadd.f32 0.0, %v1649
        %v1651 = vpop.f32.mrb[0].mxu0
        %v1652 = vadd.f32 0.0, %v1651
        %1653 = vmatprep.mubr.f32.mxu0 %v479
        %1654 = vmatmul.mubr.f32.gmra.mrb[0].mxu0 %v372
        %v1655 = vpop.f32.mrb[0].mxu0
        %v1656 = vadd.f32 0.0, %v1655
        %v1657 = vpop.f32.mrb[0].mxu0
        %v1658 = vadd.f32 0.0, %v1657
        %1659 = vmatprep.mubr.f32.mxu0 %v482
        %1660 = vmatmul.mubr.f32.gmra.mrb[0].mxu0 %v374
        %v1661 = vpop.f32.mrb[0].mxu0
        %v1662 = vadd.f32 0.0, %v1661
        %v1663 = vpop.f32.mrb[0].mxu0
        %v1664 = vadd.f32 0.0, %v1663
        %1665 = vmatprep.mubr.f32.mxu0 %v485
        %1666 = vmatmul.mubr.f32.gmra.mrb[0].mxu0 %v376
        %v1667 = vpop.f32.mrb[0].mxu0
        %v1668 = vadd.f32 0.0, %v1667
        %v1669 = vpop.f32.mrb[0].mxu0
        %v1670 = vadd.f32 0.0, %v1669
        %1671 = vdwg.mxu0
        %1672 = vmatprep.subr.mxu0 %v1490
        %1673 = vmatpush1.msra.mxu0 %v1489
        %1674 = vmatprep.subr.mxu0 %v1494
        %1675 = vmatpush1.msra.mxu0 %v1493
        %1676 = vmatprep.subr.mxu0 %v1498
        %1677 = vmatpush1.msra.mxu0 %v1497
        %1678 = vmatprep.subr.mxu0 %v1502
        %1679 = vmatpush1.msra.mxu0 %v1501
        %1680 = vmatprep.subr.mxu0 %v1506
        %1681 = vmatpush1.msra.mxu0 %v1505
        %1682 = vmatprep.subr.mxu0 %v1510
        %1683 = vmatpush1.msra.mxu0 %v1509
        %1684 = vmatprep.subr.mxu0 %v1514
        %1685 = vmatpush1.msra.mxu0 %v1513
        %1686 = vmatprep.subr.mxu0 %v1518
        %1687 = vmatpush1.msra.mxu0 %v1517
        %1688 = vmatprep.subr.mxu0 %v1522
        %1689 = vmatpush1.msra.mxu0 %v1521
        %1690 = vmatprep.subr.mxu0 %v1526
        %1691 = vmatpush1.msra.mxu0 %v1525
        %1692 = vmatprep.subr.mxu0 %v1530
        %1693 = vmatpush1.msra.mxu0 %v1529
        %1694 = vmatprep.subr.mxu0 %v1534
        %1695 = vmatpush1.msra.mxu0 %v1533
        %1696 = vmatprep.subr.mxu0 %v1538
        %1697 = vmatpush1.msra.mxu0 %v1537
        %1698 = vmatprep.subr.mxu0 %v1542
        %1699 = vmatpush1.msra.mxu0 %v1541
        %1700 = vmatprep.subr.mxu0 %v1546
        %1701 = vmatpush1.msra.mxu0 %v1545
        %1702 = vmatprep.subr.mxu0 %v1550
        %1703 = vmatpush1.msra.mxu0 %v1549
        %1704 = vmatprep.subr.mxu0 %v1554
        %1705 = vmatpush1.msra.mxu0 %v1553
        %1706 = vmatprep.subr.mxu0 %v1558
        %1707 = vmatpush1.msra.mxu0 %v1557
        %1708 = vmatprep.subr.mxu0 %v1562
        %1709 = vmatpush1.msra.mxu0 %v1561
        %1710 = vmatprep.subr.mxu0 %v1566
        %1711 = vmatpush1.msra.mxu0 %v1565
        %1712 = vmatprep.subr.mxu0 %v1570
        %1713 = vmatpush1.msra.mxu0 %v1569
        %1714 = vmatprep.subr.mxu0 %v1574
        %1715 = vmatpush1.msra.mxu0 %v1573
        %1716 = vmatprep.subr.mxu0 %v1578
        %1717 = vmatpush1.msra.mxu0 %v1577
        %1718 = vmatprep.subr.mxu0 %v1582
        %1719 = vmatpush1.msra.mxu0 %v1581
        %1720 = vmatprep.subr.mxu0 0.0
        %1721 = vmatpush1.msra.mxu0 0.0
        %1722 = vmatprep.subr.mxu0 0.0
        %1723 = vmatpush1.msra.mxu0 0.0
        %1724 = vmatprep.subr.mxu0 0.0
        %1725 = vmatpush1.msra.mxu0 0.0
        %1726 = vmatprep.subr.mxu0 0.0
        %1727 = vmatpush1.msra.mxu0 0.0
        %1728 = vmatprep.subr.mxu0 0.0
        %1729 = vmatpush1.msra.mxu0 0.0
        %1730 = vmatprep.subr.mxu0 0.0
        %1731 = vmatpush1.msra.mxu0 0.0
        %1732 = vmatprep.subr.mxu0 0.0
        %1733 = vmatpush1.msra.mxu0 0.0
        %1734 = vmatprep.subr.mxu0 0.0
        %1735 = vmatpush1.msra.mxu0 0.0
        %1736 = vmatprep.mubr.f32.mxu0 %v476
        %1737 = vmatmul.mubr.f32.gmra.mrb[0].mxu0 %v370
        %v1738 = vpop.f32.mrb[0].mxu0
        %v1739 = vadd.f32 0.0, %v1738
        %v1740 = vpop.f32.mrb[0].mxu0
        %v1741 = vadd.f32 0.0, %v1740
        %1742 = vmatprep.mubr.f32.mxu0 %v479
        %1743 = vmatmul.mubr.f32.gmra.mrb[0].mxu0 %v372
        %v1744 = vpop.f32.mrb[0].mxu0
        %v1745 = vadd.f32 0.0, %v1744
        %v1746 = vpop.f32.mrb[0].mxu0
        %v1747 = vadd.f32 0.0, %v1746
        %1748 = vmatprep.mubr.f32.mxu0 %v482
        %1749 = vmatmul.mubr.f32.gmra.mrb[0].mxu0 %v374
        %v1750 = vpop.f32.mrb[0].mxu0
        %v1751 = vadd.f32 0.0, %v1750
        %v1752 = vpop.f32.mrb[0].mxu0
        %v1753 = vadd.f32 0.0, %v1752
        %1754 = vmatprep.mubr.f32.mxu0 %v485
        %1755 = vmatmul.mubr.f32.gmra.mrb[0].mxu0 %v376
        %v1756 = vpop.f32.mrb[0].mxu0
        %v1757 = vadd.f32 0.0, %v1756
        %v1758 = vpop.f32.mrb[0].mxu0
        %v1759 = vadd.f32 0.0, %v1758
        %1760 = vdwg.mxu0
        %v1761 = vld [vmem:[%s1] sm:$0xff]
        %v1762 = vld [vmem:[%s1 + $0x10] sm:$0xff]
        %v1763 = vld [vmem:[%s1 + $0x20] sm:$0xff]
        %v1764 = vld [vmem:[%s1 + $0x30] sm:$0xff]
        %v1765 = vld [vmem:[%s364] sm:$0xff]
        %v1766 = vld [vmem:[%s364 + $0x8] sm:$0xff]
        %v1767 = vld [vmem:[%s364 + $0x10] sm:$0xff]
        %v1768 = vld [vmem:[%s364 + $0x18] sm:$0xff]
        %v1769 = vld [vmem:[%s364 + $0x20] sm:$0xff]
        %v1770 = vld [vmem:[%s364 + $0x28] sm:$0xff]
        %v1771 = vld [vmem:[%s364 + $0x30] sm:$0xff]
        %v1772 = vld [vmem:[%s364 + $0x38] sm:$0xff]
        %v1773 = vld [vmem:[%s364 + $0x40] sm:$0xff]
        %v1774 = vld [vmem:[%s364 + $0x48] sm:$0xff]
        %v1775 = vld [vmem:[%s364 + $0x50] sm:$0xff]
        %v1776 = vld [vmem:[%s364 + $0x58] sm:$0xff]
        %v1777 = vld [vmem:[%s364 + $0x60] sm:$0xff]
        %v1778 = vld [vmem:[%s364 + $0x68] sm:$0xff]
        %v1779 = vld [vmem:[%s364 + $0x70] sm:$0xff]
        %v1780 = vld [vmem:[%s364 + $0x78] sm:$0xff]
        %v1781 = vld [vmem:[%s364 + $0x80] sm:$0xff]
        %v1782 = vld [vmem:[%s364 + $0x88] sm:$0xff]
        %v1783 = vld [vmem:[%s364 + $0x90] sm:$0xff]
        %v1784 = vld [vmem:[%s364 + $0x98] sm:$0xff]
        %v1785 = vld [vmem:[%s364 + $0xa0] sm:$0xff]
        %v1786 = vld [vmem:[%s364 + $0xa8] sm:$0xff]
        %v1787 = vld [vmem:[%s364 + $0xb0] sm:$0xff]
        %v1788 = vld [vmem:[%s364 + $0xb8] sm:$0xff]
        %v1789 = vld [vmem:[%s364 + $0xc0] sm:$0xff]
        %v1790 = vld [vmem:[%s364 + $0xc8] sm:$0xff]
        %v1791 = vld [vmem:[%s364 + $0xd0] sm:$0xff]
        %v1792 = vld [vmem:[%s364 + $0xd8] sm:$0xff]
        %v1793 = vld [vmem:[%s364 + $0xe0] sm:$0xff]
        %v1794 = vld [vmem:[%s364 + $0xe8] sm:$0xff]
        %v1795 = vld [vmem:[%s364 + $0xf0] sm:$0xff]
        %v1796 = vld [vmem:[%s364 + $0xf8] sm:$0xff]
        %v1797 = vld [vmem:[%s364 + $0x100] sm:$0xff]
        %v1798 = vld [vmem:[%s364 + $0x108] sm:$0xff]
        %v1799 = vld [vmem:[%s364 + $0x110] sm:$0xff]
        %v1800 = vld [vmem:[%s364 + $0x118] sm:$0xff]
        %v1801 = vld [vmem:[%s364 + $0x120] sm:$0xff]
        %v1802 = vld [vmem:[%s364 + $0x128] sm:$0xff]
        %v1803 = vld [vmem:[%s364 + $0x130] sm:$0xff]
        %v1804 = vld [vmem:[%s364 + $0x138] sm:$0xff]
        %v1805 = vld [vmem:[%s364 + $0x140] sm:$0xff]
        %v1806 = vld [vmem:[%s364 + $0x148] sm:$0xff]
        %v1807 = vld [vmem:[%s364 + $0x150] sm:$0xff]
        %v1808 = vld [vmem:[%s364 + $0x158] sm:$0xff]
        %v1809 = vld [vmem:[%s364 + $0x160] sm:$0xff]
        %v1810 = vld [vmem:[%s364 + $0x168] sm:$0xff]
        %v1811 = vld [vmem:[%s364 + $0x170] sm:$0xff]
        %v1812 = vld [vmem:[%s364 + $0x178] sm:$0xff]
        %1817 = vrot.lane.b32.xlu0 %v370, 32
        %v1818 = vpop.permute.xlu0 %1817
        %1819 = vrot.lane.b32.xlu0 %v371, 32
        %v1820 = vpop.permute.xlu0 %1819
        %1821 = vrot.lane.b32.xlu0 %v372, 32
        %v1822 = vpop.permute.xlu0 %1821
        %1823 = vrot.lane.b32.xlu0 %v373, 32
        %v1824 = vpop.permute.xlu0 %1823
        %1825 = vrot.lane.b32.xlu0 %v374, 32
        %v1826 = vpop.permute.xlu0 %1825
        %1827 = vrot.lane.b32.xlu0 %v375, 32
        %v1828 = vpop.permute.xlu0 %1827
        %1829 = vrot.lane.b32.xlu0 %v376, 32
        %v1830 = vpop.permute.xlu0 %1829
        %1831 = vrot.lane.b32.xlu0 %v377, 32
        %v1832 = vpop.permute.xlu0 %1831
        %vm1833 = vcmask 261120
        %v1834 = vsel %vm1833, %v1818, %v1820
        %v1835 = vsel %vm1833, %v1822, %v1824
        %v1836 = vsel %vm1833, %v1826, %v1828
        %v1837 = vsel %vm1833, %v1830, %v1832
        %1886 = vrot.lane.b32.xlu0 %v1765, 127
        %v1887 = vpop.permute.xlu0 %1886
        %1888 = vrot.lane.b32.xlu0 %v1766, 127
        %v1889 = vpop.permute.xlu0 %1888
        %1890 = vrot.lane.b32.xlu0 %v1767, 127
        %v1891 = vpop.permute.xlu0 %1890
        %1892 = vrot.lane.b32.xlu0 %v1768, 127
        %v1893 = vpop.permute.xlu0 %1892
        %1894 = vrot.lane.b32.xlu0 %v1769, 127
        %v1895 = vpop.permute.xlu0 %1894
        %1896 = vrot.lane.b32.xlu0 %v1770, 127
        %v1897 = vpop.permute.xlu0 %1896
        %1898 = vrot.lane.b32.xlu0 %v1771, 127
        %v1899 = vpop.permute.xlu0 %1898
        %1900 = vrot.lane.b32.xlu0 %v1772, 127
        %v1901 = vpop.permute.xlu0 %1900
        %1902 = vrot.lane.b32.xlu0 %v1773, 127
        %v1903 = vpop.permute.xlu0 %1902
        %1904 = vrot.lane.b32.xlu0 %v1774, 127
        %v1905 = vpop.permute.xlu0 %1904
        %1906 = vrot.lane.b32.xlu0 %v1775, 127
        %v1907 = vpop.permute.xlu0 %1906
        %1908 = vrot.lane.b32.xlu0 %v1776, 127
        %v1909 = vpop.permute.xlu0 %1908
        %1910 = vrot.lane.b32.xlu0 %v1777, 127
        %v1911 = vpop.permute.xlu0 %1910
        %1912 = vrot.lane.b32.xlu0 %v1778, 127
        %v1913 = vpop.permute.xlu0 %1912
        %1914 = vrot.lane.b32.xlu0 %v1779, 127
        %v1915 = vpop.permute.xlu0 %1914
        %1916 = vrot.lane.b32.xlu0 %v1780, 127
        %v1917 = vpop.permute.xlu0 %1916
        %1918 = vrot.lane.b32.xlu0 %v1781, 127
        %v1919 = vpop.permute.xlu0 %1918
        %1920 = vrot.lane.b32.xlu0 %v1782, 127
        %v1921 = vpop.permute.xlu0 %1920
        %1922 = vrot.lane.b32.xlu0 %v1783, 127
        %v1923 = vpop.permute.xlu0 %1922
        %1924 = vrot.lane.b32.xlu0 %v1784, 127
        %v1925 = vpop.permute.xlu0 %1924
        %1926 = vrot.lane.b32.xlu0 %v1785, 127
        %v1927 = vpop.permute.xlu0 %1926
        %1928 = vrot.lane.b32.xlu0 %v1786, 127
        %v1929 = vpop.permute.xlu0 %1928
        %1930 = vrot.lane.b32.xlu0 %v1787, 127
        %v1931 = vpop.permute.xlu0 %1930
        %1932 = vrot.lane.b32.xlu0 %v1788, 127
        %v1933 = vpop.permute.xlu0 %1932
        %1934 = vrot.lane.b32.xlu0 %v1789, 127
        %v1935 = vpop.permute.xlu0 %1934
        %1936 = vrot.lane.b32.xlu0 %v1790, 127
        %v1937 = vpop.permute.xlu0 %1936
        %1938 = vrot.lane.b32.xlu0 %v1791, 127
        %v1939 = vpop.permute.xlu0 %1938
        %1940 = vrot.lane.b32.xlu0 %v1792, 127
        %v1941 = vpop.permute.xlu0 %1940
        %1942 = vrot.lane.b32.xlu0 %v1793, 127
        %v1943 = vpop.permute.xlu0 %1942
        %1944 = vrot.lane.b32.xlu0 %v1794, 127
        %v1945 = vpop.permute.xlu0 %1944
        %1946 = vrot.lane.b32.xlu0 %v1795, 127
        %v1947 = vpop.permute.xlu0 %1946
        %1948 = vrot.lane.b32.xlu0 %v1796, 127
        %v1949 = vpop.permute.xlu0 %1948
        %1950 = vrot.lane.b32.xlu0 %v1797, 127
        %v1951 = vpop.permute.xlu0 %1950
        %1952 = vrot.lane.b32.xlu0 %v1798, 127
        %v1953 = vpop.permute.xlu0 %1952
        %1954 = vrot.lane.b32.xlu0 %v1799, 127
        %v1955 = vpop.permute.xlu0 %1954
        %1956 = vrot.lane.b32.xlu0 %v1800, 127
        %v1957 = vpop.permute.xlu0 %1956
        %1958 = vrot.lane.b32.xlu0 %v1801, 127
        %v1959 = vpop.permute.xlu0 %1958
        %1960 = vrot.lane.b32.xlu0 %v1802, 127
        %v1961 = vpop.permute.xlu0 %1960
        %1962 = vrot.lane.b32.xlu0 %v1803, 127
        %v1963 = vpop.permute.xlu0 %1962
        %1964 = vrot.lane.b32.xlu0 %v1804, 127
        %v1965 = vpop.permute.xlu0 %1964
        %1966 = vrot.lane.b32.xlu0 %v1805, 127
        %v1967 = vpop.permute.xlu0 %1966
        %1968 = vrot.lane.b32.xlu0 %v1806, 127
        %v1969 = vpop.permute.xlu0 %1968
        %1970 = vrot.lane.b32.xlu0 %v1807, 127
        %v1971 = vpop.permute.xlu0 %1970
        %1972 = vrot.lane.b32.xlu0 %v1808, 127
        %v1973 = vpop.permute.xlu0 %1972
        %1974 = vrot.lane.b32.xlu0 %v1809, 127
        %v1975 = vpop.permute.xlu0 %1974
        %1976 = vrot.lane.b32.xlu0 %v1810, 127
        %v1977 = vpop.permute.xlu0 %1976
        %1978 = vrot.lane.b32.xlu0 %v1811, 127
        %v1979 = vpop.permute.xlu0 %1978
        %1980 = vrot.lane.b32.xlu0 %v1812, 127
        %v1981 = vpop.permute.xlu0 %1980
        %vm1982 = vcmask 1039360
        %v1983 = vsel %vm1982, %v1887, %v1889
        %v1984 = vsel %vm1982, %v1889, %v1891
        %v1985 = vsel %vm1982, %v1891, %v1893
        %v1986 = vsel %vm1982, %v1895, %v1897
        %v1987 = vsel %vm1982, %v1897, %v1899
        %v1988 = vsel %vm1982, %v1899, %v1901
        %v1989 = vsel %vm1982, %v1903, %v1905
        %v1990 = vsel %vm1982, %v1905, %v1907
        %v1991 = vsel %vm1982, %v1907, %v1909
        %v1992 = vsel %vm1982, %v1911, %v1913
        %v1993 = vsel %vm1982, %v1913, %v1915
        %v1994 = vsel %vm1982, %v1915, %v1917
        %v1995 = vsel %vm1982, %v1919, %v1921
        %v1996 = vsel %vm1982, %v1921, %v1923
        %v1997 = vsel %vm1982, %v1923, %v1925
        %v1998 = vsel %vm1982, %v1927, %v1929
        %v1999 = vsel %vm1982, %v1929, %v1931
        %v2000 = vsel %vm1982, %v1931, %v1933
        %v2001 = vsel %vm1982, %v1935, %v1937
        %v2002 = vsel %vm1982, %v1937, %v1939
        %v2003 = vsel %vm1982, %v1939, %v1941
        %v2004 = vsel %vm1982, %v1943, %v1945
        %v2005 = vsel %vm1982, %v1945, %v1947
        %v2006 = vsel %vm1982, %v1947, %v1949
        %v2007 = vsel %vm1982, %v1951, %v1953
        %v2008 = vsel %vm1982, %v1953, %v1955
        %v2009 = vsel %vm1982, %v1955, %v1957
        %v2010 = vsel %vm1982, %v1959, %v1961
        %v2011 = vsel %vm1982, %v1961, %v1963
        %v2012 = vsel %vm1982, %v1963, %v1965
        %v2013 = vsel %vm1982, %v1967, %v1969
        %v2014 = vsel %vm1982, %v1969, %v1971
        %v2015 = vsel %vm1982, %v1971, %v1973
        %v2016 = vsel %vm1982, %v1975, %v1977
        %v2017 = vsel %vm1982, %v1977, %v1979
        %v2018 = vsel %vm1982, %v1979, %v1981
        %vm2067 = vcmask 785408
        %v2068 = vsel %vm2067, %v1834, 0
        %v2070 = vsel %vm2067, %v1835, 0
        %v2072 = vsel %vm2067, %v1836, 0
        %v2074 = vsel %vm2067, %v1837, 0
        %2076 = vmatprep.subr.mxu0 %v1984
        %2077 = vmatpush1.msra.mxu0 %v1983
        %2078 = vmatprep.subr.mxu0 %v1987
        %2079 = vmatpush1.msra.mxu0 %v1986
        %2080 = vmatprep.subr.mxu0 %v1990
        %2081 = vmatpush1.msra.mxu0 %v1989
        %2082 = vmatprep.subr.mxu0 %v1993
        %2083 = vmatpush1.msra.mxu0 %v1992
        %2084 = vmatprep.subr.mxu0 %v1996
        %2085 = vmatpush1.msra.mxu0 %v1995
        %2086 = vmatprep.subr.mxu0 %v1999
        %2087 = vmatpush1.msra.mxu0 %v1998
        %2088 = vmatprep.subr.mxu0 %v2002
        %2089 = vmatpush1.msra.mxu0 %v2001
        %2090 = vmatprep.subr.mxu0 %v2005
        %2091 = vmatpush1.msra.mxu0 %v2004
        %2092 = vmatprep.subr.mxu0 %v2008
        %2093 = vmatpush1.msra.mxu0 %v2007
        %2094 = vmatprep.subr.mxu0 %v2011
        %2095 = vmatpush1.msra.mxu0 %v2010
        %2096 = vmatprep.subr.mxu0 %v2014
        %2097 = vmatpush1.msra.mxu0 %v2013
        %2098 = vmatprep.subr.mxu0 %v2017
        %2099 = vmatpush1.msra.mxu0 %v2016
        %2100 = vmatprep.subr.mxu0 0.0
        %2101 = vmatpush1.msra.mxu0 0.0
        %2102 = vmatprep.subr.mxu0 0.0
        %2103 = vmatpush1.msra.mxu0 0.0
        %2104 = vmatprep.subr.mxu0 0.0
        %2105 = vmatpush1.msra.mxu0 0.0
        %2106 = vmatprep.subr.mxu0 0.0
        %2107 = vmatpush1.msra.mxu0 0.0
        %2108 = vmatprep.subr.mxu0 0.0
        %2109 = vmatpush1.msra.mxu0 0.0
        %2110 = vmatprep.subr.mxu0 0.0
        %2111 = vmatpush1.msra.mxu0 0.0
        %2112 = vmatprep.subr.mxu0 0.0
        %2113 = vmatpush1.msra.mxu0 0.0
        %2114 = vmatprep.subr.mxu0 0.0
        %2115 = vmatpush1.msra.mxu0 0.0
        %2116 = vmatprep.subr.mxu0 0.0
        %2117 = vmatpush1.msra.mxu0 0.0
        %2118 = vmatprep.subr.mxu0 0.0
        %2119 = vmatpush1.msra.mxu0 0.0
        %2120 = vmatprep.subr.mxu0 0.0
        %2121 = vmatpush1.msra.mxu0 0.0
        %2122 = vmatprep.subr.mxu0 0.0
        %2123 = vmatpush1.msra.mxu0 0.0
        %2124 = vmatprep.subr.mxu0 0.0
        %2125 = vmatpush1.msra.mxu0 0.0
        %2126 = vmatprep.subr.mxu0 0.0
        %2127 = vmatpush1.msra.mxu0 0.0
        %2128 = vmatprep.subr.mxu0 0.0
        %2129 = vmatpush1.msra.mxu0 0.0
        %2130 = vmatprep.subr.mxu0 0.0
        %2131 = vmatpush1.msra.mxu0 0.0
        %2132 = vmatprep.subr.mxu0 0.0
        %2133 = vmatpush1.msra.mxu0 0.0
        %2134 = vmatprep.subr.mxu0 0.0
        %2135 = vmatpush1.msra.mxu0 0.0
        %2136 = vmatprep.subr.mxu0 0.0
        %2137 = vmatpush1.msra.mxu0 0.0
        %2138 = vmatprep.subr.mxu0 0.0
        %2139 = vmatpush1.msra.mxu0 0.0
        %2140 = vmatprep.mubr.f32.mxu0 0.0
        %2141 = vmatmul.mubr.f32.gmra.mrb[0].mxu0 %v2068
        %v2142 = vpop.f32.mrb[0].mxu0
        %v2143 = vadd.f32 0.0, %v2142
        %v2144 = vpop.f32.mrb[0].mxu0
        %v2145 = vadd.f32 0.0, %v2144
        %2146 = vmatprep.mubr.f32.mxu0 0.0
        %2147 = vmatmul.mubr.f32.gmra.mrb[0].mxu0 %v2070
        %v2148 = vpop.f32.mrb[0].mxu0
        %v2149 = vadd.f32 0.0, %v2148
        %v2150 = vpop.f32.mrb[0].mxu0
        %v2151 = vadd.f32 0.0, %v2150
        %2152 = vmatprep.mubr.f32.mxu0 0.0
        %2153 = vmatmul.mubr.f32.gmra.mrb[0].mxu0 %v2072
        %v2154 = vpop.f32.mrb[0].mxu0
        %v2155 = vadd.f32 0.0, %v2154
        %v2156 = vpop.f32.mrb[0].mxu0
        %v2157 = vadd.f32 0.0, %v2156
        %2158 = vmatprep.mubr.f32.mxu0 0.0
        %2159 = vmatmul.mubr.f32.gmra.mrb[0].mxu0 %v2074
        %v2160 = vpop.f32.mrb[0].mxu0
        %v2161 = vadd.f32 0.0, %v2160
        %v2162 = vpop.f32.mrb[0].mxu0
        %v2163 = vadd.f32 0.0, %v2162
        %2164 = vdwg.mxu0
        %2165 = vmatprep.subr.mxu0 %v1893
        %2166 = vmatpush1.msra.mxu0 %v1985
        %2167 = vmatprep.subr.mxu0 %v1901
        %2168 = vmatpush1.msra.mxu0 %v1988
        %2169 = vmatprep.subr.mxu0 %v1909
        %2170 = vmatpush1.msra.mxu0 %v1991
        %2171 = vmatprep.subr.mxu0 %v1917
        %2172 = vmatpush1.msra.mxu0 %v1994
        %2173 = vmatprep.subr.mxu0 %v1925
        %2174 = vmatpush1.msra.mxu0 %v1997
        %2175 = vmatprep.subr.mxu0 %v1933
        %2176 = vmatpush1.msra.mxu0 %v2000
        %2177 = vmatprep.subr.mxu0 %v1941
        %2178 = vmatpush1.msra.mxu0 %v2003
        %2179 = vmatprep.subr.mxu0 %v1949
        %2180 = vmatpush1.msra.mxu0 %v2006
        %2181 = vmatprep.subr.mxu0 %v1957
        %2182 = vmatpush1.msra.mxu0 %v2009
        %2183 = vmatprep.subr.mxu0 %v1965
        %2184 = vmatpush1.msra.mxu0 %v2012
        %2185 = vmatprep.subr.mxu0 %v1973
        %2186 = vmatpush1.msra.mxu0 %v2015
        %2187 = vmatprep.subr.mxu0 %v1981
        %2188 = vmatpush1.msra.mxu0 %v2018
        %2189 = vmatprep.subr.mxu0 0.0
        %2190 = vmatpush1.msra.mxu0 0.0
        %2191 = vmatprep.subr.mxu0 0.0
        %2192 = vmatpush1.msra.mxu0 0.0
        %2193 = vmatprep.subr.mxu0 0.0
        %2194 = vmatpush1.msra.mxu0 0.0
        %2195 = vmatprep.subr.mxu0 0.0
        %2196 = vmatpush1.msra.mxu0 0.0
        %2197 = vmatprep.subr.mxu0 0.0
        %2198 = vmatpush1.msra.mxu0 0.0
        %2199 = vmatprep.subr.mxu0 0.0
        %2200 = vmatpush1.msra.mxu0 0.0
        %2201 = vmatprep.subr.mxu0 0.0
        %2202 = vmatpush1.msra.mxu0 0.0
        %2203 = vmatprep.subr.mxu0 0.0
        %2204 = vmatpush1.msra.mxu0 0.0
        %2205 = vmatprep.subr.mxu0 0.0
        %2206 = vmatpush1.msra.mxu0 0.0
        %2207 = vmatprep.subr.mxu0 0.0
        %2208 = vmatpush1.msra.mxu0 0.0
        %2209 = vmatprep.subr.mxu0 0.0
        %2210 = vmatpush1.msra.mxu0 0.0
        %2211 = vmatprep.subr.mxu0 0.0
        %2212 = vmatpush1.msra.mxu0 0.0
        %2213 = vmatprep.subr.mxu0 0.0
        %2214 = vmatpush1.msra.mxu0 0.0
        %2215 = vmatprep.subr.mxu0 0.0
        %2216 = vmatpush1.msra.mxu0 0.0
        %2217 = vmatprep.subr.mxu0 0.0
        %2218 = vmatpush1.msra.mxu0 0.0
        %2219 = vmatprep.subr.mxu0 0.0
        %2220 = vmatpush1.msra.mxu0 0.0
        %2221 = vmatprep.subr.mxu0 0.0
        %2222 = vmatpush1.msra.mxu0 0.0
        %2223 = vmatprep.subr.mxu0 0.0
        %2224 = vmatpush1.msra.mxu0 0.0
        %2225 = vmatprep.subr.mxu0 0.0
        %2226 = vmatpush1.msra.mxu0 0.0
        %2227 = vmatprep.subr.mxu0 0.0
        %2228 = vmatpush1.msra.mxu0 0.0
        %2229 = vmatprep.mubr.f32.mxu0 0.0
        %2230 = vmatmul.mubr.f32.gmra.mrb[0].mxu0 %v2068
        %v2231 = vpop.f32.mrb[0].mxu0
        %v2232 = vadd.f32 0.0, %v2231
        %v2233 = vpop.f32.mrb[0].mxu0
        %v2234 = vadd.f32 0.0, %v2233
        %2235 = vmatprep.mubr.f32.mxu0 0.0
        %2236 = vmatmul.mubr.f32.gmra.mrb[0].mxu0 %v2070
        %v2237 = vpop.f32.mrb[0].mxu0
        %v2238 = vadd.f32 0.0, %v2237
        %v2239 = vpop.f32.mrb[0].mxu0
        %v2240 = vadd.f32 0.0, %v2239
        %2241 = vmatprep.mubr.f32.mxu0 0.0
        %2242 = vmatmul.mubr.f32.gmra.mrb[0].mxu0 %v2072
        %v2243 = vpop.f32.mrb[0].mxu0
        %v2244 = vadd.f32 0.0, %v2243
        %v2245 = vpop.f32.mrb[0].mxu0
        %v2246 = vadd.f32 0.0, %v2245
        %2247 = vmatprep.mubr.f32.mxu0 0.0
        %2248 = vmatmul.mubr.f32.gmra.mrb[0].mxu0 %v2074
        %v2249 = vpop.f32.mrb[0].mxu0
        %v2250 = vadd.f32 0.0, %v2249
        %v2251 = vpop.f32.mrb[0].mxu0
        %v2252 = vadd.f32 0.0, %v2251
        %2253 = vdwg.mxu0
        %v2255 = vsel %vm2067, %v1761, 0
        %v2258 = vsel %vm2067, %v1762, 0
        %v2261 = vsel %vm2067, %v1763, 0
        %v2264 = vsel %vm2067, %v1764, 0
        %2266 = vmatprep.subr.mxu0 %v1536
        %2267 = vmatpush1.msra.mxu0 %v1535
        %2268 = vmatprep.subr.mxu0 %v1540
        %2269 = vmatpush1.msra.mxu0 %v1539
        %2270 = vmatprep.subr.mxu0 %v1544
        %2271 = vmatpush1.msra.mxu0 %v1543
        %2272 = vmatprep.subr.mxu0 %v1548
        %2273 = vmatpush1.msra.mxu0 %v1547
        %2274 = vmatprep.subr.mxu0 %v1552
        %2275 = vmatpush1.msra.mxu0 %v1551
        %2276 = vmatprep.subr.mxu0 %v1556
        %2277 = vmatpush1.msra.mxu0 %v1555
        %2278 = vmatprep.subr.mxu0 %v1560
        %2279 = vmatpush1.msra.mxu0 %v1559
        %2280 = vmatprep.subr.mxu0 %v1564
        %2281 = vmatpush1.msra.mxu0 %v1563
        %2282 = vmatprep.subr.mxu0 %v1568
        %2283 = vmatpush1.msra.mxu0 %v1567
        %2284 = vmatprep.subr.mxu0 %v1572
        %2285 = vmatpush1.msra.mxu0 %v1571
        %2286 = vmatprep.subr.mxu0 %v1576
        %2287 = vmatpush1.msra.mxu0 %v1575
        %2288 = vmatprep.subr.mxu0 %v1580
        %2289 = vmatpush1.msra.mxu0 %v1579
        %2290 = vmatprep.subr.mxu0 0.0
        %2291 = vmatpush1.msra.mxu0 0.0
        %2292 = vmatprep.subr.mxu0 0.0
        %2293 = vmatpush1.msra.mxu0 0.0
        %2294 = vmatprep.subr.mxu0 0.0
        %2295 = vmatpush1.msra.mxu0 0.0
        %2296 = vmatprep.subr.mxu0 0.0
        %2297 = vmatpush1.msra.mxu0 0.0
        %2298 = vmatprep.subr.mxu0 0.0
        %2299 = vmatpush1.msra.mxu0 0.0
        %2300 = vmatprep.subr.mxu0 0.0
        %2301 = vmatpush1.msra.mxu0 0.0
        %2302 = vmatprep.subr.mxu0 0.0
        %2303 = vmatpush1.msra.mxu0 0.0
        %2304 = vmatprep.subr.mxu0 0.0
        %2305 = vmatpush1.msra.mxu0 0.0
        %2306 = vmatprep.subr.mxu0 0.0
        %2307 = vmatpush1.msra.mxu0 0.0
        %2308 = vmatprep.subr.mxu0 0.0
        %2309 = vmatpush1.msra.mxu0 0.0
        %2310 = vmatprep.subr.mxu0 0.0
        %2311 = vmatpush1.msra.mxu0 0.0
        %2312 = vmatprep.subr.mxu0 0.0
        %2313 = vmatpush1.msra.mxu0 0.0
        %2314 = vmatprep.subr.mxu0 0.0
        %2315 = vmatpush1.msra.mxu0 0.0
        %2316 = vmatprep.subr.mxu0 0.0
        %2317 = vmatpush1.msra.mxu0 0.0
        %2318 = vmatprep.subr.mxu0 0.0
        %2319 = vmatpush1.msra.mxu0 0.0
        %2320 = vmatprep.subr.mxu0 0.0
        %2321 = vmatpush1.msra.mxu0 0.0
        %2322 = vmatprep.subr.mxu0 0.0
        %2323 = vmatpush1.msra.mxu0 0.0
        %2324 = vmatprep.subr.mxu0 0.0
        %2325 = vmatpush1.msra.mxu0 0.0
        %2326 = vmatprep.subr.mxu0 0.0
        %2327 = vmatpush1.msra.mxu0 0.0
        %2328 = vmatprep.subr.mxu0 0.0
        %2329 = vmatpush1.msra.mxu0 0.0
        %2330 = vmatprep.mubr.f32.mxu0 0.0
        %2331 = vmatmul.mubr.f32.gmra.mrb[0].mxu0 %v2255
        %v2332 = vpop.f32.mrb[0].mxu0
        %v2333 = vadd.f32 %v2143, %v2332
        %v2334 = vpop.f32.mrb[0].mxu0
        %v2335 = vadd.f32 %v2145, %v2334
        %2336 = vmatprep.mubr.f32.mxu0 0.0
        %2337 = vmatmul.mubr.f32.gmra.mrb[0].mxu0 %v2258
        %v2338 = vpop.f32.mrb[0].mxu0
        %v2339 = vadd.f32 %v2149, %v2338
        %v2340 = vpop.f32.mrb[0].mxu0
        %v2341 = vadd.f32 %v2151, %v2340
        %2342 = vmatprep.mubr.f32.mxu0 0.0
        %2343 = vmatmul.mubr.f32.gmra.mrb[0].mxu0 %v2261
        %v2344 = vpop.f32.mrb[0].mxu0
        %v2345 = vadd.f32 %v2155, %v2344
        %v2346 = vpop.f32.mrb[0].mxu0
        %v2347 = vadd.f32 %v2157, %v2346
        %2348 = vmatprep.mubr.f32.mxu0 0.0
        %2349 = vmatmul.mubr.f32.gmra.mrb[0].mxu0 %v2264
        %v2350 = vpop.f32.mrb[0].mxu0
        %v2351 = vadd.f32 %v2161, %v2350
        %v2352 = vpop.f32.mrb[0].mxu0
        %v2353 = vadd.f32 %v2163, %v2352
        %2354 = vdwg.mxu0
        %2355 = vmatprep.subr.mxu0 %v1538
        %2356 = vmatpush1.msra.mxu0 %v1537
        %2357 = vmatprep.subr.mxu0 %v1542
        %2358 = vmatpush1.msra.mxu0 %v1541
        %2359 = vmatprep.subr.mxu0 %v1546
        %2360 = vmatpush1.msra.mxu0 %v1545
        %2361 = vmatprep.subr.mxu0 %v1550
        %2362 = vmatpush1.msra.mxu0 %v1549
        %2363 = vmatprep.subr.mxu0 %v1554
        %2364 = vmatpush1.msra.mxu0 %v1553
        %2365 = vmatprep.subr.mxu0 %v1558
        %2366 = vmatpush1.msra.mxu0 %v1557
        %2367 = vmatprep.subr.mxu0 %v1562
        %2368 = vmatpush1.msra.mxu0 %v1561
        %2369 = vmatprep.subr.mxu0 %v1566
        %2370 = vmatpush1.msra.mxu0 %v1565
        %2371 = vmatprep.subr.mxu0 %v1570
        %2372 = vmatpush1.msra.mxu0 %v1569
        %2373 = vmatprep.subr.mxu0 %v1574
        %2374 = vmatpush1.msra.mxu0 %v1573
        %2375 = vmatprep.subr.mxu0 %v1578
        %2376 = vmatpush1.msra.mxu0 %v1577
        %2377 = vmatprep.subr.mxu0 %v1582
        %2378 = vmatpush1.msra.mxu0 %v1581
        %2379 = vmatprep.subr.mxu0 0.0
        %2380 = vmatpush1.msra.mxu0 0.0
        %2381 = vmatprep.subr.mxu0 0.0
        %2382 = vmatpush1.msra.mxu0 0.0
        %2383 = vmatprep.subr.mxu0 0.0
        %2384 = vmatpush1.msra.mxu0 0.0
        %2385 = vmatprep.subr.mxu0 0.0
        %2386 = vmatpush1.msra.mxu0 0.0
        %2387 = vmatprep.subr.mxu0 0.0
        %2388 = vmatpush1.msra.mxu0 0.0
        %2389 = vmatprep.subr.mxu0 0.0
        %2390 = vmatpush1.msra.mxu0 0.0
        %2391 = vmatprep.subr.mxu0 0.0
        %2392 = vmatpush1.msra.mxu0 0.0
        %2393 = vmatprep.subr.mxu0 0.0
        %2394 = vmatpush1.msra.mxu0 0.0
        %2395 = vmatprep.subr.mxu0 0.0
        %2396 = vmatpush1.msra.mxu0 0.0
        %2397 = vmatprep.subr.mxu0 0.0
        %2398 = vmatpush1.msra.mxu0 0.0
        %2399 = vmatprep.subr.mxu0 0.0
        %2400 = vmatpush1.msra.mxu0 0.0
        %2401 = vmatprep.subr.mxu0 0.0
        %2402 = vmatpush1.msra.mxu0 0.0
        %2403 = vmatprep.subr.mxu0 0.0
        %2404 = vmatpush1.msra.mxu0 0.0
        %2405 = vmatprep.subr.mxu0 0.0
        %2406 = vmatpush1.msra.mxu0 0.0
        %2407 = vmatprep.subr.mxu0 0.0
        %2408 = vmatpush1.msra.mxu0 0.0
        %2409 = vmatprep.subr.mxu0 0.0
        %2410 = vmatpush1.msra.mxu0 0.0
        %2411 = vmatprep.subr.mxu0 0.0
        %2412 = vmatpush1.msra.mxu0 0.0
        %2413 = vmatprep.subr.mxu0 0.0
        %2414 = vmatpush1.msra.mxu0 0.0
        %2415 = vmatprep.subr.mxu0 0.0
        %2416 = vmatpush1.msra.mxu0 0.0
        %2417 = vmatprep.subr.mxu0 0.0
        %2418 = vmatpush1.msra.mxu0 0.0
        %2419 = vmatprep.mubr.f32.mxu0 0.0
        %2420 = vmatmul.mubr.f32.gmra.mrb[0].mxu0 %v2255
        %v2421 = vpop.f32.mrb[0].mxu0
        %v2422 = vadd.f32 %v2232, %v2421
        %v2423 = vpop.f32.mrb[0].mxu0
        %v2424 = vadd.f32 %v2234, %v2423
        %2425 = vmatprep.mubr.f32.mxu0 0.0
        %2426 = vmatmul.mubr.f32.gmra.mrb[0].mxu0 %v2258
        %v2427 = vpop.f32.mrb[0].mxu0
        %v2428 = vadd.f32 %v2238, %v2427
        %v2429 = vpop.f32.mrb[0].mxu0
        %v2430 = vadd.f32 %v2240, %v2429
        %2431 = vmatprep.mubr.f32.mxu0 0.0
        %2432 = vmatmul.mubr.f32.gmra.mrb[0].mxu0 %v2261
        %v2433 = vpop.f32.mrb[0].mxu0
        %v2434 = vadd.f32 %v2244, %v2433
        %v2435 = vpop.f32.mrb[0].mxu0
        %v2436 = vadd.f32 %v2246, %v2435
        %2437 = vmatprep.mubr.f32.mxu0 0.0
        %2438 = vmatmul.mubr.f32.gmra.mrb[0].mxu0 %v2264
        %v2439 = vpop.f32.mrb[0].mxu0
        %v2440 = vadd.f32 %v2250, %v2439
        %v2441 = vpop.f32.mrb[0].mxu0
        %v2442 = vadd.f32 %v2252, %v2441
        %2443 = vdwg.mxu0
        %2460 = vrot.lane.b32.xlu0 %v828, 96
        %v2461 = vpop.permute.xlu0 %2460
        %2462 = vrot.lane.b32.xlu0 %v830, 96
        %v2463 = vpop.permute.xlu0 %2462
        %2464 = vrot.lane.b32.xlu0 %v917, 96
        %v2465 = vpop.permute.xlu0 %2464
        %2466 = vrot.lane.b32.xlu0 %v919, 96
        %v2467 = vpop.permute.xlu0 %2466
        %2468 = vrot.lane.b32.xlu0 %v834, 96
        %v2469 = vpop.permute.xlu0 %2468
        %2470 = vrot.lane.b32.xlu0 %v836, 96
        %v2471 = vpop.permute.xlu0 %2470
        %2472 = vrot.lane.b32.xlu0 %v923, 96
        %v2473 = vpop.permute.xlu0 %2472
        %2474 = vrot.lane.b32.xlu0 %v925, 96
        %v2475 = vpop.permute.xlu0 %2474
        %2476 = vrot.lane.b32.xlu0 %v840, 96
        %v2477 = vpop.permute.xlu0 %2476
        %2478 = vrot.lane.b32.xlu0 %v842, 96
        %v2479 = vpop.permute.xlu0 %2478
        %2480 = vrot.lane.b32.xlu0 %v929, 96
        %v2481 = vpop.permute.xlu0 %2480
        %2482 = vrot.lane.b32.xlu0 %v931, 96
        %v2483 = vpop.permute.xlu0 %2482
        %2484 = vrot.lane.b32.xlu0 %v846, 96
        %v2485 = vpop.permute.xlu0 %2484
        %2486 = vrot.lane.b32.xlu0 %v848, 96
        %v2487 = vpop.permute.xlu0 %2486
        %2488 = vrot.lane.b32.xlu0 %v935, 96
        %v2489 = vpop.permute.xlu0 %2488
        %2490 = vrot.lane.b32.xlu0 %v937, 96
        %v2491 = vpop.permute.xlu0 %2490
        %v2492 = vsel %vm2067, %v2461, %v2463
        %v2493 = vsel %vm2067, %v2463, %v2465
        %v2494 = vsel %vm2067, %v2465, %v2467
        %v2495 = vsel %vm2067, %v2469, %v2471
        %v2496 = vsel %vm2067, %v2471, %v2473
        %v2497 = vsel %vm2067, %v2473, %v2475
        %v2498 = vsel %vm2067, %v2477, %v2479
        %v2499 = vsel %vm2067, %v2479, %v2481
        %v2500 = vsel %vm2067, %v2481, %v2483
        %v2501 = vsel %vm2067, %v2485, %v2487
        %v2502 = vsel %vm2067, %v2487, %v2489
        %v2503 = vsel %vm2067, %v2489, %v2491
        %2540 = vrot.lane.b32.xlu0 %v1102, 64
        %v2541 = vpop.permute.xlu0 %2540
        %2542 = vrot.lane.b32.xlu0 %v1104, 64
        %v2543 = vpop.permute.xlu0 %2542
        %2544 = vrot.lane.b32.xlu0 %v1191, 64
        %v2545 = vpop.permute.xlu0 %2544
        %2546 = vrot.lane.b32.xlu0 %v1193, 64
        %v2547 = vpop.permute.xlu0 %2546
        %2548 = vrot.lane.b32.xlu0 %v1108, 64
        %v2549 = vpop.permute.xlu0 %2548
        %2550 = vrot.lane.b32.xlu0 %v1110, 64
        %v2551 = vpop.permute.xlu0 %2550
        %2552 = vrot.lane.b32.xlu0 %v1197, 64
        %v2553 = vpop.permute.xlu0 %2552
        %2554 = vrot.lane.b32.xlu0 %v1199, 64
        %v2555 = vpop.permute.xlu0 %2554
        %2556 = vrot.lane.b32.xlu0 %v1114, 64
        %v2557 = vpop.permute.xlu0 %2556
        %2558 = vrot.lane.b32.xlu0 %v1116, 64
        %v2559 = vpop.permute.xlu0 %2558
        %2560 = vrot.lane.b32.xlu0 %v1203, 64
        %v2561 = vpop.permute.xlu0 %2560
        %2562 = vrot.lane.b32.xlu0 %v1205, 64
        %v2563 = vpop.permute.xlu0 %2562
        %2564 = vrot.lane.b32.xlu0 %v1120, 64
        %v2565 = vpop.permute.xlu0 %2564
        %2566 = vrot.lane.b32.xlu0 %v1122, 64
        %v2567 = vpop.permute.xlu0 %2566
        %2568 = vrot.lane.b32.xlu0 %v1209, 64
        %v2569 = vpop.permute.xlu0 %2568
        %2570 = vrot.lane.b32.xlu0 %v1211, 64
        %v2571 = vpop.permute.xlu0 %2570
        %v2572 = vsel %vm474, %v2541, %v2543
        %v2573 = vsel %vm474, %v2543, %v2545
        %v2574 = vsel %vm474, %v2545, %v2547
        %v2575 = vsel %vm474, %v2549, %v2551
        %v2576 = vsel %vm474, %v2551, %v2553
        %v2577 = vsel %vm474, %v2553, %v2555
        %v2578 = vsel %vm474, %v2557, %v2559
        %v2579 = vsel %vm474, %v2559, %v2561
        %v2580 = vsel %vm474, %v2561, %v2563
        %v2581 = vsel %vm474, %v2565, %v2567
        %v2582 = vsel %vm474, %v2567, %v2569
        %v2583 = vsel %vm474, %v2569, %v2571
        %2620 = vrot.lane.b32.xlu0 %v1376, 32
        %v2621 = vpop.permute.xlu0 %2620
        %2622 = vrot.lane.b32.xlu0 %v1378, 32
        %v2623 = vpop.permute.xlu0 %2622
        %2624 = vrot.lane.b32.xlu0 %v1465, 32
        %v2625 = vpop.permute.xlu0 %2624
        %2626 = vrot.lane.b32.xlu0 %v1467, 32
        %v2627 = vpop.permute.xlu0 %2626
        %2628 = vrot.lane.b32.xlu0 %v1382, 32
        %v2629 = vpop.permute.xlu0 %2628
        %2630 = vrot.lane.b32.xlu0 %v1384, 32
        %v2631 = vpop.permute.xlu0 %2630
        %2632 = vrot.lane.b32.xlu0 %v1471, 32
        %v2633 = vpop.permute.xlu0 %2632
        %2634 = vrot.lane.b32.xlu0 %v1473, 32
        %v2635 = vpop.permute.xlu0 %2634
        %2636 = vrot.lane.b32.xlu0 %v1388, 32
        %v2637 = vpop.permute.xlu0 %2636
        %2638 = vrot.lane.b32.xlu0 %v1390, 32
        %v2639 = vpop.permute.xlu0 %2638
        %2640 = vrot.lane.b32.xlu0 %v1477, 32
        %v2641 = vpop.permute.xlu0 %2640
        %2642 = vrot.lane.b32.xlu0 %v1479, 32
        %v2643 = vpop.permute.xlu0 %2642
        %2644 = vrot.lane.b32.xlu0 %v1394, 32
        %v2645 = vpop.permute.xlu0 %2644
        %2646 = vrot.lane.b32.xlu0 %v1396, 32
        %v2647 = vpop.permute.xlu0 %2646
        %2648 = vrot.lane.b32.xlu0 %v1483, 32
        %v2649 = vpop.permute.xlu0 %2648
        %2650 = vrot.lane.b32.xlu0 %v1485, 32
        %v2651 = vpop.permute.xlu0 %2650
        %v2652 = vsel %vm1833, %v2621, %v2623
        %v2653 = vsel %vm1833, %v2623, %v2625
        %v2654 = vsel %vm1833, %v2625, %v2627
        %v2655 = vsel %vm1833, %v2629, %v2631
        %v2656 = vsel %vm1833, %v2631, %v2633
        %v2657 = vsel %vm1833, %v2633, %v2635
        %v2658 = vsel %vm1833, %v2637, %v2639
        %v2659 = vsel %vm1833, %v2639, %v2641
        %v2660 = vsel %vm1833, %v2641, %v2643
        %v2661 = vsel %vm1833, %v2645, %v2647
        %v2662 = vsel %vm1833, %v2647, %v2649
        %v2663 = vsel %vm1833, %v2649, %v2651
        %2696 = vrot.lane.b32.xlu0 %v2333, 96
        %v2697 = vpop.permute.xlu0 %2696
        %2698 = vrot.lane.b32.xlu0 %v2335, 96
        %v2699 = vpop.permute.xlu0 %2698
        %2700 = vrot.lane.b32.xlu0 %v2422, 96
        %v2701 = vpop.permute.xlu0 %2700
        %2702 = vrot.lane.b32.xlu0 %v2424, 96
        %v2703 = vpop.permute.xlu0 %2702
        %2704 = vrot.lane.b32.xlu0 %v2339, 96
        %v2705 = vpop.permute.xlu0 %2704
        %2706 = vrot.lane.b32.xlu0 %v2341, 96
        %v2707 = vpop.permute.xlu0 %2706
        %2708 = vrot.lane.b32.xlu0 %v2428, 96
        %v2709 = vpop.permute.xlu0 %2708
        %2710 = vrot.lane.b32.xlu0 %v2430, 96
        %v2711 = vpop.permute.xlu0 %2710
        %2712 = vrot.lane.b32.xlu0 %v2345, 96
        %v2713 = vpop.permute.xlu0 %2712
        %2714 = vrot.lane.b32.xlu0 %v2347, 96
        %v2715 = vpop.permute.xlu0 %2714
        %2716 = vrot.lane.b32.xlu0 %v2434, 96
        %v2717 = vpop.permute.xlu0 %2716
        %2718 = vrot.lane.b32.xlu0 %v2436, 96
        %v2719 = vpop.permute.xlu0 %2718
        %2720 = vrot.lane.b32.xlu0 %v2351, 96
        %v2721 = vpop.permute.xlu0 %2720
        %2722 = vrot.lane.b32.xlu0 %v2353, 96
        %v2723 = vpop.permute.xlu0 %2722
        %2724 = vrot.lane.b32.xlu0 %v2440, 96
        %v2725 = vpop.permute.xlu0 %2724
        %2726 = vrot.lane.b32.xlu0 %v2442, 96
        %v2727 = vpop.permute.xlu0 %2726
        %v2728 = vsel %vm2067, %v2697, %v2699
        %v2729 = vsel %vm2067, %v2699, %v2701
        %v2730 = vsel %vm2067, %v2701, %v2703
        %v2731 = vsel %vm2067, %v2705, %v2707
        %v2732 = vsel %vm2067, %v2707, %v2709
        %v2733 = vsel %vm2067, %v2709, %v2711
        %v2734 = vsel %vm2067, %v2713, %v2715
        %v2735 = vsel %vm2067, %v2715, %v2717
        %v2736 = vsel %vm2067, %v2717, %v2719
        %v2737 = vsel %vm2067, %v2721, %v2723
        %v2738 = vsel %vm2067, %v2723, %v2725
        %v2739 = vsel %vm2067, %v2725, %v2727
        %v2760 = vsel %vm2067, %v645, %v2461
        %v2761 = vsel %vm2067, %v651, %v2469
        %v2762 = vsel %vm2067, %v657, %v2477
        %v2763 = vsel %vm2067, %v663, %v2485
        %v2764 = vsel %vm474, %v2467, %v2541
        %v2765 = vsel %vm474, %v2475, %v2549
        %v2766 = vsel %vm474, %v2483, %v2557
        %v2767 = vsel %vm474, %v2491, %v2565
        %v2768 = vsel %vm1833, %v2547, %v2621
        %v2769 = vsel %vm1833, %v2555, %v2629
        %v2770 = vsel %vm1833, %v2563, %v2637
        %v2771 = vsel %vm1833, %v2571, %v2645
        %v2772 = vsel %vm2067, %v1741, %v2697
        %v2773 = vsel %vm2067, %v1747, %v2705
        %v2774 = vsel %vm2067, %v1753, %v2713
        %v2775 = vsel %vm2067, %v1759, %v2721
        %v2776 = vld [vmem:[%s5] ss:$2 sm:$0xff]
        %s2777 = scalar_lea.vmem %s5, 16
        %v2778 = vld [vmem:[%s2777] ss:$2 sm:$0xff]
        %s2779 = scalar_lea.vmem %s5, 32
        %v2780 = vld [vmem:[%s2779] ss:$2 sm:$0x7f]
        %s2781 = scalar_lea.vmem %s5, 1
        %v2782 = vld [vmem:[%s2781] ss:$2 sm:$0xff]
        %s2783 = scalar_lea.vmem %s5, 17
        %v2784 = vld [vmem:[%s2783] ss:$2 sm:$0xff]
        %s2785 = scalar_lea.vmem %s5, 33
        %v2786 = vld [vmem:[%s2785] ss:$2 sm:$0x7f]
        %v2787 = vmax.f32 %v554, 0.0
        %v2788 = vmax.f32 %v556, 0.0
        %v2789 = vmax.f32 %v643, 0.0
        %v2790 = vmax.f32 %v2760, 0.0
        %v2791 = vmax.f32 %v2492, 0.0
        %v2792 = vmax.f32 %v2493, 0.0
        %v2793 = vmax.f32 %v2494, 0.0
        %v2794 = vmax.f32 %v2764, 0.0
        %v2795 = vmax.f32 %v2572, 0.0
        %v2796 = vmax.f32 %v2573, 0.0
        %v2797 = vmax.f32 %v2574, 0.0
        %v2798 = vmax.f32 %v2768, 0.0
        %v2799 = vmax.f32 %v2652, 0.0
        %v2800 = vmax.f32 %v2653, 0.0
        %v2801 = vmax.f32 %v2654, 0.0
        %v2802 = vmax.f32 %v1650, 0.0
        %v2803 = vmax.f32 %v1652, 0.0
        %v2804 = vmax.f32 %v1739, 0.0
        %v2805 = vmax.f32 %v2772, 0.0
        %v2806 = vmax.f32 %v2728, 0.0
        %v2807 = vmax.f32 %v2729, 0.0
        %v2808 = vmax.f32 %v2730, 0.0
        %v2809 = vmax.f32 %v2703, 0.0
        %v2810 = vmax.f32 %v560, 0.0
        %v2811 = vmax.f32 %v562, 0.0
        %v2812 = vmax.f32 %v649, 0.0
        %v2813 = vmax.f32 %v2761, 0.0
        %v2814 = vmax.f32 %v2495, 0.0
        %v2815 = vmax.f32 %v2496, 0.0
        %v2816 = vmax.f32 %v2497, 0.0
        %v2817 = vmax.f32 %v2765, 0.0
        %v2818 = vmax.f32 %v2575, 0.0
        %v2819 = vmax.f32 %v2576, 0.0
        %v2820 = vmax.f32 %v2577, 0.0
        %v2821 = vmax.f32 %v2769, 0.0
        %v2822 = vmax.f32 %v2655, 0.0
        %v2823 = vmax.f32 %v2656, 0.0
        %v2824 = vmax.f32 %v2657, 0.0
        %v2825 = vmax.f32 %v1656, 0.0
        %v2826 = vmax.f32 %v1658, 0.0
        %v2827 = vmax.f32 %v1745, 0.0
        %v2828 = vmax.f32 %v2773, 0.0
        %v2829 = vmax.f32 %v2731, 0.0
        %v2830 = vmax.f32 %v2732, 0.0
        %v2831 = vmax.f32 %v2733, 0.0
        %v2832 = vmax.f32 %v2711, 0.0
        %v2833 = vmax.f32 %v566, 0.0
        %v2834 = vmax.f32 %v568, 0.0
        %v2835 = vmax.f32 %v655, 0.0
        %v2836 = vmax.f32 %v2762, 0.0
        %v2837 = vmax.f32 %v2498, 0.0
        %v2838 = vmax.f32 %v2499, 0.0
        %v2839 = vmax.f32 %v2500, 0.0
        %v2840 = vmax.f32 %v2766, 0.0
        %v2841 = vmax.f32 %v2578, 0.0
        %v2842 = vmax.f32 %v2579, 0.0
        %v2843 = vmax.f32 %v2580, 0.0
        %v2844 = vmax.f32 %v2770, 0.0
        %v2845 = vmax.f32 %v2658, 0.0
        %v2846 = vmax.f32 %v2659, 0.0
        %v2847 = vmax.f32 %v2660, 0.0
        %v2848 = vmax.f32 %v1662, 0.0
        %v2849 = vmax.f32 %v1664, 0.0
        %v2850 = vmax.f32 %v1751, 0.0
        %v2851 = vmax.f32 %v2774, 0.0
        %v2852 = vmax.f32 %v2734, 0.0
        %v2853 = vmax.f32 %v2735, 0.0
        %v2854 = vmax.f32 %v2736, 0.0
        %v2855 = vmax.f32 %v2719, 0.0
        %v2856 = vmax.f32 %v572, 0.0
        %v2857 = vmax.f32 %v574, 0.0
        %v2858 = vmax.f32 %v661, 0.0
        %v2859 = vmax.f32 %v2763, 0.0
        %v2860 = vmax.f32 %v2501, 0.0
        %v2861 = vmax.f32 %v2502, 0.0
        %v2862 = vmax.f32 %v2503, 0.0
        %v2863 = vmax.f32 %v2767, 0.0
        %v2864 = vmax.f32 %v2581, 0.0
        %v2865 = vmax.f32 %v2582, 0.0
        %v2866 = vmax.f32 %v2583, 0.0
        %v2867 = vmax.f32 %v2771, 0.0
        %v2868 = vmax.f32 %v2661, 0.0
        %v2869 = vmax.f32 %v2662, 0.0
        %v2870 = vmax.f32 %v2663, 0.0
        %v2871 = vmax.f32 %v1668, 0.0
        %v2872 = vmax.f32 %v1670, 0.0
        %v2873 = vmax.f32 %v1757, 0.0
        %v2874 = vmax.f32 %v2775, 0.0
        %v2875 = vmax.f32 %v2737, 0.0
        %v2876 = vmax.f32 %v2738, 0.0
        %v2877 = vmax.f32 %v2739, 0.0
        %v2878 = vmax.f32 %v2727, 0.0
        %v2879 = vadd.f32 %v2787, %v2788
        %v2880 = vadd.f32 %v2879, %v2789
        %v2881 = vadd.f32 %v2880, %v2790
        %v2882 = vadd.f32 %v2881, %v2791
        %v2883 = vadd.f32 %v2882, %v2792
        %v2884 = vadd.f32 %v2883, %v2793
        %v2885 = vadd.f32 %v2884, %v2794
        %v2886 = vadd.f32 %v2885, %v2795
        %v2887 = vadd.f32 %v2886, %v2796
        %v2888 = vadd.f32 %v2887, %v2797
        %v2889 = vadd.f32 %v2888, %v2798
        %v2890 = vadd.f32 %v2889, %v2799
        %v2891 = vadd.f32 %v2890, %v2800
        %v2892 = vadd.f32 %v2891, %v2801
        %v2893 = vadd.f32 %v2892, %v2802
        %v2894 = vadd.f32 %v2893, %v2803
        %v2895 = vadd.f32 %v2894, %v2804
        %v2896 = vadd.f32 %v2895, %v2805
        %v2897 = vadd.f32 %v2896, %v2806
        %v2898 = vadd.f32 %v2897, %v2807
        %v2899 = vadd.f32 %v2898, %v2808
        %v2900 = vsel %vm474, %v2809, 0.0
        %v2901 = vadd.f32 %v2899, %v2900
        %2902 = vadd.xlane.f32.xlu0 %v2901
        %v2903 = vpop.xlane.xlu0 %2902
        %v2904 = vadd.f32 %v2810, %v2811
        %v2905 = vadd.f32 %v2904, %v2812
        %v2906 = vadd.f32 %v2905, %v2813
        %v2907 = vadd.f32 %v2906, %v2814
        %v2908 = vadd.f32 %v2907, %v2815
        %v2909 = vadd.f32 %v2908, %v2816
        %v2910 = vadd.f32 %v2909, %v2817
        %v2911 = vadd.f32 %v2910, %v2818
        %v2912 = vadd.f32 %v2911, %v2819
        %v2913 = vadd.f32 %v2912, %v2820
        %v2914 = vadd.f32 %v2913, %v2821
        %v2915 = vadd.f32 %v2914, %v2822
        %v2916 = vadd.f32 %v2915, %v2823
        %v2917 = vadd.f32 %v2916, %v2824
        %v2918 = vadd.f32 %v2917, %v2825
        %v2919 = vadd.f32 %v2918, %v2826
        %v2920 = vadd.f32 %v2919, %v2827
        %v2921 = vadd.f32 %v2920, %v2828
        %v2922 = vadd.f32 %v2921, %v2829
        %v2923 = vadd.f32 %v2922, %v2830
        %v2924 = vadd.f32 %v2923, %v2831
        %v2925 = vsel %vm474, %v2832, 0.0
        %v2926 = vadd.f32 %v2924, %v2925
        %2927 = vadd.xlane.f32.xlu0 %v2926
        %v2928 = vpop.xlane.xlu0 %2927
        %v2929 = vadd.f32 %v2833, %v2834
        %v2930 = vadd.f32 %v2929, %v2835
        %v2931 = vadd.f32 %v2930, %v2836
        %v2932 = vadd.f32 %v2931, %v2837
        %v2933 = vadd.f32 %v2932, %v2838
        %v2934 = vadd.f32 %v2933, %v2839
        %v2935 = vadd.f32 %v2934, %v2840
        %v2936 = vadd.f32 %v2935, %v2841
        %v2937 = vadd.f32 %v2936, %v2842
        %v2938 = vadd.f32 %v2937, %v2843
        %v2939 = vadd.f32 %v2938, %v2844
        %v2940 = vadd.f32 %v2939, %v2845
        %v2941 = vadd.f32 %v2940, %v2846
        %v2942 = vadd.f32 %v2941, %v2847
        %v2943 = vadd.f32 %v2942, %v2848
        %v2944 = vadd.f32 %v2943, %v2849
        %v2945 = vadd.f32 %v2944, %v2850
        %v2946 = vadd.f32 %v2945, %v2851
        %v2947 = vadd.f32 %v2946, %v2852
        %v2948 = vadd.f32 %v2947, %v2853
        %v2949 = vadd.f32 %v2948, %v2854
        %v2950 = vsel %vm474, %v2855, 0.0
        %v2951 = vadd.f32 %v2949, %v2950
        %2952 = vadd.xlane.f32.xlu0 %v2951
        %v2953 = vpop.xlane.xlu0 %2952
        %v2954 = vadd.f32 %v2856, %v2857
        %v2955 = vadd.f32 %v2954, %v2858
        %v2956 = vadd.f32 %v2955, %v2859
        %v2957 = vadd.f32 %v2956, %v2860
        %v2958 = vadd.f32 %v2957, %v2861
        %v2959 = vadd.f32 %v2958, %v2862
        %v2960 = vadd.f32 %v2959, %v2863
        %v2961 = vadd.f32 %v2960, %v2864
        %v2962 = vadd.f32 %v2961, %v2865
        %v2963 = vadd.f32 %v2962, %v2866
        %v2964 = vadd.f32 %v2963, %v2867
        %v2965 = vadd.f32 %v2964, %v2868
        %v2966 = vadd.f32 %v2965, %v2869
        %v2967 = vadd.f32 %v2966, %v2870
        %v2968 = vadd.f32 %v2967, %v2871
        %v2969 = vadd.f32 %v2968, %v2872
        %v2970 = vadd.f32 %v2969, %v2873
        %v2971 = vadd.f32 %v2970, %v2874
        %v2972 = vadd.f32 %v2971, %v2875
        %v2973 = vadd.f32 %v2972, %v2876
        %v2974 = vadd.f32 %v2973, %v2877
        %v2975 = vsel %vm474, %v2878, 0.0
        %v2976 = vadd.f32 %v2974, %v2975
        %2977 = vadd.xlane.f32.xlu0 %v2976
        %v2978 = vpop.xlane.xlu0 %2977
        %v2979 = vrcp.pop 2880.0
        %v2980 = vmul.f32 %v2903, %v2979
        %v2981 = vmul.f32 %v2928, %v2979
        %v2982 = vmul.f32 %v2953, %v2979
        %v2983 = vmul.f32 %v2978, %v2979
        %v2984 = vsub.f32 %v2787, %v2980
        %v2985 = vsub.f32 %v2788, %v2980
        %v2986 = vsub.f32 %v2789, %v2980
        %v2987 = vsub.f32 %v2790, %v2980
        %v2988 = vsub.f32 %v2791, %v2980
        %v2989 = vsub.f32 %v2792, %v2980
        %v2990 = vsub.f32 %v2793, %v2980
        %v2991 = vsub.f32 %v2794, %v2980
        %v2992 = vsub.f32 %v2795, %v2980
        %v2993 = vsub.f32 %v2796, %v2980
        %v2994 = vsub.f32 %v2797, %v2980
        %v2995 = vsub.f32 %v2798, %v2980
        %v2996 = vsub.f32 %v2799, %v2980
        %v2997 = vsub.f32 %v2800, %v2980
        %v2998 = vsub.f32 %v2801, %v2980
        %v2999 = vsub.f32 %v2802, %v2980
        %v3000 = vsub.f32 %v2803, %v2980
        %v3001 = vsub.f32 %v2804, %v2980
        %v3002 = vsub.f32 %v2805, %v2980
        %v3003 = vsub.f32 %v2806, %v2980
        %v3004 = vsub.f32 %v2807, %v2980
        %v3005 = vsub.f32 %v2808, %v2980
        %v3006 = vsub.f32 %v2809, %v2980
        %v3007 = vsub.f32 %v2810, %v2981
        %v3008 = vsub.f32 %v2811, %v2981
        %v3009 = vsub.f32 %v2812, %v2981
        %v3010 = vsub.f32 %v2813, %v2981
        %v3011 = vsub.f32 %v2814, %v2981
        %v3012 = vsub.f32 %v2815, %v2981
        %v3013 = vsub.f32 %v2816, %v2981
        %v3014 = vsub.f32 %v2817, %v2981
        %v3015 = vsub.f32 %v2818, %v2981
        %v3016 = vsub.f32 %v2819, %v2981
        %v3017 = vsub.f32 %v2820, %v2981
        %v3018 = vsub.f32 %v2821, %v2981
        %v3019 = vsub.f32 %v2822, %v2981
        %v3020 = vsub.f32 %v2823, %v2981
        %v3021 = vsub.f32 %v2824, %v2981
        %v3022 = vsub.f32 %v2825, %v2981
        %v3023 = vsub.f32 %v2826, %v2981
        %v3024 = vsub.f32 %v2827, %v2981
        %v3025 = vsub.f32 %v2828, %v2981
        %v3026 = vsub.f32 %v2829, %v2981
        %v3027 = vsub.f32 %v2830, %v2981
        %v3028 = vsub.f32 %v2831, %v2981
        %v3029 = vsub.f32 %v2832, %v2981
        %v3030 = vsub.f32 %v2833, %v2982
        %v3031 = vsub.f32 %v2834, %v2982
        %v3032 = vsub.f32 %v2835, %v2982
        %v3033 = vsub.f32 %v2836, %v2982
        %v3034 = vsub.f32 %v2837, %v2982
        %v3035 = vsub.f32 %v2838, %v2982
        %v3036 = vsub.f32 %v2839, %v2982
        %v3037 = vsub.f32 %v2840, %v2982
        %v3038 = vsub.f32 %v2841, %v2982
        %v3039 = vsub.f32 %v2842, %v2982
        %v3040 = vsub.f32 %v2843, %v2982
        %v3041 = vsub.f32 %v2844, %v2982
        %v3042 = vsub.f32 %v2845, %v2982
        %v3043 = vsub.f32 %v2846, %v2982
        %v3044 = vsub.f32 %v2847, %v2982
        %v3045 = vsub.f32 %v2848, %v2982
        %v3046 = vsub.f32 %v2849, %v2982
        %v3047 = vsub.f32 %v2850, %v2982
        %v3048 = vsub.f32 %v2851, %v2982
        %v3049 = vsub.f32 %v2852, %v2982
        %v3050 = vsub.f32 %v2853, %v2982
        %v3051 = vsub.f32 %v2854, %v2982
        %v3052 = vsub.f32 %v2855, %v2982
        %v3053 = vsub.f32 %v2856, %v2983
        %v3054 = vsub.f32 %v2857, %v2983
        %v3055 = vsub.f32 %v2858, %v2983
        %v3056 = vsub.f32 %v2859, %v2983
        %v3057 = vsub.f32 %v2860, %v2983
        %v3058 = vsub.f32 %v2861, %v2983
        %v3059 = vsub.f32 %v2862, %v2983
        %v3060 = vsub.f32 %v2863, %v2983
        %v3061 = vsub.f32 %v2864, %v2983
        %v3062 = vsub.f32 %v2865, %v2983
        %v3063 = vsub.f32 %v2866, %v2983
        %v3064 = vsub.f32 %v2867, %v2983
        %v3065 = vsub.f32 %v2868, %v2983
        %v3066 = vsub.f32 %v2869, %v2983
        %v3067 = vsub.f32 %v2870, %v2983
        %v3068 = vsub.f32 %v2871, %v2983
        %v3069 = vsub.f32 %v2872, %v2983
        %v3070 = vsub.f32 %v2873, %v2983
        %v3071 = vsub.f32 %v2874, %v2983
        %v3072 = vsub.f32 %v2875, %v2983
        %v3073 = vsub.f32 %v2876, %v2983
        %v3074 = vsub.f32 %v2877, %v2983
        %v3075 = vsub.f32 %v2878, %v2983
        %v3076 = vmul.f32 %v2984, %v2984
        %v3077 = vmul.f32 %v2985, %v2985
        %v3078 = vmul.f32 %v2986, %v2986
        %v3079 = vmul.f32 %v2987, %v2987
        %v3080 = vmul.f32 %v2988, %v2988
        %v3081 = vmul.f32 %v2989, %v2989
        %v3082 = vmul.f32 %v2990, %v2990
        %v3083 = vmul.f32 %v2991, %v2991
        %v3084 = vmul.f32 %v2992, %v2992
        %v3085 = vmul.f32 %v2993, %v2993
        %v3086 = vmul.f32 %v2994, %v2994
        %v3087 = vmul.f32 %v2995, %v2995
        %v3088 = vmul.f32 %v2996, %v2996
        %v3089 = vmul.f32 %v2997, %v2997
        %v3090 = vmul.f32 %v2998, %v2998
        %v3091 = vmul.f32 %v2999, %v2999
        %v3092 = vmul.f32 %v3000, %v3000
        %v3093 = vmul.f32 %v3001, %v3001
        %v3094 = vmul.f32 %v3002, %v3002
        %v3095 = vmul.f32 %v3003, %v3003
        %v3096 = vmul.f32 %v3004, %v3004
        %v3097 = vmul.f32 %v3005, %v3005
        %v3098 = vmul.f32 %v3006, %v3006
        %v3099 = vmul.f32 %v3007, %v3007
        %v3100 = vmul.f32 %v3008, %v3008
        %v3101 = vmul.f32 %v3009, %v3009
        %v3102 = vmul.f32 %v3010, %v3010
        %v3103 = vmul.f32 %v3011, %v3011
        %v3104 = vmul.f32 %v3012, %v3012
        %v3105 = vmul.f32 %v3013, %v3013
        %v3106 = vmul.f32 %v3014, %v3014
        %v3107 = vmul.f32 %v3015, %v3015
        %v3108 = vmul.f32 %v3016, %v3016
        %v3109 = vmul.f32 %v3017, %v3017
        %v3110 = vmul.f32 %v3018, %v3018
        %v3111 = vmul.f32 %v3019, %v3019
        %v3112 = vmul.f32 %v3020, %v3020
        %v3113 = vmul.f32 %v3021, %v3021
        %v3114 = vmul.f32 %v3022, %v3022
        %v3115 = vmul.f32 %v3023, %v3023
        %v3116 = vmul.f32 %v3024, %v3024
        %v3117 = vmul.f32 %v3025, %v3025
        %v3118 = vmul.f32 %v3026, %v3026
        %v3119 = vmul.f32 %v3027, %v3027
        %v3120 = vmul.f32 %v3028, %v3028
        %v3121 = vmul.f32 %v3029, %v3029
        %v3122 = vmul.f32 %v3030, %v3030
        %v3123 = vmul.f32 %v3031, %v3031
        %v3124 = vmul.f32 %v3032, %v3032
        %v3125 = vmul.f32 %v3033, %v3033
        %v3126 = vmul.f32 %v3034, %v3034
        %v3127 = vmul.f32 %v3035, %v3035
        %v3128 = vmul.f32 %v3036, %v3036
        %v3129 = vmul.f32 %v3037, %v3037
        %v3130 = vmul.f32 %v3038, %v3038
        %v3131 = vmul.f32 %v3039, %v3039
        %v3132 = vmul.f32 %v3040, %v3040
        %v3133 = vmul.f32 %v3041, %v3041
        %v3134 = vmul.f32 %v3042, %v3042
        %v3135 = vmul.f32 %v3043, %v3043
        %v3136 = vmul.f32 %v3044, %v3044
        %v3137 = vmul.f32 %v3045, %v3045
        %v3138 = vmul.f32 %v3046, %v3046
        %v3139 = vmul.f32 %v3047, %v3047
        %v3140 = vmul.f32 %v3048, %v3048
        %v3141 = vmul.f32 %v3049, %v3049
        %v3142 = vmul.f32 %v3050, %v3050
        %v3143 = vmul.f32 %v3051, %v3051
        %v3144 = vmul.f32 %v3052, %v3052
        %v3145 = vmul.f32 %v3053, %v3053
        %v3146 = vmul.f32 %v3054, %v3054
        %v3147 = vmul.f32 %v3055, %v3055
        %v3148 = vmul.f32 %v3056, %v3056
        %v3149 = vmul.f32 %v3057, %v3057
        %v3150 = vmul.f32 %v3058, %v3058
        %v3151 = vmul.f32 %v3059, %v3059
        %v3152 = vmul.f32 %v3060, %v3060
        %v3153 = vmul.f32 %v3061, %v3061
        %v3154 = vmul.f32 %v3062, %v3062
        %v3155 = vmul.f32 %v3063, %v3063
        %v3156 = vmul.f32 %v3064, %v3064
        %v3157 = vmul.f32 %v3065, %v3065
        %v3158 = vmul.f32 %v3066, %v3066
        %v3159 = vmul.f32 %v3067, %v3067
        %v3160 = vmul.f32 %v3068, %v3068
        %v3161 = vmul.f32 %v3069, %v3069
        %v3162 = vmul.f32 %v3070, %v3070
        %v3163 = vmul.f32 %v3071, %v3071
        %v3164 = vmul.f32 %v3072, %v3072
        %v3165 = vmul.f32 %v3073, %v3073
        %v3166 = vmul.f32 %v3074, %v3074
        %v3167 = vmul.f32 %v3075, %v3075
        %v3168 = vadd.f32 %v3076, %v3077
        %v3169 = vadd.f32 %v3168, %v3078
        %v3170 = vadd.f32 %v3169, %v3079
        %v3171 = vadd.f32 %v3170, %v3080
        %v3172 = vadd.f32 %v3171, %v3081
        %v3173 = vadd.f32 %v3172, %v3082
        %v3174 = vadd.f32 %v3173, %v3083
        %v3175 = vadd.f32 %v3174, %v3084
        %v3176 = vadd.f32 %v3175, %v3085
        %v3177 = vadd.f32 %v3176, %v3086
        %v3178 = vadd.f32 %v3177, %v3087
        %v3179 = vadd.f32 %v3178, %v3088
        %v3180 = vadd.f32 %v3179, %v3089
        %v3181 = vadd.f32 %v3180, %v3090
        %v3182 = vadd.f32 %v3181, %v3091
        %v3183 = vadd.f32 %v3182, %v3092
        %v3184 = vadd.f32 %v3183, %v3093
        %v3185 = vadd.f32 %v3184, %v3094
        %v3186 = vadd.f32 %v3185, %v3095
        %v3187 = vadd.f32 %v3186, %v3096
        %v3188 = vadd.f32 %v3187, %v3097
        %v3189 = vsel %vm474, %v3098, 0.0
        %v3190 = vadd.f32 %v3188, %v3189
        %3191 = vadd.xlane.f32.xlu0 %v3190
        %v3192 = vpop.xlane.xlu0 %3191
        %v3193 = vadd.f32 %v3099, %v3100
        %v3194 = vadd.f32 %v3193, %v3101
        %v3195 = vadd.f32 %v3194, %v3102
        %v3196 = vadd.f32 %v3195, %v3103
        %v3197 = vadd.f32 %v3196, %v3104
        %v3198 = vadd.f32 %v3197, %v3105
        %v3199 = vadd.f32 %v3198, %v3106
        %v3200 = vadd.f32 %v3199, %v3107
        %v3201 = vadd.f32 %v3200, %v3108
        %v3202 = vadd.f32 %v3201, %v3109
        %v3203 = vadd.f32 %v3202, %v3110
        %v3204 = vadd.f32 %v3203, %v3111
        %v3205 = vadd.f32 %v3204, %v3112
        %v3206 = vadd.f32 %v3205, %v3113
        %v3207 = vadd.f32 %v3206, %v3114
        %v3208 = vadd.f32 %v3207, %v3115
        %v3209 = vadd.f32 %v3208, %v3116
        %v3210 = vadd.f32 %v3209, %v3117
        %v3211 = vadd.f32 %v3210, %v3118
        %v3212 = vadd.f32 %v3211, %v3119
        %v3213 = vadd.f32 %v3212, %v3120
        %v3214 = vsel %vm474, %v3121, 0.0
        %v3215 = vadd.f32 %v3213, %v3214
        %3216 = vadd.xlane.f32.xlu0 %v3215
        %v3217 = vpop.xlane.xlu0 %3216
        %v3218 = vadd.f32 %v3122, %v3123
        %v3219 = vadd.f32 %v3218, %v3124
        %v3220 = vadd.f32 %v3219, %v3125
        %v3221 = vadd.f32 %v3220, %v3126
        %v3222 = vadd.f32 %v3221, %v3127
        %v3223 = vadd.f32 %v3222, %v3128
        %v3224 = vadd.f32 %v3223, %v3129
        %v3225 = vadd.f32 %v3224, %v3130
        %v3226 = vadd.f32 %v3225, %v3131
        %v3227 = vadd.f32 %v3226, %v3132
        %v3228 = vadd.f32 %v3227, %v3133
        %v3229 = vadd.f32 %v3228, %v3134
        %v3230 = vadd.f32 %v3229, %v3135
        %v3231 = vadd.f32 %v3230, %v3136
        %v3232 = vadd.f32 %v3231, %v3137
        %v3233 = vadd.f32 %v3232, %v3138
        %v3234 = vadd.f32 %v3233, %v3139
        %v3235 = vadd.f32 %v3234, %v3140
        %v3236 = vadd.f32 %v3235, %v3141
        %v3237 = vadd.f32 %v3236, %v3142
        %v3238 = vadd.f32 %v3237, %v3143
        %v3239 = vsel %vm474, %v3144, 0.0
        %v3240 = vadd.f32 %v3238, %v3239
        %3241 = vadd.xlane.f32.xlu0 %v3240
        %v3242 = vpop.xlane.xlu0 %3241
        %v3243 = vadd.f32 %v3145, %v3146
        %v3244 = vadd.f32 %v3243, %v3147
        %v3245 = vadd.f32 %v3244, %v3148
        %v3246 = vadd.f32 %v3245, %v3149
        %v3247 = vadd.f32 %v3246, %v3150
        %v3248 = vadd.f32 %v3247, %v3151
        %v3249 = vadd.f32 %v3248, %v3152
        %v3250 = vadd.f32 %v3249, %v3153
        %v3251 = vadd.f32 %v3250, %v3154
        %v3252 = vadd.f32 %v3251, %v3155
        %v3253 = vadd.f32 %v3252, %v3156
        %v3254 = vadd.f32 %v3253, %v3157
        %v3255 = vadd.f32 %v3254, %v3158
        %v3256 = vadd.f32 %v3255, %v3159
        %v3257 = vadd.f32 %v3256, %v3160
        %v3258 = vadd.f32 %v3257, %v3161
        %v3259 = vadd.f32 %v3258, %v3162
        %v3260 = vadd.f32 %v3259, %v3163
        %v3261 = vadd.f32 %v3260, %v3164
        %v3262 = vadd.f32 %v3261, %v3165
        %v3263 = vadd.f32 %v3262, %v3166
        %v3264 = vsel %vm474, %v3167, 0.0
        %v3265 = vadd.f32 %v3263, %v3264
        %3266 = vadd.xlane.f32.xlu0 %v3265
        %v3267 = vpop.xlane.xlu0 %3266
        %v3268 = vmul.f32 %v3192, %v2979
        %v3269 = vmul.f32 %v3217, %v2979
        %v3270 = vmul.f32 %v3242, %v2979
        %v3271 = vmul.f32 %v3267, %v2979
        %v3272 = vadd.f32 %v3268, 1e-05
        %v3273 = vadd.f32 %v3269, 1e-05
        %v3274 = vadd.f32 %v3270, 1e-05
        %v3275 = vadd.f32 %v3271, 1e-05
        %v3276 = vrsqrt.pop %v3272
        %v3277 = vrsqrt.pop %v3273
        %v3278 = vrsqrt.pop %v3274
        %v3279 = vrsqrt.pop %v3275
        %v3280 = vmul.f32 %v2984, %v3276
        %v3281 = vmul.f32 %v2985, %v3276
        %v3282 = vmul.f32 %v2986, %v3276
        %v3283 = vmul.f32 %v2987, %v3276
        %v3284 = vmul.f32 %v2988, %v3276
        %v3285 = vmul.f32 %v2989, %v3276
        %v3286 = vmul.f32 %v2990, %v3276
        %v3287 = vmul.f32 %v2991, %v3276
        %v3288 = vmul.f32 %v2992, %v3276
        %v3289 = vmul.f32 %v2993, %v3276
        %v3290 = vmul.f32 %v2994, %v3276
        %v3291 = vmul.f32 %v2995, %v3276
        %v3292 = vmul.f32 %v2996, %v3276
        %v3293 = vmul.f32 %v2997, %v3276
        %v3294 = vmul.f32 %v2998, %v3276
        %v3295 = vmul.f32 %v2999, %v3276
        %v3296 = vmul.f32 %v3000, %v3276
        %v3297 = vmul.f32 %v3001, %v3276
        %v3298 = vmul.f32 %v3002, %v3276
        %v3299 = vmul.f32 %v3003, %v3276
        %v3300 = vmul.f32 %v3004, %v3276
        %v3301 = vmul.f32 %v3005, %v3276
        %v3302 = vmul.f32 %v3006, %v3276
        %v3303 = vmul.f32 %v3007, %v3277
        %v3304 = vmul.f32 %v3008, %v3277
        %v3305 = vmul.f32 %v3009, %v3277
        %v3306 = vmul.f32 %v3010, %v3277
        %v3307 = vmul.f32 %v3011, %v3277
        %v3308 = vmul.f32 %v3012, %v3277
        %v3309 = vmul.f32 %v3013, %v3277
        %v3310 = vmul.f32 %v3014, %v3277
        %v3311 = vmul.f32 %v3015, %v3277
        %v3312 = vmul.f32 %v3016, %v3277
        %v3313 = vmul.f32 %v3017, %v3277
        %v3314 = vmul.f32 %v3018, %v3277
        %v3315 = vmul.f32 %v3019, %v3277
        %v3316 = vmul.f32 %v3020, %v3277
        %v3317 = vmul.f32 %v3021, %v3277
        %v3318 = vmul.f32 %v3022, %v3277
        %v3319 = vmul.f32 %v3023, %v3277
        %v3320 = vmul.f32 %v3024, %v3277
        %v3321 = vmul.f32 %v3025, %v3277
        %v3322 = vmul.f32 %v3026, %v3277
        %v3323 = vmul.f32 %v3027, %v3277
        %v3324 = vmul.f32 %v3028, %v3277
        %v3325 = vmul.f32 %v3029, %v3277
        %v3326 = vmul.f32 %v3030, %v3278
        %v3327 = vmul.f32 %v3031, %v3278
        %v3328 = vmul.f32 %v3032, %v3278
        %v3329 = vmul.f32 %v3033, %v3278
        %v3330 = vmul.f32 %v3034, %v3278
        %v3331 = vmul.f32 %v3035, %v3278
        %v3332 = vmul.f32 %v3036, %v3278
        %v3333 = vmul.f32 %v3037, %v3278
        %v3334 = vmul.f32 %v3038, %v3278
        %v3335 = vmul.f32 %v3039, %v3278
        %v3336 = vmul.f32 %v3040, %v3278
        %v3337 = vmul.f32 %v3041, %v3278
        %v3338 = vmul.f32 %v3042, %v3278
        %v3339 = vmul.f32 %v3043, %v3278
        %v3340 = vmul.f32 %v3044, %v3278
        %v3341 = vmul.f32 %v3045, %v3278
        %v3342 = vmul.f32 %v3046, %v3278
        %v3343 = vmul.f32 %v3047, %v3278
        %v3344 = vmul.f32 %v3048, %v3278
        %v3345 = vmul.f32 %v3049, %v3278
        %v3346 = vmul.f32 %v3050, %v3278
        %v3347 = vmul.f32 %v3051, %v3278
        %v3348 = vmul.f32 %v3052, %v3278
        %v3349 = vmul.f32 %v3053, %v3279
        %v3350 = vmul.f32 %v3054, %v3279
        %v3351 = vmul.f32 %v3055, %v3279
        %v3352 = vmul.f32 %v3056, %v3279
        %v3353 = vmul.f32 %v3057, %v3279
        %v3354 = vmul.f32 %v3058, %v3279
        %v3355 = vmul.f32 %v3059, %v3279
        %v3356 = vmul.f32 %v3060, %v3279
        %v3357 = vmul.f32 %v3061, %v3279
        %v3358 = vmul.f32 %v3062, %v3279
        %v3359 = vmul.f32 %v3063, %v3279
        %v3360 = vmul.f32 %v3064, %v3279
        %v3361 = vmul.f32 %v3065, %v3279
        %v3362 = vmul.f32 %v3066, %v3279
        %v3363 = vmul.f32 %v3067, %v3279
        %v3364 = vmul.f32 %v3068, %v3279
        %v3365 = vmul.f32 %v3069, %v3279
        %v3366 = vmul.f32 %v3070, %v3279
        %v3367 = vmul.f32 %v3071, %v3279
        %v3368 = vmul.f32 %v3072, %v3279
        %v3369 = vmul.f32 %v3073, %v3279
        %v3370 = vmul.f32 %v3074, %v3279
        %v3371 = vmul.f32 %v3075, %v3279
        %v3375 = vlaneseq
        %v3376 = vshrl.u32 %v3375, 7
        %v3377 = vsub.s32 0, %v3376
        %v3378 = vrot.slane %v2776, %v3377
        %v3379 = vlaneseq
        %v3380 = vshrl.u32 %v3379, 7
        %v3381 = vsub.s32 1, %v3380
        %v3382 = vrot.slane %v2776, %v3381
        %v3383 = vlaneseq
        %v3384 = vshrl.u32 %v3383, 7
        %v3385 = vsub.s32 2, %v3384
        %v3386 = vrot.slane %v2776, %v3385
        %v3387 = vlaneseq
        %v3388 = vshrl.u32 %v3387, 7
        %v3389 = vsub.s32 3, %v3388
        %v3390 = vrot.slane %v2776, %v3389
        %v3391 = vlaneseq
        %v3392 = vshrl.u32 %v3391, 7
        %v3393 = vsub.s32 4, %v3392
        %v3394 = vrot.slane %v2776, %v3393
        %v3395 = vlaneseq
        %v3396 = vshrl.u32 %v3395, 7
        %v3397 = vsub.s32 5, %v3396
        %v3398 = vrot.slane %v2776, %v3397
        %v3399 = vlaneseq
        %v3400 = vshrl.u32 %v3399, 7
        %v3401 = vsub.s32 6, %v3400
        %v3402 = vrot.slane %v2776, %v3401
        %v3403 = vlaneseq
        %v3404 = vshrl.u32 %v3403, 7
        %v3405 = vsub.s32 7, %v3404
        %v3406 = vrot.slane %v2776, %v3405
        %v3407 = vlaneseq
        %v3408 = vshrl.u32 %v3407, 7
        %v3409 = vsub.s32 0, %v3408
        %v3410 = vrot.slane %v2778, %v3409
        %v3411 = vlaneseq
        %v3412 = vshrl.u32 %v3411, 7
        %v3413 = vsub.s32 1, %v3412
        %v3414 = vrot.slane %v2778, %v3413
        %v3415 = vlaneseq
        %v3416 = vshrl.u32 %v3415, 7
        %v3417 = vsub.s32 2, %v3416
        %v3418 = vrot.slane %v2778, %v3417
        %v3419 = vlaneseq
        %v3420 = vshrl.u32 %v3419, 7
        %v3421 = vsub.s32 3, %v3420
        %v3422 = vrot.slane %v2778, %v3421
        %v3423 = vlaneseq
        %v3424 = vshrl.u32 %v3423, 7
        %v3425 = vsub.s32 4, %v3424
        %v3426 = vrot.slane %v2778, %v3425
        %v3427 = vlaneseq
        %v3428 = vshrl.u32 %v3427, 7
        %v3429 = vsub.s32 5, %v3428
        %v3430 = vrot.slane %v2778, %v3429
        %v3431 = vlaneseq
        %v3432 = vshrl.u32 %v3431, 7
        %v3433 = vsub.s32 6, %v3432
        %v3434 = vrot.slane %v2778, %v3433
        %v3435 = vlaneseq
        %v3436 = vshrl.u32 %v3435, 7
        %v3437 = vsub.s32 7, %v3436
        %v3438 = vrot.slane %v2778, %v3437
        %v3439 = vlaneseq
        %v3440 = vshrl.u32 %v3439, 7
        %v3441 = vsub.s32 0, %v3440
        %v3442 = vrot.slane %v2780, %v3441
        %v3443 = vlaneseq
        %v3444 = vshrl.u32 %v3443, 7
        %v3445 = vsub.s32 1, %v3444
        %v3446 = vrot.slane %v2780, %v3445
        %v3447 = vlaneseq
        %v3448 = vshrl.u32 %v3447, 7
        %v3449 = vsub.s32 2, %v3448
        %v3450 = vrot.slane %v2780, %v3449
        %v3451 = vlaneseq
        %v3452 = vshrl.u32 %v3451, 7
        %v3453 = vsub.s32 3, %v3452
        %v3454 = vrot.slane %v2780, %v3453
        %v3455 = vlaneseq
        %v3456 = vshrl.u32 %v3455, 7
        %v3457 = vsub.s32 4, %v3456
        %v3458 = vrot.slane %v2780, %v3457
        %v3459 = vlaneseq
        %v3460 = vshrl.u32 %v3459, 7
        %v3461 = vsub.s32 5, %v3460
        %v3462 = vrot.slane %v2780, %v3461
        %v3463 = vlaneseq
        %v3464 = vshrl.u32 %v3463, 7
        %v3465 = vsub.s32 6, %v3464
        %v3466 = vrot.slane %v2780, %v3465
        %v3490 = vmul.f32 %v3280, %v3378
        %v3491 = vmul.f32 %v3281, %v3382
        %v3492 = vmul.f32 %v3282, %v3386
        %v3493 = vmul.f32 %v3283, %v3390
        %v3494 = vmul.f32 %v3284, %v3394
        %v3495 = vmul.f32 %v3285, %v3398
        %v3496 = vmul.f32 %v3286, %v3402
        %v3497 = vmul.f32 %v3287, %v3406
        %v3498 = vmul.f32 %v3288, %v3410
        %v3499 = vmul.f32 %v3289, %v3414
        %v3500 = vmul.f32 %v3290, %v3418
        %v3501 = vmul.f32 %v3291, %v3422
        %v3502 = vmul.f32 %v3292, %v3426
        %v3503 = vmul.f32 %v3293, %v3430
        %v3504 = vmul.f32 %v3294, %v3434
        %v3505 = vmul.f32 %v3295, %v3438
        %v3506 = vmul.f32 %v3296, %v3442
        %v3507 = vmul.f32 %v3297, %v3446
        %v3508 = vmul.f32 %v3298, %v3450
        %v3509 = vmul.f32 %v3299, %v3454
        %v3510 = vmul.f32 %v3300, %v3458
        %v3511 = vmul.f32 %v3301, %v3462
        %v3512 = vmul.f32 %v3302, %v3466
        %v3513 = vmul.f32 %v3303, %v3378
        %v3514 = vmul.f32 %v3304, %v3382
        %v3515 = vmul.f32 %v3305, %v3386
        %v3516 = vmul.f32 %v3306, %v3390
        %v3517 = vmul.f32 %v3307, %v3394
        %v3518 = vmul.f32 %v3308, %v3398
        %v3519 = vmul.f32 %v3309, %v3402
        %v3520 = vmul.f32 %v3310, %v3406
        %v3521 = vmul.f32 %v3311, %v3410
        %v3522 = vmul.f32 %v3312, %v3414
        %v3523 = vmul.f32 %v3313, %v3418
        %v3524 = vmul.f32 %v3314, %v3422
        %v3525 = vmul.f32 %v3315, %v3426
        %v3526 = vmul.f32 %v3316, %v3430
        %v3527 = vmul.f32 %v3317, %v3434
        %v3528 = vmul.f32 %v3318, %v3438
        %v3529 = vmul.f32 %v3319, %v3442
        %v3530 = vmul.f32 %v3320, %v3446
        %v3531 = vmul.f32 %v3321, %v3450
        %v3532 = vmul.f32 %v3322, %v3454
        %v3533 = vmul.f32 %v3323, %v3458
        %v3534 = vmul.f32 %v3324, %v3462
        %v3535 = vmul.f32 %v3325, %v3466
        %v3536 = vmul.f32 %v3326, %v3378
        %v3537 = vmul.f32 %v3327, %v3382
        %v3538 = vmul.f32 %v3328, %v3386
        %v3539 = vmul.f32 %v3329, %v3390
        %v3540 = vmul.f32 %v3330, %v3394
        %v3541 = vmul.f32 %v3331, %v3398
        %v3542 = vmul.f32 %v3332, %v3402
        %v3543 = vmul.f32 %v3333, %v3406
        %v3544 = vmul.f32 %v3334, %v3410
        %v3545 = vmul.f32 %v3335, %v3414
        %v3546 = vmul.f32 %v3336, %v3418
        %v3547 = vmul.f32 %v3337, %v3422
        %v3548 = vmul.f32 %v3338, %v3426
        %v3549 = vmul.f32 %v3339, %v3430
        %v3550 = vmul.f32 %v3340, %v3434
        %v3551 = vmul.f32 %v3341, %v3438
        %v3552 = vmul.f32 %v3342, %v3442
        %v3553 = vmul.f32 %v3343, %v3446
        %v3554 = vmul.f32 %v3344, %v3450
        %v3555 = vmul.f32 %v3345, %v3454
        %v3556 = vmul.f32 %v3346, %v3458
        %v3557 = vmul.f32 %v3347, %v3462
        %v3558 = vmul.f32 %v3348, %v3466
        %v3559 = vmul.f32 %v3349, %v3378
        %v3560 = vmul.f32 %v3350, %v3382
        %v3561 = vmul.f32 %v3351, %v3386
        %v3562 = vmul.f32 %v3352, %v3390
        %v3563 = vmul.f32 %v3353, %v3394
        %v3564 = vmul.f32 %v3354, %v3398
        %v3565 = vmul.f32 %v3355, %v3402
        %v3566 = vmul.f32 %v3356, %v3406
        %v3567 = vmul.f32 %v3357, %v3410
        %v3568 = vmul.f32 %v3358, %v3414
        %v3569 = vmul.f32 %v3359, %v3418
        %v3570 = vmul.f32 %v3360, %v3422
        %v3571 = vmul.f32 %v3361, %v3426
        %v3572 = vmul.f32 %v3362, %v3430
        %v3573 = vmul.f32 %v3363, %v3434
        %v3574 = vmul.f32 %v3364, %v3438
        %v3575 = vmul.f32 %v3365, %v3442
        %v3576 = vmul.f32 %v3366, %v3446
        %v3577 = vmul.f32 %v3367, %v3450
        %v3578 = vmul.f32 %v3368, %v3454
        %v3579 = vmul.f32 %v3369, %v3458
        %v3580 = vmul.f32 %v3370, %v3462
        %v3581 = vmul.f32 %v3371, %v3466
        %v3585 = vlaneseq
        %v3586 = vshrl.u32 %v3585, 7
        %v3587 = vsub.s32 0, %v3586
        %v3588 = vrot.slane %v2782, %v3587
        %v3589 = vlaneseq
        %v3590 = vshrl.u32 %v3589, 7
        %v3591 = vsub.s32 1, %v3590
        %v3592 = vrot.slane %v2782, %v3591
        %v3593 = vlaneseq
        %v3594 = vshrl.u32 %v3593, 7
        %v3595 = vsub.s32 2, %v3594
        %v3596 = vrot.slane %v2782, %v3595
        %v3597 = vlaneseq
        %v3598 = vshrl.u32 %v3597, 7
        %v3599 = vsub.s32 3, %v3598
        %v3600 = vrot.slane %v2782, %v3599
        %v3601 = vlaneseq
        %v3602 = vshrl.u32 %v3601, 7
        %v3603 = vsub.s32 4, %v3602
        %v3604 = vrot.slane %v2782, %v3603
        %v3605 = vlaneseq
        %v3606 = vshrl.u32 %v3605, 7
        %v3607 = vsub.s32 5, %v3606
        %v3608 = vrot.slane %v2782, %v3607
        %v3609 = vlaneseq
        %v3610 = vshrl.u32 %v3609, 7
        %v3611 = vsub.s32 6, %v3610
        %v3612 = vrot.slane %v2782, %v3611
        %v3613 = vlaneseq
        %v3614 = vshrl.u32 %v3613, 7
        %v3615 = vsub.s32 7, %v3614
        %v3616 = vrot.slane %v2782, %v3615
        %v3617 = vlaneseq
        %v3618 = vshrl.u32 %v3617, 7
        %v3619 = vsub.s32 0, %v3618
        %v3620 = vrot.slane %v2784, %v3619
        %v3621 = vlaneseq
        %v3622 = vshrl.u32 %v3621, 7
        %v3623 = vsub.s32 1, %v3622
        %v3624 = vrot.slane %v2784, %v3623
        %v3625 = vlaneseq
        %v3626 = vshrl.u32 %v3625, 7
        %v3627 = vsub.s32 2, %v3626
        %v3628 = vrot.slane %v2784, %v3627
        %v3629 = vlaneseq
        %v3630 = vshrl.u32 %v3629, 7
        %v3631 = vsub.s32 3, %v3630
        %v3632 = vrot.slane %v2784, %v3631
        %v3633 = vlaneseq
        %v3634 = vshrl.u32 %v3633, 7
        %v3635 = vsub.s32 4, %v3634
        %v3636 = vrot.slane %v2784, %v3635
        %v3637 = vlaneseq
        %v3638 = vshrl.u32 %v3637, 7
        %v3639 = vsub.s32 5, %v3638
        %v3640 = vrot.slane %v2784, %v3639
        %v3641 = vlaneseq
        %v3642 = vshrl.u32 %v3641, 7
        %v3643 = vsub.s32 6, %v3642
        %v3644 = vrot.slane %v2784, %v3643
        %v3645 = vlaneseq
        %v3646 = vshrl.u32 %v3645, 7
        %v3647 = vsub.s32 7, %v3646
        %v3648 = vrot.slane %v2784, %v3647
        %v3649 = vlaneseq
        %v3650 = vshrl.u32 %v3649, 7
        %v3651 = vsub.s32 0, %v3650
        %v3652 = vrot.slane %v2786, %v3651
        %v3653 = vlaneseq
        %v3654 = vshrl.u32 %v3653, 7
        %v3655 = vsub.s32 1, %v3654
        %v3656 = vrot.slane %v2786, %v3655
        %v3657 = vlaneseq
        %v3658 = vshrl.u32 %v3657, 7
        %v3659 = vsub.s32 2, %v3658
        %v3660 = vrot.slane %v2786, %v3659
        %v3661 = vlaneseq
        %v3662 = vshrl.u32 %v3661, 7
        %v3663 = vsub.s32 3, %v3662
        %v3664 = vrot.slane %v2786, %v3663
        %v3665 = vlaneseq
        %v3666 = vshrl.u32 %v3665, 7
        %v3667 = vsub.s32 4, %v3666
        %v3668 = vrot.slane %v2786, %v3667
        %v3669 = vlaneseq
        %v3670 = vshrl.u32 %v3669, 7
        %v3671 = vsub.s32 5, %v3670
        %v3672 = vrot.slane %v2786, %v3671
        %v3673 = vlaneseq
        %v3674 = vshrl.u32 %v3673, 7
        %v3675 = vsub.s32 6, %v3674
        %v3676 = vrot.slane %v2786, %v3675
        %v3700 = vadd.f32 %v3490, %v3588
        %v3701 = vadd.f32 %v3491, %v3592
        %v3702 = vadd.f32 %v3492, %v3596
        %v3703 = vadd.f32 %v3493, %v3600
        %v3704 = vadd.f32 %v3494, %v3604
        %v3705 = vadd.f32 %v3495, %v3608
        %v3706 = vadd.f32 %v3496, %v3612
        %v3707 = vadd.f32 %v3497, %v3616
        %v3708 = vadd.f32 %v3498, %v3620
        %v3709 = vadd.f32 %v3499, %v3624
        %v3710 = vadd.f32 %v3500, %v3628
        %v3711 = vadd.f32 %v3501, %v3632
        %v3712 = vadd.f32 %v3502, %v3636
        %v3713 = vadd.f32 %v3503, %v3640
        %v3714 = vadd.f32 %v3504, %v3644
        %v3715 = vadd.f32 %v3505, %v3648
        %v3716 = vadd.f32 %v3506, %v3652
        %v3717 = vadd.f32 %v3507, %v3656
        %v3718 = vadd.f32 %v3508, %v3660
        %v3719 = vadd.f32 %v3509, %v3664
        %v3720 = vadd.f32 %v3510, %v3668
        %v3721 = vadd.f32 %v3511, %v3672
        %v3722 = vadd.f32 %v3512, %v3676
        %v3723 = vadd.f32 %v3513, %v3588
        %v3724 = vadd.f32 %v3514, %v3592
        %v3725 = vadd.f32 %v3515, %v3596
        %v3726 = vadd.f32 %v3516, %v3600
        %v3727 = vadd.f32 %v3517, %v3604
        %v3728 = vadd.f32 %v3518, %v3608
        %v3729 = vadd.f32 %v3519, %v3612
        %v3730 = vadd.f32 %v3520, %v3616
        %v3731 = vadd.f32 %v3521, %v3620
        %v3732 = vadd.f32 %v3522, %v3624
        %v3733 = vadd.f32 %v3523, %v3628
        %v3734 = vadd.f32 %v3524, %v3632
        %v3735 = vadd.f32 %v3525, %v3636
        %v3736 = vadd.f32 %v3526, %v3640
        %v3737 = vadd.f32 %v3527, %v3644
        %v3738 = vadd.f32 %v3528, %v3648
        %v3739 = vadd.f32 %v3529, %v3652
        %v3740 = vadd.f32 %v3530, %v3656
        %v3741 = vadd.f32 %v3531, %v3660
        %v3742 = vadd.f32 %v3532, %v3664
        %v3743 = vadd.f32 %v3533, %v3668
        %v3744 = vadd.f32 %v3534, %v3672
        %v3745 = vadd.f32 %v3535, %v3676
        %v3746 = vadd.f32 %v3536, %v3588
        %v3747 = vadd.f32 %v3537, %v3592
        %v3748 = vadd.f32 %v3538, %v3596
        %v3749 = vadd.f32 %v3539, %v3600
        %v3750 = vadd.f32 %v3540, %v3604
        %v3751 = vadd.f32 %v3541, %v3608
        %v3752 = vadd.f32 %v3542, %v3612
        %v3753 = vadd.f32 %v3543, %v3616
        %v3754 = vadd.f32 %v3544, %v3620
        %v3755 = vadd.f32 %v3545, %v3624
        %v3756 = vadd.f32 %v3546, %v3628
        %v3757 = vadd.f32 %v3547, %v3632
        %v3758 = vadd.f32 %v3548, %v3636
        %v3759 = vadd.f32 %v3549, %v3640
        %v3760 = vadd.f32 %v3550, %v3644
        %v3761 = vadd.f32 %v3551, %v3648
        %v3762 = vadd.f32 %v3552, %v3652
        %v3763 = vadd.f32 %v3553, %v3656
        %v3764 = vadd.f32 %v3554, %v3660
        %v3765 = vadd.f32 %v3555, %v3664
        %v3766 = vadd.f32 %v3556, %v3668
        %v3767 = vadd.f32 %v3557, %v3672
        %v3768 = vadd.f32 %v3558, %v3676
        %v3769 = vadd.f32 %v3559, %v3588
        %v3770 = vadd.f32 %v3560, %v3592
        %v3771 = vadd.f32 %v3561, %v3596
        %v3772 = vadd.f32 %v3562, %v3600
        %v3773 = vadd.f32 %v3563, %v3604
        %v3774 = vadd.f32 %v3564, %v3608
        %v3775 = vadd.f32 %v3565, %v3612
        %v3776 = vadd.f32 %v3566, %v3616
        %v3777 = vadd.f32 %v3567, %v3620
        %v3778 = vadd.f32 %v3568, %v3624
        %v3779 = vadd.f32 %v3569, %v3628
        %v3780 = vadd.f32 %v3570, %v3632
        %v3781 = vadd.f32 %v3571, %v3636
        %v3782 = vadd.f32 %v3572, %v3640
        %v3783 = vadd.f32 %v3573, %v3644
        %v3784 = vadd.f32 %v3574, %v3648
        %v3785 = vadd.f32 %v3575, %v3652
        %v3786 = vadd.f32 %v3576, %v3656
        %v3787 = vadd.f32 %v3577, %v3660
        %v3788 = vadd.f32 %v3578, %v3664
        %v3789 = vadd.f32 %v3579, %v3668
        %v3790 = vadd.f32 %v3580, %v3672
        %v3791 = vadd.f32 %v3581, %v3676
        %3812 = vrot.lane.b32.xlu0 %v3703, 32
        %v3813 = vpop.permute.xlu0 %3812
        %3814 = vrot.lane.b32.xlu0 %v3704, 32
        %v3815 = vpop.permute.xlu0 %3814
        %3816 = vrot.lane.b32.xlu0 %v3705, 32
        %v3817 = vpop.permute.xlu0 %3816
        %3818 = vrot.lane.b32.xlu0 %v3706, 32
        %v3819 = vpop.permute.xlu0 %3818
        %3820 = vrot.lane.b32.xlu0 %v3707, 32
        %v3821 = vpop.permute.xlu0 %3820
        %3822 = vrot.lane.b32.xlu0 %v3726, 32
        %v3823 = vpop.permute.xlu0 %3822
        %3824 = vrot.lane.b32.xlu0 %v3727, 32
        %v3825 = vpop.permute.xlu0 %3824
        %3826 = vrot.lane.b32.xlu0 %v3728, 32
        %v3827 = vpop.permute.xlu0 %3826
        %3828 = vrot.lane.b32.xlu0 %v3729, 32
        %v3829 = vpop.permute.xlu0 %3828
        %3830 = vrot.lane.b32.xlu0 %v3730, 32
        %v3831 = vpop.permute.xlu0 %3830
        %3832 = vrot.lane.b32.xlu0 %v3749, 32
        %v3833 = vpop.permute.xlu0 %3832
        %3834 = vrot.lane.b32.xlu0 %v3750, 32
        %v3835 = vpop.permute.xlu0 %3834
        %3836 = vrot.lane.b32.xlu0 %v3751, 32
        %v3837 = vpop.permute.xlu0 %3836
        %3838 = vrot.lane.b32.xlu0 %v3752, 32
        %v3839 = vpop.permute.xlu0 %3838
        %3840 = vrot.lane.b32.xlu0 %v3753, 32
        %v3841 = vpop.permute.xlu0 %3840
        %3842 = vrot.lane.b32.xlu0 %v3772, 32
        %v3843 = vpop.permute.xlu0 %3842
        %3844 = vrot.lane.b32.xlu0 %v3773, 32
        %v3845 = vpop.permute.xlu0 %3844
        %3846 = vrot.lane.b32.xlu0 %v3774, 32
        %v3847 = vpop.permute.xlu0 %3846
        %3848 = vrot.lane.b32.xlu0 %v3775, 32
        %v3849 = vpop.permute.xlu0 %3848
        %3850 = vrot.lane.b32.xlu0 %v3776, 32
        %v3851 = vpop.permute.xlu0 %3850
        %v3852 = vsel %vm1833, %v3813, %v3815
        %v3853 = vsel %vm1833, %v3815, %v3817
        %v3854 = vsel %vm1833, %v3817, %v3819
        %v3855 = vsel %vm1833, %v3819, %v3821
        %v3856 = vsel %vm1833, %v3823, %v3825
        %v3857 = vsel %vm1833, %v3825, %v3827
        %v3858 = vsel %vm1833, %v3827, %v3829
        %v3859 = vsel %vm1833, %v3829, %v3831
        %v3860 = vsel %vm1833, %v3833, %v3835
        %v3861 = vsel %vm1833, %v3835, %v3837
        %v3862 = vsel %vm1833, %v3837, %v3839
        %v3863 = vsel %vm1833, %v3839, %v3841
        %v3864 = vsel %vm1833, %v3843, %v3845
        %v3865 = vsel %vm1833, %v3845, %v3847
        %v3866 = vsel %vm1833, %v3847, %v3849
        %v3867 = vsel %vm1833, %v3849, %v3851
        %3900 = vrot.lane.b32.xlu0 %v3707, 64
        %v3901 = vpop.permute.xlu0 %3900
        %3902 = vrot.lane.b32.xlu0 %v3708, 64
        %v3903 = vpop.permute.xlu0 %3902
        %3904 = vrot.lane.b32.xlu0 %v3709, 64
        %v3905 = vpop.permute.xlu0 %3904
        %3906 = vrot.lane.b32.xlu0 %v3710, 64
        %v3907 = vpop.permute.xlu0 %3906
        %3908 = vrot.lane.b32.xlu0 %v3711, 64
        %v3909 = vpop.permute.xlu0 %3908
        %3910 = vrot.lane.b32.xlu0 %v3730, 64
        %v3911 = vpop.permute.xlu0 %3910
        %3912 = vrot.lane.b32.xlu0 %v3731, 64
        %v3913 = vpop.permute.xlu0 %3912
        %3914 = vrot.lane.b32.xlu0 %v3732, 64
        %v3915 = vpop.permute.xlu0 %3914
        %3916 = vrot.lane.b32.xlu0 %v3733, 64
        %v3917 = vpop.permute.xlu0 %3916
        %3918 = vrot.lane.b32.xlu0 %v3734, 64
        %v3919 = vpop.permute.xlu0 %3918
        %3920 = vrot.lane.b32.xlu0 %v3753, 64
        %v3921 = vpop.permute.xlu0 %3920
        %3922 = vrot.lane.b32.xlu0 %v3754, 64
        %v3923 = vpop.permute.xlu0 %3922
        %3924 = vrot.lane.b32.xlu0 %v3755, 64
        %v3925 = vpop.permute.xlu0 %3924
        %3926 = vrot.lane.b32.xlu0 %v3756, 64
        %v3927 = vpop.permute.xlu0 %3926
        %3928 = vrot.lane.b32.xlu0 %v3757, 64
        %v3929 = vpop.permute.xlu0 %3928
        %3930 = vrot.lane.b32.xlu0 %v3776, 64
        %v3931 = vpop.permute.xlu0 %3930
        %3932 = vrot.lane.b32.xlu0 %v3777, 64
        %v3933 = vpop.permute.xlu0 %3932
        %3934 = vrot.lane.b32.xlu0 %v3778, 64
        %v3935 = vpop.permute.xlu0 %3934
        %3936 = vrot.lane.b32.xlu0 %v3779, 64
        %v3937 = vpop.permute.xlu0 %3936
        %3938 = vrot.lane.b32.xlu0 %v3780, 64
        %v3939 = vpop.permute.xlu0 %3938
        %v3940 = vsel %vm474, %v3901, %v3903
        %v3941 = vsel %vm474, %v3903, %v3905
        %v3942 = vsel %vm474, %v3905, %v3907
        %v3943 = vsel %vm474, %v3907, %v3909
        %v3944 = vsel %vm474, %v3911, %v3913
        %v3945 = vsel %vm474, %v3913, %v3915
        %v3946 = vsel %vm474, %v3915, %v3917
        %v3947 = vsel %vm474, %v3917, %v3919
        %v3948 = vsel %vm474, %v3921, %v3923
        %v3949 = vsel %vm474, %v3923, %v3925
        %v3950 = vsel %vm474, %v3925, %v3927
        %v3951 = vsel %vm474, %v3927, %v3929
        %v3952 = vsel %vm474, %v3931, %v3933
        %v3953 = vsel %vm474, %v3933, %v3935
        %v3954 = vsel %vm474, %v3935, %v3937
        %v3955 = vsel %vm474, %v3937, %v3939
        %3984 = vrot.lane.b32.xlu0 %v3711, 96
        %v3985 = vpop.permute.xlu0 %3984
        %3986 = vrot.lane.b32.xlu0 %v3712, 96
        %v3987 = vpop.permute.xlu0 %3986
        %3988 = vrot.lane.b32.xlu0 %v3713, 96
        %v3989 = vpop.permute.xlu0 %3988
        %3990 = vrot.lane.b32.xlu0 %v3714, 96
        %v3991 = vpop.permute.xlu0 %3990
        %3992 = vrot.lane.b32.xlu0 %v3734, 96
        %v3993 = vpop.permute.xlu0 %3992
        %3994 = vrot.lane.b32.xlu0 %v3735, 96
        %v3995 = vpop.permute.xlu0 %3994
        %3996 = vrot.lane.b32.xlu0 %v3736, 96
        %v3997 = vpop.permute.xlu0 %3996
        %3998 = vrot.lane.b32.xlu0 %v3737, 96
        %v3999 = vpop.permute.xlu0 %3998
        %4000 = vrot.lane.b32.xlu0 %v3757, 96
        %v4001 = vpop.permute.xlu0 %4000
        %4002 = vrot.lane.b32.xlu0 %v3758, 96
        %v4003 = vpop.permute.xlu0 %4002
        %4004 = vrot.lane.b32.xlu0 %v3759, 96
        %v4005 = vpop.permute.xlu0 %4004
        %4006 = vrot.lane.b32.xlu0 %v3760, 96
        %v4007 = vpop.permute.xlu0 %4006
        %4008 = vrot.lane.b32.xlu0 %v3780, 96
        %v4009 = vpop.permute.xlu0 %4008
        %4010 = vrot.lane.b32.xlu0 %v3781, 96
        %v4011 = vpop.permute.xlu0 %4010
        %4012 = vrot.lane.b32.xlu0 %v3782, 96
        %v4013 = vpop.permute.xlu0 %4012
        %4014 = vrot.lane.b32.xlu0 %v3783, 96
        %v4015 = vpop.permute.xlu0 %4014
        %v4016 = vsel %vm2067, %v3985, %v3987
        %v4017 = vsel %vm2067, %v3987, %v3989
        %v4018 = vsel %vm2067, %v3989, %v3991
        %v4019 = vsel %vm2067, %v3993, %v3995
        %v4020 = vsel %vm2067, %v3995, %v3997
        %v4021 = vsel %vm2067, %v3997, %v3999
        %v4022 = vsel %vm2067, %v4001, %v4003
        %v4023 = vsel %vm2067, %v4003, %v4005
        %v4024 = vsel %vm2067, %v4005, %v4007
        %v4025 = vsel %vm2067, %v4009, %v4011
        %v4026 = vsel %vm2067, %v4011, %v4013
        %v4027 = vsel %vm2067, %v4013, %v4015
        %4064 = vrot.lane.b32.xlu0 %v3718, 32
        %v4065 = vpop.permute.xlu0 %4064
        %4066 = vrot.lane.b32.xlu0 %v3719, 32
        %v4067 = vpop.permute.xlu0 %4066
        %4068 = vrot.lane.b32.xlu0 %v3720, 32
        %v4069 = vpop.permute.xlu0 %4068
        %4070 = vrot.lane.b32.xlu0 %v3721, 32
        %v4071 = vpop.permute.xlu0 %4070
        %4072 = vrot.lane.b32.xlu0 %v3722, 32
        %v4073 = vpop.permute.xlu0 %4072
        %4074 = vrot.lane.b32.xlu0 %v3741, 32
        %v4075 = vpop.permute.xlu0 %4074
        %4076 = vrot.lane.b32.xlu0 %v3742, 32
        %v4077 = vpop.permute.xlu0 %4076
        %4078 = vrot.lane.b32.xlu0 %v3743, 32
        %v4079 = vpop.permute.xlu0 %4078
        %4080 = vrot.lane.b32.xlu0 %v3744, 32
        %v4081 = vpop.permute.xlu0 %4080
        %4082 = vrot.lane.b32.xlu0 %v3745, 32
        %v4083 = vpop.permute.xlu0 %4082
        %4084 = vrot.lane.b32.xlu0 %v3764, 32
        %v4085 = vpop.permute.xlu0 %4084
        %4086 = vrot.lane.b32.xlu0 %v3765, 32
        %v4087 = vpop.permute.xlu0 %4086
        %4088 = vrot.lane.b32.xlu0 %v3766, 32
        %v4089 = vpop.permute.xlu0 %4088
        %4090 = vrot.lane.b32.xlu0 %v3767, 32
        %v4091 = vpop.permute.xlu0 %4090
        %4092 = vrot.lane.b32.xlu0 %v3768, 32
        %v4093 = vpop.permute.xlu0 %4092
        %4094 = vrot.lane.b32.xlu0 %v3787, 32
        %v4095 = vpop.permute.xlu0 %4094
        %4096 = vrot.lane.b32.xlu0 %v3788, 32
        %v4097 = vpop.permute.xlu0 %4096
        %4098 = vrot.lane.b32.xlu0 %v3789, 32
        %v4099 = vpop.permute.xlu0 %4098
        %4100 = vrot.lane.b32.xlu0 %v3790, 32
        %v4101 = vpop.permute.xlu0 %4100
        %4102 = vrot.lane.b32.xlu0 %v3791, 32
        %v4103 = vpop.permute.xlu0 %4102
        %v4104 = vsel %vm1833, %v4065, %v4067
        %v4105 = vsel %vm1833, %v4067, %v4069
        %v4106 = vsel %vm1833, %v4069, %v4071
        %v4107 = vsel %vm1833, %v4071, %v4073
        %v4108 = vsel %vm1833, %v4075, %v4077
        %v4109 = vsel %vm1833, %v4077, %v4079
        %v4110 = vsel %vm1833, %v4079, %v4081
        %v4111 = vsel %vm1833, %v4081, %v4083
        %v4112 = vsel %vm1833, %v4085, %v4087
        %v4113 = vsel %vm1833, %v4087, %v4089
        %v4114 = vsel %vm1833, %v4089, %v4091
        %v4115 = vsel %vm1833, %v4091, %v4093
        %v4116 = vsel %vm1833, %v4095, %v4097
        %v4117 = vsel %vm1833, %v4097, %v4099
        %v4118 = vsel %vm1833, %v4099, %v4101
        %v4119 = vsel %vm1833, %v4101, %v4103
        %4148 = vrot.lane.b32.xlu0 %v4016, 1
        %v4149 = vpop.permute.xlu0 %4148
        %4150 = vrot.lane.b32.xlu0 %v4017, 1
        %v4151 = vpop.permute.xlu0 %4150
        %4152 = vrot.lane.b32.xlu0 %v4018, 1
        %v4153 = vpop.permute.xlu0 %4152
        %4154 = vrot.lane.b32.xlu0 %v3991, 1
        %v4155 = vpop.permute.xlu0 %4154
        %4156 = vrot.lane.b32.xlu0 %v4019, 1
        %v4157 = vpop.permute.xlu0 %4156
        %4158 = vrot.lane.b32.xlu0 %v4020, 1
        %v4159 = vpop.permute.xlu0 %4158
        %4160 = vrot.lane.b32.xlu0 %v4021, 1
        %v4161 = vpop.permute.xlu0 %4160
        %4162 = vrot.lane.b32.xlu0 %v3999, 1
        %v4163 = vpop.permute.xlu0 %4162
        %4164 = vrot.lane.b32.xlu0 %v4022, 1
        %v4165 = vpop.permute.xlu0 %4164
        %4166 = vrot.lane.b32.xlu0 %v4023, 1
        %v4167 = vpop.permute.xlu0 %4166
        %4168 = vrot.lane.b32.xlu0 %v4024, 1
        %v4169 = vpop.permute.xlu0 %4168
        %4170 = vrot.lane.b32.xlu0 %v4007, 1
        %v4171 = vpop.permute.xlu0 %4170
        %4172 = vrot.lane.b32.xlu0 %v4025, 1
        %v4173 = vpop.permute.xlu0 %4172
        %4174 = vrot.lane.b32.xlu0 %v4026, 1
        %v4175 = vpop.permute.xlu0 %4174
        %4176 = vrot.lane.b32.xlu0 %v4027, 1
        %v4177 = vpop.permute.xlu0 %4176
        %4178 = vrot.lane.b32.xlu0 %v4015, 1
        %v4179 = vpop.permute.xlu0 %4178
        %4180 = vrot.lane.b32.xlu0 %v3715, 1
        %v4181 = vpop.permute.xlu0 %4180
        %4182 = vrot.lane.b32.xlu0 %v3716, 1
        %v4183 = vpop.permute.xlu0 %4182
        %4184 = vrot.lane.b32.xlu0 %v3717, 1
        %v4185 = vpop.permute.xlu0 %4184
        %4186 = vrot.lane.b32.xlu0 %v3718, 1
        %v4187 = vpop.permute.xlu0 %4186
        %4188 = vrot.lane.b32.xlu0 %v3738, 1
        %v4189 = vpop.permute.xlu0 %4188
        %4190 = vrot.lane.b32.xlu0 %v3739, 1
        %v4191 = vpop.permute.xlu0 %4190
        %4192 = vrot.lane.b32.xlu0 %v3740, 1
        %v4193 = vpop.permute.xlu0 %4192
        %4194 = vrot.lane.b32.xlu0 %v3741, 1
        %v4195 = vpop.permute.xlu0 %4194
        %4196 = vrot.lane.b32.xlu0 %v3761, 1
        %v4197 = vpop.permute.xlu0 %4196
        %4198 = vrot.lane.b32.xlu0 %v3762, 1
        %v4199 = vpop.permute.xlu0 %4198
        %4200 = vrot.lane.b32.xlu0 %v3763, 1
        %v4201 = vpop.permute.xlu0 %4200
        %4202 = vrot.lane.b32.xlu0 %v3764, 1
        %v4203 = vpop.permute.xlu0 %4202
        %4204 = vrot.lane.b32.xlu0 %v3784, 1
        %v4205 = vpop.permute.xlu0 %4204
        %4206 = vrot.lane.b32.xlu0 %v3785, 1
        %v4207 = vpop.permute.xlu0 %4206
        %4208 = vrot.lane.b32.xlu0 %v3786, 1
        %v4209 = vpop.permute.xlu0 %4208
        %4210 = vrot.lane.b32.xlu0 %v3787, 1
        %v4211 = vpop.permute.xlu0 %4210
        %4212 = vrot.lane.b32.xlu0 %v4104, 1
        %v4213 = vpop.permute.xlu0 %4212
        %4214 = vrot.lane.b32.xlu0 %v4105, 1
        %v4215 = vpop.permute.xlu0 %4214
        %4216 = vrot.lane.b32.xlu0 %v4106, 1
        %v4217 = vpop.permute.xlu0 %4216
        %4218 = vrot.lane.b32.xlu0 %v4107, 1
        %v4219 = vpop.permute.xlu0 %4218
        %4220 = vrot.lane.b32.xlu0 %v4108, 1
        %v4221 = vpop.permute.xlu0 %4220
        %4222 = vrot.lane.b32.xlu0 %v4109, 1
        %v4223 = vpop.permute.xlu0 %4222
        %4224 = vrot.lane.b32.xlu0 %v4110, 1
        %v4225 = vpop.permute.xlu0 %4224
        %4226 = vrot.lane.b32.xlu0 %v4111, 1
        %v4227 = vpop.permute.xlu0 %4226
        %4228 = vrot.lane.b32.xlu0 %v4112, 1
        %v4229 = vpop.permute.xlu0 %4228
        %4230 = vrot.lane.b32.xlu0 %v4113, 1
        %v4231 = vpop.permute.xlu0 %4230
        %4232 = vrot.lane.b32.xlu0 %v4114, 1
        %v4233 = vpop.permute.xlu0 %4232
        %4234 = vrot.lane.b32.xlu0 %v4115, 1
        %v4235 = vpop.permute.xlu0 %4234
        %4236 = vrot.lane.b32.xlu0 %v4116, 1
        %v4237 = vpop.permute.xlu0 %4236
        %4238 = vrot.lane.b32.xlu0 %v4117, 1
        %v4239 = vpop.permute.xlu0 %4238
        %4240 = vrot.lane.b32.xlu0 %v4118, 1
        %v4241 = vpop.permute.xlu0 %4240
        %4242 = vrot.lane.b32.xlu0 %v4119, 1
        %v4243 = vpop.permute.xlu0 %4242
        %vm4244 = vcmask 7168
        %v4245 = vsel %vm4244, %v4149, %v4151
        %v4246 = vsel %vm4244, %v4151, %v4153
        %v4247 = vsel %vm4244, %v4153, %v4155
        %v4248 = vsel %vm4244, %v4157, %v4159
        %v4249 = vsel %vm4244, %v4159, %v4161
        %v4250 = vsel %vm4244, %v4161, %v4163
        %v4251 = vsel %vm4244, %v4165, %v4167
        %v4252 = vsel %vm4244, %v4167, %v4169
        %v4253 = vsel %vm4244, %v4169, %v4171
        %v4254 = vsel %vm4244, %v4173, %v4175
        %v4255 = vsel %vm4244, %v4175, %v4177
        %v4256 = vsel %vm4244, %v4177, %v4179
        %v4257 = vsel %vm4244, %v4181, %v4183
        %v4258 = vsel %vm4244, %v4183, %v4185
        %v4259 = vsel %vm4244, %v4185, %v4187
        %v4260 = vsel %vm4244, %v4189, %v4191
        %v4261 = vsel %vm4244, %v4191, %v4193
        %v4262 = vsel %vm4244, %v4193, %v4195
        %v4263 = vsel %vm4244, %v4197, %v4199
        %v4264 = vsel %vm4244, %v4199, %v4201
        %v4265 = vsel %vm4244, %v4201, %v4203
        %v4266 = vsel %vm4244, %v4205, %v4207
        %v4267 = vsel %vm4244, %v4207, %v4209
        %v4268 = vsel %vm4244, %v4209, %v4211
        %v4269 = vsel %vm4244, %v4213, %v4215
        %v4270 = vsel %vm4244, %v4215, %v4217
        %v4271 = vsel %vm4244, %v4217, %v4219
        %v4272 = vsel %vm4244, %v4221, %v4223
        %v4273 = vsel %vm4244, %v4223, %v4225
        %v4274 = vsel %vm4244, %v4225, %v4227
        %v4275 = vsel %vm4244, %v4229, %v4231
        %v4276 = vsel %vm4244, %v4231, %v4233
        %v4277 = vsel %vm4244, %v4233, %v4235
        %v4278 = vsel %vm4244, %v4237, %v4239
        %v4279 = vsel %vm4244, %v4239, %v4241
        %v4280 = vsel %vm4244, %v4241, %v4243
        %v4329 = vsel %vm4244, 0.0, %v4149
        %v4330 = vsel %vm4244, 0.0, %v4157
        %v4331 = vsel %vm4244, 0.0, %v4165
        %v4332 = vsel %vm4244, 0.0, %v4173
        %v4333 = vsel %vm4244, 0.0, %v4181
        %v4334 = vsel %vm4244, 0.0, %v4189
        %v4335 = vsel %vm4244, 0.0, %v4197
        %v4336 = vsel %vm4244, 0.0, %v4205
        %v4337 = vsel %vm4244, 0.0, %v4213
        %v4338 = vsel %vm4244, 0.0, %v4221
        %v4339 = vsel %vm4244, 0.0, %v4229
        %v4340 = vsel %vm4244, 0.0, %v4237
        %4353 = vrot.lane.b32.xlu0 %v3700, 127
        %v4354 = vpop.permute.xlu0 %4353
        %4355 = vrot.lane.b32.xlu0 %v3701, 127
        %v4356 = vpop.permute.xlu0 %4355
        %4357 = vrot.lane.b32.xlu0 %v3702, 127
        %v4358 = vpop.permute.xlu0 %4357
        %4359 = vrot.lane.b32.xlu0 %v3703, 127
        %v4360 = vpop.permute.xlu0 %4359
        %4361 = vrot.lane.b32.xlu0 %v3723, 127
        %v4362 = vpop.permute.xlu0 %4361
        %4363 = vrot.lane.b32.xlu0 %v3724, 127
        %v4364 = vpop.permute.xlu0 %4363
        %4365 = vrot.lane.b32.xlu0 %v3725, 127
        %v4366 = vpop.permute.xlu0 %4365
        %4367 = vrot.lane.b32.xlu0 %v3726, 127
        %v4368 = vpop.permute.xlu0 %4367
        %4369 = vrot.lane.b32.xlu0 %v3746, 127
        %v4370 = vpop.permute.xlu0 %4369
        %4371 = vrot.lane.b32.xlu0 %v3747, 127
        %v4372 = vpop.permute.xlu0 %4371
        %4373 = vrot.lane.b32.xlu0 %v3748, 127
        %v4374 = vpop.permute.xlu0 %4373
        %4375 = vrot.lane.b32.xlu0 %v3749, 127
        %v4376 = vpop.permute.xlu0 %4375
        %4377 = vrot.lane.b32.xlu0 %v3769, 127
        %v4378 = vpop.permute.xlu0 %4377
        %4379 = vrot.lane.b32.xlu0 %v3770, 127
        %v4380 = vpop.permute.xlu0 %4379
        %4381 = vrot.lane.b32.xlu0 %v3771, 127
        %v4382 = vpop.permute.xlu0 %4381
        %4383 = vrot.lane.b32.xlu0 %v3772, 127
        %v4384 = vpop.permute.xlu0 %4383
        %4385 = vrot.lane.b32.xlu0 %v3852, 127
        %v4386 = vpop.permute.xlu0 %4385
        %4387 = vrot.lane.b32.xlu0 %v3853, 127
        %v4388 = vpop.permute.xlu0 %4387
        %4389 = vrot.lane.b32.xlu0 %v3854, 127
        %v4390 = vpop.permute.xlu0 %4389
        %4391 = vrot.lane.b32.xlu0 %v3855, 127
        %v4392 = vpop.permute.xlu0 %4391
        %4393 = vrot.lane.b32.xlu0 %v3856, 127
        %v4394 = vpop.permute.xlu0 %4393
        %4395 = vrot.lane.b32.xlu0 %v3857, 127
        %v4396 = vpop.permute.xlu0 %4395
        %4397 = vrot.lane.b32.xlu0 %v3858, 127
        %v4398 = vpop.permute.xlu0 %4397
        %4399 = vrot.lane.b32.xlu0 %v3859, 127
        %v4400 = vpop.permute.xlu0 %4399
        %4401 = vrot.lane.b32.xlu0 %v3860, 127
        %v4402 = vpop.permute.xlu0 %4401
        %4403 = vrot.lane.b32.xlu0 %v3861, 127
        %v4404 = vpop.permute.xlu0 %4403
        %4405 = vrot.lane.b32.xlu0 %v3862, 127
        %v4406 = vpop.permute.xlu0 %4405
        %4407 = vrot.lane.b32.xlu0 %v3863, 127
        %v4408 = vpop.permute.xlu0 %4407
        %4409 = vrot.lane.b32.xlu0 %v3864, 127
        %v4410 = vpop.permute.xlu0 %4409
        %4411 = vrot.lane.b32.xlu0 %v3865, 127
        %v4412 = vpop.permute.xlu0 %4411
        %4413 = vrot.lane.b32.xlu0 %v3866, 127
        %v4414 = vpop.permute.xlu0 %4413
        %4415 = vrot.lane.b32.xlu0 %v3867, 127
        %v4416 = vpop.permute.xlu0 %4415
        %4417 = vrot.lane.b32.xlu0 %v3940, 127
        %v4418 = vpop.permute.xlu0 %4417
        %4419 = vrot.lane.b32.xlu0 %v3941, 127
        %v4420 = vpop.permute.xlu0 %4419
        %4421 = vrot.lane.b32.xlu0 %v3942, 127
        %v4422 = vpop.permute.xlu0 %4421
        %4423 = vrot.lane.b32.xlu0 %v3943, 127
        %v4424 = vpop.permute.xlu0 %4423
        %4425 = vrot.lane.b32.xlu0 %v3944, 127
        %v4426 = vpop.permute.xlu0 %4425
        %4427 = vrot.lane.b32.xlu0 %v3945, 127
        %v4428 = vpop.permute.xlu0 %4427
        %4429 = vrot.lane.b32.xlu0 %v3946, 127
        %v4430 = vpop.permute.xlu0 %4429
        %4431 = vrot.lane.b32.xlu0 %v3947, 127
        %v4432 = vpop.permute.xlu0 %4431
        %4433 = vrot.lane.b32.xlu0 %v3948, 127
        %v4434 = vpop.permute.xlu0 %4433
        %4435 = vrot.lane.b32.xlu0 %v3949, 127
        %v4436 = vpop.permute.xlu0 %4435
        %4437 = vrot.lane.b32.xlu0 %v3950, 127
        %v4438 = vpop.permute.xlu0 %4437
        %4439 = vrot.lane.b32.xlu0 %v3951, 127
        %v4440 = vpop.permute.xlu0 %4439
        %4441 = vrot.lane.b32.xlu0 %v3952, 127
        %v4442 = vpop.permute.xlu0 %4441
        %4443 = vrot.lane.b32.xlu0 %v3953, 127
        %v4444 = vpop.permute.xlu0 %4443
        %4445 = vrot.lane.b32.xlu0 %v3954, 127
        %v4446 = vpop.permute.xlu0 %4445
        %4447 = vrot.lane.b32.xlu0 %v3955, 127
        %v4448 = vpop.permute.xlu0 %4447
        %v4449 = vsel %vm1982, %v4354, %v4356
        %v4450 = vsel %vm1982, %v4356, %v4358
        %v4451 = vsel %vm1982, %v4358, %v4360
        %v4452 = vsel %vm1982, %v4362, %v4364
        %v4453 = vsel %vm1982, %v4364, %v4366
        %v4454 = vsel %vm1982, %v4366, %v4368
        %v4455 = vsel %vm1982, %v4370, %v4372
        %v4456 = vsel %vm1982, %v4372, %v4374
        %v4457 = vsel %vm1982, %v4374, %v4376
        %v4458 = vsel %vm1982, %v4378, %v4380
        %v4459 = vsel %vm1982, %v4380, %v4382
        %v4460 = vsel %vm1982, %v4382, %v4384
        %v4461 = vsel %vm1982, %v4386, %v4388
        %v4462 = vsel %vm1982, %v4388, %v4390
        %v4463 = vsel %vm1982, %v4390, %v4392
        %v4464 = vsel %vm1982, %v4394, %v4396
        %v4465 = vsel %vm1982, %v4396, %v4398
        %v4466 = vsel %vm1982, %v4398, %v4400
        %v4467 = vsel %vm1982, %v4402, %v4404
        %v4468 = vsel %vm1982, %v4404, %v4406
        %v4469 = vsel %vm1982, %v4406, %v4408
        %v4470 = vsel %vm1982, %v4410, %v4412
        %v4471 = vsel %vm1982, %v4412, %v4414
        %v4472 = vsel %vm1982, %v4414, %v4416
        %v4473 = vsel %vm1982, %v4418, %v4420
        %v4474 = vsel %vm1982, %v4420, %v4422
        %v4475 = vsel %vm1982, %v4422, %v4424
        %v4476 = vsel %vm1982, %v4426, %v4428
        %v4477 = vsel %vm1982, %v4428, %v4430
        %v4478 = vsel %vm1982, %v4430, %v4432
        %v4479 = vsel %vm1982, %v4434, %v4436
        %v4480 = vsel %vm1982, %v4436, %v4438
        %v4481 = vsel %vm1982, %v4438, %v4440
        %v4482 = vsel %vm1982, %v4442, %v4444
        %v4483 = vsel %vm1982, %v4444, %v4446
        %v4484 = vsel %vm1982, %v4446, %v4448
        %vm4533 = vcmask 777216
        %v4534 = vsel %vm4533, %v4360, 0.0
        %v4535 = vsel %vm4533, %v4368, 0.0
        %v4536 = vsel %vm4533, %v4376, 0.0
        %v4537 = vsel %vm4533, %v4384, 0.0
        %v4538 = vsel %vm4533, %v4392, 0.0
        %v4539 = vsel %vm4533, %v4400, 0.0
        %v4540 = vsel %vm4533, %v4408, 0.0
        %v4541 = vsel %vm4533, %v4416, 0.0
        %v4542 = vsel %vm4533, %v4424, 0.0
        %v4543 = vsel %vm4533, %v4432, 0.0
        %v4544 = vsel %vm4533, %v4440, 0.0
        %v4545 = vsel %vm4533, %v4448, 0.0
        %v4546 = vld [vmem:[%s2] sm:$0xff]
        %v4547 = vld [vmem:[%s2 + $0x18] sm:$0xff]
        %v4548 = vld [vmem:[%s2 + $0x30] sm:$0xff]
        %v4549 = vld [vmem:[%s2 + $0x48] sm:$0xff]
        %v4550 = vld [vmem:[%s2 + $0x60] sm:$0xff]
        %v4551 = vld [vmem:[%s2 + $0x78] sm:$0xff]
        %v4552 = vld [vmem:[%s2 + $0x90] sm:$0xff]
        %v4553 = vld [vmem:[%s2 + $0xa8] sm:$0xff]
        %v4554 = vld [vmem:[%s2] sm:$0xff]
        %v4555 = vld [vmem:[%s2 + $0x8] sm:$0xff]
        %v4556 = vld [vmem:[%s2 + $0x10] sm:$0xff]
        %v4557 = vld [vmem:[%s2 + $0x18] sm:$0xff]
        %v4558 = vld [vmem:[%s2 + $0x20] sm:$0xff]
        %v4559 = vld [vmem:[%s2 + $0x28] sm:$0xff]
        %v4560 = vld [vmem:[%s2 + $0x30] sm:$0xff]
        %v4561 = vld [vmem:[%s2 + $0x38] sm:$0xff]
        %v4562 = vld [vmem:[%s2 + $0x40] sm:$0xff]
        %v4563 = vld [vmem:[%s2 + $0x48] sm:$0xff]
        %v4564 = vld [vmem:[%s2 + $0x50] sm:$0xff]
        %v4565 = vld [vmem:[%s2 + $0x58] sm:$0xff]
        %v4566 = vld [vmem:[%s2 + $0x60] sm:$0xff]
        %v4567 = vld [vmem:[%s2 + $0x68] sm:$0xff]
        %v4568 = vld [vmem:[%s2 + $0x70] sm:$0xff]
        %v4569 = vld [vmem:[%s2 + $0x78] sm:$0xff]
        %v4570 = vld [vmem:[%s2 + $0x80] sm:$0xff]
        %v4571 = vld [vmem:[%s2 + $0x88] sm:$0xff]
        %v4572 = vld [vmem:[%s2 + $0x90] sm:$0xff]
        %v4573 = vld [vmem:[%s2 + $0x98] sm:$0xff]
        %v4574 = vld [vmem:[%s2 + $0xa0] sm:$0xff]
        %v4575 = vld [vmem:[%s2 + $0xa8] sm:$0xff]
        %v4576 = vld [vmem:[%s2 + $0xb0] sm:$0xff]
        %v4577 = vld [vmem:[%s2 + $0xb8] sm:$0xff]
        %4602 = vrot.lane.b32.xlu0 %v4554, 32
        %v4603 = vpop.permute.xlu0 %4602
        %4604 = vrot.lane.b32.xlu0 %v4555, 32
        %v4605 = vpop.permute.xlu0 %4604
        %4606 = vrot.lane.b32.xlu0 %v4556, 32
        %v4607 = vpop.permute.xlu0 %4606
        %4608 = vrot.lane.b32.xlu0 %v4557, 32
        %v4609 = vpop.permute.xlu0 %4608
        %4610 = vrot.lane.b32.xlu0 %v4558, 32
        %v4611 = vpop.permute.xlu0 %4610
        %4612 = vrot.lane.b32.xlu0 %v4559, 32
        %v4613 = vpop.permute.xlu0 %4612
        %4614 = vrot.lane.b32.xlu0 %v4560, 32
        %v4615 = vpop.permute.xlu0 %4614
        %4616 = vrot.lane.b32.xlu0 %v4561, 32
        %v4617 = vpop.permute.xlu0 %4616
        %4618 = vrot.lane.b32.xlu0 %v4562, 32
        %v4619 = vpop.permute.xlu0 %4618
        %4620 = vrot.lane.b32.xlu0 %v4563, 32
        %v4621 = vpop.permute.xlu0 %4620
        %4622 = vrot.lane.b32.xlu0 %v4564, 32
        %v4623 = vpop.permute.xlu0 %4622
        %4624 = vrot.lane.b32.xlu0 %v4565, 32
        %v4625 = vpop.permute.xlu0 %4624
        %4626 = vrot.lane.b32.xlu0 %v4566, 32
        %v4627 = vpop.permute.xlu0 %4626
        %4628 = vrot.lane.b32.xlu0 %v4567, 32
        %v4629 = vpop.permute.xlu0 %4628
        %4630 = vrot.lane.b32.xlu0 %v4568, 32
        %v4631 = vpop.permute.xlu0 %4630
        %4632 = vrot.lane.b32.xlu0 %v4569, 32
        %v4633 = vpop.permute.xlu0 %4632
        %4634 = vrot.lane.b32.xlu0 %v4570, 32
        %v4635 = vpop.permute.xlu0 %4634
        %4636 = vrot.lane.b32.xlu0 %v4571, 32
        %v4637 = vpop.permute.xlu0 %4636
        %4638 = vrot.lane.b32.xlu0 %v4572, 32
        %v4639 = vpop.permute.xlu0 %4638
        %4640 = vrot.lane.b32.xlu0 %v4573, 32
        %v4641 = vpop.permute.xlu0 %4640
        %4642 = vrot.lane.b32.xlu0 %v4574, 32
        %v4643 = vpop.permute.xlu0 %4642
        %4644 = vrot.lane.b32.xlu0 %v4575, 32
        %v4645 = vpop.permute.xlu0 %4644
        %4646 = vrot.lane.b32.xlu0 %v4576, 32
        %v4647 = vpop.permute.xlu0 %4646
        %4648 = vrot.lane.b32.xlu0 %v4577, 32
        %v4649 = vpop.permute.xlu0 %4648
        %v4650 = vsel %vm1833, %v4603, %v4605
        %v4651 = vsel %vm1833, %v4605, %v4607
        %v4652 = vsel %vm1833, %v4609, %v4611
        %v4653 = vsel %vm1833, %v4611, %v4613
        %v4654 = vsel %vm1833, %v4615, %v4617
        %v4655 = vsel %vm1833, %v4617, %v4619
        %v4656 = vsel %vm1833, %v4621, %v4623
        %v4657 = vsel %vm1833, %v4623, %v4625
        %v4658 = vsel %vm1833, %v4627, %v4629
        %v4659 = vsel %vm1833, %v4629, %v4631
        %v4660 = vsel %vm1833, %v4633, %v4635
        %v4661 = vsel %vm1833, %v4635, %v4637
        %v4662 = vsel %vm1833, %v4639, %v4641
        %v4663 = vsel %vm1833, %v4641, %v4643
        %v4664 = vsel %vm1833, %v4645, %v4647
        %v4665 = vsel %vm1833, %v4647, %v4649
        %v4674 = vsel %vm474, %v4651, 0
        %v4676 = vsel %vm474, %v4653, 0
        %v4678 = vsel %vm474, %v4655, 0
        %v4680 = vsel %vm474, %v4657, 0
        %v4682 = vsel %vm474, %v4659, 0
        %v4684 = vsel %vm474, %v4661, 0
        %v4686 = vsel %vm474, %v4663, 0
        %v4688 = vsel %vm474, %v4665, 0
        %4690 = vmatprep.subr.mxu0 %v3701
        %4691 = vmatpush1.msra.mxu0 %v3700
        %4692 = vmatprep.subr.mxu0 %v3724
        %4693 = vmatpush1.msra.mxu0 %v3723
        %4694 = vmatprep.subr.mxu0 %v3747
        %4695 = vmatpush1.msra.mxu0 %v3746
        %4696 = vmatprep.subr.mxu0 %v3770
        %4697 = vmatpush1.msra.mxu0 %v3769
        %4698 = vmatprep.subr.mxu0 %v3853
        %4699 = vmatpush1.msra.mxu0 %v3852
        %4700 = vmatprep.subr.mxu0 %v3857
        %4701 = vmatpush1.msra.mxu0 %v3856
        %4702 = vmatprep.subr.mxu0 %v3861
        %4703 = vmatpush1.msra.mxu0 %v3860
        %4704 = vmatprep.subr.mxu0 %v3865
        %4705 = vmatpush1.msra.mxu0 %v3864
        %4706 = vmatprep.subr.mxu0 %v3941
        %4707 = vmatpush1.msra.mxu0 %v3940
        %4708 = vmatprep.subr.mxu0 %v3945
        %4709 = vmatpush1.msra.mxu0 %v3944
        %4710 = vmatprep.subr.mxu0 %v3949
        %4711 = vmatpush1.msra.mxu0 %v3948
        %4712 = vmatprep.subr.mxu0 %v3953
        %4713 = vmatpush1.msra.mxu0 %v3952
        %4714 = vmatprep.subr.mxu0 %v4017
        %4715 = vmatpush1.msra.mxu0 %v4016
        %4716 = vmatprep.subr.mxu0 %v4020
        %4717 = vmatpush1.msra.mxu0 %v4019
        %4718 = vmatprep.subr.mxu0 %v4023
        %4719 = vmatpush1.msra.mxu0 %v4022
        %4720 = vmatprep.subr.mxu0 %v4026
        %4721 = vmatpush1.msra.mxu0 %v4025
        %4722 = vmatprep.subr.mxu0 %v3716
        %4723 = vmatpush1.msra.mxu0 %v3715
        %4724 = vmatprep.subr.mxu0 %v3739
        %4725 = vmatpush1.msra.mxu0 %v3738
        %4726 = vmatprep.subr.mxu0 %v3762
        %4727 = vmatpush1.msra.mxu0 %v3761
        %4728 = vmatprep.subr.mxu0 %v3785
        %4729 = vmatpush1.msra.mxu0 %v3784
        %4730 = vmatprep.subr.mxu0 %v4105
        %4731 = vmatpush1.msra.mxu0 %v4104
        %4732 = vmatprep.subr.mxu0 %v4109
        %4733 = vmatpush1.msra.mxu0 %v4108
        %4734 = vmatprep.subr.mxu0 %v4113
        %4735 = vmatpush1.msra.mxu0 %v4112
        %4736 = vmatprep.subr.mxu0 %v4117
        %4737 = vmatpush1.msra.mxu0 %v4116
        %4738 = vmatprep.subr.mxu0 0.0
        %4739 = vmatpush1.msra.mxu0 0.0
        %4740 = vmatprep.subr.mxu0 0.0
        %4741 = vmatpush1.msra.mxu0 0.0
        %4742 = vmatprep.subr.mxu0 0.0
        %4743 = vmatpush1.msra.mxu0 0.0
        %4744 = vmatprep.subr.mxu0 0.0
        %4745 = vmatpush1.msra.mxu0 0.0
        %4746 = vmatprep.subr.mxu0 0.0
        %4747 = vmatpush1.msra.mxu0 0.0
        %4748 = vmatprep.subr.mxu0 0.0
        %4749 = vmatpush1.msra.mxu0 0.0
        %4750 = vmatprep.subr.mxu0 0.0
        %4751 = vmatpush1.msra.mxu0 0.0
        %4752 = vmatprep.subr.mxu0 0.0
        %4753 = vmatpush1.msra.mxu0 0.0
        %4754 = vmatprep.mubr.f32.mxu0 %v4674
        %4755 = vmatmul.mubr.f32.gmra.mrb[0].mxu0 %v4650
        %v4756 = vpop.f32.mrb[0].mxu0
        %v4757 = vadd.f32 0.0, %v4756
        %v4758 = vpop.f32.mrb[0].mxu0
        %v4759 = vadd.f32 0.0, %v4758
        %4760 = vmatprep.mubr.f32.mxu0 %v4676
        %4761 = vmatmul.mubr.f32.gmra.mrb[0].mxu0 %v4652
        %v4762 = vpop.f32.mrb[0].mxu0
        %v4763 = vadd.f32 0.0, %v4762
        %v4764 = vpop.f32.mrb[0].mxu0
        %v4765 = vadd.f32 0.0, %v4764
        %4766 = vmatprep.mubr.f32.mxu0 %v4678
        %4767 = vmatmul.mubr.f32.gmra.mrb[0].mxu0 %v4654
        %v4768 = vpop.f32.mrb[0].mxu0
        %v4769 = vadd.f32 0.0, %v4768
        %v4770 = vpop.f32.mrb[0].mxu0
        %v4771 = vadd.f32 0.0, %v4770
        %4772 = vmatprep.mubr.f32.mxu0 %v4680
        %4773 = vmatmul.mubr.f32.gmra.mrb[0].mxu0 %v4656
        %v4774 = vpop.f32.mrb[0].mxu0
        %v4775 = vadd.f32 0.0, %v4774
        %v4776 = vpop.f32.mrb[0].mxu0
        %v4777 = vadd.f32 0.0, %v4776
        %4778 = vmatprep.mubr.f32.mxu0 %v4682
        %4779 = vmatmul.mubr.f32.gmra.mrb[0].mxu0 %v4658
        %v4780 = vpop.f32.mrb[0].mxu0
        %v4781 = vadd.f32 0.0, %v4780
        %v4782 = vpop.f32.mrb[0].mxu0
        %v4783 = vadd.f32 0.0, %v4782
        %4784 = vmatprep.mubr.f32.mxu0 %v4684
        %4785 = vmatmul.mubr.f32.gmra.mrb[0].mxu0 %v4660
        %v4786 = vpop.f32.mrb[0].mxu0
        %v4787 = vadd.f32 0.0, %v4786
        %v4788 = vpop.f32.mrb[0].mxu0
        %v4789 = vadd.f32 0.0, %v4788
        %4790 = vmatprep.mubr.f32.mxu0 %v4686
        %4791 = vmatmul.mubr.f32.gmra.mrb[0].mxu0 %v4662
        %v4792 = vpop.f32.mrb[0].mxu0
        %v4793 = vadd.f32 0.0, %v4792
        %v4794 = vpop.f32.mrb[0].mxu0
        %v4795 = vadd.f32 0.0, %v4794
        %4796 = vmatprep.mubr.f32.mxu0 %v4688
        %4797 = vmatmul.mubr.f32.gmra.mrb[0].mxu0 %v4664
        %v4798 = vpop.f32.mrb[0].mxu0
        %v4799 = vadd.f32 0.0, %v4798
        %v4800 = vpop.f32.mrb[0].mxu0
        %v4801 = vadd.f32 0.0, %v4800
        %4802 = vdwg.mxu0
        %4803 = vmatprep.subr.mxu0 %v3703
        %4804 = vmatpush1.msra.mxu0 %v3702
        %4805 = vmatprep.subr.mxu0 %v3726
        %4806 = vmatpush1.msra.mxu0 %v3725
        %4807 = vmatprep.subr.mxu0 %v3749
        %4808 = vmatpush1.msra.mxu0 %v3748
        %4809 = vmatprep.subr.mxu0 %v3772
        %4810 = vmatpush1.msra.mxu0 %v3771
        %4811 = vmatprep.subr.mxu0 %v3855
        %4812 = vmatpush1.msra.mxu0 %v3854
        %4813 = vmatprep.subr.mxu0 %v3859
        %4814 = vmatpush1.msra.mxu0 %v3858
        %4815 = vmatprep.subr.mxu0 %v3863
        %4816 = vmatpush1.msra.mxu0 %v3862
        %4817 = vmatprep.subr.mxu0 %v3867
        %4818 = vmatpush1.msra.mxu0 %v3866
        %4819 = vmatprep.subr.mxu0 %v3943
        %4820 = vmatpush1.msra.mxu0 %v3942
        %4821 = vmatprep.subr.mxu0 %v3947
        %4822 = vmatpush1.msra.mxu0 %v3946
        %4823 = vmatprep.subr.mxu0 %v3951
        %4824 = vmatpush1.msra.mxu0 %v3950
        %4825 = vmatprep.subr.mxu0 %v3955
        %4826 = vmatpush1.msra.mxu0 %v3954
        %4827 = vmatprep.subr.mxu0 %v3991
        %4828 = vmatpush1.msra.mxu0 %v4018
        %4829 = vmatprep.subr.mxu0 %v3999
        %4830 = vmatpush1.msra.mxu0 %v4021
        %4831 = vmatprep.subr.mxu0 %v4007
        %4832 = vmatpush1.msra.mxu0 %v4024
        %4833 = vmatprep.subr.mxu0 %v4015
        %4834 = vmatpush1.msra.mxu0 %v4027
        %4835 = vmatprep.subr.mxu0 %v3718
        %4836 = vmatpush1.msra.mxu0 %v3717
        %4837 = vmatprep.subr.mxu0 %v3741
        %4838 = vmatpush1.msra.mxu0 %v3740
        %4839 = vmatprep.subr.mxu0 %v3764
        %4840 = vmatpush1.msra.mxu0 %v3763
        %4841 = vmatprep.subr.mxu0 %v3787
        %4842 = vmatpush1.msra.mxu0 %v3786
        %4843 = vmatprep.subr.mxu0 %v4107
        %4844 = vmatpush1.msra.mxu0 %v4106
        %4845 = vmatprep.subr.mxu0 %v4111
        %4846 = vmatpush1.msra.mxu0 %v4110
        %4847 = vmatprep.subr.mxu0 %v4115
        %4848 = vmatpush1.msra.mxu0 %v4114
        %4849 = vmatprep.subr.mxu0 %v4119
        %4850 = vmatpush1.msra.mxu0 %v4118
        %4851 = vmatprep.subr.mxu0 0.0
        %4852 = vmatpush1.msra.mxu0 0.0
        %4853 = vmatprep.subr.mxu0 0.0
        %4854 = vmatpush1.msra.mxu0 0.0
        %4855 = vmatprep.subr.mxu0 0.0
        %4856 = vmatpush1.msra.mxu0 0.0
        %4857 = vmatprep.subr.mxu0 0.0
        %4858 = vmatpush1.msra.mxu0 0.0
        %4859 = vmatprep.subr.mxu0 0.0
        %4860 = vmatpush1.msra.mxu0 0.0
        %4861 = vmatprep.subr.mxu0 0.0
        %4862 = vmatpush1.msra.mxu0 0.0
        %4863 = vmatprep.subr.mxu0 0.0
        %4864 = vmatpush1.msra.mxu0 0.0
        %4865 = vmatprep.subr.mxu0 0.0
        %4866 = vmatpush1.msra.mxu0 0.0
        %4867 = vmatprep.mubr.f32.mxu0 %v4674
        %4868 = vmatmul.mubr.f32.gmra.mrb[0].mxu0 %v4650
        %v4869 = vpop.f32.mrb[0].mxu0
        %v4870 = vadd.f32 0.0, %v4869
        %v4871 = vpop.f32.mrb[0].mxu0
        %v4872 = vadd.f32 0.0, %v4871
        %4873 = vmatprep.mubr.f32.mxu0 %v4676
        %4874 = vmatmul.mubr.f32.gmra.mrb[0].mxu0 %v4652
        %v4875 = vpop.f32.mrb[0].mxu0
        %v4876 = vadd.f32 0.0, %v4875
        %v4877 = vpop.f32.mrb[0].mxu0
        %v4878 = vadd.f32 0.0, %v4877
        %4879 = vmatprep.mubr.f32.mxu0 %v4678
        %4880 = vmatmul.mubr.f32.gmra.mrb[0].mxu0 %v4654
        %v4881 = vpop.f32.mrb[0].mxu0
        %v4882 = vadd.f32 0.0, %v4881
        %v4883 = vpop.f32.mrb[0].mxu0
        %v4884 = vadd.f32 0.0, %v4883
        %4885 = vmatprep.mubr.f32.mxu0 %v4680
        %4886 = vmatmul.mubr.f32.gmra.mrb[0].mxu0 %v4656
        %v4887 = vpop.f32.mrb[0].mxu0
        %v4888 = vadd.f32 0.0, %v4887
        %v4889 = vpop.f32.mrb[0].mxu0
        %v4890 = vadd.f32 0.0, %v4889
        %4891 = vmatprep.mubr.f32.mxu0 %v4682
        %4892 = vmatmul.mubr.f32.gmra.mrb[0].mxu0 %v4658
        %v4893 = vpop.f32.mrb[0].mxu0
        %v4894 = vadd.f32 0.0, %v4893
        %v4895 = vpop.f32.mrb[0].mxu0
        %v4896 = vadd.f32 0.0, %v4895
        %4897 = vmatprep.mubr.f32.mxu0 %v4684
        %4898 = vmatmul.mubr.f32.gmra.mrb[0].mxu0 %v4660
        %v4899 = vpop.f32.mrb[0].mxu0
        %v4900 = vadd.f32 0.0, %v4899
        %v4901 = vpop.f32.mrb[0].mxu0
        %v4902 = vadd.f32 0.0, %v4901
        %4903 = vmatprep.mubr.f32.mxu0 %v4686
        %4904 = vmatmul.mubr.f32.gmra.mrb[0].mxu0 %v4662
        %v4905 = vpop.f32.mrb[0].mxu0
        %v4906 = vadd.f32 0.0, %v4905
        %v4907 = vpop.f32.mrb[0].mxu0
        %v4908 = vadd.f32 0.0, %v4907
        %4909 = vmatprep.mubr.f32.mxu0 %v4688
        %4910 = vmatmul.mubr.f32.gmra.mrb[0].mxu0 %v4664
        %v4911 = vpop.f32.mrb[0].mxu0
        %v4912 = vadd.f32 0.0, %v4911
        %v4913 = vpop.f32.mrb[0].mxu0
        %v4914 = vadd.f32 0.0, %v4913
        %4915 = vdwg.mxu0
        %v4917 = vsel %vm2067, %v4546, 0
        %v4920 = vsel %vm2067, %v4547, 0
        %v4923 = vsel %vm2067, %v4548, 0
        %v4926 = vsel %vm2067, %v4549, 0
        %v4929 = vsel %vm2067, %v4550, 0
        %v4932 = vsel %vm2067, %v4551, 0
        %v4935 = vsel %vm2067, %v4552, 0
        %v4938 = vsel %vm2067, %v4553, 0
        %4940 = vmatprep.subr.mxu0 %v4245
        %4941 = vmatpush1.msra.mxu0 %v4329
        %4942 = vmatprep.subr.mxu0 %v4248
        %4943 = vmatpush1.msra.mxu0 %v4330
        %4944 = vmatprep.subr.mxu0 %v4251
        %4945 = vmatpush1.msra.mxu0 %v4331
        %4946 = vmatprep.subr.mxu0 %v4254
        %4947 = vmatpush1.msra.mxu0 %v4332
        %4948 = vmatprep.subr.mxu0 %v4257
        %4949 = vmatpush1.msra.mxu0 %v4333
        %4950 = vmatprep.subr.mxu0 %v4260
        %4951 = vmatpush1.msra.mxu0 %v4334
        %4952 = vmatprep.subr.mxu0 %v4263
        %4953 = vmatpush1.msra.mxu0 %v4335
        %4954 = vmatprep.subr.mxu0 %v4266
        %4955 = vmatpush1.msra.mxu0 %v4336
        %4956 = vmatprep.subr.mxu0 %v4269
        %4957 = vmatpush1.msra.mxu0 %v4337
        %4958 = vmatprep.subr.mxu0 %v4272
        %4959 = vmatpush1.msra.mxu0 %v4338
        %4960 = vmatprep.subr.mxu0 %v4275
        %4961 = vmatpush1.msra.mxu0 %v4339
        %4962 = vmatprep.subr.mxu0 %v4278
        %4963 = vmatpush1.msra.mxu0 %v4340
        %4964 = vmatprep.subr.mxu0 0.0
        %4965 = vmatpush1.msra.mxu0 0.0
        %4966 = vmatprep.subr.mxu0 0.0
        %4967 = vmatpush1.msra.mxu0 0.0
        %4968 = vmatprep.subr.mxu0 0.0
        %4969 = vmatpush1.msra.mxu0 0.0
        %4970 = vmatprep.subr.mxu0 0.0
        %4971 = vmatpush1.msra.mxu0 0.0
        %4972 = vmatprep.subr.mxu0 0.0
        %4973 = vmatpush1.msra.mxu0 0.0
        %4974 = vmatprep.subr.mxu0 0.0
        %4975 = vmatpush1.msra.mxu0 0.0
        %4976 = vmatprep.subr.mxu0 0.0
        %4977 = vmatpush1.msra.mxu0 0.0
        %4978 = vmatprep.subr.mxu0 0.0
        %4979 = vmatpush1.msra.mxu0 0.0
        %4980 = vmatprep.subr.mxu0 0.0
        %4981 = vmatpush1.msra.mxu0 0.0
        %4982 = vmatprep.subr.mxu0 0.0
        %4983 = vmatpush1.msra.mxu0 0.0
        %4984 = vmatprep.subr.mxu0 0.0
        %4985 = vmatpush1.msra.mxu0 0.0
        %4986 = vmatprep.subr.mxu0 0.0
        %4987 = vmatpush1.msra.mxu0 0.0
        %4988 = vmatprep.subr.mxu0 0.0
        %4989 = vmatpush1.msra.mxu0 0.0
        %4990 = vmatprep.subr.mxu0 0.0
        %4991 = vmatpush1.msra.mxu0 0.0
        %4992 = vmatprep.subr.mxu0 0.0
        %4993 = vmatpush1.msra.mxu0 0.0
        %4994 = vmatprep.subr.mxu0 0.0
        %4995 = vmatpush1.msra.mxu0 0.0
        %4996 = vmatprep.subr.mxu0 0.0
        %4997 = vmatpush1.msra.mxu0 0.0
        %4998 = vmatprep.subr.mxu0 0.0
        %4999 = vmatpush1.msra.mxu0 0.0
        %5000 = vmatprep.subr.mxu0 0.0
        %5001 = vmatpush1.msra.mxu0 0.0
        %5002 = vmatprep.subr.mxu0 0.0
        %5003 = vmatpush1.msra.mxu0 0.0
        %5004 = vmatprep.mubr.f32.mxu0 0.0
        %5005 = vmatmul.mubr.f32.gmra.mrb[0].mxu0 %v4917
        %v5006 = vpop.f32.mrb[0].mxu0
        %v5007 = vadd.f32 %v4757, %v5006
        %v5008 = vpop.f32.mrb[0].mxu0
        %v5009 = vadd.f32 %v4759, %v5008
        %5010 = vmatprep.mubr.f32.mxu0 0.0
        %5011 = vmatmul.mubr.f32.gmra.mrb[0].mxu0 %v4920
        %v5012 = vpop.f32.mrb[0].mxu0
        %v5013 = vadd.f32 %v4763, %v5012
        %v5014 = vpop.f32.mrb[0].mxu0
        %v5015 = vadd.f32 %v4765, %v5014
        %5016 = vmatprep.mubr.f32.mxu0 0.0
        %5017 = vmatmul.mubr.f32.gmra.mrb[0].mxu0 %v4923
        %v5018 = vpop.f32.mrb[0].mxu0
        %v5019 = vadd.f32 %v4769, %v5018
        %v5020 = vpop.f32.mrb[0].mxu0
        %v5021 = vadd.f32 %v4771, %v5020
        %5022 = vmatprep.mubr.f32.mxu0 0.0
        %5023 = vmatmul.mubr.f32.gmra.mrb[0].mxu0 %v4926
        %v5024 = vpop.f32.mrb[0].mxu0
        %v5025 = vadd.f32 %v4775, %v5024
        %v5026 = vpop.f32.mrb[0].mxu0
        %v5027 = vadd.f32 %v4777, %v5026
        %5028 = vmatprep.mubr.f32.mxu0 0.0
        %5029 = vmatmul.mubr.f32.gmra.mrb[0].mxu0 %v4929
        %v5030 = vpop.f32.mrb[0].mxu0
        %v5031 = vadd.f32 %v4781, %v5030
        %v5032 = vpop.f32.mrb[0].mxu0
        %v5033 = vadd.f32 %v4783, %v5032
        %5034 = vmatprep.mubr.f32.mxu0 0.0
        %5035 = vmatmul.mubr.f32.gmra.mrb[0].mxu0 %v4932
        %v5036 = vpop.f32.mrb[0].mxu0
        %v5037 = vadd.f32 %v4787, %v5036
        %v5038 = vpop.f32.mrb[0].mxu0
        %v5039 = vadd.f32 %v4789, %v5038
        %5040 = vmatprep.mubr.f32.mxu0 0.0
        %5041 = vmatmul.mubr.f32.gmra.mrb[0].mxu0 %v4935
        %v5042 = vpop.f32.mrb[0].mxu0
        %v5043 = vadd.f32 %v4793, %v5042
        %v5044 = vpop.f32.mrb[0].mxu0
        %v5045 = vadd.f32 %v4795, %v5044
        %5046 = vmatprep.mubr.f32.mxu0 0.0
        %5047 = vmatmul.mubr.f32.gmra.mrb[0].mxu0 %v4938
        %v5048 = vpop.f32.mrb[0].mxu0
        %v5049 = vadd.f32 %v4799, %v5048
        %v5050 = vpop.f32.mrb[0].mxu0
        %v5051 = vadd.f32 %v4801, %v5050
        %5052 = vdwg.mxu0
        %5053 = vmatprep.subr.mxu0 %v4247
        %5054 = vmatpush1.msra.mxu0 %v4246
        %5055 = vmatprep.subr.mxu0 %v4250
        %5056 = vmatpush1.msra.mxu0 %v4249
        %5057 = vmatprep.subr.mxu0 %v4253
        %5058 = vmatpush1.msra.mxu0 %v4252
        %5059 = vmatprep.subr.mxu0 %v4256
        %5060 = vmatpush1.msra.mxu0 %v4255
        %5061 = vmatprep.subr.mxu0 %v4259
        %5062 = vmatpush1.msra.mxu0 %v4258
        %5063 = vmatprep.subr.mxu0 %v4262
        %5064 = vmatpush1.msra.mxu0 %v4261
        %5065 = vmatprep.subr.mxu0 %v4265
        %5066 = vmatpush1.msra.mxu0 %v4264
        %5067 = vmatprep.subr.mxu0 %v4268
        %5068 = vmatpush1.msra.mxu0 %v4267
        %5069 = vmatprep.subr.mxu0 %v4271
        %5070 = vmatpush1.msra.mxu0 %v4270
        %5071 = vmatprep.subr.mxu0 %v4274
        %5072 = vmatpush1.msra.mxu0 %v4273
        %5073 = vmatprep.subr.mxu0 %v4277
        %5074 = vmatpush1.msra.mxu0 %v4276
        %5075 = vmatprep.subr.mxu0 %v4280
        %5076 = vmatpush1.msra.mxu0 %v4279
        %5077 = vmatprep.subr.mxu0 0.0
        %5078 = vmatpush1.msra.mxu0 0.0
        %5079 = vmatprep.subr.mxu0 0.0
        %5080 = vmatpush1.msra.mxu0 0.0
        %5081 = vmatprep.subr.mxu0 0.0
        %5082 = vmatpush1.msra.mxu0 0.0
        %5083 = vmatprep.subr.mxu0 0.0
        %5084 = vmatpush1.msra.mxu0 0.0
        %5085 = vmatprep.subr.mxu0 0.0
        %5086 = vmatpush1.msra.mxu0 0.0
        %5087 = vmatprep.subr.mxu0 0.0
        %5088 = vmatpush1.msra.mxu0 0.0
        %5089 = vmatprep.subr.mxu0 0.0
        %5090 = vmatpush1.msra.mxu0 0.0
        %5091 = vmatprep.subr.mxu0 0.0
        %5092 = vmatpush1.msra.mxu0 0.0
        %5093 = vmatprep.subr.mxu0 0.0
        %5094 = vmatpush1.msra.mxu0 0.0
        %5095 = vmatprep.subr.mxu0 0.0
        %5096 = vmatpush1.msra.mxu0 0.0
        %5097 = vmatprep.subr.mxu0 0.0
        %5098 = vmatpush1.msra.mxu0 0.0
        %5099 = vmatprep.subr.mxu0 0.0
        %5100 = vmatpush1.msra.mxu0 0.0
        %5101 = vmatprep.subr.mxu0 0.0
        %5102 = vmatpush1.msra.mxu0 0.0
        %5103 = vmatprep.subr.mxu0 0.0
        %5104 = vmatpush1.msra.mxu0 0.0
        %5105 = vmatprep.subr.mxu0 0.0
        %5106 = vmatpush1.msra.mxu0 0.0
        %5107 = vmatprep.subr.mxu0 0.0
        %5108 = vmatpush1.msra.mxu0 0.0
        %5109 = vmatprep.subr.mxu0 0.0
        %5110 = vmatpush1.msra.mxu0 0.0
        %5111 = vmatprep.subr.mxu0 0.0
        %5112 = vmatpush1.msra.mxu0 0.0
        %5113 = vmatprep.subr.mxu0 0.0
        %5114 = vmatpush1.msra.mxu0 0.0
        %5115 = vmatprep.subr.mxu0 0.0
        %5116 = vmatpush1.msra.mxu0 0.0
        %5117 = vmatprep.mubr.f32.mxu0 0.0
        %5118 = vmatmul.mubr.f32.gmra.mrb[0].mxu0 %v4917
        %v5119 = vpop.f32.mrb[0].mxu0
        %v5120 = vadd.f32 %v4870, %v5119
        %v5121 = vpop.f32.mrb[0].mxu0
        %v5122 = vadd.f32 %v4872, %v5121
        %5123 = vmatprep.mubr.f32.mxu0 0.0
        %5124 = vmatmul.mubr.f32.gmra.mrb[0].mxu0 %v4920
        %v5125 = vpop.f32.mrb[0].mxu0
        %v5126 = vadd.f32 %v4876, %v5125
        %v5127 = vpop.f32.mrb[0].mxu0
        %v5128 = vadd.f32 %v4878, %v5127
        %5129 = vmatprep.mubr.f32.mxu0 0.0
        %5130 = vmatmul.mubr.f32.gmra.mrb[0].mxu0 %v4923
        %v5131 = vpop.f32.mrb[0].mxu0
        %v5132 = vadd.f32 %v4882, %v5131
        %v5133 = vpop.f32.mrb[0].mxu0
        %v5134 = vadd.f32 %v4884, %v5133
        %5135 = vmatprep.mubr.f32.mxu0 0.0
        %5136 = vmatmul.mubr.f32.gmra.mrb[0].mxu0 %v4926
        %v5137 = vpop.f32.mrb[0].mxu0
        %v5138 = vadd.f32 %v4888, %v5137
        %v5139 = vpop.f32.mrb[0].mxu0
        %v5140 = vadd.f32 %v4890, %v5139
        %5141 = vmatprep.mubr.f32.mxu0 0.0
        %5142 = vmatmul.mubr.f32.gmra.mrb[0].mxu0 %v4929
        %v5143 = vpop.f32.mrb[0].mxu0
        %v5144 = vadd.f32 %v4894, %v5143
        %v5145 = vpop.f32.mrb[0].mxu0
        %v5146 = vadd.f32 %v4896, %v5145
        %5147 = vmatprep.mubr.f32.mxu0 0.0
        %5148 = vmatmul.mubr.f32.gmra.mrb[0].mxu0 %v4932
        %v5149 = vpop.f32.mrb[0].mxu0
        %v5150 = vadd.f32 %v4900, %v5149
        %v5151 = vpop.f32.mrb[0].mxu0
        %v5152 = vadd.f32 %v4902, %v5151
        %5153 = vmatprep.mubr.f32.mxu0 0.0
        %5154 = vmatmul.mubr.f32.gmra.mrb[0].mxu0 %v4935
        %v5155 = vpop.f32.mrb[0].mxu0
        %v5156 = vadd.f32 %v4906, %v5155
        %v5157 = vpop.f32.mrb[0].mxu0
        %v5158 = vadd.f32 %v4908, %v5157
        %5159 = vmatprep.mubr.f32.mxu0 0.0
        %5160 = vmatmul.mubr.f32.gmra.mrb[0].mxu0 %v4938
        %v5161 = vpop.f32.mrb[0].mxu0
        %v5162 = vadd.f32 %v4912, %v5161
        %v5163 = vpop.f32.mrb[0].mxu0
        %v5164 = vadd.f32 %v4914, %v5163
        %5165 = vdwg.mxu0
        %5166 = vrot.lane.b32.xlu0 %v4556, 96
        %v5167 = vpop.permute.xlu0 %5166
        %5168 = vrot.lane.b32.xlu0 %v4559, 96
        %v5169 = vpop.permute.xlu0 %5168
        %5170 = vrot.lane.b32.xlu0 %v4562, 96
        %v5171 = vpop.permute.xlu0 %5170
        %5172 = vrot.lane.b32.xlu0 %v4565, 96
        %v5173 = vpop.permute.xlu0 %5172
        %5174 = vrot.lane.b32.xlu0 %v4568, 96
        %v5175 = vpop.permute.xlu0 %5174
        %5176 = vrot.lane.b32.xlu0 %v4571, 96
        %v5177 = vpop.permute.xlu0 %5176
        %5178 = vrot.lane.b32.xlu0 %v4574, 96
        %v5179 = vpop.permute.xlu0 %5178
        %5180 = vrot.lane.b32.xlu0 %v4577, 96
        %v5181 = vpop.permute.xlu0 %5180
        %v5182 = vsel %vm2067, %v5167, 0
        %v5184 = vsel %vm2067, %v5169, 0
        %v5186 = vsel %vm2067, %v5171, 0
        %v5188 = vsel %vm2067, %v5173, 0
        %v5190 = vsel %vm2067, %v5175, 0
        %v5192 = vsel %vm2067, %v5177, 0
        %v5194 = vsel %vm2067, %v5179, 0
        %v5196 = vsel %vm2067, %v5181, 0
        %5198 = vmatprep.subr.mxu0 %v4450
        %5199 = vmatpush1.msra.mxu0 %v4449
        %5200 = vmatprep.subr.mxu0 %v4453
        %5201 = vmatpush1.msra.mxu0 %v4452
        %5202 = vmatprep.subr.mxu0 %v4456
        %5203 = vmatpush1.msra.mxu0 %v4455
        %5204 = vmatprep.subr.mxu0 %v4459
        %5205 = vmatpush1.msra.mxu0 %v4458
        %5206 = vmatprep.subr.mxu0 %v4462
        %5207 = vmatpush1.msra.mxu0 %v4461
        %5208 = vmatprep.subr.mxu0 %v4465
        %5209 = vmatpush1.msra.mxu0 %v4464
        %5210 = vmatprep.subr.mxu0 %v4468
        %5211 = vmatpush1.msra.mxu0 %v4467
        %5212 = vmatprep.subr.mxu0 %v4471
        %5213 = vmatpush1.msra.mxu0 %v4470
        %5214 = vmatprep.subr.mxu0 %v4474
        %5215 = vmatpush1.msra.mxu0 %v4473
        %5216 = vmatprep.subr.mxu0 %v4477
        %5217 = vmatpush1.msra.mxu0 %v4476
        %5218 = vmatprep.subr.mxu0 %v4480
        %5219 = vmatpush1.msra.mxu0 %v4479
        %5220 = vmatprep.subr.mxu0 %v4483
        %5221 = vmatpush1.msra.mxu0 %v4482
        %5222 = vmatprep.subr.mxu0 0.0
        %5223 = vmatpush1.msra.mxu0 0.0
        %5224 = vmatprep.subr.mxu0 0.0
        %5225 = vmatpush1.msra.mxu0 0.0
        %5226 = vmatprep.subr.mxu0 0.0
        %5227 = vmatpush1.msra.mxu0 0.0
        %5228 = vmatprep.subr.mxu0 0.0
        %5229 = vmatpush1.msra.mxu0 0.0
        %5230 = vmatprep.subr.mxu0 0.0
        %5231 = vmatpush1.msra.mxu0 0.0
        %5232 = vmatprep.subr.mxu0 0.0
        %5233 = vmatpush1.msra.mxu0 0.0
        %5234 = vmatprep.subr.mxu0 0.0
        %5235 = vmatpush1.msra.mxu0 0.0
        %5236 = vmatprep.subr.mxu0 0.0
        %5237 = vmatpush1.msra.mxu0 0.0
        %5238 = vmatprep.subr.mxu0 0.0
        %5239 = vmatpush1.msra.mxu0 0.0
        %5240 = vmatprep.subr.mxu0 0.0
        %5241 = vmatpush1.msra.mxu0 0.0
        %5242 = vmatprep.subr.mxu0 0.0
        %5243 = vmatpush1.msra.mxu0 0.0
        %5244 = vmatprep.subr.mxu0 0.0
        %5245 = vmatpush1.msra.mxu0 0.0
        %5246 = vmatprep.subr.mxu0 0.0
        %5247 = vmatpush1.msra.mxu0 0.0
        %5248 = vmatprep.subr.mxu0 0.0
        %5249 = vmatpush1.msra.mxu0 0.0
        %5250 = vmatprep.subr.mxu0 0.0
        %5251 = vmatpush1.msra.mxu0 0.0
        %5252 = vmatprep.subr.mxu0 0.0
        %5253 = vmatpush1.msra.mxu0 0.0
        %5254 = vmatprep.subr.mxu0 0.0
        %5255 = vmatpush1.msra.mxu0 0.0
        %5256 = vmatprep.subr.mxu0 0.0
        %5257 = vmatpush1.msra.mxu0 0.0
        %5258 = vmatprep.subr.mxu0 0.0
        %5259 = vmatpush1.msra.mxu0 0.0
        %5260 = vmatprep.subr.mxu0 0.0
        %5261 = vmatpush1.msra.mxu0 0.0
        %5262 = vmatprep.mubr.f32.mxu0 0.0
        %5263 = vmatmul.mubr.f32.gmra.mrb[0].mxu0 %v5182
        %v5264 = vpop.f32.mrb[0].mxu0
        %v5265 = vadd.f32 0.0, %v5264
        %v5266 = vpop.f32.mrb[0].mxu0
        %v5267 = vadd.f32 0.0, %v5266
        %5268 = vmatprep.mubr.f32.mxu0 0.0
        %5269 = vmatmul.mubr.f32.gmra.mrb[0].mxu0 %v5184
        %v5270 = vpop.f32.mrb[0].mxu0
        %v5271 = vadd.f32 0.0, %v5270
        %v5272 = vpop.f32.mrb[0].mxu0
        %v5273 = vadd.f32 0.0, %v5272
        %5274 = vmatprep.mubr.f32.mxu0 0.0
        %5275 = vmatmul.mubr.f32.gmra.mrb[0].mxu0 %v5186
        %v5276 = vpop.f32.mrb[0].mxu0
        %v5277 = vadd.f32 0.0, %v5276
        %v5278 = vpop.f32.mrb[0].mxu0
        %v5279 = vadd.f32 0.0, %v5278
        %5280 = vmatprep.mubr.f32.mxu0 0.0
        %5281 = vmatmul.mubr.f32.gmra.mrb[0].mxu0 %v5188
        %v5282 = vpop.f32.mrb[0].mxu0
        %v5283 = vadd.f32 0.0, %v5282
        %v5284 = vpop.f32.mrb[0].mxu0
        %v5285 = vadd.f32 0.0, %v5284
        %5286 = vmatprep.mubr.f32.mxu0 0.0
        %5287 = vmatmul.mubr.f32.gmra.mrb[0].mxu0 %v5190
        %v5288 = vpop.f32.mrb[0].mxu0
        %v5289 = vadd.f32 0.0, %v5288
        %v5290 = vpop.f32.mrb[0].mxu0
        %v5291 = vadd.f32 0.0, %v5290
        %5292 = vmatprep.mubr.f32.mxu0 0.0
        %5293 = vmatmul.mubr.f32.gmra.mrb[0].mxu0 %v5192
        %v5294 = vpop.f32.mrb[0].mxu0
        %v5295 = vadd.f32 0.0, %v5294
        %v5296 = vpop.f32.mrb[0].mxu0
        %v5297 = vadd.f32 0.0, %v5296
        %5298 = vmatprep.mubr.f32.mxu0 0.0
        %5299 = vmatmul.mubr.f32.gmra.mrb[0].mxu0 %v5194
        %v5300 = vpop.f32.mrb[0].mxu0
        %v5301 = vadd.f32 0.0, %v5300
        %v5302 = vpop.f32.mrb[0].mxu0
        %v5303 = vadd.f32 0.0, %v5302
        %5304 = vmatprep.mubr.f32.mxu0 0.0
        %5305 = vmatmul.mubr.f32.gmra.mrb[0].mxu0 %v5196
        %v5306 = vpop.f32.mrb[0].mxu0
        %v5307 = vadd.f32 0.0, %v5306
        %v5308 = vpop.f32.mrb[0].mxu0
        %v5309 = vadd.f32 0.0, %v5308
        %5310 = vdwg.mxu0
        %5311 = vmatprep.subr.mxu0 %v4534
        %5312 = vmatpush1.msra.mxu0 %v4451
        %5313 = vmatprep.subr.mxu0 %v4535
        %5314 = vmatpush1.msra.mxu0 %v4454
        %5315 = vmatprep.subr.mxu0 %v4536
        %5316 = vmatpush1.msra.mxu0 %v4457
        %5317 = vmatprep.subr.mxu0 %v4537
        %5318 = vmatpush1.msra.mxu0 %v4460
        %5319 = vmatprep.subr.mxu0 %v4538
        %5320 = vmatpush1.msra.mxu0 %v4463
        %5321 = vmatprep.subr.mxu0 %v4539
        %5322 = vmatpush1.msra.mxu0 %v4466
        %5323 = vmatprep.subr.mxu0 %v4540
        %5324 = vmatpush1.msra.mxu0 %v4469
        %5325 = vmatprep.subr.mxu0 %v4541
        %5326 = vmatpush1.msra.mxu0 %v4472
        %5327 = vmatprep.subr.mxu0 %v4542
        %5328 = vmatpush1.msra.mxu0 %v4475
        %5329 = vmatprep.subr.mxu0 %v4543
        %5330 = vmatpush1.msra.mxu0 %v4478
        %5331 = vmatprep.subr.mxu0 %v4544
        %5332 = vmatpush1.msra.mxu0 %v4481
        %5333 = vmatprep.subr.mxu0 %v4545
        %5334 = vmatpush1.msra.mxu0 %v4484
        %5335 = vmatprep.subr.mxu0 0.0
        %5336 = vmatpush1.msra.mxu0 0.0
        %5337 = vmatprep.subr.mxu0 0.0
        %5338 = vmatpush1.msra.mxu0 0.0
        %5339 = vmatprep.subr.mxu0 0.0
        %5340 = vmatpush1.msra.mxu0 0.0
        %5341 = vmatprep.subr.mxu0 0.0
        %5342 = vmatpush1.msra.mxu0 0.0
        %5343 = vmatprep.subr.mxu0 0.0
        %5344 = vmatpush1.msra.mxu0 0.0
        %5345 = vmatprep.subr.mxu0 0.0
        %5346 = vmatpush1.msra.mxu0 0.0
        %5347 = vmatprep.subr.mxu0 0.0
        %5348 = vmatpush1.msra.mxu0 0.0
        %5349 = vmatprep.subr.mxu0 0.0
        %5350 = vmatpush1.msra.mxu0 0.0
        %5351 = vmatprep.subr.mxu0 0.0
        %5352 = vmatpush1.msra.mxu0 0.0
        %5353 = vmatprep.subr.mxu0 0.0
        %5354 = vmatpush1.msra.mxu0 0.0
        %5355 = vmatprep.subr.mxu0 0.0
        %5356 = vmatpush1.msra.mxu0 0.0
        %5357 = vmatprep.subr.mxu0 0.0
        %5358 = vmatpush1.msra.mxu0 0.0
        %5359 = vmatprep.subr.mxu0 0.0
        %5360 = vmatpush1.msra.mxu0 0.0
        %5361 = vmatprep.subr.mxu0 0.0
        %5362 = vmatpush1.msra.mxu0 0.0
        %5363 = vmatprep.subr.mxu0 0.0
        %5364 = vmatpush1.msra.mxu0 0.0
        %5365 = vmatprep.subr.mxu0 0.0
        %5366 = vmatpush1.msra.mxu0 0.0
        %5367 = vmatprep.subr.mxu0 0.0
        %5368 = vmatpush1.msra.mxu0 0.0
        %5369 = vmatprep.subr.mxu0 0.0
        %5370 = vmatpush1.msra.mxu0 0.0
        %5371 = vmatprep.subr.mxu0 0.0
        %5372 = vmatpush1.msra.mxu0 0.0
        %5373 = vmatprep.subr.mxu0 0.0
        %5374 = vmatpush1.msra.mxu0 0.0
        %5375 = vmatprep.mubr.f32.mxu0 0.0
        %5376 = vmatmul.mubr.f32.gmra.mrb[0].mxu0 %v5182
        %v5377 = vpop.f32.mrb[0].mxu0
        %v5378 = vadd.f32 0.0, %v5377
        %v5379 = vpop.f32.mrb[0].mxu0
        %v5380 = vadd.f32 0.0, %v5379
        %5381 = vmatprep.mubr.f32.mxu0 0.0
        %5382 = vmatmul.mubr.f32.gmra.mrb[0].mxu0 %v5184
        %v5383 = vpop.f32.mrb[0].mxu0
        %v5384 = vadd.f32 0.0, %v5383
        %v5385 = vpop.f32.mrb[0].mxu0
        %v5386 = vadd.f32 0.0, %v5385
        %5387 = vmatprep.mubr.f32.mxu0 0.0
        %5388 = vmatmul.mubr.f32.gmra.mrb[0].mxu0 %v5186
        %v5389 = vpop.f32.mrb[0].mxu0
        %v5390 = vadd.f32 0.0, %v5389
        %v5391 = vpop.f32.mrb[0].mxu0
        %v5392 = vadd.f32 0.0, %v5391
        %5393 = vmatprep.mubr.f32.mxu0 0.0
        %5394 = vmatmul.mubr.f32.gmra.mrb[0].mxu0 %v5188
        %v5395 = vpop.f32.mrb[0].mxu0
        %v5396 = vadd.f32 0.0, %v5395
        %v5397 = vpop.f32.mrb[0].mxu0
        %v5398 = vadd.f32 0.0, %v5397
        %5399 = vmatprep.mubr.f32.mxu0 0.0
        %5400 = vmatmul.mubr.f32.gmra.mrb[0].mxu0 %v5190
        %v5401 = vpop.f32.mrb[0].mxu0
        %v5402 = vadd.f32 0.0, %v5401
        %v5403 = vpop.f32.mrb[0].mxu0
        %v5404 = vadd.f32 0.0, %v5403
        %5405 = vmatprep.mubr.f32.mxu0 0.0
        %5406 = vmatmul.mubr.f32.gmra.mrb[0].mxu0 %v5192
        %v5407 = vpop.f32.mrb[0].mxu0
        %v5408 = vadd.f32 0.0, %v5407
        %v5409 = vpop.f32.mrb[0].mxu0
        %v5410 = vadd.f32 0.0, %v5409
        %5411 = vmatprep.mubr.f32.mxu0 0.0
        %5412 = vmatmul.mubr.f32.gmra.mrb[0].mxu0 %v5194
        %v5413 = vpop.f32.mrb[0].mxu0
        %v5414 = vadd.f32 0.0, %v5413
        %v5415 = vpop.f32.mrb[0].mxu0
        %v5416 = vadd.f32 0.0, %v5415
        %5417 = vmatprep.mubr.f32.mxu0 0.0
        %5418 = vmatmul.mubr.f32.gmra.mrb[0].mxu0 %v5196
        %v5419 = vpop.f32.mrb[0].mxu0
        %v5420 = vadd.f32 0.0, %v5419
        %v5421 = vpop.f32.mrb[0].mxu0
        %v5422 = vadd.f32 0.0, %v5421
        %5423 = vdwg.mxu0
        %v5424 = vadd.f32 %v5007, %v5265
        %v5425 = vadd.f32 %v5009, %v5267
        %v5426 = vadd.f32 %v5120, %v5378
        %v5427 = vadd.f32 %v5122, %v5380
        %v5428 = vadd.f32 %v5013, %v5271
        %v5429 = vadd.f32 %v5015, %v5273
        %v5430 = vadd.f32 %v5126, %v5384
        %v5431 = vadd.f32 %v5128, %v5386
        %v5432 = vadd.f32 %v5019, %v5277
        %v5433 = vadd.f32 %v5021, %v5279
        %v5434 = vadd.f32 %v5132, %v5390
        %v5435 = vadd.f32 %v5134, %v5392
        %v5436 = vadd.f32 %v5025, %v5283
        %v5437 = vadd.f32 %v5027, %v5285
        %v5438 = vadd.f32 %v5138, %v5396
        %v5439 = vadd.f32 %v5140, %v5398
        %v5440 = vadd.f32 %v5031, %v5289
        %v5441 = vadd.f32 %v5033, %v5291
        %v5442 = vadd.f32 %v5144, %v5402
        %v5443 = vadd.f32 %v5146, %v5404
        %v5444 = vadd.f32 %v5037, %v5295
        %v5445 = vadd.f32 %v5039, %v5297
        %v5446 = vadd.f32 %v5150, %v5408
        %v5447 = vadd.f32 %v5152, %v5410
        %v5448 = vadd.f32 %v5043, %v5301
        %v5449 = vadd.f32 %v5045, %v5303
        %v5450 = vadd.f32 %v5156, %v5414
        %v5451 = vadd.f32 %v5158, %v5416
        %v5452 = vadd.f32 %v5049, %v5307
        %v5453 = vadd.f32 %v5051, %v5309
        %v5454 = vadd.f32 %v5162, %v5420
        %v5455 = vadd.f32 %v5164, %v5422
        %v5456 = vld [vmem:[%s6] ss:$2 sm:$0xf]
        %s5457 = scalar_lea.vmem %s6, 1
        %v5458 = vld [vmem:[%s5457] ss:$2 sm:$0xf]
        %v5459 = vmax.f32 %v5424, 0.0
        %v5460 = vmax.f32 %v5425, 0.0
        %v5461 = vmax.f32 %v5426, 0.0
        %v5462 = vmax.f32 %v5427, 0.0
        %v5463 = vmax.f32 %v5428, 0.0
        %v5464 = vmax.f32 %v5429, 0.0
        %v5465 = vmax.f32 %v5430, 0.0
        %v5466 = vmax.f32 %v5431, 0.0
        %v5467 = vmax.f32 %v5432, 0.0
        %v5468 = vmax.f32 %v5433, 0.0
        %v5469 = vmax.f32 %v5434, 0.0
        %v5470 = vmax.f32 %v5435, 0.0
        %v5471 = vmax.f32 %v5436, 0.0
        %v5472 = vmax.f32 %v5437, 0.0
        %v5473 = vmax.f32 %v5438, 0.0
        %v5474 = vmax.f32 %v5439, 0.0
        %v5475 = vmax.f32 %v5440, 0.0
        %v5476 = vmax.f32 %v5441, 0.0
        %v5477 = vmax.f32 %v5442, 0.0
        %v5478 = vmax.f32 %v5443, 0.0
        %v5479 = vmax.f32 %v5444, 0.0
        %v5480 = vmax.f32 %v5445, 0.0
        %v5481 = vmax.f32 %v5446, 0.0
        %v5482 = vmax.f32 %v5447, 0.0
        %v5483 = vmax.f32 %v5448, 0.0
        %v5484 = vmax.f32 %v5449, 0.0
        %v5485 = vmax.f32 %v5450, 0.0
        %v5486 = vmax.f32 %v5451, 0.0
        %v5487 = vmax.f32 %v5452, 0.0
        %v5488 = vmax.f32 %v5453, 0.0
        %v5489 = vmax.f32 %v5454, 0.0
        %v5490 = vmax.f32 %v5455, 0.0
        %v5491 = vadd.f32 %v5459, %v5460
        %v5492 = vadd.f32 %v5491, %v5461
        %v5493 = vsel %vm2067, %v5462, 0.0
        %v5494 = vadd.f32 %v5492, %v5493
        %5495 = vadd.xlane.f32.xlu0 %v5494
        %v5496 = vpop.xlane.xlu0 %5495
        %v5497 = vadd.f32 %v5463, %v5464
        %v5498 = vadd.f32 %v5497, %v5465
        %v5499 = vsel %vm2067, %v5466, 0.0
        %v5500 = vadd.f32 %v5498, %v5499
        %5501 = vadd.xlane.f32.xlu0 %v5500
        %v5502 = vpop.xlane.xlu0 %5501
        %v5503 = vadd.f32 %v5467, %v5468
        %v5504 = vadd.f32 %v5503, %v5469
        %v5505 = vsel %vm2067, %v5470, 0.0
        %v5506 = vadd.f32 %v5504, %v5505
        %5507 = vadd.xlane.f32.xlu0 %v5506
        %v5508 = vpop.xlane.xlu0 %5507
        %v5509 = vadd.f32 %v5471, %v5472
        %v5510 = vadd.f32 %v5509, %v5473
        %v5511 = vsel %vm2067, %v5474, 0.0
        %v5512 = vadd.f32 %v5510, %v5511
        %5513 = vadd.xlane.f32.xlu0 %v5512
        %v5514 = vpop.xlane.xlu0 %5513
        %v5515 = vadd.f32 %v5475, %v5476
        %v5516 = vadd.f32 %v5515, %v5477
        %v5517 = vsel %vm2067, %v5478, 0.0
        %v5518 = vadd.f32 %v5516, %v5517
        %5519 = vadd.xlane.f32.xlu0 %v5518
        %v5520 = vpop.xlane.xlu0 %5519
        %v5521 = vadd.f32 %v5479, %v5480
        %v5522 = vadd.f32 %v5521, %v5481
        %v5523 = vsel %vm2067, %v5482, 0.0
        %v5524 = vadd.f32 %v5522, %v5523
        %5525 = vadd.xlane.f32.xlu0 %v5524
        %v5526 = vpop.xlane.xlu0 %5525
        %v5527 = vadd.f32 %v5483, %v5484
        %v5528 = vadd.f32 %v5527, %v5485
        %v5529 = vsel %vm2067, %v5486, 0.0
        %v5530 = vadd.f32 %v5528, %v5529
        %5531 = vadd.xlane.f32.xlu0 %v5530
        %v5532 = vpop.xlane.xlu0 %5531
        %v5533 = vadd.f32 %v5487, %v5488
        %v5534 = vadd.f32 %v5533, %v5489
        %v5535 = vsel %vm2067, %v5490, 0.0
        %v5536 = vadd.f32 %v5534, %v5535
        %5537 = vadd.xlane.f32.xlu0 %v5536
        %v5538 = vpop.xlane.xlu0 %5537
        %v5539 = vrcp.pop 480.0
        %v5540 = vmul.f32 %v5496, %v5539
        %v5541 = vmul.f32 %v5502, %v5539
        %v5542 = vmul.f32 %v5508, %v5539
        %v5543 = vmul.f32 %v5514, %v5539
        %v5544 = vmul.f32 %v5520, %v5539
        %v5545 = vmul.f32 %v5526, %v5539
        %v5546 = vmul.f32 %v5532, %v5539
        %v5547 = vmul.f32 %v5538, %v5539
        %v5548 = vsub.f32 %v5459, %v5540
        %v5549 = vsub.f32 %v5460, %v5540
        %v5550 = vsub.f32 %v5461, %v5540
        %v5551 = vsub.f32 %v5462, %v5540
        %v5552 = vsub.f32 %v5463, %v5541
        %v5553 = vsub.f32 %v5464, %v5541
        %v5554 = vsub.f32 %v5465, %v5541
        %v5555 = vsub.f32 %v5466, %v5541
        %v5556 = vsub.f32 %v5467, %v5542
        %v5557 = vsub.f32 %v5468, %v5542
        %v5558 = vsub.f32 %v5469, %v5542
        %v5559 = vsub.f32 %v5470, %v5542
        %v5560 = vsub.f32 %v5471, %v5543
        %v5561 = vsub.f32 %v5472, %v5543
        %v5562 = vsub.f32 %v5473, %v5543
        %v5563 = vsub.f32 %v5474, %v5543
        %v5564 = vsub.f32 %v5475, %v5544
        %v5565 = vsub.f32 %v5476, %v5544
        %v5566 = vsub.f32 %v5477, %v5544
        %v5567 = vsub.f32 %v5478, %v5544
        %v5568 = vsub.f32 %v5479, %v5545
        %v5569 = vsub.f32 %v5480, %v5545
        %v5570 = vsub.f32 %v5481, %v5545
        %v5571 = vsub.f32 %v5482, %v5545
        %v5572 = vsub.f32 %v5483, %v5546
        %v5573 = vsub.f32 %v5484, %v5546
        %v5574 = vsub.f32 %v5485, %v5546
        %v5575 = vsub.f32 %v5486, %v5546
        %v5576 = vsub.f32 %v5487, %v5547
        %v5577 = vsub.f32 %v5488, %v5547
        %v5578 = vsub.f32 %v5489, %v5547
        %v5579 = vsub.f32 %v5490, %v5547
        %v5580 = vmul.f32 %v5548, %v5548
        %v5581 = vmul.f32 %v5549, %v5549
        %v5582 = vmul.f32 %v5550, %v5550
        %v5583 = vmul.f32 %v5551, %v5551
        %v5584 = vmul.f32 %v5552, %v5552
        %v5585 = vmul.f32 %v5553, %v5553
        %v5586 = vmul.f32 %v5554, %v5554
        %v5587 = vmul.f32 %v5555, %v5555
        %v5588 = vmul.f32 %v5556, %v5556
        %v5589 = vmul.f32 %v5557, %v5557
        %v5590 = vmul.f32 %v5558, %v5558
        %v5591 = vmul.f32 %v5559, %v5559
        %v5592 = vmul.f32 %v5560, %v5560
        %v5593 = vmul.f32 %v5561, %v5561
        %v5594 = vmul.f32 %v5562, %v5562
        %v5595 = vmul.f32 %v5563, %v5563
        %v5596 = vmul.f32 %v5564, %v5564
        %v5597 = vmul.f32 %v5565, %v5565
        %v5598 = vmul.f32 %v5566, %v5566
        %v5599 = vmul.f32 %v5567, %v5567
        %v5600 = vmul.f32 %v5568, %v5568
        %v5601 = vmul.f32 %v5569, %v5569
        %v5602 = vmul.f32 %v5570, %v5570
        %v5603 = vmul.f32 %v5571, %v5571
        %v5604 = vmul.f32 %v5572, %v5572
        %v5605 = vmul.f32 %v5573, %v5573
        %v5606 = vmul.f32 %v5574, %v5574
        %v5607 = vmul.f32 %v5575, %v5575
        %v5608 = vmul.f32 %v5576, %v5576
        %v5609 = vmul.f32 %v5577, %v5577
        %v5610 = vmul.f32 %v5578, %v5578
        %v5611 = vmul.f32 %v5579, %v5579
        %v5612 = vadd.f32 %v5580, %v5581
        %v5613 = vadd.f32 %v5612, %v5582
        %v5614 = vsel %vm2067, %v5583, 0.0
        %v5615 = vadd.f32 %v5613, %v5614
        %5616 = vadd.xlane.f32.xlu0 %v5615
        %v5617 = vpop.xlane.xlu0 %5616
        %v5618 = vadd.f32 %v5584, %v5585
        %v5619 = vadd.f32 %v5618, %v5586
        %v5620 = vsel %vm2067, %v5587, 0.0
        %v5621 = vadd.f32 %v5619, %v5620
        %5622 = vadd.xlane.f32.xlu0 %v5621
        %v5623 = vpop.xlane.xlu0 %5622
        %v5624 = vadd.f32 %v5588, %v5589
        %v5625 = vadd.f32 %v5624, %v5590
        %v5626 = vsel %vm2067, %v5591, 0.0
        %v5627 = vadd.f32 %v5625, %v5626
        %5628 = vadd.xlane.f32.xlu0 %v5627
        %v5629 = vpop.xlane.xlu0 %5628
        %v5630 = vadd.f32 %v5592, %v5593
        %v5631 = vadd.f32 %v5630, %v5594
        %v5632 = vsel %vm2067, %v5595, 0.0
        %v5633 = vadd.f32 %v5631, %v5632
        %5634 = vadd.xlane.f32.xlu0 %v5633
        %v5635 = vpop.xlane.xlu0 %5634
        %v5636 = vadd.f32 %v5596, %v5597
        %v5637 = vadd.f32 %v5636, %v5598
        %v5638 = vsel %vm2067, %v5599, 0.0
        %v5639 = vadd.f32 %v5637, %v5638
        %5640 = vadd.xlane.f32.xlu0 %v5639
        %v5641 = vpop.xlane.xlu0 %5640
        %v5642 = vadd.f32 %v5600, %v5601
        %v5643 = vadd.f32 %v5642, %v5602
        %v5644 = vsel %vm2067, %v5603, 0.0
        %v5645 = vadd.f32 %v5643, %v5644
        %5646 = vadd.xlane.f32.xlu0 %v5645
        %v5647 = vpop.xlane.xlu0 %5646
        %v5648 = vadd.f32 %v5604, %v5605
        %v5649 = vadd.f32 %v5648, %v5606
        %v5650 = vsel %vm2067, %v5607, 0.0
        %v5651 = vadd.f32 %v5649, %v5650
        %5652 = vadd.xlane.f32.xlu0 %v5651
        %v5653 = vpop.xlane.xlu0 %5652
        %v5654 = vadd.f32 %v5608, %v5609
        %v5655 = vadd.f32 %v5654, %v5610
        %v5656 = vsel %vm2067, %v5611, 0.0
        %v5657 = vadd.f32 %v5655, %v5656
        %5658 = vadd.xlane.f32.xlu0 %v5657
        %v5659 = vpop.xlane.xlu0 %5658
        %v5660 = vmul.f32 %v5617, %v5539
        %v5661 = vmul.f32 %v5623, %v5539
        %v5662 = vmul.f32 %v5629, %v5539
        %v5663 = vmul.f32 %v5635, %v5539
        %v5664 = vmul.f32 %v5641, %v5539
        %v5665 = vmul.f32 %v5647, %v5539
        %v5666 = vmul.f32 %v5653, %v5539
        %v5667 = vmul.f32 %v5659, %v5539
        %v5668 = vadd.f32 %v5660, 1e-05
        %v5669 = vadd.f32 %v5661, 1e-05
        %v5670 = vadd.f32 %v5662, 1e-05
        %v5671 = vadd.f32 %v5663, 1e-05
        %v5672 = vadd.f32 %v5664, 1e-05
        %v5673 = vadd.f32 %v5665, 1e-05
        %v5674 = vadd.f32 %v5666, 1e-05
        %v5675 = vadd.f32 %v5667, 1e-05
        %v5676 = vrsqrt.pop %v5668
        %v5677 = vrsqrt.pop %v5669
        %v5678 = vrsqrt.pop %v5670
        %v5679 = vrsqrt.pop %v5671
        %v5680 = vrsqrt.pop %v5672
        %v5681 = vrsqrt.pop %v5673
        %v5682 = vrsqrt.pop %v5674
        %v5683 = vrsqrt.pop %v5675
        %v5684 = vmul.f32 %v5548, %v5676
        %v5685 = vmul.f32 %v5549, %v5676
        %v5686 = vmul.f32 %v5550, %v5676
        %v5687 = vmul.f32 %v5551, %v5676
        %v5688 = vmul.f32 %v5552, %v5677
        %v5689 = vmul.f32 %v5553, %v5677
        %v5690 = vmul.f32 %v5554, %v5677
        %v5691 = vmul.f32 %v5555, %v5677
        %v5692 = vmul.f32 %v5556, %v5678
        %v5693 = vmul.f32 %v5557, %v5678
        %v5694 = vmul.f32 %v5558, %v5678
        %v5695 = vmul.f32 %v5559, %v5678
        %v5696 = vmul.f32 %v5560, %v5679
        %v5697 = vmul.f32 %v5561, %v5679
        %v5698 = vmul.f32 %v5562, %v5679
        %v5699 = vmul.f32 %v5563, %v5679
        %v5700 = vmul.f32 %v5564, %v5680
        %v5701 = vmul.f32 %v5565, %v5680
        %v5702 = vmul.f32 %v5566, %v5680
        %v5703 = vmul.f32 %v5567, %v5680
        %v5704 = vmul.f32 %v5568, %v5681
        %v5705 = vmul.f32 %v5569, %v5681
        %v5706 = vmul.f32 %v5570, %v5681
        %v5707 = vmul.f32 %v5571, %v5681
        %v5708 = vmul.f32 %v5572, %v5682
        %v5709 = vmul.f32 %v5573, %v5682
        %v5710 = vmul.f32 %v5574, %v5682
        %v5711 = vmul.f32 %v5575, %v5682
        %v5712 = vmul.f32 %v5576, %v5683
        %v5713 = vmul.f32 %v5577, %v5683
        %v5714 = vmul.f32 %v5578, %v5683
        %v5715 = vmul.f32 %v5579, %v5683
        %v5717 = vlaneseq
        %v5718 = vshrl.u32 %v5717, 7
        %v5719 = vsub.s32 0, %v5718
        %v5720 = vrot.slane %v5456, %v5719
        %v5721 = vlaneseq
        %v5722 = vshrl.u32 %v5721, 7
        %v5723 = vsub.s32 1, %v5722
        %v5724 = vrot.slane %v5456, %v5723
        %v5725 = vlaneseq
        %v5726 = vshrl.u32 %v5725, 7
        %v5727 = vsub.s32 2, %v5726
        %v5728 = vrot.slane %v5456, %v5727
        %v5729 = vlaneseq
        %v5730 = vshrl.u32 %v5729, 7
        %v5731 = vsub.s32 3, %v5730
        %v5732 = vrot.slane %v5456, %v5731
        %v5737 = vmul.f32 %v5684, %v5720
        %v5738 = vmul.f32 %v5685, %v5724
        %v5739 = vmul.f32 %v5686, %v5728
        %v5740 = vmul.f32 %v5687, %v5732
        %v5741 = vmul.f32 %v5688, %v5720
        %v5742 = vmul.f32 %v5689, %v5724
        %v5743 = vmul.f32 %v5690, %v5728
        %v5744 = vmul.f32 %v5691, %v5732
        %v5745 = vmul.f32 %v5692, %v5720
        %v5746 = vmul.f32 %v5693, %v5724
        %v5747 = vmul.f32 %v5694, %v5728
        %v5748 = vmul.f32 %v5695, %v5732
        %v5749 = vmul.f32 %v5696, %v5720
        %v5750 = vmul.f32 %v5697, %v5724
        %v5751 = vmul.f32 %v5698, %v5728
        %v5752 = vmul.f32 %v5699, %v5732
        %v5753 = vmul.f32 %v5700, %v5720
        %v5754 = vmul.f32 %v5701, %v5724
        %v5755 = vmul.f32 %v5702, %v5728
        %v5756 = vmul.f32 %v5703, %v5732
        %v5757 = vmul.f32 %v5704, %v5720
        %v5758 = vmul.f32 %v5705, %v5724
        %v5759 = vmul.f32 %v5706, %v5728
        %v5760 = vmul.f32 %v5707, %v5732
        %v5761 = vmul.f32 %v5708, %v5720
        %v5762 = vmul.f32 %v5709, %v5724
        %v5763 = vmul.f32 %v5710, %v5728
        %v5764 = vmul.f32 %v5711, %v5732
        %v5765 = vmul.f32 %v5712, %v5720
        %v5766 = vmul.f32 %v5713, %v5724
        %v5767 = vmul.f32 %v5714, %v5728
        %v5768 = vmul.f32 %v5715, %v5732
        %v5770 = vlaneseq
        %v5771 = vshrl.u32 %v5770, 7
        %v5772 = vsub.s32 0, %v5771
        %v5773 = vrot.slane %v5458, %v5772
        %v5774 = vlaneseq
        %v5775 = vshrl.u32 %v5774, 7
        %v5776 = vsub.s32 1, %v5775
        %v5777 = vrot.slane %v5458, %v5776
        %v5778 = vlaneseq
        %v5779 = vshrl.u32 %v5778, 7
        %v5780 = vsub.s32 2, %v5779
        %v5781 = vrot.slane %v5458, %v5780
        %v5782 = vlaneseq
        %v5783 = vshrl.u32 %v5782, 7
        %v5784 = vsub.s32 3, %v5783
        %v5785 = vrot.slane %v5458, %v5784
        %v5790 = vadd.f32 %v5737, %v5773
        %v5791 = vadd.f32 %v5738, %v5777
        %v5792 = vadd.f32 %v5739, %v5781
        %v5793 = vadd.f32 %v5740, %v5785
        %v5794 = vadd.f32 %v5741, %v5773
        %v5795 = vadd.f32 %v5742, %v5777
        %v5796 = vadd.f32 %v5743, %v5781
        %v5797 = vadd.f32 %v5744, %v5785
        %v5798 = vadd.f32 %v5745, %v5773
        %v5799 = vadd.f32 %v5746, %v5777
        %v5800 = vadd.f32 %v5747, %v5781
        %v5801 = vadd.f32 %v5748, %v5785
        %v5802 = vadd.f32 %v5749, %v5773
        %v5803 = vadd.f32 %v5750, %v5777
        %v5804 = vadd.f32 %v5751, %v5781
        %v5805 = vadd.f32 %v5752, %v5785
        %v5806 = vadd.f32 %v5753, %v5773
        %v5807 = vadd.f32 %v5754, %v5777
        %v5808 = vadd.f32 %v5755, %v5781
        %v5809 = vadd.f32 %v5756, %v5785
        %v5810 = vadd.f32 %v5757, %v5773
        %v5811 = vadd.f32 %v5758, %v5777
        %v5812 = vadd.f32 %v5759, %v5781
        %v5813 = vadd.f32 %v5760, %v5785
        %v5814 = vadd.f32 %v5761, %v5773
        %v5815 = vadd.f32 %v5762, %v5777
        %v5816 = vadd.f32 %v5763, %v5781
        %v5817 = vadd.f32 %v5764, %v5785
        %v5818 = vadd.f32 %v5765, %v5773
        %v5819 = vadd.f32 %v5766, %v5777
        %v5820 = vadd.f32 %v5767, %v5781
        %v5821 = vadd.f32 %v5768, %v5785
        %5854 = vrot.lane.b32.xlu0 %v5790, 3
        %v5855 = vpop.permute.xlu0 %5854
        %5856 = vrot.lane.b32.xlu0 %v5791, 3
        %v5857 = vpop.permute.xlu0 %5856
        %5858 = vrot.lane.b32.xlu0 %v5792, 3
        %v5859 = vpop.permute.xlu0 %5858
        %5860 = vrot.lane.b32.xlu0 %v5793, 3
        %v5861 = vpop.permute.xlu0 %5860
        %5862 = vrot.lane.b32.xlu0 %v5794, 3
        %v5863 = vpop.permute.xlu0 %5862
        %5864 = vrot.lane.b32.xlu0 %v5795, 3
        %v5865 = vpop.permute.xlu0 %5864
        %5866 = vrot.lane.b32.xlu0 %v5796, 3
        %v5867 = vpop.permute.xlu0 %5866
        %5868 = vrot.lane.b32.xlu0 %v5797, 3
        %v5869 = vpop.permute.xlu0 %5868
        %5870 = vrot.lane.b32.xlu0 %v5798, 3
        %v5871 = vpop.permute.xlu0 %5870
        %5872 = vrot.lane.b32.xlu0 %v5799, 3
        %v5873 = vpop.permute.xlu0 %5872
        %5874 = vrot.lane.b32.xlu0 %v5800, 3
        %v5875 = vpop.permute.xlu0 %5874
        %5876 = vrot.lane.b32.xlu0 %v5801, 3
        %v5877 = vpop.permute.xlu0 %5876
        %5878 = vrot.lane.b32.xlu0 %v5802, 3
        %v5879 = vpop.permute.xlu0 %5878
        %5880 = vrot.lane.b32.xlu0 %v5803, 3
        %v5881 = vpop.permute.xlu0 %5880
        %5882 = vrot.lane.b32.xlu0 %v5804, 3
        %v5883 = vpop.permute.xlu0 %5882
        %5884 = vrot.lane.b32.xlu0 %v5805, 3
        %v5885 = vpop.permute.xlu0 %5884
        %5886 = vrot.lane.b32.xlu0 %v5806, 3
        %v5887 = vpop.permute.xlu0 %5886
        %5888 = vrot.lane.b32.xlu0 %v5807, 3
        %v5889 = vpop.permute.xlu0 %5888
        %5890 = vrot.lane.b32.xlu0 %v5808, 3
        %v5891 = vpop.permute.xlu0 %5890
        %5892 = vrot.lane.b32.xlu0 %v5809, 3
        %v5893 = vpop.permute.xlu0 %5892
        %5894 = vrot.lane.b32.xlu0 %v5810, 3
        %v5895 = vpop.permute.xlu0 %5894
        %5896 = vrot.lane.b32.xlu0 %v5811, 3
        %v5897 = vpop.permute.xlu0 %5896
        %5898 = vrot.lane.b32.xlu0 %v5812, 3
        %v5899 = vpop.permute.xlu0 %5898
        %5900 = vrot.lane.b32.xlu0 %v5813, 3
        %v5901 = vpop.permute.xlu0 %5900
        %5902 = vrot.lane.b32.xlu0 %v5814, 3
        %v5903 = vpop.permute.xlu0 %5902
        %5904 = vrot.lane.b32.xlu0 %v5815, 3
        %v5905 = vpop.permute.xlu0 %5904
        %5906 = vrot.lane.b32.xlu0 %v5816, 3
        %v5907 = vpop.permute.xlu0 %5906
        %5908 = vrot.lane.b32.xlu0 %v5817, 3
        %v5909 = vpop.permute.xlu0 %5908
        %5910 = vrot.lane.b32.xlu0 %v5818, 3
        %v5911 = vpop.permute.xlu0 %5910
        %5912 = vrot.lane.b32.xlu0 %v5819, 3
        %v5913 = vpop.permute.xlu0 %5912
        %5914 = vrot.lane.b32.xlu0 %v5820, 3
        %v5915 = vpop.permute.xlu0 %5914
        %5916 = vrot.lane.b32.xlu0 %v5821, 3
        %v5917 = vpop.permute.xlu0 %5916
        %vm5918 = vcmask 23552
        %v5919 = vsel %vm5918, %v5855, %v5857
        %v5920 = vsel %vm5918, %v5857, %v5859
        %v5921 = vsel %vm5918, %v5859, %v5861
        %v5922 = vsel %vm5918, %v5863, %v5865
        %v5923 = vsel %vm5918, %v5865, %v5867
        %v5924 = vsel %vm5918, %v5867, %v5869
        %v5925 = vsel %vm5918, %v5871, %v5873
        %v5926 = vsel %vm5918, %v5873, %v5875
        %v5927 = vsel %vm5918, %v5875, %v5877
        %v5928 = vsel %vm5918, %v5879, %v5881
        %v5929 = vsel %vm5918, %v5881, %v5883
        %v5930 = vsel %vm5918, %v5883, %v5885
        %v5931 = vsel %vm5918, %v5887, %v5889
        %v5932 = vsel %vm5918, %v5889, %v5891
        %v5933 = vsel %vm5918, %v5891, %v5893
        %v5934 = vsel %vm5918, %v5895, %v5897
        %v5935 = vsel %vm5918, %v5897, %v5899
        %v5936 = vsel %vm5918, %v5899, %v5901
        %v5937 = vsel %vm5918, %v5903, %v5905
        %v5938 = vsel %vm5918, %v5905, %v5907
        %v5939 = vsel %vm5918, %v5907, %v5909
        %v5940 = vsel %vm5918, %v5911, %v5913
        %v5941 = vsel %vm5918, %v5913, %v5915
        %v5942 = vsel %vm5918, %v5915, %v5917
        %v5975 = vsel %vm5918, 0.0, %v5855
        %v5976 = vsel %vm5918, 0.0, %v5863
        %v5977 = vsel %vm5918, 0.0, %v5871
        %v5978 = vsel %vm5918, 0.0, %v5879
        %v5979 = vsel %vm5918, 0.0, %v5887
        %v5980 = vsel %vm5918, 0.0, %v5895
        %v5981 = vsel %vm5918, 0.0, %v5903
        %v5982 = vsel %vm5918, 0.0, %v5911
        %vm5983 = vcmask 809984
        %v5984 = vsel %vm5983, %v5921, 0.0
        %v5985 = vsel %vm5983, %v5924, 0.0
        %v5986 = vsel %vm5983, %v5927, 0.0
        %v5987 = vsel %vm5983, %v5930, 0.0
        %v5988 = vsel %vm5983, %v5933, 0.0
        %v5989 = vsel %vm5983, %v5936, 0.0
        %v5990 = vsel %vm5983, %v5939, 0.0
        %v5991 = vsel %vm5983, %v5942, 0.0
        %6008 = vrot.lane.b32.xlu0 %v5975, 127
        %v6009 = vpop.permute.xlu0 %6008
        %6010 = vrot.lane.b32.xlu0 %v5919, 127
        %v6011 = vpop.permute.xlu0 %6010
        %6012 = vrot.lane.b32.xlu0 %v5920, 127
        %v6013 = vpop.permute.xlu0 %6012
        %6014 = vrot.lane.b32.xlu0 %v5984, 127
        %v6015 = vpop.permute.xlu0 %6014
        %6016 = vrot.lane.b32.xlu0 %v5976, 127
        %v6017 = vpop.permute.xlu0 %6016
        %6018 = vrot.lane.b32.xlu0 %v5922, 127
        %v6019 = vpop.permute.xlu0 %6018
        %6020 = vrot.lane.b32.xlu0 %v5923, 127
        %v6021 = vpop.permute.xlu0 %6020
        %6022 = vrot.lane.b32.xlu0 %v5985, 127
        %v6023 = vpop.permute.xlu0 %6022
        %6024 = vrot.lane.b32.xlu0 %v5977, 127
        %v6025 = vpop.permute.xlu0 %6024
        %6026 = vrot.lane.b32.xlu0 %v5925, 127
        %v6027 = vpop.permute.xlu0 %6026
        %6028 = vrot.lane.b32.xlu0 %v5926, 127
        %v6029 = vpop.permute.xlu0 %6028
        %6030 = vrot.lane.b32.xlu0 %v5986, 127
        %v6031 = vpop.permute.xlu0 %6030
        %6032 = vrot.lane.b32.xlu0 %v5978, 127
        %v6033 = vpop.permute.xlu0 %6032
        %6034 = vrot.lane.b32.xlu0 %v5928, 127
        %v6035 = vpop.permute.xlu0 %6034
        %6036 = vrot.lane.b32.xlu0 %v5929, 127
        %v6037 = vpop.permute.xlu0 %6036
        %6038 = vrot.lane.b32.xlu0 %v5987, 127
        %v6039 = vpop.permute.xlu0 %6038
        %6040 = vrot.lane.b32.xlu0 %v5979, 127
        %v6041 = vpop.permute.xlu0 %6040
        %6042 = vrot.lane.b32.xlu0 %v5931, 127
        %v6043 = vpop.permute.xlu0 %6042
        %6044 = vrot.lane.b32.xlu0 %v5932, 127
        %v6045 = vpop.permute.xlu0 %6044
        %6046 = vrot.lane.b32.xlu0 %v5988, 127
        %v6047 = vpop.permute.xlu0 %6046
        %6048 = vrot.lane.b32.xlu0 %v5980, 127
        %v6049 = vpop.permute.xlu0 %6048
        %6050 = vrot.lane.b32.xlu0 %v5934, 127
        %v6051 = vpop.permute.xlu0 %6050
        %6052 = vrot.lane.b32.xlu0 %v5935, 127
        %v6053 = vpop.permute.xlu0 %6052
        %6054 = vrot.lane.b32.xlu0 %v5989, 127
        %v6055 = vpop.permute.xlu0 %6054
        %6056 = vrot.lane.b32.xlu0 %v5981, 127
        %v6057 = vpop.permute.xlu0 %6056
        %6058 = vrot.lane.b32.xlu0 %v5937, 127
        %v6059 = vpop.permute.xlu0 %6058
        %6060 = vrot.lane.b32.xlu0 %v5938, 127
        %v6061 = vpop.permute.xlu0 %6060
        %6062 = vrot.lane.b32.xlu0 %v5990, 127
        %v6063 = vpop.permute.xlu0 %6062
        %6064 = vrot.lane.b32.xlu0 %v5982, 127
        %v6065 = vpop.permute.xlu0 %6064
        %6066 = vrot.lane.b32.xlu0 %v5940, 127
        %v6067 = vpop.permute.xlu0 %6066
        %6068 = vrot.lane.b32.xlu0 %v5941, 127
        %v6069 = vpop.permute.xlu0 %6068
        %6070 = vrot.lane.b32.xlu0 %v5991, 127
        %v6071 = vpop.permute.xlu0 %6070
        %v6072 = vsel %vm1982, %v6009, %v6011
        %v6073 = vsel %vm1982, %v6011, %v6013
        %v6074 = vsel %vm1982, %v6013, %v6015
        %v6075 = vsel %vm1982, %v6017, %v6019
        %v6076 = vsel %vm1982, %v6019, %v6021
        %v6077 = vsel %vm1982, %v6021, %v6023
        %v6078 = vsel %vm1982, %v6025, %v6027
        %v6079 = vsel %vm1982, %v6027, %v6029
        %v6080 = vsel %vm1982, %v6029, %v6031
        %v6081 = vsel %vm1982, %v6033, %v6035
        %v6082 = vsel %vm1982, %v6035, %v6037
        %v6083 = vsel %vm1982, %v6037, %v6039
        %v6084 = vsel %vm1982, %v6041, %v6043
        %v6085 = vsel %vm1982, %v6043, %v6045
        %v6086 = vsel %vm1982, %v6045, %v6047
        %v6087 = vsel %vm1982, %v6049, %v6051
        %v6088 = vsel %vm1982, %v6051, %v6053
        %v6089 = vsel %vm1982, %v6053, %v6055
        %v6090 = vsel %vm1982, %v6057, %v6059
        %v6091 = vsel %vm1982, %v6059, %v6061
        %v6092 = vsel %vm1982, %v6061, %v6063
        %v6093 = vsel %vm1982, %v6065, %v6067
        %v6094 = vsel %vm1982, %v6067, %v6069
        %v6095 = vsel %vm1982, %v6069, %v6071
        %6120 = vrot.lane.b32.xlu0 %v5975, 126
        %v6121 = vpop.permute.xlu0 %6120
        %6122 = vrot.lane.b32.xlu0 %v5919, 126
        %v6123 = vpop.permute.xlu0 %6122
        %6124 = vrot.lane.b32.xlu0 %v5920, 126
        %v6125 = vpop.permute.xlu0 %6124
        %6126 = vrot.lane.b32.xlu0 %v5984, 126
        %v6127 = vpop.permute.xlu0 %6126
        %6128 = vrot.lane.b32.xlu0 %v5976, 126
        %v6129 = vpop.permute.xlu0 %6128
        %6130 = vrot.lane.b32.xlu0 %v5922, 126
        %v6131 = vpop.permute.xlu0 %6130
        %6132 = vrot.lane.b32.xlu0 %v5923, 126
        %v6133 = vpop.permute.xlu0 %6132
        %6134 = vrot.lane.b32.xlu0 %v5985, 126
        %v6135 = vpop.permute.xlu0 %6134
        %6136 = vrot.lane.b32.xlu0 %v5977, 126
        %v6137 = vpop.permute.xlu0 %6136
        %6138 = vrot.lane.b32.xlu0 %v5925, 126
        %v6139 = vpop.permute.xlu0 %6138
        %6140 = vrot.lane.b32.xlu0 %v5926, 126
        %v6141 = vpop.permute.xlu0 %6140
        %6142 = vrot.lane.b32.xlu0 %v5986, 126
        %v6143 = vpop.permute.xlu0 %6142
        %6144 = vrot.lane.b32.xlu0 %v5978, 126
        %v6145 = vpop.permute.xlu0 %6144
        %6146 = vrot.lane.b32.xlu0 %v5928, 126
        %v6147 = vpop.permute.xlu0 %6146
        %6148 = vrot.lane.b32.xlu0 %v5929, 126
        %v6149 = vpop.permute.xlu0 %6148
        %6150 = vrot.lane.b32.xlu0 %v5987, 126
        %v6151 = vpop.permute.xlu0 %6150
        %6152 = vrot.lane.b32.xlu0 %v5979, 126
        %v6153 = vpop.permute.xlu0 %6152
        %6154 = vrot.lane.b32.xlu0 %v5931, 126
        %v6155 = vpop.permute.xlu0 %6154
        %6156 = vrot.lane.b32.xlu0 %v5932, 126
        %v6157 = vpop.permute.xlu0 %6156
        %6158 = vrot.lane.b32.xlu0 %v5988, 126
        %v6159 = vpop.permute.xlu0 %6158
        %6160 = vrot.lane.b32.xlu0 %v5980, 126
        %v6161 = vpop.permute.xlu0 %6160
        %6162 = vrot.lane.b32.xlu0 %v5934, 126
        %v6163 = vpop.permute.xlu0 %6162
        %6164 = vrot.lane.b32.xlu0 %v5935, 126
        %v6165 = vpop.permute.xlu0 %6164
        %6166 = vrot.lane.b32.xlu0 %v5989, 126
        %v6167 = vpop.permute.xlu0 %6166
        %6168 = vrot.lane.b32.xlu0 %v5981, 126
        %v6169 = vpop.permute.xlu0 %6168
        %6170 = vrot.lane.b32.xlu0 %v5937, 126
        %v6171 = vpop.permute.xlu0 %6170
        %6172 = vrot.lane.b32.xlu0 %v5938, 126
        %v6173 = vpop.permute.xlu0 %6172
        %6174 = vrot.lane.b32.xlu0 %v5990, 126
        %v6175 = vpop.permute.xlu0 %6174
        %6176 = vrot.lane.b32.xlu0 %v5982, 126
        %v6177 = vpop.permute.xlu0 %6176
        %6178 = vrot.lane.b32.xlu0 %v5940, 126
        %v6179 = vpop.permute.xlu0 %6178
        %6180 = vrot.lane.b32.xlu0 %v5941, 126
        %v6181 = vpop.permute.xlu0 %6180
        %6182 = vrot.lane.b32.xlu0 %v5991, 126
        %v6183 = vpop.permute.xlu0 %6182
        %vm6184 = vcmask 1031168
        %v6185 = vsel %vm6184, %v6121, %v6123
        %v6186 = vsel %vm6184, %v6123, %v6125
        %v6187 = vsel %vm6184, %v6125, %v6127
        %v6188 = vsel %vm6184, %v6129, %v6131
        %v6189 = vsel %vm6184, %v6131, %v6133
        %v6190 = vsel %vm6184, %v6133, %v6135
        %v6191 = vsel %vm6184, %v6137, %v6139
        %v6192 = vsel %vm6184, %v6139, %v6141
        %v6193 = vsel %vm6184, %v6141, %v6143
        %v6194 = vsel %vm6184, %v6145, %v6147
        %v6195 = vsel %vm6184, %v6147, %v6149
        %v6196 = vsel %vm6184, %v6149, %v6151
        %v6197 = vsel %vm6184, %v6153, %v6155
        %v6198 = vsel %vm6184, %v6155, %v6157
        %v6199 = vsel %vm6184, %v6157, %v6159
        %v6200 = vsel %vm6184, %v6161, %v6163
        %v6201 = vsel %vm6184, %v6163, %v6165
        %v6202 = vsel %vm6184, %v6165, %v6167
        %v6203 = vsel %vm6184, %v6169, %v6171
        %v6204 = vsel %vm6184, %v6171, %v6173
        %v6205 = vsel %vm6184, %v6173, %v6175
        %v6206 = vsel %vm6184, %v6177, %v6179
        %v6207 = vsel %vm6184, %v6179, %v6181
        %v6208 = vsel %vm6184, %v6181, %v6183
        %6233 = vrot.lane.b32.xlu0 %v5975, 125
        %v6234 = vpop.permute.xlu0 %6233
        %6235 = vrot.lane.b32.xlu0 %v5919, 125
        %v6236 = vpop.permute.xlu0 %6235
        %6237 = vrot.lane.b32.xlu0 %v5920, 125
        %v6238 = vpop.permute.xlu0 %6237
        %6239 = vrot.lane.b32.xlu0 %v5984, 125
        %v6240 = vpop.permute.xlu0 %6239
        %6241 = vrot.lane.b32.xlu0 %v5976, 125
        %v6242 = vpop.permute.xlu0 %6241
        %6243 = vrot.lane.b32.xlu0 %v5922, 125
        %v6244 = vpop.permute.xlu0 %6243
        %6245 = vrot.lane.b32.xlu0 %v5923, 125
        %v6246 = vpop.permute.xlu0 %6245
        %6247 = vrot.lane.b32.xlu0 %v5985, 125
        %v6248 = vpop.permute.xlu0 %6247
        %6249 = vrot.lane.b32.xlu0 %v5977, 125
        %v6250 = vpop.permute.xlu0 %6249
        %6251 = vrot.lane.b32.xlu0 %v5925, 125
        %v6252 = vpop.permute.xlu0 %6251
        %6253 = vrot.lane.b32.xlu0 %v5926, 125
        %v6254 = vpop.permute.xlu0 %6253
        %6255 = vrot.lane.b32.xlu0 %v5986, 125
        %v6256 = vpop.permute.xlu0 %6255
        %6257 = vrot.lane.b32.xlu0 %v5978, 125
        %v6258 = vpop.permute.xlu0 %6257
        %6259 = vrot.lane.b32.xlu0 %v5928, 125
        %v6260 = vpop.permute.xlu0 %6259
        %6261 = vrot.lane.b32.xlu0 %v5929, 125
        %v6262 = vpop.permute.xlu0 %6261
        %6263 = vrot.lane.b32.xlu0 %v5987, 125
        %v6264 = vpop.permute.xlu0 %6263
        %6265 = vrot.lane.b32.xlu0 %v5979, 125
        %v6266 = vpop.permute.xlu0 %6265
        %6267 = vrot.lane.b32.xlu0 %v5931, 125
        %v6268 = vpop.permute.xlu0 %6267
        %6269 = vrot.lane.b32.xlu0 %v5932, 125
        %v6270 = vpop.permute.xlu0 %6269
        %6271 = vrot.lane.b32.xlu0 %v5988, 125
        %v6272 = vpop.permute.xlu0 %6271
        %6273 = vrot.lane.b32.xlu0 %v5980, 125
        %v6274 = vpop.permute.xlu0 %6273
        %6275 = vrot.lane.b32.xlu0 %v5934, 125
        %v6276 = vpop.permute.xlu0 %6275
        %6277 = vrot.lane.b32.xlu0 %v5935, 125
        %v6278 = vpop.permute.xlu0 %6277
        %6279 = vrot.lane.b32.xlu0 %v5989, 125
        %v6280 = vpop.permute.xlu0 %6279
        %6281 = vrot.lane.b32.xlu0 %v5981, 125
        %v6282 = vpop.permute.xlu0 %6281
        %6283 = vrot.lane.b32.xlu0 %v5937, 125
        %v6284 = vpop.permute.xlu0 %6283
        %6285 = vrot.lane.b32.xlu0 %v5938, 125
        %v6286 = vpop.permute.xlu0 %6285
        %6287 = vrot.lane.b32.xlu0 %v5990, 125
        %v6288 = vpop.permute.xlu0 %6287
        %6289 = vrot.lane.b32.xlu0 %v5982, 125
        %v6290 = vpop.permute.xlu0 %6289
        %6291 = vrot.lane.b32.xlu0 %v5940, 125
        %v6292 = vpop.permute.xlu0 %6291
        %6293 = vrot.lane.b32.xlu0 %v5941, 125
        %v6294 = vpop.permute.xlu0 %6293
        %6295 = vrot.lane.b32.xlu0 %v5991, 125
        %v6296 = vpop.permute.xlu0 %6295
        %vm6297 = vcmask 1022976
        %v6298 = vsel %vm6297, %v6234, %v6236
        %v6299 = vsel %vm6297, %v6236, %v6238
        %v6300 = vsel %vm6297, %v6238, %v6240
        %v6301 = vsel %vm6297, %v6242, %v6244
        %v6302 = vsel %vm6297, %v6244, %v6246
        %v6303 = vsel %vm6297, %v6246, %v6248
        %v6304 = vsel %vm6297, %v6250, %v6252
        %v6305 = vsel %vm6297, %v6252, %v6254
        %v6306 = vsel %vm6297, %v6254, %v6256
        %v6307 = vsel %vm6297, %v6258, %v6260
        %v6308 = vsel %vm6297, %v6260, %v6262
        %v6309 = vsel %vm6297, %v6262, %v6264
        %v6310 = vsel %vm6297, %v6266, %v6268
        %v6311 = vsel %vm6297, %v6268, %v6270
        %v6312 = vsel %vm6297, %v6270, %v6272
        %v6313 = vsel %vm6297, %v6274, %v6276
        %v6314 = vsel %vm6297, %v6276, %v6278
        %v6315 = vsel %vm6297, %v6278, %v6280
        %v6316 = vsel %vm6297, %v6282, %v6284
        %v6317 = vsel %vm6297, %v6284, %v6286
        %v6318 = vsel %vm6297, %v6286, %v6288
        %v6319 = vsel %vm6297, %v6290, %v6292
        %v6320 = vsel %vm6297, %v6292, %v6294
        %v6321 = vsel %vm6297, %v6294, %v6296
        %6346 = vrot.lane.b32.xlu0 %v5975, 124
        %v6347 = vpop.permute.xlu0 %6346
        %6348 = vrot.lane.b32.xlu0 %v5919, 124
        %v6349 = vpop.permute.xlu0 %6348
        %6350 = vrot.lane.b32.xlu0 %v5920, 124
        %v6351 = vpop.permute.xlu0 %6350
        %6352 = vrot.lane.b32.xlu0 %v5984, 124
        %v6353 = vpop.permute.xlu0 %6352
        %6354 = vrot.lane.b32.xlu0 %v5976, 124
        %v6355 = vpop.permute.xlu0 %6354
        %6356 = vrot.lane.b32.xlu0 %v5922, 124
        %v6357 = vpop.permute.xlu0 %6356
        %6358 = vrot.lane.b32.xlu0 %v5923, 124
        %v6359 = vpop.permute.xlu0 %6358
        %6360 = vrot.lane.b32.xlu0 %v5985, 124
        %v6361 = vpop.permute.xlu0 %6360
        %6362 = vrot.lane.b32.xlu0 %v5977, 124
        %v6363 = vpop.permute.xlu0 %6362
        %6364 = vrot.lane.b32.xlu0 %v5925, 124
        %v6365 = vpop.permute.xlu0 %6364
        %6366 = vrot.lane.b32.xlu0 %v5926, 124
        %v6367 = vpop.permute.xlu0 %6366
        %6368 = vrot.lane.b32.xlu0 %v5986, 124
        %v6369 = vpop.permute.xlu0 %6368
        %6370 = vrot.lane.b32.xlu0 %v5978, 124
        %v6371 = vpop.permute.xlu0 %6370
        %6372 = vrot.lane.b32.xlu0 %v5928, 124
        %v6373 = vpop.permute.xlu0 %6372
        %6374 = vrot.lane.b32.xlu0 %v5929, 124
        %v6375 = vpop.permute.xlu0 %6374
        %6376 = vrot.lane.b32.xlu0 %v5987, 124
        %v6377 = vpop.permute.xlu0 %6376
        %6378 = vrot.lane.b32.xlu0 %v5979, 124
        %v6379 = vpop.permute.xlu0 %6378
        %6380 = vrot.lane.b32.xlu0 %v5931, 124
        %v6381 = vpop.permute.xlu0 %6380
        %6382 = vrot.lane.b32.xlu0 %v5932, 124
        %v6383 = vpop.permute.xlu0 %6382
        %6384 = vrot.lane.b32.xlu0 %v5988, 124
        %v6385 = vpop.permute.xlu0 %6384
        %6386 = vrot.lane.b32.xlu0 %v5980, 124
        %v6387 = vpop.permute.xlu0 %6386
        %6388 = vrot.lane.b32.xlu0 %v5934, 124
        %v6389 = vpop.permute.xlu0 %6388
        %6390 = vrot.lane.b32.xlu0 %v5935, 124
        %v6391 = vpop.permute.xlu0 %6390
        %6392 = vrot.lane.b32.xlu0 %v5989, 124
        %v6393 = vpop.permute.xlu0 %6392
        %6394 = vrot.lane.b32.xlu0 %v5981, 124
        %v6395 = vpop.permute.xlu0 %6394
        %6396 = vrot.lane.b32.xlu0 %v5937, 124
        %v6397 = vpop.permute.xlu0 %6396
        %6398 = vrot.lane.b32.xlu0 %v5938, 124
        %v6399 = vpop.permute.xlu0 %6398
        %6400 = vrot.lane.b32.xlu0 %v5990, 124
        %v6401 = vpop.permute.xlu0 %6400
        %6402 = vrot.lane.b32.xlu0 %v5982, 124
        %v6403 = vpop.permute.xlu0 %6402
        %6404 = vrot.lane.b32.xlu0 %v5940, 124
        %v6405 = vpop.permute.xlu0 %6404
        %6406 = vrot.lane.b32.xlu0 %v5941, 124
        %v6407 = vpop.permute.xlu0 %6406
        %6408 = vrot.lane.b32.xlu0 %v5991, 124
        %v6409 = vpop.permute.xlu0 %6408
        %vm6410 = vcmask 1014784
        %v6411 = vsel %vm6410, %v6347, %v6349
        %v6412 = vsel %vm6410, %v6349, %v6351
        %v6413 = vsel %vm6410, %v6351, %v6353
        %v6414 = vsel %vm6410, %v6355, %v6357
        %v6415 = vsel %vm6410, %v6357, %v6359
        %v6416 = vsel %vm6410, %v6359, %v6361
        %v6417 = vsel %vm6410, %v6363, %v6365
        %v6418 = vsel %vm6410, %v6365, %v6367
        %v6419 = vsel %vm6410, %v6367, %v6369
        %v6420 = vsel %vm6410, %v6371, %v6373
        %v6421 = vsel %vm6410, %v6373, %v6375
        %v6422 = vsel %vm6410, %v6375, %v6377
        %v6423 = vsel %vm6410, %v6379, %v6381
        %v6424 = vsel %vm6410, %v6381, %v6383
        %v6425 = vsel %vm6410, %v6383, %v6385
        %v6426 = vsel %vm6410, %v6387, %v6389
        %v6427 = vsel %vm6410, %v6389, %v6391
        %v6428 = vsel %vm6410, %v6391, %v6393
        %v6429 = vsel %vm6410, %v6395, %v6397
        %v6430 = vsel %vm6410, %v6397, %v6399
        %v6431 = vsel %vm6410, %v6399, %v6401
        %v6432 = vsel %vm6410, %v6403, %v6405
        %v6433 = vsel %vm6410, %v6405, %v6407
        %v6434 = vsel %vm6410, %v6407, %v6409
        %6459 = vrot.lane.b32.xlu0 %v5975, 123
        %v6460 = vpop.permute.xlu0 %6459
        %6461 = vrot.lane.b32.xlu0 %v5919, 123
        %v6462 = vpop.permute.xlu0 %6461
        %6463 = vrot.lane.b32.xlu0 %v5920, 123
        %v6464 = vpop.permute.xlu0 %6463
        %6465 = vrot.lane.b32.xlu0 %v5984, 123
        %v6466 = vpop.permute.xlu0 %6465
        %6467 = vrot.lane.b32.xlu0 %v5976, 123
        %v6468 = vpop.permute.xlu0 %6467
        %6469 = vrot.lane.b32.xlu0 %v5922, 123
        %v6470 = vpop.permute.xlu0 %6469
        %6471 = vrot.lane.b32.xlu0 %v5923, 123
        %v6472 = vpop.permute.xlu0 %6471
        %6473 = vrot.lane.b32.xlu0 %v5985, 123
        %v6474 = vpop.permute.xlu0 %6473
        %6475 = vrot.lane.b32.xlu0 %v5977, 123
        %v6476 = vpop.permute.xlu0 %6475
        %6477 = vrot.lane.b32.xlu0 %v5925, 123
        %v6478 = vpop.permute.xlu0 %6477
        %6479 = vrot.lane.b32.xlu0 %v5926, 123
        %v6480 = vpop.permute.xlu0 %6479
        %6481 = vrot.lane.b32.xlu0 %v5986, 123
        %v6482 = vpop.permute.xlu0 %6481
        %6483 = vrot.lane.b32.xlu0 %v5978, 123
        %v6484 = vpop.permute.xlu0 %6483
        %6485 = vrot.lane.b32.xlu0 %v5928, 123
        %v6486 = vpop.permute.xlu0 %6485
        %6487 = vrot.lane.b32.xlu0 %v5929, 123
        %v6488 = vpop.permute.xlu0 %6487
        %6489 = vrot.lane.b32.xlu0 %v5987, 123
        %v6490 = vpop.permute.xlu0 %6489
        %6491 = vrot.lane.b32.xlu0 %v5979, 123
        %v6492 = vpop.permute.xlu0 %6491
        %6493 = vrot.lane.b32.xlu0 %v5931, 123
        %v6494 = vpop.permute.xlu0 %6493
        %6495 = vrot.lane.b32.xlu0 %v5932, 123
        %v6496 = vpop.permute.xlu0 %6495
        %6497 = vrot.lane.b32.xlu0 %v5988, 123
        %v6498 = vpop.permute.xlu0 %6497
        %6499 = vrot.lane.b32.xlu0 %v5980, 123
        %v6500 = vpop.permute.xlu0 %6499
        %6501 = vrot.lane.b32.xlu0 %v5934, 123
        %v6502 = vpop.permute.xlu0 %6501
        %6503 = vrot.lane.b32.xlu0 %v5935, 123
        %v6504 = vpop.permute.xlu0 %6503
        %6505 = vrot.lane.b32.xlu0 %v5989, 123
        %v6506 = vpop.permute.xlu0 %6505
        %6507 = vrot.lane.b32.xlu0 %v5981, 123
        %v6508 = vpop.permute.xlu0 %6507
        %6509 = vrot.lane.b32.xlu0 %v5937, 123
        %v6510 = vpop.permute.xlu0 %6509
        %6511 = vrot.lane.b32.xlu0 %v5938, 123
        %v6512 = vpop.permute.xlu0 %6511
        %6513 = vrot.lane.b32.xlu0 %v5990, 123
        %v6514 = vpop.permute.xlu0 %6513
        %6515 = vrot.lane.b32.xlu0 %v5982, 123
        %v6516 = vpop.permute.xlu0 %6515
        %6517 = vrot.lane.b32.xlu0 %v5940, 123
        %v6518 = vpop.permute.xlu0 %6517
        %6519 = vrot.lane.b32.xlu0 %v5941, 123
        %v6520 = vpop.permute.xlu0 %6519
        %6521 = vrot.lane.b32.xlu0 %v5991, 123
        %v6522 = vpop.permute.xlu0 %6521
        %vm6523 = vcmask 1006592
        %v6524 = vsel %vm6523, %v6460, %v6462
        %v6525 = vsel %vm6523, %v6462, %v6464
        %v6526 = vsel %vm6523, %v6464, %v6466
        %v6527 = vsel %vm6523, %v6468, %v6470
        %v6528 = vsel %vm6523, %v6470, %v6472
        %v6529 = vsel %vm6523, %v6472, %v6474
        %v6530 = vsel %vm6523, %v6476, %v6478
        %v6531 = vsel %vm6523, %v6478, %v6480
        %v6532 = vsel %vm6523, %v6480, %v6482
        %v6533 = vsel %vm6523, %v6484, %v6486
        %v6534 = vsel %vm6523, %v6486, %v6488
        %v6535 = vsel %vm6523, %v6488, %v6490
        %v6536 = vsel %vm6523, %v6492, %v6494
        %v6537 = vsel %vm6523, %v6494, %v6496
        %v6538 = vsel %vm6523, %v6496, %v6498
        %v6539 = vsel %vm6523, %v6500, %v6502
        %v6540 = vsel %vm6523, %v6502, %v6504
        %v6541 = vsel %vm6523, %v6504, %v6506
        %v6542 = vsel %vm6523, %v6508, %v6510
        %v6543 = vsel %vm6523, %v6510, %v6512
        %v6544 = vsel %vm6523, %v6512, %v6514
        %v6545 = vsel %vm6523, %v6516, %v6518
        %v6546 = vsel %vm6523, %v6518, %v6520
        %v6547 = vsel %vm6523, %v6520, %v6522
        %v6572 = vlaneseq
        %v6573 = vshrl.u32 %v6572, 7
        %v6574 = vadd.s32 %v6573, 8
        %v6575 = vadd.s32 %v6573, 16
        %v6576 = vadd.s32 %v6573, 24
        %v6577 = vadd.s32 %v6573, 32
        %v6578 = vadd.s32 %v6573, 40
        %v6579 = vadd.s32 %v6573, 48
        %v6580 = vadd.s32 %v6573, 56
        %v6581 = vadd.s32 %v6573, 64
        %v6582 = vadd.s32 %v6573, 72
        %v6583 = vadd.s32 %v6573, 80
        %v6584 = vadd.s32 %v6573, 88
        %v6585 = vadd.s32 %v6573, 96
        %v6586 = vadd.s32 %v6573, 104
        %v6587 = vadd.s32 %v6573, 112
        %v6588 = vadd.s32 %v6573, 120
        %v6589 = vadd.s32 %v6573, 128
        %v6590 = vadd.s32 %v6573, 136
        %v6591 = vadd.s32 %v6573, 144
        %v6592 = vadd.s32 %v6573, 152
        %v6593 = vadd.s32 %v6573, 160
        %v6594 = vadd.s32 %v6573, 168
        %v6595 = vadd.s32 %v6573, 176
        %v6596 = vadd.s32 %v6573, 184
        %v6597 = vadd.s32 %v6573, 192
        %v6598 = vadd.s32 %v6573, 200
        %v6599 = vadd.s32 %v6573, 208
        %v6600 = vadd.s32 %v6573, 216
        %v6601 = vadd.s32 %v6573, 224
        %v6602 = vadd.s32 %v6573, 232
        %v6603 = vadd.s32 %v6573, 240
        %v6604 = vadd.s32 %v6573, 248
        %v6605 = vadd.s32 %v6573, 256
        %v6606 = vadd.s32 %v6573, 264
        %v6607 = vadd.s32 %v6573, 272
        %v6608 = vadd.s32 %v6573, 280
        %v6609 = vadd.s32 %v6573, 288
        %v6610 = vadd.s32 %v6573, 296
        %v6611 = vadd.s32 %v6573, 304
        %v6612 = vadd.s32 %v6573, 312
        %v6613 = vadd.s32 %v6573, 320
        %v6614 = vadd.s32 %v6573, 328
        %v6615 = vadd.s32 %v6573, 336
        %v6616 = vadd.s32 %v6573, 344
        %v6617 = vadd.s32 %v6573, 352
        %v6618 = vadd.s32 %v6573, 360
        %v6619 = vadd.s32 %v6573, 368
        %v6620 = vadd.s32 %v6573, 376
        %v6621 = vadd.s32 %v6573, 384
        %v6622 = vadd.s32 %v6573, 392
        %v6623 = vadd.s32 %v6573, 400
        %v6624 = vadd.s32 %v6573, 408
        %v6625 = vadd.s32 %v6573, 416
        %v6626 = vadd.s32 %v6573, 424
        %v6627 = vadd.s32 %v6573, 432
        %v6628 = vadd.s32 %v6573, 440
        %v6629 = vadd.s32 %v6573, 448
        %v6630 = vadd.s32 %v6573, 456
        %v6631 = vadd.s32 %v6573, 464
        %v6632 = vadd.s32 %v6573, 472
        %v6633 = vadd.s32 %v6573, 480
        %v6634 = vlaneseq
        %v6635 = vand.u32 %v6634, 127
        %v6636 = vmul.u32 %v6635, 6
        %vm6637 = vcmp.eq.s32.totalorder %v6573, %v6636
        %vm6638 = vcmp.eq.s32.totalorder %v6574, %v6636
        %vm6639 = vcmp.eq.s32.totalorder %v6575, %v6636
        %vm6640 = vcmp.eq.s32.totalorder %v6576, %v6636
        %vm6641 = vcmp.eq.s32.totalorder %v6577, %v6636
        %vm6642 = vcmp.eq.s32.totalorder %v6578, %v6636
        %vm6643 = vcmp.eq.s32.totalorder %v6579, %v6636
        %vm6644 = vcmp.eq.s32.totalorder %v6580, %v6636
        %vm6645 = vcmp.eq.s32.totalorder %v6581, %v6636
        %vm6646 = vcmp.eq.s32.totalorder %v6582, %v6636
        %vm6647 = vcmp.eq.s32.totalorder %v6583, %v6636
        %vm6648 = vcmp.eq.s32.totalorder %v6584, %v6636
        %vm6649 = vcmp.eq.s32.totalorder %v6585, %v6636
        %vm6650 = vcmp.eq.s32.totalorder %v6586, %v6636
        %vm6651 = vcmp.eq.s32.totalorder %v6587, %v6636
        %vm6652 = vcmp.eq.s32.totalorder %v6588, %v6636
        %vm6653 = vcmp.eq.s32.totalorder %v6589, %v6636
        %vm6654 = vcmp.eq.s32.totalorder %v6590, %v6636
        %vm6655 = vcmp.eq.s32.totalorder %v6591, %v6636
        %vm6656 = vcmp.eq.s32.totalorder %v6592, %v6636
        %vm6657 = vcmp.eq.s32.totalorder %v6593, %v6636
        %vm6658 = vcmp.eq.s32.totalorder %v6594, %v6636
        %vm6659 = vcmp.eq.s32.totalorder %v6595, %v6636
        %vm6660 = vcmp.eq.s32.totalorder %v6596, %v6636
        %vm6661 = vcmp.eq.s32.totalorder %v6597, %v6636
        %vm6662 = vcmp.eq.s32.totalorder %v6598, %v6636
        %vm6663 = vcmp.eq.s32.totalorder %v6599, %v6636
        %vm6664 = vcmp.eq.s32.totalorder %v6600, %v6636
        %vm6665 = vcmp.eq.s32.totalorder %v6601, %v6636
        %vm6666 = vcmp.eq.s32.totalorder %v6602, %v6636
        %vm6667 = vcmp.eq.s32.totalorder %v6603, %v6636
        %vm6668 = vcmp.eq.s32.totalorder %v6604, %v6636
        %vm6669 = vcmp.eq.s32.totalorder %v6605, %v6636
        %vm6670 = vcmp.eq.s32.totalorder %v6606, %v6636
        %vm6671 = vcmp.eq.s32.totalorder %v6607, %v6636
        %vm6672 = vcmp.eq.s32.totalorder %v6608, %v6636
        %vm6673 = vcmp.eq.s32.totalorder %v6609, %v6636
        %vm6674 = vcmp.eq.s32.totalorder %v6610, %v6636
        %vm6675 = vcmp.eq.s32.totalorder %v6611, %v6636
        %vm6676 = vcmp.eq.s32.totalorder %v6612, %v6636
        %vm6677 = vcmp.eq.s32.totalorder %v6613, %v6636
        %vm6678 = vcmp.eq.s32.totalorder %v6614, %v6636
        %vm6679 = vcmp.eq.s32.totalorder %v6615, %v6636
        %vm6680 = vcmp.eq.s32.totalorder %v6616, %v6636
        %vm6681 = vcmp.eq.s32.totalorder %v6617, %v6636
        %vm6682 = vcmp.eq.s32.totalorder %v6618, %v6636
        %vm6683 = vcmp.eq.s32.totalorder %v6619, %v6636
        %vm6684 = vcmp.eq.s32.totalorder %v6620, %v6636
        %vm6685 = vcmp.eq.s32.totalorder %v6621, %v6636
        %vm6686 = vcmp.eq.s32.totalorder %v6622, %v6636
        %vm6687 = vcmp.eq.s32.totalorder %v6623, %v6636
        %vm6688 = vcmp.eq.s32.totalorder %v6624, %v6636
        %vm6689 = vcmp.eq.s32.totalorder %v6625, %v6636
        %vm6690 = vcmp.eq.s32.totalorder %v6626, %v6636
        %vm6691 = vcmp.eq.s32.totalorder %v6627, %v6636
        %vm6692 = vcmp.eq.s32.totalorder %v6628, %v6636
        %vm6693 = vcmp.eq.s32.totalorder %v6629, %v6636
        %vm6694 = vcmp.eq.s32.totalorder %v6630, %v6636
        %vm6695 = vcmp.eq.s32.totalorder %v6631, %v6636
        %vm6696 = vcmp.eq.s32.totalorder %v6632, %v6636
        %vm6697 = vcmp.eq.s32.totalorder %v6633, %v6636
        %v6698 = vsel %vm6637, 1, 0
        %v6699 = vsel %vm6638, 1, 0
        %v6700 = vsel %vm6639, 1, 0
        %v6701 = vsel %vm6640, 1, 0
        %v6702 = vsel %vm6641, 1, 0
        %v6703 = vsel %vm6642, 1, 0
        %v6704 = vsel %vm6643, 1, 0
        %v6705 = vsel %vm6644, 1, 0
        %v6706 = vsel %vm6645, 1, 0
        %v6707 = vsel %vm6646, 1, 0
        %v6708 = vsel %vm6647, 1, 0
        %v6709 = vsel %vm6648, 1, 0
        %v6710 = vsel %vm6649, 1, 0
        %v6711 = vsel %vm6650, 1, 0
        %v6712 = vsel %vm6651, 1, 0
        %v6713 = vsel %vm6652, 1, 0
        %v6714 = vsel %vm6653, 1, 0
        %v6715 = vsel %vm6654, 1, 0
        %v6716 = vsel %vm6655, 1, 0
        %v6717 = vsel %vm6656, 1, 0
        %v6718 = vsel %vm6657, 1, 0
        %v6719 = vsel %vm6658, 1, 0
        %v6720 = vsel %vm6659, 1, 0
        %v6721 = vsel %vm6660, 1, 0
        %v6722 = vsel %vm6661, 1, 0
        %v6723 = vsel %vm6662, 1, 0
        %v6724 = vsel %vm6663, 1, 0
        %v6725 = vsel %vm6664, 1, 0
        %v6726 = vsel %vm6665, 1, 0
        %v6727 = vsel %vm6666, 1, 0
        %v6728 = vsel %vm6667, 1, 0
        %v6729 = vsel %vm6668, 1, 0
        %v6730 = vsel %vm6669, 1, 0
        %v6731 = vsel %vm6670, 1, 0
        %v6732 = vsel %vm6671, 1, 0
        %v6733 = vsel %vm6672, 1, 0
        %v6734 = vsel %vm6673, 1, 0
        %v6735 = vsel %vm6674, 1, 0
        %v6736 = vsel %vm6675, 1, 0
        %v6737 = vsel %vm6676, 1, 0
        %v6738 = vsel %vm6677, 1, 0
        %v6739 = vsel %vm6678, 1, 0
        %v6740 = vsel %vm6679, 1, 0
        %v6741 = vsel %vm6680, 1, 0
        %v6742 = vsel %vm6681, 1, 0
        %v6743 = vsel %vm6682, 1, 0
        %v6744 = vsel %vm6683, 1, 0
        %v6745 = vsel %vm6684, 1, 0
        %v6746 = vsel %vm6685, 1, 0
        %v6747 = vsel %vm6686, 1, 0
        %v6748 = vsel %vm6687, 1, 0
        %v6749 = vsel %vm6688, 1, 0
        %v6750 = vsel %vm6689, 1, 0
        %v6751 = vsel %vm6690, 1, 0
        %v6752 = vsel %vm6691, 1, 0
        %v6753 = vsel %vm6692, 1, 0
        %v6754 = vsel %vm6693, 1, 0
        %v6755 = vsel %vm6694, 1, 0
        %v6756 = vsel %vm6695, 1, 0
        %v6757 = vsel %vm6696, 1, 0
        %v6758 = vsel %vm6697, 1, 0
        %v6759 = vcvt.s32.f32 %v6698
        %v6760 = vcvt.s32.f32 %v6699
        %v6761 = vcvt.s32.f32 %v6700
        %v6762 = vcvt.s32.f32 %v6701
        %v6763 = vcvt.s32.f32 %v6702
        %v6764 = vcvt.s32.f32 %v6703
        %v6765 = vcvt.s32.f32 %v6704
        %v6766 = vcvt.s32.f32 %v6705
        %v6767 = vcvt.s32.f32 %v6706
        %v6768 = vcvt.s32.f32 %v6707
        %v6769 = vcvt.s32.f32 %v6708
        %v6770 = vcvt.s32.f32 %v6709
        %v6771 = vcvt.s32.f32 %v6710
        %v6772 = vcvt.s32.f32 %v6711
        %v6773 = vcvt.s32.f32 %v6712
        %v6774 = vcvt.s32.f32 %v6713
        %v6775 = vcvt.s32.f32 %v6714
        %v6776 = vcvt.s32.f32 %v6715
        %v6777 = vcvt.s32.f32 %v6716
        %v6778 = vcvt.s32.f32 %v6717
        %v6779 = vcvt.s32.f32 %v6718
        %v6780 = vcvt.s32.f32 %v6719
        %v6781 = vcvt.s32.f32 %v6720
        %v6782 = vcvt.s32.f32 %v6721
        %v6783 = vcvt.s32.f32 %v6722
        %v6784 = vcvt.s32.f32 %v6723
        %v6785 = vcvt.s32.f32 %v6724
        %v6786 = vcvt.s32.f32 %v6725
        %v6787 = vcvt.s32.f32 %v6726
        %v6788 = vcvt.s32.f32 %v6727
        %v6789 = vcvt.s32.f32 %v6728
        %v6790 = vcvt.s32.f32 %v6729
        %v6791 = vcvt.s32.f32 %v6730
        %v6792 = vcvt.s32.f32 %v6731
        %v6793 = vcvt.s32.f32 %v6732
        %v6794 = vcvt.s32.f32 %v6733
        %v6795 = vcvt.s32.f32 %v6734
        %v6796 = vcvt.s32.f32 %v6735
        %v6797 = vcvt.s32.f32 %v6736
        %v6798 = vcvt.s32.f32 %v6737
        %v6799 = vcvt.s32.f32 %v6738
        %v6800 = vcvt.s32.f32 %v6739
        %v6801 = vcvt.s32.f32 %v6740
        %v6802 = vcvt.s32.f32 %v6741
        %v6803 = vcvt.s32.f32 %v6742
        %v6804 = vcvt.s32.f32 %v6743
        %v6805 = vcvt.s32.f32 %v6744
        %v6806 = vcvt.s32.f32 %v6745
        %v6807 = vcvt.s32.f32 %v6746
        %v6808 = vcvt.s32.f32 %v6747
        %v6809 = vcvt.s32.f32 %v6748
        %v6810 = vcvt.s32.f32 %v6749
        %v6811 = vcvt.s32.f32 %v6750
        %v6812 = vcvt.s32.f32 %v6751
        %v6813 = vcvt.s32.f32 %v6752
        %v6814 = vcvt.s32.f32 %v6753
        %v6815 = vcvt.s32.f32 %v6754
        %v6816 = vcvt.s32.f32 %v6755
        %v6817 = vcvt.s32.f32 %v6756
        %v6818 = vcvt.s32.f32 %v6757
        %v6819 = vcvt.s32.f32 %v6758
        %vm6820 = vcmask 793600
        %v6821 = vsel %vm6820, %v5984, 0
        %v6823 = vsel %vm6820, %v5985, 0
        %v6825 = vsel %vm6820, %v5986, 0
        %v6827 = vsel %vm6820, %v5987, 0
        %v6829 = vsel %vm6820, %v5988, 0
        %v6831 = vsel %vm6820, %v5989, 0
        %v6833 = vsel %vm6820, %v5990, 0
        %v6835 = vsel %vm6820, %v5991, 0
        %v6837 = vsel %vm6820, %v6015, 0
        %v6839 = vsel %vm6820, %v6023, 0
        %v6841 = vsel %vm6820, %v6031, 0
        %v6843 = vsel %vm6820, %v6039, 0
        %v6845 = vsel %vm6820, %v6047, 0
        %v6847 = vsel %vm6820, %v6055, 0
        %v6849 = vsel %vm6820, %v6063, 0
        %v6851 = vsel %vm6820, %v6071, 0
        %v6853 = vsel %vm6820, %v6127, 0
        %v6855 = vsel %vm6820, %v6135, 0
        %v6857 = vsel %vm6820, %v6143, 0
        %v6859 = vsel %vm6820, %v6151, 0
        %v6861 = vsel %vm6820, %v6159, 0
        %v6863 = vsel %vm6820, %v6167, 0
        %v6865 = vsel %vm6820, %v6175, 0
        %v6867 = vsel %vm6820, %v6183, 0
        %v6869 = vsel %vm6820, %v6240, 0
        %v6871 = vsel %vm6820, %v6248, 0
        %v6873 = vsel %vm6820, %v6256, 0
        %v6875 = vsel %vm6820, %v6264, 0
        %v6877 = vsel %vm6820, %v6272, 0
        %v6879 = vsel %vm6820, %v6280, 0
        %v6881 = vsel %vm6820, %v6288, 0
        %v6883 = vsel %vm6820, %v6296, 0
        %v6885 = vsel %vm6820, %v6353, 0
        %v6887 = vsel %vm6820, %v6361, 0
        %v6889 = vsel %vm6820, %v6369, 0
        %v6891 = vsel %vm6820, %v6377, 0
        %v6893 = vsel %vm6820, %v6385, 0
        %v6895 = vsel %vm6820, %v6393, 0
        %v6897 = vsel %vm6820, %v6401, 0
        %v6899 = vsel %vm6820, %v6409, 0
        %v6901 = vsel %vm6820, %v6466, 0
        %v6903 = vsel %vm6820, %v6474, 0
        %v6905 = vsel %vm6820, %v6482, 0
        %v6907 = vsel %vm6820, %v6490, 0
        %v6909 = vsel %vm6820, %v6498, 0
        %v6911 = vsel %vm6820, %v6506, 0
        %v6913 = vsel %vm6820, %v6514, 0
        %v6915 = vsel %vm6820, %v6522, 0
        %vm6917 = vcmask 1040384
        %v6919 = vsel %vm6917, %v6819, 0
        %6921 = vmatprep.subr.mxu0 0.0
        %6922 = vmatpush1.msra.mxu0 %v6759
        %6923 = vmatprep.subr.mxu0 0.0
        %6924 = vmatpush1.msra.mxu0 %v6760
        %6925 = vmatprep.subr.mxu0 0.0
        %6926 = vmatpush1.msra.mxu0 %v6761
        %6927 = vmatprep.subr.mxu0 0.0
        %6928 = vmatpush1.msra.mxu0 %v6762
        %6929 = vmatprep.subr.mxu0 0.0
        %6930 = vmatpush1.msra.mxu0 %v6763
        %6931 = vmatprep.subr.mxu0 0.0
        %6932 = vmatpush1.msra.mxu0 %v6764
        %6933 = vmatprep.subr.mxu0 0.0
        %6934 = vmatpush1.msra.mxu0 %v6765
        %6935 = vmatprep.subr.mxu0 0.0
        %6936 = vmatpush1.msra.mxu0 %v6766
        %6937 = vmatprep.subr.mxu0 0.0
        %6938 = vmatpush1.msra.mxu0 %v6767
        %6939 = vmatprep.subr.mxu0 0.0
        %6940 = vmatpush1.msra.mxu0 %v6768
        %6941 = vmatprep.subr.mxu0 0.0
        %6942 = vmatpush1.msra.mxu0 %v6769
        %6943 = vmatprep.subr.mxu0 0.0
        %6944 = vmatpush1.msra.mxu0 %v6770
        %6945 = vmatprep.subr.mxu0 0.0
        %6946 = vmatpush1.msra.mxu0 %v6771
        %6947 = vmatprep.subr.mxu0 0.0
        %6948 = vmatpush1.msra.mxu0 %v6772
        %6949 = vmatprep.subr.mxu0 0.0
        %6950 = vmatpush1.msra.mxu0 %v6773
        %6951 = vmatprep.subr.mxu0 0.0
        %6952 = vmatpush1.msra.mxu0 %v6774
        %6953 = vmatprep.subr.mxu0 0.0
        %6954 = vmatpush1.msra.mxu0 %v6775
        %6955 = vmatprep.subr.mxu0 0.0
        %6956 = vmatpush1.msra.mxu0 %v6776
        %6957 = vmatprep.subr.mxu0 0.0
        %6958 = vmatpush1.msra.mxu0 %v6777
        %6959 = vmatprep.subr.mxu0 0.0
        %6960 = vmatpush1.msra.mxu0 %v6778
        %6961 = vmatprep.subr.mxu0 0.0
        %6962 = vmatpush1.msra.mxu0 %v6779
        %6963 = vmatprep.subr.mxu0 0.0
        %6964 = vmatpush1.msra.mxu0 %v6780
        %6965 = vmatprep.subr.mxu0 0.0
        %6966 = vmatpush1.msra.mxu0 %v6781
        %6967 = vmatprep.subr.mxu0 0.0
        %6968 = vmatpush1.msra.mxu0 %v6782
        %6969 = vmatprep.subr.mxu0 0.0
        %6970 = vmatpush1.msra.mxu0 %v6783
        %6971 = vmatprep.subr.mxu0 0.0
        %6972 = vmatpush1.msra.mxu0 %v6784
        %6973 = vmatprep.subr.mxu0 0.0
        %6974 = vmatpush1.msra.mxu0 %v6785
        %6975 = vmatprep.subr.mxu0 0.0
        %6976 = vmatpush1.msra.mxu0 %v6786
        %6977 = vmatprep.subr.mxu0 0.0
        %6978 = vmatpush1.msra.mxu0 %v6787
        %6979 = vmatprep.subr.mxu0 0.0
        %6980 = vmatpush1.msra.mxu0 %v6788
        %6981 = vmatprep.subr.mxu0 0.0
        %6982 = vmatpush1.msra.mxu0 %v6789
        %6983 = vmatprep.subr.mxu0 0.0
        %6984 = vmatpush1.msra.mxu0 %v6790
        %6985 = vmatprep.mubr.f32.mxu0 %v5919
        %6986 = vmatmul.mubr.f32.gmra.mrb[0].mxu0 %v5975
        %v6987 = vpop.f32.mrb[0].mxu0
        %v6988 = vadd.f32 0.0, %v6987
        %v6989 = vpop.f32.mrb[0].mxu0
        %6990 = vmatprep.mubr.f32.mxu0 %v5922
        %6991 = vmatmul.mubr.f32.gmra.mrb[0].mxu0 %v5976
        %v6992 = vpop.f32.mrb[0].mxu0
        %v6993 = vadd.f32 0.0, %v6992
        %v6994 = vpop.f32.mrb[0].mxu0
        %6995 = vmatprep.mubr.f32.mxu0 %v5925
        %6996 = vmatmul.mubr.f32.gmra.mrb[0].mxu0 %v5977
        %v6997 = vpop.f32.mrb[0].mxu0
        %v6998 = vadd.f32 0.0, %v6997
        %v6999 = vpop.f32.mrb[0].mxu0
        %7000 = vmatprep.mubr.f32.mxu0 %v5928
        %7001 = vmatmul.mubr.f32.gmra.mrb[0].mxu0 %v5978
        %v7002 = vpop.f32.mrb[0].mxu0
        %v7003 = vadd.f32 0.0, %v7002
        %v7004 = vpop.f32.mrb[0].mxu0
        %7005 = vmatprep.mubr.f32.mxu0 %v5931
        %7006 = vmatmul.mubr.f32.gmra.mrb[0].mxu0 %v5979
        %v7007 = vpop.f32.mrb[0].mxu0
        %v7008 = vadd.f32 0.0, %v7007
        %v7009 = vpop.f32.mrb[0].mxu0
        %7010 = vmatprep.mubr.f32.mxu0 %v5934
        %7011 = vmatmul.mubr.f32.gmra.mrb[0].mxu0 %v5980
        %v7012 = vpop.f32.mrb[0].mxu0
        %v7013 = vadd.f32 0.0, %v7012
        %v7014 = vpop.f32.mrb[0].mxu0
        %7015 = vmatprep.mubr.f32.mxu0 %v5937
        %7016 = vmatmul.mubr.f32.gmra.mrb[0].mxu0 %v5981
        %v7017 = vpop.f32.mrb[0].mxu0
        %v7018 = vadd.f32 0.0, %v7017
        %v7019 = vpop.f32.mrb[0].mxu0
        %7020 = vmatprep.mubr.f32.mxu0 %v5940
        %7021 = vmatmul.mubr.f32.gmra.mrb[0].mxu0 %v5982
        %v7022 = vpop.f32.mrb[0].mxu0
        %v7023 = vadd.f32 0.0, %v7022
        %v7024 = vpop.f32.mrb[0].mxu0
        %7025 = vmatprep.mubr.f32.mxu0 %v6073
        %7026 = vmatmul.mubr.f32.gmra.mrb[0].mxu0 %v6072
        %v7027 = vpop.f32.mrb[0].mxu0
        %v7028 = vadd.f32 0.0, %v7027
        %v7029 = vpop.f32.mrb[0].mxu0
        %7030 = vmatprep.mubr.f32.mxu0 %v6076
        %7031 = vmatmul.mubr.f32.gmra.mrb[0].mxu0 %v6075
        %v7032 = vpop.f32.mrb[0].mxu0
        %v7033 = vadd.f32 0.0, %v7032
        %v7034 = vpop.f32.mrb[0].mxu0
        %7035 = vmatprep.mubr.f32.mxu0 %v6079
        %7036 = vmatmul.mubr.f32.gmra.mrb[0].mxu0 %v6078
        %v7037 = vpop.f32.mrb[0].mxu0
        %v7038 = vadd.f32 0.0, %v7037
        %v7039 = vpop.f32.mrb[0].mxu0
        %7040 = vmatprep.mubr.f32.mxu0 %v6082
        %7041 = vmatmul.mubr.f32.gmra.mrb[0].mxu0 %v6081
        %v7042 = vpop.f32.mrb[0].mxu0
        %v7043 = vadd.f32 0.0, %v7042
        %v7044 = vpop.f32.mrb[0].mxu0
        %7045 = vmatprep.mubr.f32.mxu0 %v6085
        %7046 = vmatmul.mubr.f32.gmra.mrb[0].mxu0 %v6084
        %v7047 = vpop.f32.mrb[0].mxu0
        %v7048 = vadd.f32 0.0, %v7047
        %v7049 = vpop.f32.mrb[0].mxu0
        %7050 = vmatprep.mubr.f32.mxu0 %v6088
        %7051 = vmatmul.mubr.f32.gmra.mrb[0].mxu0 %v6087
        %v7052 = vpop.f32.mrb[0].mxu0
        %v7053 = vadd.f32 0.0, %v7052
        %v7054 = vpop.f32.mrb[0].mxu0
        %7055 = vmatprep.mubr.f32.mxu0 %v6091
        %7056 = vmatmul.mubr.f32.gmra.mrb[0].mxu0 %v6090
        %v7057 = vpop.f32.mrb[0].mxu0
        %v7058 = vadd.f32 0.0, %v7057
        %v7059 = vpop.f32.mrb[0].mxu0
        %7060 = vmatprep.mubr.f32.mxu0 %v6094
        %7061 = vmatmul.mubr.f32.gmra.mrb[0].mxu0 %v6093
        %v7062 = vpop.f32.mrb[0].mxu0
        %v7063 = vadd.f32 0.0, %v7062
        %v7064 = vpop.f32.mrb[0].mxu0
        %7065 = vmatprep.mubr.f32.mxu0 %v6186
        %7066 = vmatmul.mubr.f32.gmra.mrb[0].mxu0 %v6185
        %v7067 = vpop.f32.mrb[0].mxu0
        %v7068 = vadd.f32 0.0, %v7067
        %v7069 = vpop.f32.mrb[0].mxu0
        %7070 = vmatprep.mubr.f32.mxu0 %v6189
        %7071 = vmatmul.mubr.f32.gmra.mrb[0].mxu0 %v6188
        %v7072 = vpop.f32.mrb[0].mxu0
        %v7073 = vadd.f32 0.0, %v7072
        %v7074 = vpop.f32.mrb[0].mxu0
        %7075 = vmatprep.mubr.f32.mxu0 %v6192
        %7076 = vmatmul.mubr.f32.gmra.mrb[0].mxu0 %v6191
        %v7077 = vpop.f32.mrb[0].mxu0
        %v7078 = vadd.f32 0.0, %v7077
        %v7079 = vpop.f32.mrb[0].mxu0
        %7080 = vmatprep.mubr.f32.mxu0 %v6195
        %7081 = vmatmul.mubr.f32.gmra.mrb[0].mxu0 %v6194
        %v7082 = vpop.f32.mrb[0].mxu0
        %v7083 = vadd.f32 0.0, %v7082
        %v7084 = vpop.f32.mrb[0].mxu0
        %7085 = vmatprep.mubr.f32.mxu0 %v6198
        %7086 = vmatmul.mubr.f32.gmra.mrb[0].mxu0 %v6197
        %v7087 = vpop.f32.mrb[0].mxu0
        %v7088 = vadd.f32 0.0, %v7087
        %v7089 = vpop.f32.mrb[0].mxu0
        %7090 = vmatprep.mubr.f32.mxu0 %v6201
        %7091 = vmatmul.mubr.f32.gmra.mrb[0].mxu0 %v6200
        %v7092 = vpop.f32.mrb[0].mxu0
        %v7093 = vadd.f32 0.0, %v7092
        %v7094 = vpop.f32.mrb[0].mxu0
        %7095 = vmatprep.mubr.f32.mxu0 %v6204
        %7096 = vmatmul.mubr.f32.gmra.mrb[0].mxu0 %v6203
        %v7097 = vpop.f32.mrb[0].mxu0
        %v7098 = vadd.f32 0.0, %v7097
        %v7099 = vpop.f32.mrb[0].mxu0
        %7100 = vmatprep.mubr.f32.mxu0 %v6207
        %7101 = vmatmul.mubr.f32.gmra.mrb[0].mxu0 %v6206
        %v7102 = vpop.f32.mrb[0].mxu0
        %v7103 = vadd.f32 0.0, %v7102
        %v7104 = vpop.f32.mrb[0].mxu0
        %7105 = vmatprep.mubr.f32.mxu0 %v6299
        %7106 = vmatmul.mubr.f32.gmra.mrb[0].mxu0 %v6298
        %v7107 = vpop.f32.mrb[0].mxu0
        %v7108 = vadd.f32 0.0, %v7107
        %v7109 = vpop.f32.mrb[0].mxu0
        %7110 = vmatprep.mubr.f32.mxu0 %v6302
        %7111 = vmatmul.mubr.f32.gmra.mrb[0].mxu0 %v6301
        %v7112 = vpop.f32.mrb[0].mxu0
        %v7113 = vadd.f32 0.0, %v7112
        %v7114 = vpop.f32.mrb[0].mxu0
        %7115 = vmatprep.mubr.f32.mxu0 %v6305
        %7116 = vmatmul.mubr.f32.gmra.mrb[0].mxu0 %v6304
        %v7117 = vpop.f32.mrb[0].mxu0
        %v7118 = vadd.f32 0.0, %v7117
        %v7119 = vpop.f32.mrb[0].mxu0
        %7120 = vmatprep.mubr.f32.mxu0 %v6308
        %7121 = vmatmul.mubr.f32.gmra.mrb[0].mxu0 %v6307
        %v7122 = vpop.f32.mrb[0].mxu0
        %v7123 = vadd.f32 0.0, %v7122
        %v7124 = vpop.f32.mrb[0].mxu0
        %7125 = vmatprep.mubr.f32.mxu0 %v6311
        %7126 = vmatmul.mubr.f32.gmra.mrb[0].mxu0 %v6310
        %v7127 = vpop.f32.mrb[0].mxu0
        %v7128 = vadd.f32 0.0, %v7127
        %v7129 = vpop.f32.mrb[0].mxu0
        %7130 = vmatprep.mubr.f32.mxu0 %v6314
        %7131 = vmatmul.mubr.f32.gmra.mrb[0].mxu0 %v6313
        %v7132 = vpop.f32.mrb[0].mxu0
        %v7133 = vadd.f32 0.0, %v7132
        %v7134 = vpop.f32.mrb[0].mxu0
        %7135 = vmatprep.mubr.f32.mxu0 %v6317
        %7136 = vmatmul.mubr.f32.gmra.mrb[0].mxu0 %v6316
        %v7137 = vpop.f32.mrb[0].mxu0
        %v7138 = vadd.f32 0.0, %v7137
        %v7139 = vpop.f32.mrb[0].mxu0
        %7140 = vmatprep.mubr.f32.mxu0 %v6320
        %7141 = vmatmul.mubr.f32.gmra.mrb[0].mxu0 %v6319
        %v7142 = vpop.f32.mrb[0].mxu0
        %v7143 = vadd.f32 0.0, %v7142
        %v7144 = vpop.f32.mrb[0].mxu0
        %7145 = vmatprep.mubr.f32.mxu0 %v6412
        %7146 = vmatmul.mubr.f32.gmra.mrb[0].mxu0 %v6411
        %v7147 = vpop.f32.mrb[0].mxu0
        %v7148 = vadd.f32 0.0, %v7147
        %v7149 = vpop.f32.mrb[0].mxu0
        %7150 = vmatprep.mubr.f32.mxu0 %v6415
        %7151 = vmatmul.mubr.f32.gmra.mrb[0].mxu0 %v6414
        %v7152 = vpop.f32.mrb[0].mxu0
        %v7153 = vadd.f32 0.0, %v7152
        %v7154 = vpop.f32.mrb[0].mxu0
        %7155 = vmatprep.mubr.f32.mxu0 %v6418
        %7156 = vmatmul.mubr.f32.gmra.mrb[0].mxu0 %v6417
        %v7157 = vpop.f32.mrb[0].mxu0
        %v7158 = vadd.f32 0.0, %v7157
        %v7159 = vpop.f32.mrb[0].mxu0
        %7160 = vmatprep.mubr.f32.mxu0 %v6421
        %7161 = vmatmul.mubr.f32.gmra.mrb[0].mxu0 %v6420
        %v7162 = vpop.f32.mrb[0].mxu0
        %v7163 = vadd.f32 0.0, %v7162
        %v7164 = vpop.f32.mrb[0].mxu0
        %7165 = vmatprep.mubr.f32.mxu0 %v6424
        %7166 = vmatmul.mubr.f32.gmra.mrb[0].mxu0 %v6423
        %v7167 = vpop.f32.mrb[0].mxu0
        %v7168 = vadd.f32 0.0, %v7167
        %v7169 = vpop.f32.mrb[0].mxu0
        %7170 = vmatprep.mubr.f32.mxu0 %v6427
        %7171 = vmatmul.mubr.f32.gmra.mrb[0].mxu0 %v6426
        %v7172 = vpop.f32.mrb[0].mxu0
        %v7173 = vadd.f32 0.0, %v7172
        %v7174 = vpop.f32.mrb[0].mxu0
        %7175 = vmatprep.mubr.f32.mxu0 %v6430
        %7176 = vmatmul.mubr.f32.gmra.mrb[0].mxu0 %v6429
        %v7177 = vpop.f32.mrb[0].mxu0
        %v7178 = vadd.f32 0.0, %v7177
        %v7179 = vpop.f32.mrb[0].mxu0
        %7180 = vmatprep.mubr.f32.mxu0 %v6433
        %7181 = vmatmul.mubr.f32.gmra.mrb[0].mxu0 %v6432
        %v7182 = vpop.f32.mrb[0].mxu0
        %v7183 = vadd.f32 0.0, %v7182
        %v7184 = vpop.f32.mrb[0].mxu0
        %7185 = vmatprep.mubr.f32.mxu0 %v6525
        %7186 = vmatmul.mubr.f32.gmra.mrb[0].mxu0 %v6524
        %v7187 = vpop.f32.mrb[0].mxu0
        %v7188 = vadd.f32 0.0, %v7187
        %v7189 = vpop.f32.mrb[0].mxu0
        %7190 = vmatprep.mubr.f32.mxu0 %v6528
        %7191 = vmatmul.mubr.f32.gmra.mrb[0].mxu0 %v6527
        %v7192 = vpop.f32.mrb[0].mxu0
        %v7193 = vadd.f32 0.0, %v7192
        %v7194 = vpop.f32.mrb[0].mxu0
        %7195 = vmatprep.mubr.f32.mxu0 %v6531
        %7196 = vmatmul.mubr.f32.gmra.mrb[0].mxu0 %v6530
        %v7197 = vpop.f32.mrb[0].mxu0
        %v7198 = vadd.f32 0.0, %v7197
        %v7199 = vpop.f32.mrb[0].mxu0
        %7200 = vmatprep.mubr.f32.mxu0 %v6534
        %7201 = vmatmul.mubr.f32.gmra.mrb[0].mxu0 %v6533
        %v7202 = vpop.f32.mrb[0].mxu0
        %v7203 = vadd.f32 0.0, %v7202
        %v7204 = vpop.f32.mrb[0].mxu0
        %7205 = vmatprep.mubr.f32.mxu0 %v6537
        %7206 = vmatmul.mubr.f32.gmra.mrb[0].mxu0 %v6536
        %v7207 = vpop.f32.mrb[0].mxu0
        %v7208 = vadd.f32 0.0, %v7207
        %v7209 = vpop.f32.mrb[0].mxu0
        %7210 = vmatprep.mubr.f32.mxu0 %v6540
        %7211 = vmatmul.mubr.f32.gmra.mrb[0].mxu0 %v6539
        %v7212 = vpop.f32.mrb[0].mxu0
        %v7213 = vadd.f32 0.0, %v7212
        %v7214 = vpop.f32.mrb[0].mxu0
        %7215 = vmatprep.mubr.f32.mxu0 %v6543
        %7216 = vmatmul.mubr.f32.gmra.mrb[0].mxu0 %v6542
        %v7217 = vpop.f32.mrb[0].mxu0
        %v7218 = vadd.f32 0.0, %v7217
        %v7219 = vpop.f32.mrb[0].mxu0
        %7220 = vmatprep.mubr.f32.mxu0 %v6546
        %7221 = vmatmul.mubr.f32.gmra.mrb[0].mxu0 %v6545
        %v7222 = vpop.f32.mrb[0].mxu0
        %v7223 = vadd.f32 0.0, %v7222
        %v7224 = vpop.f32.mrb[0].mxu0
        %7225 = vdwg.mxu0
        %7226 = vmatprep.subr.mxu0 0.0
        %7227 = vmatpush1.msra.mxu0 %v6791
        %7228 = vmatprep.subr.mxu0 0.0
        %7229 = vmatpush1.msra.mxu0 %v6792
        %7230 = vmatprep.subr.mxu0 0.0
        %7231 = vmatpush1.msra.mxu0 %v6793
        %7232 = vmatprep.subr.mxu0 0.0
        %7233 = vmatpush1.msra.mxu0 %v6794
        %7234 = vmatprep.subr.mxu0 0.0
        %7235 = vmatpush1.msra.mxu0 %v6795
        %7236 = vmatprep.subr.mxu0 0.0
        %7237 = vmatpush1.msra.mxu0 %v6796
        %7238 = vmatprep.subr.mxu0 0.0
        %7239 = vmatpush1.msra.mxu0 %v6797
        %7240 = vmatprep.subr.mxu0 0.0
        %7241 = vmatpush1.msra.mxu0 %v6798
        %7242 = vmatprep.subr.mxu0 0.0
        %7243 = vmatpush1.msra.mxu0 %v6799
        %7244 = vmatprep.subr.mxu0 0.0
        %7245 = vmatpush1.msra.mxu0 %v6800
        %7246 = vmatprep.subr.mxu0 0.0
        %7247 = vmatpush1.msra.mxu0 %v6801
        %7248 = vmatprep.subr.mxu0 0.0
        %7249 = vmatpush1.msra.mxu0 %v6802
        %7250 = vmatprep.subr.mxu0 0.0
        %7251 = vmatpush1.msra.mxu0 %v6803
        %7252 = vmatprep.subr.mxu0 0.0
        %7253 = vmatpush1.msra.mxu0 %v6804
        %7254 = vmatprep.subr.mxu0 0.0
        %7255 = vmatpush1.msra.mxu0 %v6805
        %7256 = vmatprep.subr.mxu0 0.0
        %7257 = vmatpush1.msra.mxu0 %v6806
        %7258 = vmatprep.subr.mxu0 0.0
        %7259 = vmatpush1.msra.mxu0 %v6807
        %7260 = vmatprep.subr.mxu0 0.0
        %7261 = vmatpush1.msra.mxu0 %v6808
        %7262 = vmatprep.subr.mxu0 0.0
        %7263 = vmatpush1.msra.mxu0 %v6809
        %7264 = vmatprep.subr.mxu0 0.0
        %7265 = vmatpush1.msra.mxu0 %v6810
        %7266 = vmatprep.subr.mxu0 0.0
        %7267 = vmatpush1.msra.mxu0 %v6811
        %7268 = vmatprep.subr.mxu0 0.0
        %7269 = vmatpush1.msra.mxu0 %v6812
        %7270 = vmatprep.subr.mxu0 0.0
        %7271 = vmatpush1.msra.mxu0 %v6813
        %7272 = vmatprep.subr.mxu0 0.0
        %7273 = vmatpush1.msra.mxu0 %v6814
        %7274 = vmatprep.subr.mxu0 0.0
        %7275 = vmatpush1.msra.mxu0 %v6815
        %7276 = vmatprep.subr.mxu0 0.0
        %7277 = vmatpush1.msra.mxu0 %v6816
        %7278 = vmatprep.subr.mxu0 0.0
        %7279 = vmatpush1.msra.mxu0 %v6817
        %7280 = vmatprep.subr.mxu0 0.0
        %7281 = vmatpush1.msra.mxu0 %v6818
        %7282 = vmatprep.subr.mxu0 0.0
        %7283 = vmatpush1.msra.mxu0 %v6919
        %7284 = vmatprep.subr.mxu0 0.0
        %7285 = vmatpush1.msra.mxu0 0.0
        %7286 = vmatprep.subr.mxu0 0.0
        %7287 = vmatpush1.msra.mxu0 0.0
        %7288 = vmatprep.subr.mxu0 0.0
        %7289 = vmatpush1.msra.mxu0 0.0
        %7290 = vmatprep.mubr.f32.mxu0 %v6821
        %7291 = vmatmul.mubr.f32.gmra.mrb[0].mxu0 %v5920
        %v7292 = vpop.f32.mrb[0].mxu0
        %v7293 = vadd.f32 %v6988, %v7292
        %v7294 = vpop.f32.mrb[0].mxu0
        %7295 = vmatprep.mubr.f32.mxu0 %v6823
        %7296 = vmatmul.mubr.f32.gmra.mrb[0].mxu0 %v5923
        %v7297 = vpop.f32.mrb[0].mxu0
        %v7298 = vadd.f32 %v6993, %v7297
        %v7299 = vpop.f32.mrb[0].mxu0
        %7300 = vmatprep.mubr.f32.mxu0 %v6825
        %7301 = vmatmul.mubr.f32.gmra.mrb[0].mxu0 %v5926
        %v7302 = vpop.f32.mrb[0].mxu0
        %v7303 = vadd.f32 %v6998, %v7302
        %v7304 = vpop.f32.mrb[0].mxu0
        %7305 = vmatprep.mubr.f32.mxu0 %v6827
        %7306 = vmatmul.mubr.f32.gmra.mrb[0].mxu0 %v5929
        %v7307 = vpop.f32.mrb[0].mxu0
        %v7308 = vadd.f32 %v7003, %v7307
        %v7309 = vpop.f32.mrb[0].mxu0
        %7310 = vmatprep.mubr.f32.mxu0 %v6829
        %7311 = vmatmul.mubr.f32.gmra.mrb[0].mxu0 %v5932
        %v7312 = vpop.f32.mrb[0].mxu0
        %v7313 = vadd.f32 %v7008, %v7312
        %v7314 = vpop.f32.mrb[0].mxu0
        %7315 = vmatprep.mubr.f32.mxu0 %v6831
        %7316 = vmatmul.mubr.f32.gmra.mrb[0].mxu0 %v5935
        %v7317 = vpop.f32.mrb[0].mxu0
        %v7318 = vadd.f32 %v7013, %v7317
        %v7319 = vpop.f32.mrb[0].mxu0
        %7320 = vmatprep.mubr.f32.mxu0 %v6833
        %7321 = vmatmul.mubr.f32.gmra.mrb[0].mxu0 %v5938
        %v7322 = vpop.f32.mrb[0].mxu0
        %v7323 = vadd.f32 %v7018, %v7322
        %v7324 = vpop.f32.mrb[0].mxu0
        %7325 = vmatprep.mubr.f32.mxu0 %v6835
        %7326 = vmatmul.mubr.f32.gmra.mrb[0].mxu0 %v5941
        %v7327 = vpop.f32.mrb[0].mxu0
        %v7328 = vadd.f32 %v7023, %v7327
        %v7329 = vpop.f32.mrb[0].mxu0
        %7330 = vmatprep.mubr.f32.mxu0 %v6837
        %7331 = vmatmul.mubr.f32.gmra.mrb[0].mxu0 %v6074
        %v7332 = vpop.f32.mrb[0].mxu0
        %v7333 = vadd.f32 %v7028, %v7332
        %v7334 = vpop.f32.mrb[0].mxu0
        %7335 = vmatprep.mubr.f32.mxu0 %v6839
        %7336 = vmatmul.mubr.f32.gmra.mrb[0].mxu0 %v6077
        %v7337 = vpop.f32.mrb[0].mxu0
        %v7338 = vadd.f32 %v7033, %v7337
        %v7339 = vpop.f32.mrb[0].mxu0
        %7340 = vmatprep.mubr.f32.mxu0 %v6841
        %7341 = vmatmul.mubr.f32.gmra.mrb[0].mxu0 %v6080
        %v7342 = vpop.f32.mrb[0].mxu0
        %v7343 = vadd.f32 %v7038, %v7342
        %v7344 = vpop.f32.mrb[0].mxu0
        %7345 = vmatprep.mubr.f32.mxu0 %v6843
        %7346 = vmatmul.mubr.f32.gmra.mrb[0].mxu0 %v6083
        %v7347 = vpop.f32.mrb[0].mxu0
        %v7348 = vadd.f32 %v7043, %v7347
        %v7349 = vpop.f32.mrb[0].mxu0
        %7350 = vmatprep.mubr.f32.mxu0 %v6845
        %7351 = vmatmul.mubr.f32.gmra.mrb[0].mxu0 %v6086
        %v7352 = vpop.f32.mrb[0].mxu0
        %v7353 = vadd.f32 %v7048, %v7352
        %v7354 = vpop.f32.mrb[0].mxu0
        %7355 = vmatprep.mubr.f32.mxu0 %v6847
        %7356 = vmatmul.mubr.f32.gmra.mrb[0].mxu0 %v6089
        %v7357 = vpop.f32.mrb[0].mxu0
        %v7358 = vadd.f32 %v7053, %v7357
        %v7359 = vpop.f32.mrb[0].mxu0
        %7360 = vmatprep.mubr.f32.mxu0 %v6849
        %7361 = vmatmul.mubr.f32.gmra.mrb[0].mxu0 %v6092
        %v7362 = vpop.f32.mrb[0].mxu0
        %v7363 = vadd.f32 %v7058, %v7362
        %v7364 = vpop.f32.mrb[0].mxu0
        %7365 = vmatprep.mubr.f32.mxu0 %v6851
        %7366 = vmatmul.mubr.f32.gmra.mrb[0].mxu0 %v6095
        %v7367 = vpop.f32.mrb[0].mxu0
        %v7368 = vadd.f32 %v7063, %v7367
        %v7369 = vpop.f32.mrb[0].mxu0
        %7370 = vmatprep.mubr.f32.mxu0 %v6853
        %7371 = vmatmul.mubr.f32.gmra.mrb[0].mxu0 %v6187
        %v7372 = vpop.f32.mrb[0].mxu0
        %v7373 = vadd.f32 %v7068, %v7372
        %v7374 = vpop.f32.mrb[0].mxu0
        %7375 = vmatprep.mubr.f32.mxu0 %v6855
        %7376 = vmatmul.mubr.f32.gmra.mrb[0].mxu0 %v6190
        %v7377 = vpop.f32.mrb[0].mxu0
        %v7378 = vadd.f32 %v7073, %v7377
        %v7379 = vpop.f32.mrb[0].mxu0
        %7380 = vmatprep.mubr.f32.mxu0 %v6857
        %7381 = vmatmul.mubr.f32.gmra.mrb[0].mxu0 %v6193
        %v7382 = vpop.f32.mrb[0].mxu0
        %v7383 = vadd.f32 %v7078, %v7382
        %v7384 = vpop.f32.mrb[0].mxu0
        %7385 = vmatprep.mubr.f32.mxu0 %v6859
        %7386 = vmatmul.mubr.f32.gmra.mrb[0].mxu0 %v6196
        %v7387 = vpop.f32.mrb[0].mxu0
        %v7388 = vadd.f32 %v7083, %v7387
        %v7389 = vpop.f32.mrb[0].mxu0
        %7390 = vmatprep.mubr.f32.mxu0 %v6861
        %7391 = vmatmul.mubr.f32.gmra.mrb[0].mxu0 %v6199
        %v7392 = vpop.f32.mrb[0].mxu0
        %v7393 = vadd.f32 %v7088, %v7392
        %v7394 = vpop.f32.mrb[0].mxu0
        %7395 = vmatprep.mubr.f32.mxu0 %v6863
        %7396 = vmatmul.mubr.f32.gmra.mrb[0].mxu0 %v6202
        %v7397 = vpop.f32.mrb[0].mxu0
        %v7398 = vadd.f32 %v7093, %v7397
        %v7399 = vpop.f32.mrb[0].mxu0
        %7400 = vmatprep.mubr.f32.mxu0 %v6865
        %7401 = vmatmul.mubr.f32.gmra.mrb[0].mxu0 %v6205
        %v7402 = vpop.f32.mrb[0].mxu0
        %v7403 = vadd.f32 %v7098, %v7402
        %v7404 = vpop.f32.mrb[0].mxu0
        %7405 = vmatprep.mubr.f32.mxu0 %v6867
        %7406 = vmatmul.mubr.f32.gmra.mrb[0].mxu0 %v6208
        %v7407 = vpop.f32.mrb[0].mxu0
        %v7408 = vadd.f32 %v7103, %v7407
        %v7409 = vpop.f32.mrb[0].mxu0
        %7410 = vmatprep.mubr.f32.mxu0 %v6869
        %7411 = vmatmul.mubr.f32.gmra.mrb[0].mxu0 %v6300
        %v7412 = vpop.f32.mrb[0].mxu0
        %v7413 = vadd.f32 %v7108, %v7412
        %v7414 = vpop.f32.mrb[0].mxu0
        %7415 = vmatprep.mubr.f32.mxu0 %v6871
        %7416 = vmatmul.mubr.f32.gmra.mrb[0].mxu0 %v6303
        %v7417 = vpop.f32.mrb[0].mxu0
        %v7418 = vadd.f32 %v7113, %v7417
        %v7419 = vpop.f32.mrb[0].mxu0
        %7420 = vmatprep.mubr.f32.mxu0 %v6873
        %7421 = vmatmul.mubr.f32.gmra.mrb[0].mxu0 %v6306
        %v7422 = vpop.f32.mrb[0].mxu0
        %v7423 = vadd.f32 %v7118, %v7422
        %v7424 = vpop.f32.mrb[0].mxu0
        %7425 = vmatprep.mubr.f32.mxu0 %v6875
        %7426 = vmatmul.mubr.f32.gmra.mrb[0].mxu0 %v6309
        %v7427 = vpop.f32.mrb[0].mxu0
        %v7428 = vadd.f32 %v7123, %v7427
        %v7429 = vpop.f32.mrb[0].mxu0
        %7430 = vmatprep.mubr.f32.mxu0 %v6877
        %7431 = vmatmul.mubr.f32.gmra.mrb[0].mxu0 %v6312
        %v7432 = vpop.f32.mrb[0].mxu0
        %v7433 = vadd.f32 %v7128, %v7432
        %v7434 = vpop.f32.mrb[0].mxu0
        %7435 = vmatprep.mubr.f32.mxu0 %v6879
        %7436 = vmatmul.mubr.f32.gmra.mrb[0].mxu0 %v6315
        %v7437 = vpop.f32.mrb[0].mxu0
        %v7438 = vadd.f32 %v7133, %v7437
        %v7439 = vpop.f32.mrb[0].mxu0
        %7440 = vmatprep.mubr.f32.mxu0 %v6881
        %7441 = vmatmul.mubr.f32.gmra.mrb[0].mxu0 %v6318
        %v7442 = vpop.f32.mrb[0].mxu0
        %v7443 = vadd.f32 %v7138, %v7442
        %v7444 = vpop.f32.mrb[0].mxu0
        %7445 = vmatprep.mubr.f32.mxu0 %v6883
        %7446 = vmatmul.mubr.f32.gmra.mrb[0].mxu0 %v6321
        %v7447 = vpop.f32.mrb[0].mxu0
        %v7448 = vadd.f32 %v7143, %v7447
        %v7449 = vpop.f32.mrb[0].mxu0
        %7450 = vmatprep.mubr.f32.mxu0 %v6885
        %7451 = vmatmul.mubr.f32.gmra.mrb[0].mxu0 %v6413
        %v7452 = vpop.f32.mrb[0].mxu0
        %v7453 = vadd.f32 %v7148, %v7452
        %v7454 = vpop.f32.mrb[0].mxu0
        %7455 = vmatprep.mubr.f32.mxu0 %v6887
        %7456 = vmatmul.mubr.f32.gmra.mrb[0].mxu0 %v6416
        %v7457 = vpop.f32.mrb[0].mxu0
        %v7458 = vadd.f32 %v7153, %v7457
        %v7459 = vpop.f32.mrb[0].mxu0
        %7460 = vmatprep.mubr.f32.mxu0 %v6889
        %7461 = vmatmul.mubr.f32.gmra.mrb[0].mxu0 %v6419
        %v7462 = vpop.f32.mrb[0].mxu0
        %v7463 = vadd.f32 %v7158, %v7462
        %v7464 = vpop.f32.mrb[0].mxu0
        %7465 = vmatprep.mubr.f32.mxu0 %v6891
        %7466 = vmatmul.mubr.f32.gmra.mrb[0].mxu0 %v6422
        %v7467 = vpop.f32.mrb[0].mxu0
        %v7468 = vadd.f32 %v7163, %v7467
        %v7469 = vpop.f32.mrb[0].mxu0
        %7470 = vmatprep.mubr.f32.mxu0 %v6893
        %7471 = vmatmul.mubr.f32.gmra.mrb[0].mxu0 %v6425
        %v7472 = vpop.f32.mrb[0].mxu0
        %v7473 = vadd.f32 %v7168, %v7472
        %v7474 = vpop.f32.mrb[0].mxu0
        %7475 = vmatprep.mubr.f32.mxu0 %v6895
        %7476 = vmatmul.mubr.f32.gmra.mrb[0].mxu0 %v6428
        %v7477 = vpop.f32.mrb[0].mxu0
        %v7478 = vadd.f32 %v7173, %v7477
        %v7479 = vpop.f32.mrb[0].mxu0
        %7480 = vmatprep.mubr.f32.mxu0 %v6897
        %7481 = vmatmul.mubr.f32.gmra.mrb[0].mxu0 %v6431
        %v7482 = vpop.f32.mrb[0].mxu0
        %v7483 = vadd.f32 %v7178, %v7482
        %v7484 = vpop.f32.mrb[0].mxu0
        %7485 = vmatprep.mubr.f32.mxu0 %v6899
        %7486 = vmatmul.mubr.f32.gmra.mrb[0].mxu0 %v6434
        %v7487 = vpop.f32.mrb[0].mxu0
        %v7488 = vadd.f32 %v7183, %v7487
        %v7489 = vpop.f32.mrb[0].mxu0
        %7490 = vmatprep.mubr.f32.mxu0 %v6901
        %7491 = vmatmul.mubr.f32.gmra.mrb[0].mxu0 %v6526
        %v7492 = vpop.f32.mrb[0].mxu0
        %v7493 = vadd.f32 %v7188, %v7492
        %v7494 = vpop.f32.mrb[0].mxu0
        %7495 = vmatprep.mubr.f32.mxu0 %v6903
        %7496 = vmatmul.mubr.f32.gmra.mrb[0].mxu0 %v6529
        %v7497 = vpop.f32.mrb[0].mxu0
        %v7498 = vadd.f32 %v7193, %v7497
        %v7499 = vpop.f32.mrb[0].mxu0
        %7500 = vmatprep.mubr.f32.mxu0 %v6905
        %7501 = vmatmul.mubr.f32.gmra.mrb[0].mxu0 %v6532
        %v7502 = vpop.f32.mrb[0].mxu0
        %v7503 = vadd.f32 %v7198, %v7502
        %v7504 = vpop.f32.mrb[0].mxu0
        %7505 = vmatprep.mubr.f32.mxu0 %v6907
        %7506 = vmatmul.mubr.f32.gmra.mrb[0].mxu0 %v6535
        %v7507 = vpop.f32.mrb[0].mxu0
        %v7508 = vadd.f32 %v7203, %v7507
        %v7509 = vpop.f32.mrb[0].mxu0
        %7510 = vmatprep.mubr.f32.mxu0 %v6909
        %7511 = vmatmul.mubr.f32.gmra.mrb[0].mxu0 %v6538
        %v7512 = vpop.f32.mrb[0].mxu0
        %v7513 = vadd.f32 %v7208, %v7512
        %v7514 = vpop.f32.mrb[0].mxu0
        %7515 = vmatprep.mubr.f32.mxu0 %v6911
        %7516 = vmatmul.mubr.f32.gmra.mrb[0].mxu0 %v6541
        %v7517 = vpop.f32.mrb[0].mxu0
        %v7518 = vadd.f32 %v7213, %v7517
        %v7519 = vpop.f32.mrb[0].mxu0
        %7520 = vmatprep.mubr.f32.mxu0 %v6913
        %7521 = vmatmul.mubr.f32.gmra.mrb[0].mxu0 %v6544
        %v7522 = vpop.f32.mrb[0].mxu0
        %v7523 = vadd.f32 %v7218, %v7522
        %v7524 = vpop.f32.mrb[0].mxu0
        %7525 = vmatprep.mubr.f32.mxu0 %v6915
        %7526 = vmatmul.mubr.f32.gmra.mrb[0].mxu0 %v6547
        %v7527 = vpop.f32.mrb[0].mxu0
        %v7528 = vadd.f32 %v7223, %v7527
        %v7529 = vpop.f32.mrb[0].mxu0
        %7530 = vdwg.mxu0
        %v7531 = vld [vmem:[%s3] sm:$0xff]
        %v7532 = vld [vmem:[%s3 + $0x8] sm:$0xff]
        %v7533 = vld [vmem:[%s3 + $0x10] sm:$0xff]
        %v7534 = vld [vmem:[%s3 + $0x30] sm:$0xff]
        %v7535 = vld [vmem:[%s3 + $0x38] sm:$0xff]
        %v7536 = vld [vmem:[%s3 + $0x40] sm:$0xff]
        %v7537 = vld [vmem:[%s3 + $0x60] sm:$0xff]
        %v7538 = vld [vmem:[%s3 + $0x68] sm:$0xff]
        %v7539 = vld [vmem:[%s3 + $0x70] sm:$0xff]
        %v7540 = vld [vmem:[%s3 + $0x90] sm:$0xff]
        %v7541 = vld [vmem:[%s3 + $0x98] sm:$0xff]
        %v7542 = vld [vmem:[%s3 + $0xa0] sm:$0xff]
        %v7543 = vld [vmem:[%s3 + $0xc0] sm:$0xff]
        %v7544 = vld [vmem:[%s3 + $0xc8] sm:$0xff]
        %v7545 = vld [vmem:[%s3 + $0xd0] sm:$0xff]
        %v7546 = vld [vmem:[%s3 + $0xf0] sm:$0xff]
        %v7547 = vld [vmem:[%s3 + $0xf8] sm:$0xff]
        %v7548 = vld [vmem:[%s3 + $0x100] sm:$0xff]
        %v7549 = vld [vmem:[%s3 + $0x120] sm:$0xff]
        %v7550 = vld [vmem:[%s3 + $0x128] sm:$0xff]
        %v7551 = vld [vmem:[%s3 + $0x130] sm:$0xff]
        %v7552 = vld [vmem:[%s3 + $0x150] sm:$0xff]
        %v7553 = vld [vmem:[%s3 + $0x158] sm:$0xff]
        %v7554 = vld [vmem:[%s3 + $0x160] sm:$0xff]
        %v7555 = vld [vmem:[%s3 + $0x180] sm:$0xff]
        %v7556 = vld [vmem:[%s3 + $0x188] sm:$0xff]
        %v7557 = vld [vmem:[%s3 + $0x190] sm:$0xff]
        %v7558 = vld [vmem:[%s3 + $0x1b0] sm:$0xff]
        %v7559 = vld [vmem:[%s3 + $0x1b8] sm:$0xff]
        %v7560 = vld [vmem:[%s3 + $0x1c0] sm:$0xff]
        %v7561 = vld [vmem:[%s3 + $0x1e0] sm:$0xff]
        %v7562 = vld [vmem:[%s3 + $0x1e8] sm:$0xff]
        %v7563 = vld [vmem:[%s3 + $0x1f0] sm:$0xff]
        %v7564 = vld [vmem:[%s3 + $0x210] sm:$0xff]
        %v7565 = vld [vmem:[%s3 + $0x218] sm:$0xff]
        %v7566 = vld [vmem:[%s3 + $0x220] sm:$0xff]
        %v7567 = vld [vmem:[%s3 + $0x240] sm:$0xff]
        %v7568 = vld [vmem:[%s3 + $0x248] sm:$0xff]
        %v7569 = vld [vmem:[%s3 + $0x250] sm:$0xff]
        %v7570 = vld [vmem:[%s3 + $0x270] sm:$0xff]
        %v7571 = vld [vmem:[%s3 + $0x278] sm:$0xff]
        %v7572 = vld [vmem:[%s3 + $0x280] sm:$0xff]
        %v7573 = vld [vmem:[%s3 + $0x2a0] sm:$0xff]
        %v7574 = vld [vmem:[%s3 + $0x2a8] sm:$0xff]
        %v7575 = vld [vmem:[%s3 + $0x2b0] sm:$0xff]
        %v7576 = vld [vmem:[%s3 + $0x2d0] sm:$0xff]
        %v7577 = vld [vmem:[%s3 + $0x2d8] sm:$0xff]
        %v7578 = vld [vmem:[%s3 + $0x2e0] sm:$0xff]
        %v7579 = vld [vmem:[%s3 + $0x18] sm:$0xff]
        %v7580 = vld [vmem:[%s3 + $0x20] sm:$0xff]
        %v7581 = vld [vmem:[%s3 + $0x28] sm:$0xff]
        %v7582 = vld [vmem:[%s3 + $0x48] sm:$0xff]
        %v7583 = vld [vmem:[%s3 + $0x50] sm:$0xff]
        %v7584 = vld [vmem:[%s3 + $0x58] sm:$0xff]
        %v7585 = vld [vmem:[%s3 + $0x78] sm:$0xff]
        %v7586 = vld [vmem:[%s3 + $0x80] sm:$0xff]
        %v7587 = vld [vmem:[%s3 + $0x88] sm:$0xff]
        %v7588 = vld [vmem:[%s3 + $0xa8] sm:$0xff]
        %v7589 = vld [vmem:[%s3 + $0xb0] sm:$0xff]
        %v7590 = vld [vmem:[%s3 + $0xb8] sm:$0xff]
        %v7591 = vld [vmem:[%s3 + $0xd8] sm:$0xff]
        %v7592 = vld [vmem:[%s3 + $0xe0] sm:$0xff]
        %v7593 = vld [vmem:[%s3 + $0xe8] sm:$0xff]
        %v7594 = vld [vmem:[%s3 + $0x108] sm:$0xff]
        %v7595 = vld [vmem:[%s3 + $0x110] sm:$0xff]
        %v7596 = vld [vmem:[%s3 + $0x118] sm:$0xff]
        %v7597 = vld [vmem:[%s3 + $0x138] sm:$0xff]
        %v7598 = vld [vmem:[%s3 + $0x140] sm:$0xff]
        %v7599 = vld [vmem:[%s3 + $0x148] sm:$0xff]
        %v7600 = vld [vmem:[%s3 + $0x168] sm:$0xff]
        %v7601 = vld [vmem:[%s3 + $0x170] sm:$0xff]
        %v7602 = vld [vmem:[%s3 + $0x178] sm:$0xff]
        %v7603 = vld [vmem:[%s3 + $0x198] sm:$0xff]
        %v7604 = vld [vmem:[%s3 + $0x1a0] sm:$0xff]
        %v7605 = vld [vmem:[%s3 + $0x1a8] sm:$0xff]
        %v7606 = vld [vmem:[%s3 + $0x1c8] sm:$0xff]
        %v7607 = vld [vmem:[%s3 + $0x1d0] sm:$0xff]
        %v7608 = vld [vmem:[%s3 + $0x1d8] sm:$0xff]
        %v7609 = vld [vmem:[%s3 + $0x1f8] sm:$0xff]
        %v7610 = vld [vmem:[%s3 + $0x200] sm:$0xff]
        %v7611 = vld [vmem:[%s3 + $0x208] sm:$0xff]
        %v7612 = vld [vmem:[%s3 + $0x228] sm:$0xff]
        %v7613 = vld [vmem:[%s3 + $0x230] sm:$0xff]
        %v7614 = vld [vmem:[%s3 + $0x238] sm:$0xff]
        %v7615 = vld [vmem:[%s3 + $0x258] sm:$0xff]
        %v7616 = vld [vmem:[%s3 + $0x260] sm:$0xff]
        %v7617 = vld [vmem:[%s3 + $0x268] sm:$0xff]
        %v7618 = vld [vmem:[%s3 + $0x288] sm:$0xff]
        %v7619 = vld [vmem:[%s3 + $0x290] sm:$0xff]
        %v7620 = vld [vmem:[%s3 + $0x298] sm:$0xff]
        %v7621 = vld [vmem:[%s3 + $0x2b8] sm:$0xff]
        %v7622 = vld [vmem:[%s3 + $0x2c0] sm:$0xff]
        %v7623 = vld [vmem:[%s3 + $0x2c8] sm:$0xff]
        %v7624 = vld [vmem:[%s3 + $0x2e8] sm:$0xff]
        %v7625 = vld [vmem:[%s3 + $0x2f0] sm:$0xff]
        %v7626 = vld [vmem:[%s3 + $0x2f8] sm:$0xff]
        %7675 = vrot.lane.b32.xlu0 %v7293, 127
        %v7676 = vpop.permute.xlu0 %7675
        %7677 = vrot.lane.b32.xlu0 %v7298, 127
        %v7678 = vpop.permute.xlu0 %7677
        %7679 = vrot.lane.b32.xlu0 %v7303, 127
        %v7680 = vpop.permute.xlu0 %7679
        %7681 = vrot.lane.b32.xlu0 %v7308, 127
        %v7682 = vpop.permute.xlu0 %7681
        %7683 = vrot.lane.b32.xlu0 %v7313, 127
        %v7684 = vpop.permute.xlu0 %7683
        %7685 = vrot.lane.b32.xlu0 %v7318, 127
        %v7686 = vpop.permute.xlu0 %7685
        %7687 = vrot.lane.b32.xlu0 %v7323, 127
        %v7688 = vpop.permute.xlu0 %7687
        %7689 = vrot.lane.b32.xlu0 %v7328, 127
        %v7690 = vpop.permute.xlu0 %7689
        %7691 = vrot.lane.b32.xlu0 %v7333, 127
        %v7692 = vpop.permute.xlu0 %7691
        %7693 = vrot.lane.b32.xlu0 %v7338, 127
        %v7694 = vpop.permute.xlu0 %7693
        %7695 = vrot.lane.b32.xlu0 %v7343, 127
        %v7696 = vpop.permute.xlu0 %7695
        %7697 = vrot.lane.b32.xlu0 %v7348, 127
        %v7698 = vpop.permute.xlu0 %7697
        %7699 = vrot.lane.b32.xlu0 %v7353, 127
        %v7700 = vpop.permute.xlu0 %7699
        %7701 = vrot.lane.b32.xlu0 %v7358, 127
        %v7702 = vpop.permute.xlu0 %7701
        %7703 = vrot.lane.b32.xlu0 %v7363, 127
        %v7704 = vpop.permute.xlu0 %7703
        %7705 = vrot.lane.b32.xlu0 %v7368, 127
        %v7706 = vpop.permute.xlu0 %7705
        %7707 = vrot.lane.b32.xlu0 %v7373, 127
        %v7708 = vpop.permute.xlu0 %7707
        %7709 = vrot.lane.b32.xlu0 %v7378, 127
        %v7710 = vpop.permute.xlu0 %7709
        %7711 = vrot.lane.b32.xlu0 %v7383, 127
        %v7712 = vpop.permute.xlu0 %7711
        %7713 = vrot.lane.b32.xlu0 %v7388, 127
        %v7714 = vpop.permute.xlu0 %7713
        %7715 = vrot.lane.b32.xlu0 %v7393, 127
        %v7716 = vpop.permute.xlu0 %7715
        %7717 = vrot.lane.b32.xlu0 %v7398, 127
        %v7718 = vpop.permute.xlu0 %7717
        %7719 = vrot.lane.b32.xlu0 %v7403, 127
        %v7720 = vpop.permute.xlu0 %7719
        %7721 = vrot.lane.b32.xlu0 %v7408, 127
        %v7722 = vpop.permute.xlu0 %7721
        %7723 = vrot.lane.b32.xlu0 %v7413, 127
        %v7724 = vpop.permute.xlu0 %7723
        %7725 = vrot.lane.b32.xlu0 %v7418, 127
        %v7726 = vpop.permute.xlu0 %7725
        %7727 = vrot.lane.b32.xlu0 %v7423, 127
        %v7728 = vpop.permute.xlu0 %7727
        %7729 = vrot.lane.b32.xlu0 %v7428, 127
        %v7730 = vpop.permute.xlu0 %7729
        %7731 = vrot.lane.b32.xlu0 %v7433, 127
        %v7732 = vpop.permute.xlu0 %7731
        %7733 = vrot.lane.b32.xlu0 %v7438, 127
        %v7734 = vpop.permute.xlu0 %7733
        %7735 = vrot.lane.b32.xlu0 %v7443, 127
        %v7736 = vpop.permute.xlu0 %7735
        %7737 = vrot.lane.b32.xlu0 %v7448, 127
        %v7738 = vpop.permute.xlu0 %7737
        %7739 = vrot.lane.b32.xlu0 %v7453, 127
        %v7740 = vpop.permute.xlu0 %7739
        %7741 = vrot.lane.b32.xlu0 %v7458, 127
        %v7742 = vpop.permute.xlu0 %7741
        %7743 = vrot.lane.b32.xlu0 %v7463, 127
        %v7744 = vpop.permute.xlu0 %7743
        %7745 = vrot.lane.b32.xlu0 %v7468, 127
        %v7746 = vpop.permute.xlu0 %7745
        %7747 = vrot.lane.b32.xlu0 %v7473, 127
        %v7748 = vpop.permute.xlu0 %7747
        %7749 = vrot.lane.b32.xlu0 %v7478, 127
        %v7750 = vpop.permute.xlu0 %7749
        %7751 = vrot.lane.b32.xlu0 %v7483, 127
        %v7752 = vpop.permute.xlu0 %7751
        %7753 = vrot.lane.b32.xlu0 %v7488, 127
        %v7754 = vpop.permute.xlu0 %7753
        %7755 = vrot.lane.b32.xlu0 %v7493, 127
        %v7756 = vpop.permute.xlu0 %7755
        %7757 = vrot.lane.b32.xlu0 %v7498, 127
        %v7758 = vpop.permute.xlu0 %7757
        %7759 = vrot.lane.b32.xlu0 %v7503, 127
        %v7760 = vpop.permute.xlu0 %7759
        %7761 = vrot.lane.b32.xlu0 %v7508, 127
        %v7762 = vpop.permute.xlu0 %7761
        %7763 = vrot.lane.b32.xlu0 %v7513, 127
        %v7764 = vpop.permute.xlu0 %7763
        %7765 = vrot.lane.b32.xlu0 %v7518, 127
        %v7766 = vpop.permute.xlu0 %7765
        %7767 = vrot.lane.b32.xlu0 %v7523, 127
        %v7768 = vpop.permute.xlu0 %7767
        %7769 = vrot.lane.b32.xlu0 %v7528, 127
        %v7770 = vpop.permute.xlu0 %7769
        %7819 = vmatprep.subr.mxu0 0.0
        %7820 = vmatpush1.msra.mxu0 %v7676
        %7821 = vmatprep.subr.mxu0 0.0
        %7822 = vmatpush1.msra.mxu0 %v7678
        %7823 = vmatprep.subr.mxu0 0.0
        %7824 = vmatpush1.msra.mxu0 %v7680
        %7825 = vmatprep.subr.mxu0 0.0
        %7826 = vmatpush1.msra.mxu0 %v7682
        %7827 = vmatprep.subr.mxu0 0.0
        %7828 = vmatpush1.msra.mxu0 %v7684
        %7829 = vmatprep.subr.mxu0 0.0
        %7830 = vmatpush1.msra.mxu0 %v7686
        %7831 = vmatprep.subr.mxu0 0.0
        %7832 = vmatpush1.msra.mxu0 %v7688
        %7833 = vmatprep.subr.mxu0 0.0
        %7834 = vmatpush1.msra.mxu0 %v7690
        %7835 = vmatprep.subr.mxu0 0.0
        %7836 = vmatpush1.msra.mxu0 %v7692
        %7837 = vmatprep.subr.mxu0 0.0
        %7838 = vmatpush1.msra.mxu0 %v7694
        %7839 = vmatprep.subr.mxu0 0.0
        %7840 = vmatpush1.msra.mxu0 %v7696
        %7841 = vmatprep.subr.mxu0 0.0
        %7842 = vmatpush1.msra.mxu0 %v7698
        %7843 = vmatprep.subr.mxu0 0.0
        %7844 = vmatpush1.msra.mxu0 %v7700
        %7845 = vmatprep.subr.mxu0 0.0
        %7846 = vmatpush1.msra.mxu0 %v7702
        %7847 = vmatprep.subr.mxu0 0.0
        %7848 = vmatpush1.msra.mxu0 %v7704
        %7849 = vmatprep.subr.mxu0 0.0
        %7850 = vmatpush1.msra.mxu0 %v7706
        %7851 = vmatprep.subr.mxu0 0.0
        %7852 = vmatpush1.msra.mxu0 %v7708
        %7853 = vmatprep.subr.mxu0 0.0
        %7854 = vmatpush1.msra.mxu0 %v7710
        %7855 = vmatprep.subr.mxu0 0.0
        %7856 = vmatpush1.msra.mxu0 %v7712
        %7857 = vmatprep.subr.mxu0 0.0
        %7858 = vmatpush1.msra.mxu0 %v7714
        %7859 = vmatprep.subr.mxu0 0.0
        %7860 = vmatpush1.msra.mxu0 %v7716
        %7861 = vmatprep.subr.mxu0 0.0
        %7862 = vmatpush1.msra.mxu0 %v7718
        %7863 = vmatprep.subr.mxu0 0.0
        %7864 = vmatpush1.msra.mxu0 %v7720
        %7865 = vmatprep.subr.mxu0 0.0
        %7866 = vmatpush1.msra.mxu0 %v7722
        %7867 = vmatprep.subr.mxu0 0.0
        %7868 = vmatpush1.msra.mxu0 %v7724
        %7869 = vmatprep.subr.mxu0 0.0
        %7870 = vmatpush1.msra.mxu0 %v7726
        %7871 = vmatprep.subr.mxu0 0.0
        %7872 = vmatpush1.msra.mxu0 %v7728
        %7873 = vmatprep.subr.mxu0 0.0
        %7874 = vmatpush1.msra.mxu0 %v7730
        %7875 = vmatprep.subr.mxu0 0.0
        %7876 = vmatpush1.msra.mxu0 %v7732
        %7877 = vmatprep.subr.mxu0 0.0
        %7878 = vmatpush1.msra.mxu0 %v7734
        %7879 = vmatprep.subr.mxu0 0.0
        %7880 = vmatpush1.msra.mxu0 %v7736
        %7881 = vmatprep.subr.mxu0 0.0
        %7882 = vmatpush1.msra.mxu0 %v7738
        %7883 = vmatprep.mubr.f32.mxu0 %v7580
        %7884 = vmatmul.mubr.f32.gmra.mrb[0].mxu0 %v7579
        %v7885 = vpop.f32.mrb[0].mxu0
        %v7886 = vadd.f32 0.0, %v7885
        %v7887 = vpop.f32.mrb[0].mxu0
        %7888 = vmatprep.mubr.f32.mxu0 %v7583
        %7889 = vmatmul.mubr.f32.gmra.mrb[0].mxu0 %v7582
        %v7890 = vpop.f32.mrb[0].mxu0
        %v7891 = vadd.f32 0.0, %v7890
        %v7892 = vpop.f32.mrb[0].mxu0
        %7893 = vmatprep.mubr.f32.mxu0 %v7586
        %7894 = vmatmul.mubr.f32.gmra.mrb[0].mxu0 %v7585
        %v7895 = vpop.f32.mrb[0].mxu0
        %v7896 = vadd.f32 0.0, %v7895
        %v7897 = vpop.f32.mrb[0].mxu0
        %7898 = vmatprep.mubr.f32.mxu0 %v7589
        %7899 = vmatmul.mubr.f32.gmra.mrb[0].mxu0 %v7588
        %v7900 = vpop.f32.mrb[0].mxu0
        %v7901 = vadd.f32 0.0, %v7900
        %v7902 = vpop.f32.mrb[0].mxu0
        %7903 = vmatprep.mubr.f32.mxu0 %v7592
        %7904 = vmatmul.mubr.f32.gmra.mrb[0].mxu0 %v7591
        %v7905 = vpop.f32.mrb[0].mxu0
        %v7906 = vadd.f32 0.0, %v7905
        %v7907 = vpop.f32.mrb[0].mxu0
        %7908 = vmatprep.mubr.f32.mxu0 %v7595
        %7909 = vmatmul.mubr.f32.gmra.mrb[0].mxu0 %v7594
        %v7910 = vpop.f32.mrb[0].mxu0
        %v7911 = vadd.f32 0.0, %v7910
        %v7912 = vpop.f32.mrb[0].mxu0
        %7913 = vmatprep.mubr.f32.mxu0 %v7598
        %7914 = vmatmul.mubr.f32.gmra.mrb[0].mxu0 %v7597
        %v7915 = vpop.f32.mrb[0].mxu0
        %v7916 = vadd.f32 0.0, %v7915
        %v7917 = vpop.f32.mrb[0].mxu0
        %7918 = vmatprep.mubr.f32.mxu0 %v7601
        %7919 = vmatmul.mubr.f32.gmra.mrb[0].mxu0 %v7600
        %v7920 = vpop.f32.mrb[0].mxu0
        %v7921 = vadd.f32 0.0, %v7920
        %v7922 = vpop.f32.mrb[0].mxu0
        %7923 = vmatprep.mubr.f32.mxu0 %v7604
        %7924 = vmatmul.mubr.f32.gmra.mrb[0].mxu0 %v7603
        %v7925 = vpop.f32.mrb[0].mxu0
        %v7926 = vadd.f32 0.0, %v7925
        %v7927 = vpop.f32.mrb[0].mxu0
        %7928 = vmatprep.mubr.f32.mxu0 %v7607
        %7929 = vmatmul.mubr.f32.gmra.mrb[0].mxu0 %v7606
        %v7930 = vpop.f32.mrb[0].mxu0
        %v7931 = vadd.f32 0.0, %v7930
        %v7932 = vpop.f32.mrb[0].mxu0
        %7933 = vmatprep.mubr.f32.mxu0 %v7610
        %7934 = vmatmul.mubr.f32.gmra.mrb[0].mxu0 %v7609
        %v7935 = vpop.f32.mrb[0].mxu0
        %v7936 = vadd.f32 0.0, %v7935
        %v7937 = vpop.f32.mrb[0].mxu0
        %7938 = vmatprep.mubr.f32.mxu0 %v7613
        %7939 = vmatmul.mubr.f32.gmra.mrb[0].mxu0 %v7612
        %v7940 = vpop.f32.mrb[0].mxu0
        %v7941 = vadd.f32 0.0, %v7940
        %v7942 = vpop.f32.mrb[0].mxu0
        %7943 = vmatprep.mubr.f32.mxu0 %v7616
        %7944 = vmatmul.mubr.f32.gmra.mrb[0].mxu0 %v7615
        %v7945 = vpop.f32.mrb[0].mxu0
        %v7946 = vadd.f32 0.0, %v7945
        %v7947 = vpop.f32.mrb[0].mxu0
        %7948 = vmatprep.mubr.f32.mxu0 %v7619
        %7949 = vmatmul.mubr.f32.gmra.mrb[0].mxu0 %v7618
        %v7950 = vpop.f32.mrb[0].mxu0
        %v7951 = vadd.f32 0.0, %v7950
        %v7952 = vpop.f32.mrb[0].mxu0
        %7953 = vmatprep.mubr.f32.mxu0 %v7622
        %7954 = vmatmul.mubr.f32.gmra.mrb[0].mxu0 %v7621
        %v7955 = vpop.f32.mrb[0].mxu0
        %v7956 = vadd.f32 0.0, %v7955
        %v7957 = vpop.f32.mrb[0].mxu0
        %7958 = vmatprep.mubr.f32.mxu0 %v7625
        %7959 = vmatmul.mubr.f32.gmra.mrb[0].mxu0 %v7624
        %v7960 = vpop.f32.mrb[0].mxu0
        %v7961 = vadd.f32 0.0, %v7960
        %v7962 = vpop.f32.mrb[0].mxu0
        %7963 = vdwg.mxu0
        %7964 = vmatprep.subr.mxu0 0.0
        %7965 = vmatpush1.msra.mxu0 %v7740
        %7966 = vmatprep.subr.mxu0 0.0
        %7967 = vmatpush1.msra.mxu0 %v7742
        %7968 = vmatprep.subr.mxu0 0.0
        %7969 = vmatpush1.msra.mxu0 %v7744
        %7970 = vmatprep.subr.mxu0 0.0
        %7971 = vmatpush1.msra.mxu0 %v7746
        %7972 = vmatprep.subr.mxu0 0.0
        %7973 = vmatpush1.msra.mxu0 %v7748
        %7974 = vmatprep.subr.mxu0 0.0
        %7975 = vmatpush1.msra.mxu0 %v7750
        %7976 = vmatprep.subr.mxu0 0.0
        %7977 = vmatpush1.msra.mxu0 %v7752
        %7978 = vmatprep.subr.mxu0 0.0
        %7979 = vmatpush1.msra.mxu0 %v7754
        %7980 = vmatprep.subr.mxu0 0.0
        %7981 = vmatpush1.msra.mxu0 %v7756
        %7982 = vmatprep.subr.mxu0 0.0
        %7983 = vmatpush1.msra.mxu0 %v7758
        %7984 = vmatprep.subr.mxu0 0.0
        %7985 = vmatpush1.msra.mxu0 %v7760
        %7986 = vmatprep.subr.mxu0 0.0
        %7987 = vmatpush1.msra.mxu0 %v7762
        %7988 = vmatprep.subr.mxu0 0.0
        %7989 = vmatpush1.msra.mxu0 %v7764
        %7990 = vmatprep.subr.mxu0 0.0
        %7991 = vmatpush1.msra.mxu0 %v7766
        %7992 = vmatprep.subr.mxu0 0.0
        %7993 = vmatpush1.msra.mxu0 %v7768
        %7994 = vmatprep.subr.mxu0 0.0
        %7995 = vmatpush1.msra.mxu0 %v7770
        %7996 = vmatprep.subr.mxu0 0.0
        %7997 = vmatpush1.msra.mxu0 0.0
        %7998 = vmatprep.subr.mxu0 0.0
        %7999 = vmatpush1.msra.mxu0 0.0
        %8000 = vmatprep.subr.mxu0 0.0
        %8001 = vmatpush1.msra.mxu0 0.0
        %8002 = vmatprep.subr.mxu0 0.0
        %8003 = vmatpush1.msra.mxu0 0.0
        %8004 = vmatprep.subr.mxu0 0.0
        %8005 = vmatpush1.msra.mxu0 0.0
        %8006 = vmatprep.subr.mxu0 0.0
        %8007 = vmatpush1.msra.mxu0 0.0
        %8008 = vmatprep.subr.mxu0 0.0
        %8009 = vmatpush1.msra.mxu0 0.0
        %8010 = vmatprep.subr.mxu0 0.0
        %8011 = vmatpush1.msra.mxu0 0.0
        %8012 = vmatprep.subr.mxu0 0.0
        %8013 = vmatpush1.msra.mxu0 0.0
        %8014 = vmatprep.subr.mxu0 0.0
        %8015 = vmatpush1.msra.mxu0 0.0
        %8016 = vmatprep.subr.mxu0 0.0
        %8017 = vmatpush1.msra.mxu0 0.0
        %8018 = vmatprep.subr.mxu0 0.0
        %8019 = vmatpush1.msra.mxu0 0.0
        %8020 = vmatprep.subr.mxu0 0.0
        %8021 = vmatpush1.msra.mxu0 0.0
        %8022 = vmatprep.subr.mxu0 0.0
        %8023 = vmatpush1.msra.mxu0 0.0
        %8024 = vmatprep.subr.mxu0 0.0
        %8025 = vmatpush1.msra.mxu0 0.0
        %8026 = vmatprep.subr.mxu0 0.0
        %8027 = vmatpush1.msra.mxu0 0.0
        %8028 = vmatprep.mubr.f32.mxu0 0.0
        %8029 = vmatmul.mubr.f32.gmra.mrb[0].mxu0 %v7581
        %v8030 = vpop.f32.mrb[0].mxu0
        %v8031 = vadd.f32 %v7886, %v8030
        %v8032 = vpop.f32.mrb[0].mxu0
        %8033 = vmatprep.mubr.f32.mxu0 0.0
        %8034 = vmatmul.mubr.f32.gmra.mrb[0].mxu0 %v7584
        %v8035 = vpop.f32.mrb[0].mxu0
        %v8036 = vadd.f32 %v7891, %v8035
        %v8037 = vpop.f32.mrb[0].mxu0
        %8038 = vmatprep.mubr.f32.mxu0 0.0
        %8039 = vmatmul.mubr.f32.gmra.mrb[0].mxu0 %v7587
        %v8040 = vpop.f32.mrb[0].mxu0
        %v8041 = vadd.f32 %v7896, %v8040
        %v8042 = vpop.f32.mrb[0].mxu0
        %8043 = vmatprep.mubr.f32.mxu0 0.0
        %8044 = vmatmul.mubr.f32.gmra.mrb[0].mxu0 %v7590
        %v8045 = vpop.f32.mrb[0].mxu0
        %v8046 = vadd.f32 %v7901, %v8045
        %v8047 = vpop.f32.mrb[0].mxu0
        %8048 = vmatprep.mubr.f32.mxu0 0.0
        %8049 = vmatmul.mubr.f32.gmra.mrb[0].mxu0 %v7593
        %v8050 = vpop.f32.mrb[0].mxu0
        %v8051 = vadd.f32 %v7906, %v8050
        %v8052 = vpop.f32.mrb[0].mxu0
        %8053 = vmatprep.mubr.f32.mxu0 0.0
        %8054 = vmatmul.mubr.f32.gmra.mrb[0].mxu0 %v7596
        %v8055 = vpop.f32.mrb[0].mxu0
        %v8056 = vadd.f32 %v7911, %v8055
        %v8057 = vpop.f32.mrb[0].mxu0
        %8058 = vmatprep.mubr.f32.mxu0 0.0
        %8059 = vmatmul.mubr.f32.gmra.mrb[0].mxu0 %v7599
        %v8060 = vpop.f32.mrb[0].mxu0
        %v8061 = vadd.f32 %v7916, %v8060
        %v8062 = vpop.f32.mrb[0].mxu0
        %8063 = vmatprep.mubr.f32.mxu0 0.0
        %8064 = vmatmul.mubr.f32.gmra.mrb[0].mxu0 %v7602
        %v8065 = vpop.f32.mrb[0].mxu0
        %v8066 = vadd.f32 %v7921, %v8065
        %v8067 = vpop.f32.mrb[0].mxu0
        %8068 = vmatprep.mubr.f32.mxu0 0.0
        %8069 = vmatmul.mubr.f32.gmra.mrb[0].mxu0 %v7605
        %v8070 = vpop.f32.mrb[0].mxu0
        %v8071 = vadd.f32 %v7926, %v8070
        %v8072 = vpop.f32.mrb[0].mxu0
        %8073 = vmatprep.mubr.f32.mxu0 0.0
        %8074 = vmatmul.mubr.f32.gmra.mrb[0].mxu0 %v7608
        %v8075 = vpop.f32.mrb[0].mxu0
        %v8076 = vadd.f32 %v7931, %v8075
        %v8077 = vpop.f32.mrb[0].mxu0
        %8078 = vmatprep.mubr.f32.mxu0 0.0
        %8079 = vmatmul.mubr.f32.gmra.mrb[0].mxu0 %v7611
        %v8080 = vpop.f32.mrb[0].mxu0
        %v8081 = vadd.f32 %v7936, %v8080
        %v8082 = vpop.f32.mrb[0].mxu0
        %8083 = vmatprep.mubr.f32.mxu0 0.0
        %8084 = vmatmul.mubr.f32.gmra.mrb[0].mxu0 %v7614
        %v8085 = vpop.f32.mrb[0].mxu0
        %v8086 = vadd.f32 %v7941, %v8085
        %v8087 = vpop.f32.mrb[0].mxu0
        %8088 = vmatprep.mubr.f32.mxu0 0.0
        %8089 = vmatmul.mubr.f32.gmra.mrb[0].mxu0 %v7617
        %v8090 = vpop.f32.mrb[0].mxu0
        %v8091 = vadd.f32 %v7946, %v8090
        %v8092 = vpop.f32.mrb[0].mxu0
        %8093 = vmatprep.mubr.f32.mxu0 0.0
        %8094 = vmatmul.mubr.f32.gmra.mrb[0].mxu0 %v7620
        %v8095 = vpop.f32.mrb[0].mxu0
        %v8096 = vadd.f32 %v7951, %v8095
        %v8097 = vpop.f32.mrb[0].mxu0
        %8098 = vmatprep.mubr.f32.mxu0 0.0
        %8099 = vmatmul.mubr.f32.gmra.mrb[0].mxu0 %v7623
        %v8100 = vpop.f32.mrb[0].mxu0
        %v8101 = vadd.f32 %v7956, %v8100
        %v8102 = vpop.f32.mrb[0].mxu0
        %8103 = vmatprep.mubr.f32.mxu0 0.0
        %8104 = vmatmul.mubr.f32.gmra.mrb[0].mxu0 %v7626
        %v8105 = vpop.f32.mrb[0].mxu0
        %v8106 = vadd.f32 %v7961, %v8105
        %v8107 = vpop.f32.mrb[0].mxu0
        %8108 = vdwg.mxu0
        %8109 = vmatprep.subr.mxu0 0.0
        %8110 = vmatpush1.msra.mxu0 %v7293
        %8111 = vmatprep.subr.mxu0 0.0
        %8112 = vmatpush1.msra.mxu0 %v7298
        %8113 = vmatprep.subr.mxu0 0.0
        %8114 = vmatpush1.msra.mxu0 %v7303
        %8115 = vmatprep.subr.mxu0 0.0
        %8116 = vmatpush1.msra.mxu0 %v7308
        %8117 = vmatprep.subr.mxu0 0.0
        %8118 = vmatpush1.msra.mxu0 %v7313
        %8119 = vmatprep.subr.mxu0 0.0
        %8120 = vmatpush1.msra.mxu0 %v7318
        %8121 = vmatprep.subr.mxu0 0.0
        %8122 = vmatpush1.msra.mxu0 %v7323
        %8123 = vmatprep.subr.mxu0 0.0
        %8124 = vmatpush1.msra.mxu0 %v7328
        %8125 = vmatprep.subr.mxu0 0.0
        %8126 = vmatpush1.msra.mxu0 %v7333
        %8127 = vmatprep.subr.mxu0 0.0
        %8128 = vmatpush1.msra.mxu0 %v7338
        %8129 = vmatprep.subr.mxu0 0.0
        %8130 = vmatpush1.msra.mxu0 %v7343
        %8131 = vmatprep.subr.mxu0 0.0
        %8132 = vmatpush1.msra.mxu0 %v7348
        %8133 = vmatprep.subr.mxu0 0.0
        %8134 = vmatpush1.msra.mxu0 %v7353
        %8135 = vmatprep.subr.mxu0 0.0
        %8136 = vmatpush1.msra.mxu0 %v7358
        %8137 = vmatprep.subr.mxu0 0.0
        %8138 = vmatpush1.msra.mxu0 %v7363
        %8139 = vmatprep.subr.mxu0 0.0
        %8140 = vmatpush1.msra.mxu0 %v7368
        %8141 = vmatprep.subr.mxu0 0.0
        %8142 = vmatpush1.msra.mxu0 %v7373
        %8143 = vmatprep.subr.mxu0 0.0
        %8144 = vmatpush1.msra.mxu0 %v7378
        %8145 = vmatprep.subr.mxu0 0.0
        %8146 = vmatpush1.msra.mxu0 %v7383
        %8147 = vmatprep.subr.mxu0 0.0
        %8148 = vmatpush1.msra.mxu0 %v7388
        %8149 = vmatprep.subr.mxu0 0.0
        %8150 = vmatpush1.msra.mxu0 %v7393
        %8151 = vmatprep.subr.mxu0 0.0
        %8152 = vmatpush1.msra.mxu0 %v7398
        %8153 = vmatprep.subr.mxu0 0.0
        %8154 = vmatpush1.msra.mxu0 %v7403
        %8155 = vmatprep.subr.mxu0 0.0
        %8156 = vmatpush1.msra.mxu0 %v7408
        %8157 = vmatprep.subr.mxu0 0.0
        %8158 = vmatpush1.msra.mxu0 %v7413
        %8159 = vmatprep.subr.mxu0 0.0
        %8160 = vmatpush1.msra.mxu0 %v7418
        %8161 = vmatprep.subr.mxu0 0.0
        %8162 = vmatpush1.msra.mxu0 %v7423
        %8163 = vmatprep.subr.mxu0 0.0
        %8164 = vmatpush1.msra.mxu0 %v7428
        %8165 = vmatprep.subr.mxu0 0.0
        %8166 = vmatpush1.msra.mxu0 %v7433
        %8167 = vmatprep.subr.mxu0 0.0
        %8168 = vmatpush1.msra.mxu0 %v7438
        %8169 = vmatprep.subr.mxu0 0.0
        %8170 = vmatpush1.msra.mxu0 %v7443
        %8171 = vmatprep.subr.mxu0 0.0
        %8172 = vmatpush1.msra.mxu0 %v7448
        %8173 = vmatprep.mubr.f32.mxu0 %v7532
        %8174 = vmatmul.mubr.f32.gmra.mrb[0].mxu0 %v7531
        %v8175 = vpop.f32.mrb[0].mxu0
        %v8176 = vadd.f32 %v8031, %v8175
        %v8177 = vpop.f32.mrb[0].mxu0
        %8178 = vmatprep.mubr.f32.mxu0 %v7535
        %8179 = vmatmul.mubr.f32.gmra.mrb[0].mxu0 %v7534
        %v8180 = vpop.f32.mrb[0].mxu0
        %v8181 = vadd.f32 %v8036, %v8180
        %v8182 = vpop.f32.mrb[0].mxu0
        %8183 = vmatprep.mubr.f32.mxu0 %v7538
        %8184 = vmatmul.mubr.f32.gmra.mrb[0].mxu0 %v7537
        %v8185 = vpop.f32.mrb[0].mxu0
        %v8186 = vadd.f32 %v8041, %v8185
        %v8187 = vpop.f32.mrb[0].mxu0
        %8188 = vmatprep.mubr.f32.mxu0 %v7541
        %8189 = vmatmul.mubr.f32.gmra.mrb[0].mxu0 %v7540
        %v8190 = vpop.f32.mrb[0].mxu0
        %v8191 = vadd.f32 %v8046, %v8190
        %v8192 = vpop.f32.mrb[0].mxu0
        %8193 = vmatprep.mubr.f32.mxu0 %v7544
        %8194 = vmatmul.mubr.f32.gmra.mrb[0].mxu0 %v7543
        %v8195 = vpop.f32.mrb[0].mxu0
        %v8196 = vadd.f32 %v8051, %v8195
        %v8197 = vpop.f32.mrb[0].mxu0
        %8198 = vmatprep.mubr.f32.mxu0 %v7547
        %8199 = vmatmul.mubr.f32.gmra.mrb[0].mxu0 %v7546
        %v8200 = vpop.f32.mrb[0].mxu0
        %v8201 = vadd.f32 %v8056, %v8200
        %v8202 = vpop.f32.mrb[0].mxu0
        %8203 = vmatprep.mubr.f32.mxu0 %v7550
        %8204 = vmatmul.mubr.f32.gmra.mrb[0].mxu0 %v7549
        %v8205 = vpop.f32.mrb[0].mxu0
        %v8206 = vadd.f32 %v8061, %v8205
        %v8207 = vpop.f32.mrb[0].mxu0
        %8208 = vmatprep.mubr.f32.mxu0 %v7553
        %8209 = vmatmul.mubr.f32.gmra.mrb[0].mxu0 %v7552
        %v8210 = vpop.f32.mrb[0].mxu0
        %v8211 = vadd.f32 %v8066, %v8210
        %v8212 = vpop.f32.mrb[0].mxu0
        %8213 = vmatprep.mubr.f32.mxu0 %v7556
        %8214 = vmatmul.mubr.f32.gmra.mrb[0].mxu0 %v7555
        %v8215 = vpop.f32.mrb[0].mxu0
        %v8216 = vadd.f32 %v8071, %v8215
        %v8217 = vpop.f32.mrb[0].mxu0
        %8218 = vmatprep.mubr.f32.mxu0 %v7559
        %8219 = vmatmul.mubr.f32.gmra.mrb[0].mxu0 %v7558
        %v8220 = vpop.f32.mrb[0].mxu0
        %v8221 = vadd.f32 %v8076, %v8220
        %v8222 = vpop.f32.mrb[0].mxu0
        %8223 = vmatprep.mubr.f32.mxu0 %v7562
        %8224 = vmatmul.mubr.f32.gmra.mrb[0].mxu0 %v7561
        %v8225 = vpop.f32.mrb[0].mxu0
        %v8226 = vadd.f32 %v8081, %v8225
        %v8227 = vpop.f32.mrb[0].mxu0
        %8228 = vmatprep.mubr.f32.mxu0 %v7565
        %8229 = vmatmul.mubr.f32.gmra.mrb[0].mxu0 %v7564
        %v8230 = vpop.f32.mrb[0].mxu0
        %v8231 = vadd.f32 %v8086, %v8230
        %v8232 = vpop.f32.mrb[0].mxu0
        %8233 = vmatprep.mubr.f32.mxu0 %v7568
        %8234 = vmatmul.mubr.f32.gmra.mrb[0].mxu0 %v7567
        %v8235 = vpop.f32.mrb[0].mxu0
        %v8236 = vadd.f32 %v8091, %v8235
        %v8237 = vpop.f32.mrb[0].mxu0
        %8238 = vmatprep.mubr.f32.mxu0 %v7571
        %8239 = vmatmul.mubr.f32.gmra.mrb[0].mxu0 %v7570
        %v8240 = vpop.f32.mrb[0].mxu0
        %v8241 = vadd.f32 %v8096, %v8240
        %v8242 = vpop.f32.mrb[0].mxu0
        %8243 = vmatprep.mubr.f32.mxu0 %v7574
        %8244 = vmatmul.mubr.f32.gmra.mrb[0].mxu0 %v7573
        %v8245 = vpop.f32.mrb[0].mxu0
        %v8246 = vadd.f32 %v8101, %v8245
        %v8247 = vpop.f32.mrb[0].mxu0
        %8248 = vmatprep.mubr.f32.mxu0 %v7577
        %8249 = vmatmul.mubr.f32.gmra.mrb[0].mxu0 %v7576
        %v8250 = vpop.f32.mrb[0].mxu0
        %v8251 = vadd.f32 %v8106, %v8250
        %v8252 = vpop.f32.mrb[0].mxu0
        %8253 = vdwg.mxu0
        %8254 = vmatprep.subr.mxu0 0.0
        %8255 = vmatpush1.msra.mxu0 %v7453
        %8256 = vmatprep.subr.mxu0 0.0
        %8257 = vmatpush1.msra.mxu0 %v7458
        %8258 = vmatprep.subr.mxu0 0.0
        %8259 = vmatpush1.msra.mxu0 %v7463
        %8260 = vmatprep.subr.mxu0 0.0
        %8261 = vmatpush1.msra.mxu0 %v7468
        %8262 = vmatprep.subr.mxu0 0.0
        %8263 = vmatpush1.msra.mxu0 %v7473
        %8264 = vmatprep.subr.mxu0 0.0
        %8265 = vmatpush1.msra.mxu0 %v7478
        %8266 = vmatprep.subr.mxu0 0.0
        %8267 = vmatpush1.msra.mxu0 %v7483
        %8268 = vmatprep.subr.mxu0 0.0
        %8269 = vmatpush1.msra.mxu0 %v7488
        %8270 = vmatprep.subr.mxu0 0.0
        %8271 = vmatpush1.msra.mxu0 %v7493
        %8272 = vmatprep.subr.mxu0 0.0
        %8273 = vmatpush1.msra.mxu0 %v7498
        %8274 = vmatprep.subr.mxu0 0.0
        %8275 = vmatpush1.msra.mxu0 %v7503
        %8276 = vmatprep.subr.mxu0 0.0
        %8277 = vmatpush1.msra.mxu0 %v7508
        %8278 = vmatprep.subr.mxu0 0.0
        %8279 = vmatpush1.msra.mxu0 %v7513
        %8280 = vmatprep.subr.mxu0 0.0
        %8281 = vmatpush1.msra.mxu0 %v7518
        %8282 = vmatprep.subr.mxu0 0.0
        %8283 = vmatpush1.msra.mxu0 %v7523
        %8284 = vmatprep.subr.mxu0 0.0
        %8285 = vmatpush1.msra.mxu0 %v7528
        %8286 = vmatprep.subr.mxu0 0.0
        %8287 = vmatpush1.msra.mxu0 0.0
        %8288 = vmatprep.subr.mxu0 0.0
        %8289 = vmatpush1.msra.mxu0 0.0
        %8290 = vmatprep.subr.mxu0 0.0
        %8291 = vmatpush1.msra.mxu0 0.0
        %8292 = vmatprep.subr.mxu0 0.0
        %8293 = vmatpush1.msra.mxu0 0.0
        %8294 = vmatprep.subr.mxu0 0.0
        %8295 = vmatpush1.msra.mxu0 0.0
        %8296 = vmatprep.subr.mxu0 0.0
        %8297 = vmatpush1.msra.mxu0 0.0
        %8298 = vmatprep.subr.mxu0 0.0
        %8299 = vmatpush1.msra.mxu0 0.0
        %8300 = vmatprep.subr.mxu0 0.0
        %8301 = vmatpush1.msra.mxu0 0.0
        %8302 = vmatprep.subr.mxu0 0.0
        %8303 = vmatpush1.msra.mxu0 0.0
        %8304 = vmatprep.subr.mxu0 0.0
        %8305 = vmatpush1.msra.mxu0 0.0
        %8306 = vmatprep.subr.mxu0 0.0
        %8307 = vmatpush1.msra.mxu0 0.0
        %8308 = vmatprep.subr.mxu0 0.0
        %8309 = vmatpush1.msra.mxu0 0.0
        %8310 = vmatprep.subr.mxu0 0.0
        %8311 = vmatpush1.msra.mxu0 0.0
        %8312 = vmatprep.subr.mxu0 0.0
        %8313 = vmatpush1.msra.mxu0 0.0
        %8314 = vmatprep.subr.mxu0 0.0
        %8315 = vmatpush1.msra.mxu0 0.0
        %8316 = vmatprep.subr.mxu0 0.0
        %8317 = vmatpush1.msra.mxu0 0.0
        %8318 = vmatprep.mubr.f32.mxu0 0.0
        %8319 = vmatmul.mubr.f32.gmra.mrb[0].mxu0 %v7533
        %v8320 = vpop.f32.mrb[0].mxu0
        %v8321 = vadd.f32 %v8176, %v8320
        %v8322 = vpop.f32.mrb[0].mxu0
        %8323 = vmatprep.mubr.f32.mxu0 0.0
        %8324 = vmatmul.mubr.f32.gmra.mrb[0].mxu0 %v7536
        %v8325 = vpop.f32.mrb[0].mxu0
        %v8326 = vadd.f32 %v8181, %v8325
        %v8327 = vpop.f32.mrb[0].mxu0
        %8328 = vmatprep.mubr.f32.mxu0 0.0
        %8329 = vmatmul.mubr.f32.gmra.mrb[0].mxu0 %v7539
        %v8330 = vpop.f32.mrb[0].mxu0
        %v8331 = vadd.f32 %v8186, %v8330
        %v8332 = vpop.f32.mrb[0].mxu0
        %8333 = vmatprep.mubr.f32.mxu0 0.0
        %8334 = vmatmul.mubr.f32.gmra.mrb[0].mxu0 %v7542
        %v8335 = vpop.f32.mrb[0].mxu0
        %v8336 = vadd.f32 %v8191, %v8335
        %v8337 = vpop.f32.mrb[0].mxu0
        %8338 = vmatprep.mubr.f32.mxu0 0.0
        %8339 = vmatmul.mubr.f32.gmra.mrb[0].mxu0 %v7545
        %v8340 = vpop.f32.mrb[0].mxu0
        %v8341 = vadd.f32 %v8196, %v8340
        %v8342 = vpop.f32.mrb[0].mxu0
        %8343 = vmatprep.mubr.f32.mxu0 0.0
        %8344 = vmatmul.mubr.f32.gmra.mrb[0].mxu0 %v7548
        %v8345 = vpop.f32.mrb[0].mxu0
        %v8346 = vadd.f32 %v8201, %v8345
        %v8347 = vpop.f32.mrb[0].mxu0
        %8348 = vmatprep.mubr.f32.mxu0 0.0
        %8349 = vmatmul.mubr.f32.gmra.mrb[0].mxu0 %v7551
        %v8350 = vpop.f32.mrb[0].mxu0
        %v8351 = vadd.f32 %v8206, %v8350
        %v8352 = vpop.f32.mrb[0].mxu0
        %8353 = vmatprep.mubr.f32.mxu0 0.0
        %8354 = vmatmul.mubr.f32.gmra.mrb[0].mxu0 %v7554
        %v8355 = vpop.f32.mrb[0].mxu0
        %v8356 = vadd.f32 %v8211, %v8355
        %v8357 = vpop.f32.mrb[0].mxu0
        %8358 = vmatprep.mubr.f32.mxu0 0.0
        %8359 = vmatmul.mubr.f32.gmra.mrb[0].mxu0 %v7557
        %v8360 = vpop.f32.mrb[0].mxu0
        %v8361 = vadd.f32 %v8216, %v8360
        %v8362 = vpop.f32.mrb[0].mxu0
        %8363 = vmatprep.mubr.f32.mxu0 0.0
        %8364 = vmatmul.mubr.f32.gmra.mrb[0].mxu0 %v7560
        %v8365 = vpop.f32.mrb[0].mxu0
        %v8366 = vadd.f32 %v8221, %v8365
        %v8367 = vpop.f32.mrb[0].mxu0
        %8368 = vmatprep.mubr.f32.mxu0 0.0
        %8369 = vmatmul.mubr.f32.gmra.mrb[0].mxu0 %v7563
        %v8370 = vpop.f32.mrb[0].mxu0
        %v8371 = vadd.f32 %v8226, %v8370
        %v8372 = vpop.f32.mrb[0].mxu0
        %8373 = vmatprep.mubr.f32.mxu0 0.0
        %8374 = vmatmul.mubr.f32.gmra.mrb[0].mxu0 %v7566
        %v8375 = vpop.f32.mrb[0].mxu0
        %v8376 = vadd.f32 %v8231, %v8375
        %v8377 = vpop.f32.mrb[0].mxu0
        %8378 = vmatprep.mubr.f32.mxu0 0.0
        %8379 = vmatmul.mubr.f32.gmra.mrb[0].mxu0 %v7569
        %v8380 = vpop.f32.mrb[0].mxu0
        %v8381 = vadd.f32 %v8236, %v8380
        %v8382 = vpop.f32.mrb[0].mxu0
        %8383 = vmatprep.mubr.f32.mxu0 0.0
        %8384 = vmatmul.mubr.f32.gmra.mrb[0].mxu0 %v7572
        %v8385 = vpop.f32.mrb[0].mxu0
        %v8386 = vadd.f32 %v8241, %v8385
        %v8387 = vpop.f32.mrb[0].mxu0
        %8388 = vmatprep.mubr.f32.mxu0 0.0
        %8389 = vmatmul.mubr.f32.gmra.mrb[0].mxu0 %v7575
        %v8390 = vpop.f32.mrb[0].mxu0
        %v8391 = vadd.f32 %v8246, %v8390
        %v8392 = vpop.f32.mrb[0].mxu0
        %8393 = vmatprep.mubr.f32.mxu0 0.0
        %8394 = vmatmul.mubr.f32.gmra.mrb[0].mxu0 %v7578
        %v8395 = vpop.f32.mrb[0].mxu0
        %v8396 = vadd.f32 %v8251, %v8395
        %v8397 = vpop.f32.mrb[0].mxu0
        %8398 = vdwg.mxu0
        %v8399 = vld [vmem:[%s7] sm:$0x1]
        %v8400 = vld [vmem:[%s7 + $0x1] sm:$0x1]
        %v8401 = vmax.f32 %v8321, 0.0
        %v8402 = vmax.f32 %v8326, 0.0
        %v8403 = vmax.f32 %v8331, 0.0
        %v8404 = vmax.f32 %v8336, 0.0
        %v8405 = vmax.f32 %v8341, 0.0
        %v8406 = vmax.f32 %v8346, 0.0
        %v8407 = vmax.f32 %v8351, 0.0
        %v8408 = vmax.f32 %v8356, 0.0
        %v8409 = vmax.f32 %v8361, 0.0
        %v8410 = vmax.f32 %v8366, 0.0
        %v8411 = vmax.f32 %v8371, 0.0
        %v8412 = vmax.f32 %v8376, 0.0
        %v8413 = vmax.f32 %v8381, 0.0
        %v8414 = vmax.f32 %v8386, 0.0
        %v8415 = vmax.f32 %v8391, 0.0
        %v8416 = vmax.f32 %v8396, 0.0
        %vm8417 = vcmask 654336
        %v8418 = vsel %vm8417, %v8401, 0.0
        %8419 = vadd.xlane.f32.xlu0 %v8418
        %v8420 = vpop.xlane.xlu0 %8419
        %v8421 = vsel %vm8417, %v8402, 0.0
        %8422 = vadd.xlane.f32.xlu0 %v8421
        %v8423 = vpop.xlane.xlu0 %8422
        %v8424 = vsel %vm8417, %v8403, 0.0
        %8425 = vadd.xlane.f32.xlu0 %v8424
        %v8426 = vpop.xlane.xlu0 %8425
        %v8427 = vsel %vm8417, %v8404, 0.0
        %8428 = vadd.xlane.f32.xlu0 %v8427
        %v8429 = vpop.xlane.xlu0 %8428
        %v8430 = vsel %vm8417, %v8405, 0.0
        %8431 = vadd.xlane.f32.xlu0 %v8430
        %v8432 = vpop.xlane.xlu0 %8431
        %v8433 = vsel %vm8417, %v8406, 0.0
        %8434 = vadd.xlane.f32.xlu0 %v8433
        %v8435 = vpop.xlane.xlu0 %8434
        %v8436 = vsel %vm8417, %v8407, 0.0
        %8437 = vadd.xlane.f32.xlu0 %v8436
        %v8438 = vpop.xlane.xlu0 %8437
        %v8439 = vsel %vm8417, %v8408, 0.0
        %8440 = vadd.xlane.f32.xlu0 %v8439
        %v8441 = vpop.xlane.xlu0 %8440
        %v8442 = vsel %vm8417, %v8409, 0.0
        %8443 = vadd.xlane.f32.xlu0 %v8442
        %v8444 = vpop.xlane.xlu0 %8443
        %v8445 = vsel %vm8417, %v8410, 0.0
        %8446 = vadd.xlane.f32.xlu0 %v8445
        %v8447 = vpop.xlane.xlu0 %8446
        %v8448 = vsel %vm8417, %v8411, 0.0
        %8449 = vadd.xlane.f32.xlu0 %v8448
        %v8450 = vpop.xlane.xlu0 %8449
        %v8451 = vsel %vm8417, %v8412, 0.0
        %8452 = vadd.xlane.f32.xlu0 %v8451
        %v8453 = vpop.xlane.xlu0 %8452
        %v8454 = vsel %vm8417, %v8413, 0.0
        %8455 = vadd.xlane.f32.xlu0 %v8454
        %v8456 = vpop.xlane.xlu0 %8455
        %v8457 = vsel %vm8417, %v8414, 0.0
        %8458 = vadd.xlane.f32.xlu0 %v8457
        %v8459 = vpop.xlane.xlu0 %8458
        %v8460 = vsel %vm8417, %v8415, 0.0
        %8461 = vadd.xlane.f32.xlu0 %v8460
        %v8462 = vpop.xlane.xlu0 %8461
        %v8463 = vsel %vm8417, %v8416, 0.0
        %8464 = vadd.xlane.f32.xlu0 %v8463
        %v8465 = vpop.xlane.xlu0 %8464
        %v8466 = vrcp.pop 80.0
        %v8467 = vmul.f32 %v8420, %v8466
        %v8468 = vmul.f32 %v8423, %v8466
        %v8469 = vmul.f32 %v8426, %v8466
        %v8470 = vmul.f32 %v8429, %v8466
        %v8471 = vmul.f32 %v8432, %v8466
        %v8472 = vmul.f32 %v8435, %v8466
        %v8473 = vmul.f32 %v8438, %v8466
        %v8474 = vmul.f32 %v8441, %v8466
        %v8475 = vmul.f32 %v8444, %v8466
        %v8476 = vmul.f32 %v8447, %v8466
        %v8477 = vmul.f32 %v8450, %v8466
        %v8478 = vmul.f32 %v8453, %v8466
        %v8479 = vmul.f32 %v8456, %v8466
        %v8480 = vmul.f32 %v8459, %v8466
        %v8481 = vmul.f32 %v8462, %v8466
        %v8482 = vmul.f32 %v8465, %v8466
        %v8483 = vsub.f32 %v8401, %v8467
        %v8484 = vsub.f32 %v8402, %v8468
        %v8485 = vsub.f32 %v8403, %v8469
        %v8486 = vsub.f32 %v8404, %v8470
        %v8487 = vsub.f32 %v8405, %v8471
        %v8488 = vsub.f32 %v8406, %v8472
        %v8489 = vsub.f32 %v8407, %v8473
        %v8490 = vsub.f32 %v8408, %v8474
        %v8491 = vsub.f32 %v8409, %v8475
        %v8492 = vsub.f32 %v8410, %v8476
        %v8493 = vsub.f32 %v8411, %v8477
        %v8494 = vsub.f32 %v8412, %v8478
        %v8495 = vsub.f32 %v8413, %v8479
        %v8496 = vsub.f32 %v8414, %v8480
        %v8497 = vsub.f32 %v8415, %v8481
        %v8498 = vsub.f32 %v8416, %v8482
        %v8499 = vmul.f32 %v8483, %v8483
        %v8500 = vmul.f32 %v8484, %v8484
        %v8501 = vmul.f32 %v8485, %v8485
        %v8502 = vmul.f32 %v8486, %v8486
        %v8503 = vmul.f32 %v8487, %v8487
        %v8504 = vmul.f32 %v8488, %v8488
        %v8505 = vmul.f32 %v8489, %v8489
        %v8506 = vmul.f32 %v8490, %v8490
        %v8507 = vmul.f32 %v8491, %v8491
        %v8508 = vmul.f32 %v8492, %v8492
        %v8509 = vmul.f32 %v8493, %v8493
        %v8510 = vmul.f32 %v8494, %v8494
        %v8511 = vmul.f32 %v8495, %v8495
        %v8512 = vmul.f32 %v8496, %v8496
        %v8513 = vmul.f32 %v8497, %v8497
        %v8514 = vmul.f32 %v8498, %v8498
        %v8515 = vsel %vm8417, %v8499, 0.0
        %8516 = vadd.xlane.f32.xlu0 %v8515
        %v8517 = vpop.xlane.xlu0 %8516
        %v8518 = vsel %vm8417, %v8500, 0.0
        %8519 = vadd.xlane.f32.xlu0 %v8518
        %v8520 = vpop.xlane.xlu0 %8519
        %v8521 = vsel %vm8417, %v8501, 0.0
        %8522 = vadd.xlane.f32.xlu0 %v8521
        %v8523 = vpop.xlane.xlu0 %8522
        %v8524 = vsel %vm8417, %v8502, 0.0
        %8525 = vadd.xlane.f32.xlu0 %v8524
        %v8526 = vpop.xlane.xlu0 %8525
        %v8527 = vsel %vm8417, %v8503, 0.0
        %8528 = vadd.xlane.f32.xlu0 %v8527
        %v8529 = vpop.xlane.xlu0 %8528
        %v8530 = vsel %vm8417, %v8504, 0.0
        %8531 = vadd.xlane.f32.xlu0 %v8530
        %v8532 = vpop.xlane.xlu0 %8531
        %v8533 = vsel %vm8417, %v8505, 0.0
        %8534 = vadd.xlane.f32.xlu0 %v8533
        %v8535 = vpop.xlane.xlu0 %8534
        %v8536 = vsel %vm8417, %v8506, 0.0
        %8537 = vadd.xlane.f32.xlu0 %v8536
        %v8538 = vpop.xlane.xlu0 %8537
        %v8539 = vsel %vm8417, %v8507, 0.0
        %8540 = vadd.xlane.f32.xlu0 %v8539
        %v8541 = vpop.xlane.xlu0 %8540
        %v8542 = vsel %vm8417, %v8508, 0.0
        %8543 = vadd.xlane.f32.xlu0 %v8542
        %v8544 = vpop.xlane.xlu0 %8543
        %v8545 = vsel %vm8417, %v8509, 0.0
        %8546 = vadd.xlane.f32.xlu0 %v8545
        %v8547 = vpop.xlane.xlu0 %8546
        %v8548 = vsel %vm8417, %v8510, 0.0
        %8549 = vadd.xlane.f32.xlu0 %v8548
        %v8550 = vpop.xlane.xlu0 %8549
        %v8551 = vsel %vm8417, %v8511, 0.0
        %8552 = vadd.xlane.f32.xlu0 %v8551
        %v8553 = vpop.xlane.xlu0 %8552
        %v8554 = vsel %vm8417, %v8512, 0.0
        %8555 = vadd.xlane.f32.xlu0 %v8554
        %v8556 = vpop.xlane.xlu0 %8555
        %v8557 = vsel %vm8417, %v8513, 0.0
        %8558 = vadd.xlane.f32.xlu0 %v8557
        %v8559 = vpop.xlane.xlu0 %8558
        %v8560 = vsel %vm8417, %v8514, 0.0
        %8561 = vadd.xlane.f32.xlu0 %v8560
        %v8562 = vpop.xlane.xlu0 %8561
        %v8563 = vmul.f32 %v8517, %v8466
        %v8564 = vmul.f32 %v8520, %v8466
        %v8565 = vmul.f32 %v8523, %v8466
        %v8566 = vmul.f32 %v8526, %v8466
        %v8567 = vmul.f32 %v8529, %v8466
        %v8568 = vmul.f32 %v8532, %v8466
        %v8569 = vmul.f32 %v8535, %v8466
        %v8570 = vmul.f32 %v8538, %v8466
        %v8571 = vmul.f32 %v8541, %v8466
        %v8572 = vmul.f32 %v8544, %v8466
        %v8573 = vmul.f32 %v8547, %v8466
        %v8574 = vmul.f32 %v8550, %v8466
        %v8575 = vmul.f32 %v8553, %v8466
        %v8576 = vmul.f32 %v8556, %v8466
        %v8577 = vmul.f32 %v8559, %v8466
        %v8578 = vmul.f32 %v8562, %v8466
        %v8579 = vadd.f32 %v8563, 1e-05
        %v8580 = vadd.f32 %v8564, 1e-05
        %v8581 = vadd.f32 %v8565, 1e-05
        %v8582 = vadd.f32 %v8566, 1e-05
        %v8583 = vadd.f32 %v8567, 1e-05
        %v8584 = vadd.f32 %v8568, 1e-05
        %v8585 = vadd.f32 %v8569, 1e-05
        %v8586 = vadd.f32 %v8570, 1e-05
        %v8587 = vadd.f32 %v8571, 1e-05
        %v8588 = vadd.f32 %v8572, 1e-05
        %v8589 = vadd.f32 %v8573, 1e-05
        %v8590 = vadd.f32 %v8574, 1e-05
        %v8591 = vadd.f32 %v8575, 1e-05
        %v8592 = vadd.f32 %v8576, 1e-05
        %v8593 = vadd.f32 %v8577, 1e-05
        %v8594 = vadd.f32 %v8578, 1e-05
        %v8595 = vrsqrt.pop %v8579
        %v8596 = vrsqrt.pop %v8580
        %v8597 = vrsqrt.pop %v8581
        %v8598 = vrsqrt.pop %v8582
        %v8599 = vrsqrt.pop %v8583
        %v8600 = vrsqrt.pop %v8584
        %v8601 = vrsqrt.pop %v8585
        %v8602 = vrsqrt.pop %v8586
        %v8603 = vrsqrt.pop %v8587
        %v8604 = vrsqrt.pop %v8588
        %v8605 = vrsqrt.pop %v8589
        %v8606 = vrsqrt.pop %v8590
        %v8607 = vrsqrt.pop %v8591
        %v8608 = vrsqrt.pop %v8592
        %v8609 = vrsqrt.pop %v8593
        %v8610 = vrsqrt.pop %v8594
        %v8611 = vmul.f32 %v8483, %v8595
        %v8612 = vmul.f32 %v8484, %v8596
        %v8613 = vmul.f32 %v8485, %v8597
        %v8614 = vmul.f32 %v8486, %v8598
        %v8615 = vmul.f32 %v8487, %v8599
        %v8616 = vmul.f32 %v8488, %v8600
        %v8617 = vmul.f32 %v8489, %v8601
        %v8618 = vmul.f32 %v8490, %v8602
        %v8619 = vmul.f32 %v8491, %v8603
        %v8620 = vmul.f32 %v8492, %v8604
        %v8621 = vmul.f32 %v8493, %v8605
        %v8622 = vmul.f32 %v8494, %v8606
        %v8623 = vmul.f32 %v8495, %v8607
        %v8624 = vmul.f32 %v8496, %v8608
        %v8625 = vmul.f32 %v8497, %v8609
        %v8626 = vmul.f32 %v8498, %v8610
        %v8627 = vlaneseq
        %v8628 = vshrl.u32 %v8627, 7
        %v8629 = vsub.s32 0, %v8628
        %v8630 = vrot.slane %v8399, %v8629
        %v8631 = vmul.f32 %v8611, %v8630
        %v8632 = vmul.f32 %v8612, %v8630
        %v8633 = vmul.f32 %v8613, %v8630
        %v8634 = vmul.f32 %v8614, %v8630
        %v8635 = vmul.f32 %v8615, %v8630
        %v8636 = vmul.f32 %v8616, %v8630
        %v8637 = vmul.f32 %v8617, %v8630
        %v8638 = vmul.f32 %v8618, %v8630
        %v8639 = vmul.f32 %v8619, %v8630
        %v8640 = vmul.f32 %v8620, %v8630
        %v8641 = vmul.f32 %v8621, %v8630
        %v8642 = vmul.f32 %v8622, %v8630
        %v8643 = vmul.f32 %v8623, %v8630
        %v8644 = vmul.f32 %v8624, %v8630
        %v8645 = vmul.f32 %v8625, %v8630
        %v8646 = vmul.f32 %v8626, %v8630
        %v8647 = vlaneseq
        %v8648 = vshrl.u32 %v8647, 7
        %v8649 = vsub.s32 0, %v8648
        %v8650 = vrot.slane %v8400, %v8649
        %v8651 = vadd.f32 %v8631, %v8650
        %v8652 = vadd.f32 %v8632, %v8650
        %v8653 = vadd.f32 %v8633, %v8650
        %v8654 = vadd.f32 %v8634, %v8650
        %v8655 = vadd.f32 %v8635, %v8650
        %v8656 = vadd.f32 %v8636, %v8650
        %v8657 = vadd.f32 %v8637, %v8650
        %v8658 = vadd.f32 %v8638, %v8650
        %v8659 = vadd.f32 %v8639, %v8650
        %v8660 = vadd.f32 %v8640, %v8650
        %v8661 = vadd.f32 %v8641, %v8650
        %v8662 = vadd.f32 %v8642, %v8650
        %v8663 = vadd.f32 %v8643, %v8650
        %v8664 = vadd.f32 %v8644, %v8650
        %v8665 = vadd.f32 %v8645, %v8650
        %v8666 = vadd.f32 %v8646, %v8650
        %8683 = vrot.lane.b32.xlu0 %v8651, 3
        %v8684 = vpop.permute.xlu0 %8683
        %8685 = vrot.lane.b32.xlu0 %v8652, 3
        %v8686 = vpop.permute.xlu0 %8685
        %8687 = vrot.lane.b32.xlu0 %v8653, 3
        %v8688 = vpop.permute.xlu0 %8687
        %8689 = vrot.lane.b32.xlu0 %v8654, 3
        %v8690 = vpop.permute.xlu0 %8689
        %8691 = vrot.lane.b32.xlu0 %v8655, 3
        %v8692 = vpop.permute.xlu0 %8691
        %8693 = vrot.lane.b32.xlu0 %v8656, 3
        %v8694 = vpop.permute.xlu0 %8693
        %8695 = vrot.lane.b32.xlu0 %v8657, 3
        %v8696 = vpop.permute.xlu0 %8695
        %8697 = vrot.lane.b32.xlu0 %v8658, 3
        %v8698 = vpop.permute.xlu0 %8697
        %8699 = vrot.lane.b32.xlu0 %v8659, 3
        %v8700 = vpop.permute.xlu0 %8699
        %8701 = vrot.lane.b32.xlu0 %v8660, 3
        %v8702 = vpop.permute.xlu0 %8701
        %8703 = vrot.lane.b32.xlu0 %v8661, 3
        %v8704 = vpop.permute.xlu0 %8703
        %8705 = vrot.lane.b32.xlu0 %v8662, 3
        %v8706 = vpop.permute.xlu0 %8705
        %8707 = vrot.lane.b32.xlu0 %v8663, 3
        %v8708 = vpop.permute.xlu0 %8707
        %8709 = vrot.lane.b32.xlu0 %v8664, 3
        %v8710 = vpop.permute.xlu0 %8709
        %8711 = vrot.lane.b32.xlu0 %v8665, 3
        %v8712 = vpop.permute.xlu0 %8711
        %8713 = vrot.lane.b32.xlu0 %v8666, 3
        %v8714 = vpop.permute.xlu0 %8713
        %v8731 = vsel %vm5918, 0.0, %v8684
        %v8732 = vsel %vm5918, 0.0, %v8686
        %v8733 = vsel %vm5918, 0.0, %v8688
        %v8734 = vsel %vm5918, 0.0, %v8690
        %v8735 = vsel %vm5918, 0.0, %v8692
        %v8736 = vsel %vm5918, 0.0, %v8694
        %v8737 = vsel %vm5918, 0.0, %v8696
        %v8738 = vsel %vm5918, 0.0, %v8698
        %v8739 = vsel %vm5918, 0.0, %v8700
        %v8740 = vsel %vm5918, 0.0, %v8702
        %v8741 = vsel %vm5918, 0.0, %v8704
        %v8742 = vsel %vm5918, 0.0, %v8706
        %v8743 = vsel %vm5918, 0.0, %v8708
        %v8744 = vsel %vm5918, 0.0, %v8710
        %v8745 = vsel %vm5918, 0.0, %v8712
        %v8746 = vsel %vm5918, 0.0, %v8714
        %vm8747 = vcmask 678912
        %v8748 = vsel %vm8747, %v8731, 0.0
        %v8749 = vsel %vm8747, %v8732, 0.0
        %v8750 = vsel %vm8747, %v8733, 0.0
        %v8751 = vsel %vm8747, %v8734, 0.0
        %v8752 = vsel %vm8747, %v8735, 0.0
        %v8753 = vsel %vm8747, %v8736, 0.0
        %v8754 = vsel %vm8747, %v8737, 0.0
        %v8755 = vsel %vm8747, %v8738, 0.0
        %v8756 = vsel %vm8747, %v8739, 0.0
        %v8757 = vsel %vm8747, %v8740, 0.0
        %v8758 = vsel %vm8747, %v8741, 0.0
        %v8759 = vsel %vm8747, %v8742, 0.0
        %v8760 = vsel %vm8747, %v8743, 0.0
        %v8761 = vsel %vm8747, %v8744, 0.0
        %v8762 = vsel %vm8747, %v8745, 0.0
        %v8763 = vsel %vm8747, %v8746, 0.0
        %8780 = vrot.lane.b32.xlu0 %v8748, 127
        %v8781 = vpop.permute.xlu0 %8780
        %8782 = vrot.lane.b32.xlu0 %v8749, 127
        %v8783 = vpop.permute.xlu0 %8782
        %8784 = vrot.lane.b32.xlu0 %v8750, 127
        %v8785 = vpop.permute.xlu0 %8784
        %8786 = vrot.lane.b32.xlu0 %v8751, 127
        %v8787 = vpop.permute.xlu0 %8786
        %8788 = vrot.lane.b32.xlu0 %v8752, 127
        %v8789 = vpop.permute.xlu0 %8788
        %8790 = vrot.lane.b32.xlu0 %v8753, 127
        %v8791 = vpop.permute.xlu0 %8790
        %8792 = vrot.lane.b32.xlu0 %v8754, 127
        %v8793 = vpop.permute.xlu0 %8792
        %8794 = vrot.lane.b32.xlu0 %v8755, 127
        %v8795 = vpop.permute.xlu0 %8794
        %8796 = vrot.lane.b32.xlu0 %v8756, 127
        %v8797 = vpop.permute.xlu0 %8796
        %8798 = vrot.lane.b32.xlu0 %v8757, 127
        %v8799 = vpop.permute.xlu0 %8798
        %8800 = vrot.lane.b32.xlu0 %v8758, 127
        %v8801 = vpop.permute.xlu0 %8800
        %8802 = vrot.lane.b32.xlu0 %v8759, 127
        %v8803 = vpop.permute.xlu0 %8802
        %8804 = vrot.lane.b32.xlu0 %v8760, 127
        %v8805 = vpop.permute.xlu0 %8804
        %8806 = vrot.lane.b32.xlu0 %v8761, 127
        %v8807 = vpop.permute.xlu0 %8806
        %8808 = vrot.lane.b32.xlu0 %v8762, 127
        %v8809 = vpop.permute.xlu0 %8808
        %8810 = vrot.lane.b32.xlu0 %v8763, 127
        %v8811 = vpop.permute.xlu0 %8810
        %8812 = vrot.lane.b32.xlu0 %v8748, 126
        %v8813 = vpop.permute.xlu0 %8812
        %8814 = vrot.lane.b32.xlu0 %v8749, 126
        %v8815 = vpop.permute.xlu0 %8814
        %8816 = vrot.lane.b32.xlu0 %v8750, 126
        %v8817 = vpop.permute.xlu0 %8816
        %8818 = vrot.lane.b32.xlu0 %v8751, 126
        %v8819 = vpop.permute.xlu0 %8818
        %8820 = vrot.lane.b32.xlu0 %v8752, 126
        %v8821 = vpop.permute.xlu0 %8820
        %8822 = vrot.lane.b32.xlu0 %v8753, 126
        %v8823 = vpop.permute.xlu0 %8822
        %8824 = vrot.lane.b32.xlu0 %v8754, 126
        %v8825 = vpop.permute.xlu0 %8824
        %8826 = vrot.lane.b32.xlu0 %v8755, 126
        %v8827 = vpop.permute.xlu0 %8826
        %8828 = vrot.lane.b32.xlu0 %v8756, 126
        %v8829 = vpop.permute.xlu0 %8828
        %8830 = vrot.lane.b32.xlu0 %v8757, 126
        %v8831 = vpop.permute.xlu0 %8830
        %8832 = vrot.lane.b32.xlu0 %v8758, 126
        %v8833 = vpop.permute.xlu0 %8832
        %8834 = vrot.lane.b32.xlu0 %v8759, 126
        %v8835 = vpop.permute.xlu0 %8834
        %8836 = vrot.lane.b32.xlu0 %v8760, 126
        %v8837 = vpop.permute.xlu0 %8836
        %8838 = vrot.lane.b32.xlu0 %v8761, 126
        %v8839 = vpop.permute.xlu0 %8838
        %8840 = vrot.lane.b32.xlu0 %v8762, 126
        %v8841 = vpop.permute.xlu0 %8840
        %8842 = vrot.lane.b32.xlu0 %v8763, 126
        %v8843 = vpop.permute.xlu0 %8842
        %8844 = vrot.lane.b32.xlu0 %v8748, 125
        %v8845 = vpop.permute.xlu0 %8844
        %8846 = vrot.lane.b32.xlu0 %v8749, 125
        %v8847 = vpop.permute.xlu0 %8846
        %8848 = vrot.lane.b32.xlu0 %v8750, 125
        %v8849 = vpop.permute.xlu0 %8848
        %8850 = vrot.lane.b32.xlu0 %v8751, 125
        %v8851 = vpop.permute.xlu0 %8850
        %8852 = vrot.lane.b32.xlu0 %v8752, 125
        %v8853 = vpop.permute.xlu0 %8852
        %8854 = vrot.lane.b32.xlu0 %v8753, 125
        %v8855 = vpop.permute.xlu0 %8854
        %8856 = vrot.lane.b32.xlu0 %v8754, 125
        %v8857 = vpop.permute.xlu0 %8856
        %8858 = vrot.lane.b32.xlu0 %v8755, 125
        %v8859 = vpop.permute.xlu0 %8858
        %8860 = vrot.lane.b32.xlu0 %v8756, 125
        %v8861 = vpop.permute.xlu0 %8860
        %8862 = vrot.lane.b32.xlu0 %v8757, 125
        %v8863 = vpop.permute.xlu0 %8862
        %8864 = vrot.lane.b32.xlu0 %v8758, 125
        %v8865 = vpop.permute.xlu0 %8864
        %8866 = vrot.lane.b32.xlu0 %v8759, 125
        %v8867 = vpop.permute.xlu0 %8866
        %8868 = vrot.lane.b32.xlu0 %v8760, 125
        %v8869 = vpop.permute.xlu0 %8868
        %8870 = vrot.lane.b32.xlu0 %v8761, 125
        %v8871 = vpop.permute.xlu0 %8870
        %8872 = vrot.lane.b32.xlu0 %v8762, 125
        %v8873 = vpop.permute.xlu0 %8872
        %8874 = vrot.lane.b32.xlu0 %v8763, 125
        %v8875 = vpop.permute.xlu0 %8874
        %8876 = vrot.lane.b32.xlu0 %v8748, 124
        %v8877 = vpop.permute.xlu0 %8876
        %8878 = vrot.lane.b32.xlu0 %v8749, 124
        %v8879 = vpop.permute.xlu0 %8878
        %8880 = vrot.lane.b32.xlu0 %v8750, 124
        %v8881 = vpop.permute.xlu0 %8880
        %8882 = vrot.lane.b32.xlu0 %v8751, 124
        %v8883 = vpop.permute.xlu0 %8882
        %8884 = vrot.lane.b32.xlu0 %v8752, 124
        %v8885 = vpop.permute.xlu0 %8884
        %8886 = vrot.lane.b32.xlu0 %v8753, 124
        %v8887 = vpop.permute.xlu0 %8886
        %8888 = vrot.lane.b32.xlu0 %v8754, 124
        %v8889 = vpop.permute.xlu0 %8888
        %8890 = vrot.lane.b32.xlu0 %v8755, 124
        %v8891 = vpop.permute.xlu0 %8890
        %8892 = vrot.lane.b32.xlu0 %v8756, 124
        %v8893 = vpop.permute.xlu0 %8892
        %8894 = vrot.lane.b32.xlu0 %v8757, 124
        %v8895 = vpop.permute.xlu0 %8894
        %8896 = vrot.lane.b32.xlu0 %v8758, 124
        %v8897 = vpop.permute.xlu0 %8896
        %8898 = vrot.lane.b32.xlu0 %v8759, 124
        %v8899 = vpop.permute.xlu0 %8898
        %8900 = vrot.lane.b32.xlu0 %v8760, 124
        %v8901 = vpop.permute.xlu0 %8900
        %8902 = vrot.lane.b32.xlu0 %v8761, 124
        %v8903 = vpop.permute.xlu0 %8902
        %8904 = vrot.lane.b32.xlu0 %v8762, 124
        %v8905 = vpop.permute.xlu0 %8904
        %8906 = vrot.lane.b32.xlu0 %v8763, 124
        %v8907 = vpop.permute.xlu0 %8906
        %8908 = vrot.lane.b32.xlu0 %v8748, 123
        %v8909 = vpop.permute.xlu0 %8908
        %8910 = vrot.lane.b32.xlu0 %v8749, 123
        %v8911 = vpop.permute.xlu0 %8910
        %8912 = vrot.lane.b32.xlu0 %v8750, 123
        %v8913 = vpop.permute.xlu0 %8912
        %8914 = vrot.lane.b32.xlu0 %v8751, 123
        %v8915 = vpop.permute.xlu0 %8914
        %8916 = vrot.lane.b32.xlu0 %v8752, 123
        %v8917 = vpop.permute.xlu0 %8916
        %8918 = vrot.lane.b32.xlu0 %v8753, 123
        %v8919 = vpop.permute.xlu0 %8918
        %8920 = vrot.lane.b32.xlu0 %v8754, 123
        %v8921 = vpop.permute.xlu0 %8920
        %8922 = vrot.lane.b32.xlu0 %v8755, 123
        %v8923 = vpop.permute.xlu0 %8922
        %8924 = vrot.lane.b32.xlu0 %v8756, 123
        %v8925 = vpop.permute.xlu0 %8924
        %8926 = vrot.lane.b32.xlu0 %v8757, 123
        %v8927 = vpop.permute.xlu0 %8926
        %8928 = vrot.lane.b32.xlu0 %v8758, 123
        %v8929 = vpop.permute.xlu0 %8928
        %8930 = vrot.lane.b32.xlu0 %v8759, 123
        %v8931 = vpop.permute.xlu0 %8930
        %8932 = vrot.lane.b32.xlu0 %v8760, 123
        %v8933 = vpop.permute.xlu0 %8932
        %8934 = vrot.lane.b32.xlu0 %v8761, 123
        %v8935 = vpop.permute.xlu0 %8934
        %8936 = vrot.lane.b32.xlu0 %v8762, 123
        %v8937 = vpop.permute.xlu0 %8936
        %8938 = vrot.lane.b32.xlu0 %v8763, 123
        %v8939 = vpop.permute.xlu0 %8938
        %vm8940 = vcmask 646144
        %v8941 = vsel %vm8940, %v8748, 0
        %v8943 = vsel %vm8940, %v8749, 0
        %v8945 = vsel %vm8940, %v8750, 0
        %v8947 = vsel %vm8940, %v8751, 0
        %v8949 = vsel %vm8940, %v8752, 0
        %v8951 = vsel %vm8940, %v8753, 0
        %v8953 = vsel %vm8940, %v8754, 0
        %v8955 = vsel %vm8940, %v8755, 0
        %v8957 = vsel %vm8940, %v8756, 0
        %v8959 = vsel %vm8940, %v8757, 0
        %v8961 = vsel %vm8940, %v8758, 0
        %v8963 = vsel %vm8940, %v8759, 0
        %v8965 = vsel %vm8940, %v8760, 0
        %v8967 = vsel %vm8940, %v8761, 0
        %v8969 = vsel %vm8940, %v8762, 0
        %v8971 = vsel %vm8940, %v8763, 0
        %v8973 = vsel %vm8940, %v8781, 0
        %v8975 = vsel %vm8940, %v8783, 0
        %v8977 = vsel %vm8940, %v8785, 0
        %v8979 = vsel %vm8940, %v8787, 0
        %v8981 = vsel %vm8940, %v8789, 0
        %v8983 = vsel %vm8940, %v8791, 0
        %v8985 = vsel %vm8940, %v8793, 0
        %v8987 = vsel %vm8940, %v8795, 0
        %v8989 = vsel %vm8940, %v8797, 0
        %v8991 = vsel %vm8940, %v8799, 0
        %v8993 = vsel %vm8940, %v8801, 0
        %v8995 = vsel %vm8940, %v8803, 0
        %v8997 = vsel %vm8940, %v8805, 0
        %v8999 = vsel %vm8940, %v8807, 0
        %v9001 = vsel %vm8940, %v8809, 0
        %v9003 = vsel %vm8940, %v8811, 0
        %v9005 = vsel %vm8940, %v8813, 0
        %v9007 = vsel %vm8940, %v8815, 0
        %v9009 = vsel %vm8940, %v8817, 0
        %v9011 = vsel %vm8940, %v8819, 0
        %v9013 = vsel %vm8940, %v8821, 0
        %v9015 = vsel %vm8940, %v8823, 0
        %v9017 = vsel %vm8940, %v8825, 0
        %v9019 = vsel %vm8940, %v8827, 0
        %v9021 = vsel %vm8940, %v8829, 0
        %v9023 = vsel %vm8940, %v8831, 0
        %v9025 = vsel %vm8940, %v8833, 0
        %v9027 = vsel %vm8940, %v8835, 0
        %v9029 = vsel %vm8940, %v8837, 0
        %v9031 = vsel %vm8940, %v8839, 0
        %v9033 = vsel %vm8940, %v8841, 0
        %v9035 = vsel %vm8940, %v8843, 0
        %v9037 = vsel %vm8940, %v8845, 0
        %v9039 = vsel %vm8940, %v8847, 0
        %v9041 = vsel %vm8940, %v8849, 0
        %v9043 = vsel %vm8940, %v8851, 0
        %v9045 = vsel %vm8940, %v8853, 0
        %v9047 = vsel %vm8940, %v8855, 0
        %v9049 = vsel %vm8940, %v8857, 0
        %v9051 = vsel %vm8940, %v8859, 0
        %v9053 = vsel %vm8940, %v8861, 0
        %v9055 = vsel %vm8940, %v8863, 0
        %v9057 = vsel %vm8940, %v8865, 0
        %v9059 = vsel %vm8940, %v8867, 0
        %v9061 = vsel %vm8940, %v8869, 0
        %v9063 = vsel %vm8940, %v8871, 0
        %v9065 = vsel %vm8940, %v8873, 0
        %v9067 = vsel %vm8940, %v8875, 0
        %v9069 = vsel %vm8940, %v8877, 0
        %v9071 = vsel %vm8940, %v8879, 0
        %v9073 = vsel %vm8940, %v8881, 0
        %v9075 = vsel %vm8940, %v8883, 0
        %v9077 = vsel %vm8940, %v8885, 0
        %v9079 = vsel %vm8940, %v8887, 0
        %v9081 = vsel %vm8940, %v8889, 0
        %v9083 = vsel %vm8940, %v8891, 0
        %v9085 = vsel %vm8940, %v8893, 0
        %v9087 = vsel %vm8940, %v8895, 0
        %v9089 = vsel %vm8940, %v8897, 0
        %v9091 = vsel %vm8940, %v8899, 0
        %v9093 = vsel %vm8940, %v8901, 0
        %v9095 = vsel %vm8940, %v8903, 0
        %v9097 = vsel %vm8940, %v8905, 0
        %v9099 = vsel %vm8940, %v8907, 0
        %v9101 = vsel %vm8940, %v8909, 0
        %v9103 = vsel %vm8940, %v8911, 0
        %v9105 = vsel %vm8940, %v8913, 0
        %v9107 = vsel %vm8940, %v8915, 0
        %v9109 = vsel %vm8940, %v8917, 0
        %v9111 = vsel %vm8940, %v8919, 0
        %v9113 = vsel %vm8940, %v8921, 0
        %v9115 = vsel %vm8940, %v8923, 0
        %v9117 = vsel %vm8940, %v8925, 0
        %v9119 = vsel %vm8940, %v8927, 0
        %v9121 = vsel %vm8940, %v8929, 0
        %v9123 = vsel %vm8940, %v8931, 0
        %v9125 = vsel %vm8940, %v8933, 0
        %v9127 = vsel %vm8940, %v8935, 0
        %v9129 = vsel %vm8940, %v8937, 0
        %v9131 = vsel %vm8940, %v8939, 0
        %vm9133 = vcmask 1046528
        %v9135 = vsel %vm9133, %v6768, 0
        %9137 = vmatprep.subr.mxu0 0.0
        %9138 = vmatpush1.msra.mxu0 %v6759
        %9139 = vmatprep.subr.mxu0 0.0
        %9140 = vmatpush1.msra.mxu0 %v6760
        %9141 = vmatprep.subr.mxu0 0.0
        %9142 = vmatpush1.msra.mxu0 %v6761
        %9143 = vmatprep.subr.mxu0 0.0
        %9144 = vmatpush1.msra.mxu0 %v6762
        %9145 = vmatprep.subr.mxu0 0.0
        %9146 = vmatpush1.msra.mxu0 %v6763
        %9147 = vmatprep.subr.mxu0 0.0
        %9148 = vmatpush1.msra.mxu0 %v6764
        %9149 = vmatprep.subr.mxu0 0.0
        %9150 = vmatpush1.msra.mxu0 %v6765
        %9151 = vmatprep.subr.mxu0 0.0
        %9152 = vmatpush1.msra.mxu0 %v6766
        %9153 = vmatprep.subr.mxu0 0.0
        %9154 = vmatpush1.msra.mxu0 %v6767
        %9155 = vmatprep.subr.mxu0 0.0
        %9156 = vmatpush1.msra.mxu0 %v9135
        %9157 = vmatprep.subr.mxu0 0.0
        %9158 = vmatpush1.msra.mxu0 0.0
        %9159 = vmatprep.subr.mxu0 0.0
        %9160 = vmatpush1.msra.mxu0 0.0
        %9161 = vmatprep.subr.mxu0 0.0
        %9162 = vmatpush1.msra.mxu0 0.0
        %9163 = vmatprep.subr.mxu0 0.0
        %9164 = vmatpush1.msra.mxu0 0.0
        %9165 = vmatprep.subr.mxu0 0.0
        %9166 = vmatpush1.msra.mxu0 0.0
        %9167 = vmatprep.subr.mxu0 0.0
        %9168 = vmatpush1.msra.mxu0 0.0
        %9169 = vmatprep.subr.mxu0 0.0
        %9170 = vmatpush1.msra.mxu0 0.0
        %9171 = vmatprep.subr.mxu0 0.0
        %9172 = vmatpush1.msra.mxu0 0.0
        %9173 = vmatprep.subr.mxu0 0.0
        %9174 = vmatpush1.msra.mxu0 0.0
        %9175 = vmatprep.subr.mxu0 0.0
        %9176 = vmatpush1.msra.mxu0 0.0
        %9177 = vmatprep.subr.mxu0 0.0
        %9178 = vmatpush1.msra.mxu0 0.0
        %9179 = vmatprep.subr.mxu0 0.0
        %9180 = vmatpush1.msra.mxu0 0.0
        %9181 = vmatprep.subr.mxu0 0.0
        %9182 = vmatpush1.msra.mxu0 0.0
        %9183 = vmatprep.subr.mxu0 0.0
        %9184 = vmatpush1.msra.mxu0 0.0
        %9185 = vmatprep.subr.mxu0 0.0
        %9186 = vmatpush1.msra.mxu0 0.0
        %9187 = vmatprep.subr.mxu0 0.0
        %9188 = vmatpush1.msra.mxu0 0.0
        %9189 = vmatprep.subr.mxu0 0.0
        %9190 = vmatpush1.msra.mxu0 0.0
        %9191 = vmatprep.subr.mxu0 0.0
        %9192 = vmatpush1.msra.mxu0 0.0
        %9193 = vmatprep.subr.mxu0 0.0
        %9194 = vmatpush1.msra.mxu0 0.0
        %9195 = vmatprep.subr.mxu0 0.0
        %9196 = vmatpush1.msra.mxu0 0.0
        %9197 = vmatprep.subr.mxu0 0.0
        %9198 = vmatpush1.msra.mxu0 0.0
        %9199 = vmatprep.subr.mxu0 0.0
        %9200 = vmatpush1.msra.mxu0 0.0
        %9201 = vmatprep.mubr.f32.mxu0 0.0
        %9202 = vmatmul.mubr.f32.gmra.mrb[0].mxu0 %v8941
        %v9203 = vpop.f32.mrb[0].mxu0
        %v9204 = vadd.f32 0.0, %v9203
        %v9205 = vpop.f32.mrb[0].mxu0
        %9206 = vmatprep.mubr.f32.mxu0 0.0
        %9207 = vmatmul.mubr.f32.gmra.mrb[0].mxu0 %v8943
        %v9208 = vpop.f32.mrb[0].mxu0
        %v9209 = vadd.f32 0.0, %v9208
        %v9210 = vpop.f32.mrb[0].mxu0
        %9211 = vmatprep.mubr.f32.mxu0 0.0
        %9212 = vmatmul.mubr.f32.gmra.mrb[0].mxu0 %v8945
        %v9213 = vpop.f32.mrb[0].mxu0
        %v9214 = vadd.f32 0.0, %v9213
        %v9215 = vpop.f32.mrb[0].mxu0
        %9216 = vmatprep.mubr.f32.mxu0 0.0
        %9217 = vmatmul.mubr.f32.gmra.mrb[0].mxu0 %v8947
        %v9218 = vpop.f32.mrb[0].mxu0
        %v9219 = vadd.f32 0.0, %v9218
        %v9220 = vpop.f32.mrb[0].mxu0
        %9221 = vmatprep.mubr.f32.mxu0 0.0
        %9222 = vmatmul.mubr.f32.gmra.mrb[0].mxu0 %v8949
        %v9223 = vpop.f32.mrb[0].mxu0
        %v9224 = vadd.f32 0.0, %v9223
        %v9225 = vpop.f32.mrb[0].mxu0
        %9226 = vmatprep.mubr.f32.mxu0 0.0
        %9227 = vmatmul.mubr.f32.gmra.mrb[0].mxu0 %v8951
        %v9228 = vpop.f32.mrb[0].mxu0
        %v9229 = vadd.f32 0.0, %v9228
        %v9230 = vpop.f32.mrb[0].mxu0
        %9231 = vmatprep.mubr.f32.mxu0 0.0
        %9232 = vmatmul.mubr.f32.gmra.mrb[0].mxu0 %v8953
        %v9233 = vpop.f32.mrb[0].mxu0
        %v9234 = vadd.f32 0.0, %v9233
        %v9235 = vpop.f32.mrb[0].mxu0
        %9236 = vmatprep.mubr.f32.mxu0 0.0
        %9237 = vmatmul.mubr.f32.gmra.mrb[0].mxu0 %v8955
        %v9238 = vpop.f32.mrb[0].mxu0
        %v9239 = vadd.f32 0.0, %v9238
        %v9240 = vpop.f32.mrb[0].mxu0
        %9241 = vmatprep.mubr.f32.mxu0 0.0
        %9242 = vmatmul.mubr.f32.gmra.mrb[0].mxu0 %v8957
        %v9243 = vpop.f32.mrb[0].mxu0
        %v9244 = vadd.f32 0.0, %v9243
        %v9245 = vpop.f32.mrb[0].mxu0
        %9246 = vmatprep.mubr.f32.mxu0 0.0
        %9247 = vmatmul.mubr.f32.gmra.mrb[0].mxu0 %v8959
        %v9248 = vpop.f32.mrb[0].mxu0
        %v9249 = vadd.f32 0.0, %v9248
        %v9250 = vpop.f32.mrb[0].mxu0
        %9251 = vmatprep.mubr.f32.mxu0 0.0
        %9252 = vmatmul.mubr.f32.gmra.mrb[0].mxu0 %v8961
        %v9253 = vpop.f32.mrb[0].mxu0
        %v9254 = vadd.f32 0.0, %v9253
        %v9255 = vpop.f32.mrb[0].mxu0
        %9256 = vmatprep.mubr.f32.mxu0 0.0
        %9257 = vmatmul.mubr.f32.gmra.mrb[0].mxu0 %v8963
        %v9258 = vpop.f32.mrb[0].mxu0
        %v9259 = vadd.f32 0.0, %v9258
        %v9260 = vpop.f32.mrb[0].mxu0
        %9261 = vmatprep.mubr.f32.mxu0 0.0
        %9262 = vmatmul.mubr.f32.gmra.mrb[0].mxu0 %v8965
        %v9263 = vpop.f32.mrb[0].mxu0
        %v9264 = vadd.f32 0.0, %v9263
        %v9265 = vpop.f32.mrb[0].mxu0
        %9266 = vmatprep.mubr.f32.mxu0 0.0
        %9267 = vmatmul.mubr.f32.gmra.mrb[0].mxu0 %v8967
        %v9268 = vpop.f32.mrb[0].mxu0
        %v9269 = vadd.f32 0.0, %v9268
        %v9270 = vpop.f32.mrb[0].mxu0
        %9271 = vmatprep.mubr.f32.mxu0 0.0
        %9272 = vmatmul.mubr.f32.gmra.mrb[0].mxu0 %v8969
        %v9273 = vpop.f32.mrb[0].mxu0
        %v9274 = vadd.f32 0.0, %v9273
        %v9275 = vpop.f32.mrb[0].mxu0
        %9276 = vmatprep.mubr.f32.mxu0 0.0
        %9277 = vmatmul.mubr.f32.gmra.mrb[0].mxu0 %v8971
        %v9278 = vpop.f32.mrb[0].mxu0
        %v9279 = vadd.f32 0.0, %v9278
        %v9280 = vpop.f32.mrb[0].mxu0
        %9281 = vmatprep.mubr.f32.mxu0 0.0
        %9282 = vmatmul.mubr.f32.gmra.mrb[0].mxu0 %v8973
        %v9283 = vpop.f32.mrb[0].mxu0
        %v9284 = vadd.f32 0.0, %v9283
        %v9285 = vpop.f32.mrb[0].mxu0
        %9286 = vmatprep.mubr.f32.mxu0 0.0
        %9287 = vmatmul.mubr.f32.gmra.mrb[0].mxu0 %v8975
        %v9288 = vpop.f32.mrb[0].mxu0
        %v9289 = vadd.f32 0.0, %v9288
        %v9290 = vpop.f32.mrb[0].mxu0
        %9291 = vmatprep.mubr.f32.mxu0 0.0
        %9292 = vmatmul.mubr.f32.gmra.mrb[0].mxu0 %v8977
        %v9293 = vpop.f32.mrb[0].mxu0
        %v9294 = vadd.f32 0.0, %v9293
        %v9295 = vpop.f32.mrb[0].mxu0
        %9296 = vmatprep.mubr.f32.mxu0 0.0
        %9297 = vmatmul.mubr.f32.gmra.mrb[0].mxu0 %v8979
        %v9298 = vpop.f32.mrb[0].mxu0
        %v9299 = vadd.f32 0.0, %v9298
        %v9300 = vpop.f32.mrb[0].mxu0
        %9301 = vmatprep.mubr.f32.mxu0 0.0
        %9302 = vmatmul.mubr.f32.gmra.mrb[0].mxu0 %v8981
        %v9303 = vpop.f32.mrb[0].mxu0
        %v9304 = vadd.f32 0.0, %v9303
        %v9305 = vpop.f32.mrb[0].mxu0
        %9306 = vmatprep.mubr.f32.mxu0 0.0
        %9307 = vmatmul.mubr.f32.gmra.mrb[0].mxu0 %v8983
        %v9308 = vpop.f32.mrb[0].mxu0
        %v9309 = vadd.f32 0.0, %v9308
        %v9310 = vpop.f32.mrb[0].mxu0
        %9311 = vmatprep.mubr.f32.mxu0 0.0
        %9312 = vmatmul.mubr.f32.gmra.mrb[0].mxu0 %v8985
        %v9313 = vpop.f32.mrb[0].mxu0
        %v9314 = vadd.f32 0.0, %v9313
        %v9315 = vpop.f32.mrb[0].mxu0
        %9316 = vmatprep.mubr.f32.mxu0 0.0
        %9317 = vmatmul.mubr.f32.gmra.mrb[0].mxu0 %v8987
        %v9318 = vpop.f32.mrb[0].mxu0
        %v9319 = vadd.f32 0.0, %v9318
        %v9320 = vpop.f32.mrb[0].mxu0
        %9321 = vmatprep.mubr.f32.mxu0 0.0
        %9322 = vmatmul.mubr.f32.gmra.mrb[0].mxu0 %v8989
        %v9323 = vpop.f32.mrb[0].mxu0
        %v9324 = vadd.f32 0.0, %v9323
        %v9325 = vpop.f32.mrb[0].mxu0
        %9326 = vmatprep.mubr.f32.mxu0 0.0
        %9327 = vmatmul.mubr.f32.gmra.mrb[0].mxu0 %v8991
        %v9328 = vpop.f32.mrb[0].mxu0
        %v9329 = vadd.f32 0.0, %v9328
        %v9330 = vpop.f32.mrb[0].mxu0
        %9331 = vmatprep.mubr.f32.mxu0 0.0
        %9332 = vmatmul.mubr.f32.gmra.mrb[0].mxu0 %v8993
        %v9333 = vpop.f32.mrb[0].mxu0
        %v9334 = vadd.f32 0.0, %v9333
        %v9335 = vpop.f32.mrb[0].mxu0
        %9336 = vmatprep.mubr.f32.mxu0 0.0
        %9337 = vmatmul.mubr.f32.gmra.mrb[0].mxu0 %v8995
        %v9338 = vpop.f32.mrb[0].mxu0
        %v9339 = vadd.f32 0.0, %v9338
        %v9340 = vpop.f32.mrb[0].mxu0
        %9341 = vmatprep.mubr.f32.mxu0 0.0
        %9342 = vmatmul.mubr.f32.gmra.mrb[0].mxu0 %v8997
        %v9343 = vpop.f32.mrb[0].mxu0
        %v9344 = vadd.f32 0.0, %v9343
        %v9345 = vpop.f32.mrb[0].mxu0
        %9346 = vmatprep.mubr.f32.mxu0 0.0
        %9347 = vmatmul.mubr.f32.gmra.mrb[0].mxu0 %v8999
        %v9348 = vpop.f32.mrb[0].mxu0
        %v9349 = vadd.f32 0.0, %v9348
        %v9350 = vpop.f32.mrb[0].mxu0
        %9351 = vmatprep.mubr.f32.mxu0 0.0
        %9352 = vmatmul.mubr.f32.gmra.mrb[0].mxu0 %v9001
        %v9353 = vpop.f32.mrb[0].mxu0
        %v9354 = vadd.f32 0.0, %v9353
        %v9355 = vpop.f32.mrb[0].mxu0
        %9356 = vmatprep.mubr.f32.mxu0 0.0
        %9357 = vmatmul.mubr.f32.gmra.mrb[0].mxu0 %v9003
        %v9358 = vpop.f32.mrb[0].mxu0
        %v9359 = vadd.f32 0.0, %v9358
        %v9360 = vpop.f32.mrb[0].mxu0
        %9361 = vmatprep.mubr.f32.mxu0 0.0
        %9362 = vmatmul.mubr.f32.gmra.mrb[0].mxu0 %v9005
        %v9363 = vpop.f32.mrb[0].mxu0
        %v9364 = vadd.f32 0.0, %v9363
        %v9365 = vpop.f32.mrb[0].mxu0
        %9366 = vmatprep.mubr.f32.mxu0 0.0
        %9367 = vmatmul.mubr.f32.gmra.mrb[0].mxu0 %v9007
        %v9368 = vpop.f32.mrb[0].mxu0
        %v9369 = vadd.f32 0.0, %v9368
        %v9370 = vpop.f32.mrb[0].mxu0
        %9371 = vmatprep.mubr.f32.mxu0 0.0
        %9372 = vmatmul.mubr.f32.gmra.mrb[0].mxu0 %v9009
        %v9373 = vpop.f32.mrb[0].mxu0
        %v9374 = vadd.f32 0.0, %v9373
        %v9375 = vpop.f32.mrb[0].mxu0
        %9376 = vmatprep.mubr.f32.mxu0 0.0
        %9377 = vmatmul.mubr.f32.gmra.mrb[0].mxu0 %v9011
        %v9378 = vpop.f32.mrb[0].mxu0
        %v9379 = vadd.f32 0.0, %v9378
        %v9380 = vpop.f32.mrb[0].mxu0
        %9381 = vmatprep.mubr.f32.mxu0 0.0
        %9382 = vmatmul.mubr.f32.gmra.mrb[0].mxu0 %v9013
        %v9383 = vpop.f32.mrb[0].mxu0
        %v9384 = vadd.f32 0.0, %v9383
        %v9385 = vpop.f32.mrb[0].mxu0
        %9386 = vmatprep.mubr.f32.mxu0 0.0
        %9387 = vmatmul.mubr.f32.gmra.mrb[0].mxu0 %v9015
        %v9388 = vpop.f32.mrb[0].mxu0
        %v9389 = vadd.f32 0.0, %v9388
        %v9390 = vpop.f32.mrb[0].mxu0
        %9391 = vmatprep.mubr.f32.mxu0 0.0
        %9392 = vmatmul.mubr.f32.gmra.mrb[0].mxu0 %v9017
        %v9393 = vpop.f32.mrb[0].mxu0
        %v9394 = vadd.f32 0.0, %v9393
        %v9395 = vpop.f32.mrb[0].mxu0
        %9396 = vmatprep.mubr.f32.mxu0 0.0
        %9397 = vmatmul.mubr.f32.gmra.mrb[0].mxu0 %v9019
        %v9398 = vpop.f32.mrb[0].mxu0
        %v9399 = vadd.f32 0.0, %v9398
        %v9400 = vpop.f32.mrb[0].mxu0
        %9401 = vmatprep.mubr.f32.mxu0 0.0
        %9402 = vmatmul.mubr.f32.gmra.mrb[0].mxu0 %v9021
        %v9403 = vpop.f32.mrb[0].mxu0
        %v9404 = vadd.f32 0.0, %v9403
        %v9405 = vpop.f32.mrb[0].mxu0
        %9406 = vmatprep.mubr.f32.mxu0 0.0
        %9407 = vmatmul.mubr.f32.gmra.mrb[0].mxu0 %v9023
        %v9408 = vpop.f32.mrb[0].mxu0
        %v9409 = vadd.f32 0.0, %v9408
        %v9410 = vpop.f32.mrb[0].mxu0
        %9411 = vmatprep.mubr.f32.mxu0 0.0
        %9412 = vmatmul.mubr.f32.gmra.mrb[0].mxu0 %v9025
        %v9413 = vpop.f32.mrb[0].mxu0
        %v9414 = vadd.f32 0.0, %v9413
        %v9415 = vpop.f32.mrb[0].mxu0
        %9416 = vmatprep.mubr.f32.mxu0 0.0
        %9417 = vmatmul.mubr.f32.gmra.mrb[0].mxu0 %v9027
        %v9418 = vpop.f32.mrb[0].mxu0
        %v9419 = vadd.f32 0.0, %v9418
        %v9420 = vpop.f32.mrb[0].mxu0
        %9421 = vmatprep.mubr.f32.mxu0 0.0
        %9422 = vmatmul.mubr.f32.gmra.mrb[0].mxu0 %v9029
        %v9423 = vpop.f32.mrb[0].mxu0
        %v9424 = vadd.f32 0.0, %v9423
        %v9425 = vpop.f32.mrb[0].mxu0
        %9426 = vmatprep.mubr.f32.mxu0 0.0
        %9427 = vmatmul.mubr.f32.gmra.mrb[0].mxu0 %v9031
        %v9428 = vpop.f32.mrb[0].mxu0
        %v9429 = vadd.f32 0.0, %v9428
        %v9430 = vpop.f32.mrb[0].mxu0
        %9431 = vmatprep.mubr.f32.mxu0 0.0
        %9432 = vmatmul.mubr.f32.gmra.mrb[0].mxu0 %v9033
        %v9433 = vpop.f32.mrb[0].mxu0
        %v9434 = vadd.f32 0.0, %v9433
        %v9435 = vpop.f32.mrb[0].mxu0
        %9436 = vmatprep.mubr.f32.mxu0 0.0
        %9437 = vmatmul.mubr.f32.gmra.mrb[0].mxu0 %v9035
        %v9438 = vpop.f32.mrb[0].mxu0
        %v9439 = vadd.f32 0.0, %v9438
        %v9440 = vpop.f32.mrb[0].mxu0
        %9441 = vmatprep.mubr.f32.mxu0 0.0
        %9442 = vmatmul.mubr.f32.gmra.mrb[0].mxu0 %v9037
        %v9443 = vpop.f32.mrb[0].mxu0
        %v9444 = vadd.f32 0.0, %v9443
        %v9445 = vpop.f32.mrb[0].mxu0
        %9446 = vmatprep.mubr.f32.mxu0 0.0
        %9447 = vmatmul.mubr.f32.gmra.mrb[0].mxu0 %v9039
        %v9448 = vpop.f32.mrb[0].mxu0
        %v9449 = vadd.f32 0.0, %v9448
        %v9450 = vpop.f32.mrb[0].mxu0
        %9451 = vmatprep.mubr.f32.mxu0 0.0
        %9452 = vmatmul.mubr.f32.gmra.mrb[0].mxu0 %v9041
        %v9453 = vpop.f32.mrb[0].mxu0
        %v9454 = vadd.f32 0.0, %v9453
        %v9455 = vpop.f32.mrb[0].mxu0
        %9456 = vmatprep.mubr.f32.mxu0 0.0
        %9457 = vmatmul.mubr.f32.gmra.mrb[0].mxu0 %v9043
        %v9458 = vpop.f32.mrb[0].mxu0
        %v9459 = vadd.f32 0.0, %v9458
        %v9460 = vpop.f32.mrb[0].mxu0
        %9461 = vmatprep.mubr.f32.mxu0 0.0
        %9462 = vmatmul.mubr.f32.gmra.mrb[0].mxu0 %v9045
        %v9463 = vpop.f32.mrb[0].mxu0
        %v9464 = vadd.f32 0.0, %v9463
        %v9465 = vpop.f32.mrb[0].mxu0
        %9466 = vmatprep.mubr.f32.mxu0 0.0
        %9467 = vmatmul.mubr.f32.gmra.mrb[0].mxu0 %v9047
        %v9468 = vpop.f32.mrb[0].mxu0
        %v9469 = vadd.f32 0.0, %v9468
        %v9470 = vpop.f32.mrb[0].mxu0
        %9471 = vmatprep.mubr.f32.mxu0 0.0
        %9472 = vmatmul.mubr.f32.gmra.mrb[0].mxu0 %v9049
        %v9473 = vpop.f32.mrb[0].mxu0
        %v9474 = vadd.f32 0.0, %v9473
        %v9475 = vpop.f32.mrb[0].mxu0
        %9476 = vmatprep.mubr.f32.mxu0 0.0
        %9477 = vmatmul.mubr.f32.gmra.mrb[0].mxu0 %v9051
        %v9478 = vpop.f32.mrb[0].mxu0
        %v9479 = vadd.f32 0.0, %v9478
        %v9480 = vpop.f32.mrb[0].mxu0
        %9481 = vmatprep.mubr.f32.mxu0 0.0
        %9482 = vmatmul.mubr.f32.gmra.mrb[0].mxu0 %v9053
        %v9483 = vpop.f32.mrb[0].mxu0
        %v9484 = vadd.f32 0.0, %v9483
        %v9485 = vpop.f32.mrb[0].mxu0
        %9486 = vmatprep.mubr.f32.mxu0 0.0
        %9487 = vmatmul.mubr.f32.gmra.mrb[0].mxu0 %v9055
        %v9488 = vpop.f32.mrb[0].mxu0
        %v9489 = vadd.f32 0.0, %v9488
        %v9490 = vpop.f32.mrb[0].mxu0
        %9491 = vmatprep.mubr.f32.mxu0 0.0
        %9492 = vmatmul.mubr.f32.gmra.mrb[0].mxu0 %v9057
        %v9493 = vpop.f32.mrb[0].mxu0
        %v9494 = vadd.f32 0.0, %v9493
        %v9495 = vpop.f32.mrb[0].mxu0
        %9496 = vmatprep.mubr.f32.mxu0 0.0
        %9497 = vmatmul.mubr.f32.gmra.mrb[0].mxu0 %v9059
        %v9498 = vpop.f32.mrb[0].mxu0
        %v9499 = vadd.f32 0.0, %v9498
        %v9500 = vpop.f32.mrb[0].mxu0
        %9501 = vmatprep.mubr.f32.mxu0 0.0
        %9502 = vmatmul.mubr.f32.gmra.mrb[0].mxu0 %v9061
        %v9503 = vpop.f32.mrb[0].mxu0
        %v9504 = vadd.f32 0.0, %v9503
        %v9505 = vpop.f32.mrb[0].mxu0
        %9506 = vmatprep.mubr.f32.mxu0 0.0
        %9507 = vmatmul.mubr.f32.gmra.mrb[0].mxu0 %v9063
        %v9508 = vpop.f32.mrb[0].mxu0
        %v9509 = vadd.f32 0.0, %v9508
        %v9510 = vpop.f32.mrb[0].mxu0
        %9511 = vmatprep.mubr.f32.mxu0 0.0
        %9512 = vmatmul.mubr.f32.gmra.mrb[0].mxu0 %v9065
        %v9513 = vpop.f32.mrb[0].mxu0
        %v9514 = vadd.f32 0.0, %v9513
        %v9515 = vpop.f32.mrb[0].mxu0
        %9516 = vmatprep.mubr.f32.mxu0 0.0
        %9517 = vmatmul.mubr.f32.gmra.mrb[0].mxu0 %v9067
        %v9518 = vpop.f32.mrb[0].mxu0
        %v9519 = vadd.f32 0.0, %v9518
        %v9520 = vpop.f32.mrb[0].mxu0
        %9521 = vmatprep.mubr.f32.mxu0 0.0
        %9522 = vmatmul.mubr.f32.gmra.mrb[0].mxu0 %v9069
        %v9523 = vpop.f32.mrb[0].mxu0
        %v9524 = vadd.f32 0.0, %v9523
        %v9525 = vpop.f32.mrb[0].mxu0
        %9526 = vmatprep.mubr.f32.mxu0 0.0
        %9527 = vmatmul.mubr.f32.gmra.mrb[0].mxu0 %v9071
        %v9528 = vpop.f32.mrb[0].mxu0
        %v9529 = vadd.f32 0.0, %v9528
        %v9530 = vpop.f32.mrb[0].mxu0
        %9531 = vmatprep.mubr.f32.mxu0 0.0
        %9532 = vmatmul.mubr.f32.gmra.mrb[0].mxu0 %v9073
        %v9533 = vpop.f32.mrb[0].mxu0
        %v9534 = vadd.f32 0.0, %v9533
        %v9535 = vpop.f32.mrb[0].mxu0
        %9536 = vmatprep.mubr.f32.mxu0 0.0
        %9537 = vmatmul.mubr.f32.gmra.mrb[0].mxu0 %v9075
        %v9538 = vpop.f32.mrb[0].mxu0
        %v9539 = vadd.f32 0.0, %v9538
        %v9540 = vpop.f32.mrb[0].mxu0
        %9541 = vmatprep.mubr.f32.mxu0 0.0
        %9542 = vmatmul.mubr.f32.gmra.mrb[0].mxu0 %v9077
        %v9543 = vpop.f32.mrb[0].mxu0
        %v9544 = vadd.f32 0.0, %v9543
        %v9545 = vpop.f32.mrb[0].mxu0
        %9546 = vmatprep.mubr.f32.mxu0 0.0
        %9547 = vmatmul.mubr.f32.gmra.mrb[0].mxu0 %v9079
        %v9548 = vpop.f32.mrb[0].mxu0
        %v9549 = vadd.f32 0.0, %v9548
        %v9550 = vpop.f32.mrb[0].mxu0
        %9551 = vmatprep.mubr.f32.mxu0 0.0
        %9552 = vmatmul.mubr.f32.gmra.mrb[0].mxu0 %v9081
        %v9553 = vpop.f32.mrb[0].mxu0
        %v9554 = vadd.f32 0.0, %v9553
        %v9555 = vpop.f32.mrb[0].mxu0
        %9556 = vmatprep.mubr.f32.mxu0 0.0
        %9557 = vmatmul.mubr.f32.gmra.mrb[0].mxu0 %v9083
        %v9558 = vpop.f32.mrb[0].mxu0
        %v9559 = vadd.f32 0.0, %v9558
        %v9560 = vpop.f32.mrb[0].mxu0
        %9561 = vmatprep.mubr.f32.mxu0 0.0
        %9562 = vmatmul.mubr.f32.gmra.mrb[0].mxu0 %v9085
        %v9563 = vpop.f32.mrb[0].mxu0
        %v9564 = vadd.f32 0.0, %v9563
        %v9565 = vpop.f32.mrb[0].mxu0
        %9566 = vmatprep.mubr.f32.mxu0 0.0
        %9567 = vmatmul.mubr.f32.gmra.mrb[0].mxu0 %v9087
        %v9568 = vpop.f32.mrb[0].mxu0
        %v9569 = vadd.f32 0.0, %v9568
        %v9570 = vpop.f32.mrb[0].mxu0
        %9571 = vmatprep.mubr.f32.mxu0 0.0
        %9572 = vmatmul.mubr.f32.gmra.mrb[0].mxu0 %v9089
        %v9573 = vpop.f32.mrb[0].mxu0
        %v9574 = vadd.f32 0.0, %v9573
        %v9575 = vpop.f32.mrb[0].mxu0
        %9576 = vmatprep.mubr.f32.mxu0 0.0
        %9577 = vmatmul.mubr.f32.gmra.mrb[0].mxu0 %v9091
        %v9578 = vpop.f32.mrb[0].mxu0
        %v9579 = vadd.f32 0.0, %v9578
        %v9580 = vpop.f32.mrb[0].mxu0
        %9581 = vmatprep.mubr.f32.mxu0 0.0
        %9582 = vmatmul.mubr.f32.gmra.mrb[0].mxu0 %v9093
        %v9583 = vpop.f32.mrb[0].mxu0
        %v9584 = vadd.f32 0.0, %v9583
        %v9585 = vpop.f32.mrb[0].mxu0
        %9586 = vmatprep.mubr.f32.mxu0 0.0
        %9587 = vmatmul.mubr.f32.gmra.mrb[0].mxu0 %v9095
        %v9588 = vpop.f32.mrb[0].mxu0
        %v9589 = vadd.f32 0.0, %v9588
        %v9590 = vpop.f32.mrb[0].mxu0
        %9591 = vmatprep.mubr.f32.mxu0 0.0
        %9592 = vmatmul.mubr.f32.gmra.mrb[0].mxu0 %v9097
        %v9593 = vpop.f32.mrb[0].mxu0
        %v9594 = vadd.f32 0.0, %v9593
        %v9595 = vpop.f32.mrb[0].mxu0
        %9596 = vmatprep.mubr.f32.mxu0 0.0
        %9597 = vmatmul.mubr.f32.gmra.mrb[0].mxu0 %v9099
        %v9598 = vpop.f32.mrb[0].mxu0
        %v9599 = vadd.f32 0.0, %v9598
        %v9600 = vpop.f32.mrb[0].mxu0
        %9601 = vmatprep.mubr.f32.mxu0 0.0
        %9602 = vmatmul.mubr.f32.gmra.mrb[0].mxu0 %v9101
        %v9603 = vpop.f32.mrb[0].mxu0
        %v9604 = vadd.f32 0.0, %v9603
        %v9605 = vpop.f32.mrb[0].mxu0
        %9606 = vmatprep.mubr.f32.mxu0 0.0
        %9607 = vmatmul.mubr.f32.gmra.mrb[0].mxu0 %v9103
        %v9608 = vpop.f32.mrb[0].mxu0
        %v9609 = vadd.f32 0.0, %v9608
        %v9610 = vpop.f32.mrb[0].mxu0
        %9611 = vmatprep.mubr.f32.mxu0 0.0
        %9612 = vmatmul.mubr.f32.gmra.mrb[0].mxu0 %v9105
        %v9613 = vpop.f32.mrb[0].mxu0
        %v9614 = vadd.f32 0.0, %v9613
        %v9615 = vpop.f32.mrb[0].mxu0
        %9616 = vmatprep.mubr.f32.mxu0 0.0
        %9617 = vmatmul.mubr.f32.gmra.mrb[0].mxu0 %v9107
        %v9618 = vpop.f32.mrb[0].mxu0
        %v9619 = vadd.f32 0.0, %v9618
        %v9620 = vpop.f32.mrb[0].mxu0
        %9621 = vmatprep.mubr.f32.mxu0 0.0
        %9622 = vmatmul.mubr.f32.gmra.mrb[0].mxu0 %v9109
        %v9623 = vpop.f32.mrb[0].mxu0
        %v9624 = vadd.f32 0.0, %v9623
        %v9625 = vpop.f32.mrb[0].mxu0
        %9626 = vmatprep.mubr.f32.mxu0 0.0
        %9627 = vmatmul.mubr.f32.gmra.mrb[0].mxu0 %v9111
        %v9628 = vpop.f32.mrb[0].mxu0
        %v9629 = vadd.f32 0.0, %v9628
        %v9630 = vpop.f32.mrb[0].mxu0
        %9631 = vmatprep.mubr.f32.mxu0 0.0
        %9632 = vmatmul.mubr.f32.gmra.mrb[0].mxu0 %v9113
        %v9633 = vpop.f32.mrb[0].mxu0
        %v9634 = vadd.f32 0.0, %v9633
        %v9635 = vpop.f32.mrb[0].mxu0
        %9636 = vmatprep.mubr.f32.mxu0 0.0
        %9637 = vmatmul.mubr.f32.gmra.mrb[0].mxu0 %v9115
        %v9638 = vpop.f32.mrb[0].mxu0
        %v9639 = vadd.f32 0.0, %v9638
        %v9640 = vpop.f32.mrb[0].mxu0
        %9641 = vmatprep.mubr.f32.mxu0 0.0
        %9642 = vmatmul.mubr.f32.gmra.mrb[0].mxu0 %v9117
        %v9643 = vpop.f32.mrb[0].mxu0
        %v9644 = vadd.f32 0.0, %v9643
        %v9645 = vpop.f32.mrb[0].mxu0
        %9646 = vmatprep.mubr.f32.mxu0 0.0
        %9647 = vmatmul.mubr.f32.gmra.mrb[0].mxu0 %v9119
        %v9648 = vpop.f32.mrb[0].mxu0
        %v9649 = vadd.f32 0.0, %v9648
        %v9650 = vpop.f32.mrb[0].mxu0
        %9651 = vmatprep.mubr.f32.mxu0 0.0
        %9652 = vmatmul.mubr.f32.gmra.mrb[0].mxu0 %v9121
        %v9653 = vpop.f32.mrb[0].mxu0
        %v9654 = vadd.f32 0.0, %v9653
        %v9655 = vpop.f32.mrb[0].mxu0
        %9656 = vmatprep.mubr.f32.mxu0 0.0
        %9657 = vmatmul.mubr.f32.gmra.mrb[0].mxu0 %v9123
        %v9658 = vpop.f32.mrb[0].mxu0
        %v9659 = vadd.f32 0.0, %v9658
        %v9660 = vpop.f32.mrb[0].mxu0
        %9661 = vmatprep.mubr.f32.mxu0 0.0
        %9662 = vmatmul.mubr.f32.gmra.mrb[0].mxu0 %v9125
        %v9663 = vpop.f32.mrb[0].mxu0
        %v9664 = vadd.f32 0.0, %v9663
        %v9665 = vpop.f32.mrb[0].mxu0
        %9666 = vmatprep.mubr.f32.mxu0 0.0
        %9667 = vmatmul.mubr.f32.gmra.mrb[0].mxu0 %v9127
        %v9668 = vpop.f32.mrb[0].mxu0
        %v9669 = vadd.f32 0.0, %v9668
        %v9670 = vpop.f32.mrb[0].mxu0
        %9671 = vmatprep.mubr.f32.mxu0 0.0
        %9672 = vmatmul.mubr.f32.gmra.mrb[0].mxu0 %v9129
        %v9673 = vpop.f32.mrb[0].mxu0
        %v9674 = vadd.f32 0.0, %v9673
        %v9675 = vpop.f32.mrb[0].mxu0
        %9676 = vmatprep.mubr.f32.mxu0 0.0
        %9677 = vmatmul.mubr.f32.gmra.mrb[0].mxu0 %v9131
        %v9678 = vpop.f32.mrb[0].mxu0
        %v9679 = vadd.f32 0.0, %v9678
        %v9680 = vpop.f32.mrb[0].mxu0
        %9681 = vdwg.mxu0
        %v9682 = vld [vmem:[%s4] sm:$0xff]
        %v9683 = vld [vmem:[%s4 + $0x8] sm:$0xff]
        %v9684 = vld [vmem:[%s4 + $0x10] sm:$0xff]
        %v9685 = vld [vmem:[%s4 + $0x18] sm:$0xff]
        %v9686 = vld [vmem:[%s4 + $0x20] sm:$0xff]
        %v9687 = vld [vmem:[%s4 + $0x28] sm:$0xff]
        %v9688 = vld [vmem:[%s4 + $0x60] sm:$0xff]
        %v9689 = vld [vmem:[%s4 + $0x68] sm:$0xff]
        %v9690 = vld [vmem:[%s4 + $0x70] sm:$0xff]
        %v9691 = vld [vmem:[%s4 + $0x78] sm:$0xff]
        %v9692 = vld [vmem:[%s4 + $0x80] sm:$0xff]
        %v9693 = vld [vmem:[%s4 + $0x88] sm:$0xff]
        %v9694 = vld [vmem:[%s4 + $0xc0] sm:$0xff]
        %v9695 = vld [vmem:[%s4 + $0xc8] sm:$0xff]
        %v9696 = vld [vmem:[%s4 + $0xd0] sm:$0xff]
        %v9697 = vld [vmem:[%s4 + $0xd8] sm:$0xff]
        %v9698 = vld [vmem:[%s4 + $0xe0] sm:$0xff]
        %v9699 = vld [vmem:[%s4 + $0xe8] sm:$0xff]
        %v9700 = vld [vmem:[%s4 + $0x120] sm:$0xff]
        %v9701 = vld [vmem:[%s4 + $0x128] sm:$0xff]
        %v9702 = vld [vmem:[%s4 + $0x130] sm:$0xff]
        %v9703 = vld [vmem:[%s4 + $0x138] sm:$0xff]
        %v9704 = vld [vmem:[%s4 + $0x140] sm:$0xff]
        %v9705 = vld [vmem:[%s4 + $0x148] sm:$0xff]
        %v9706 = vld [vmem:[%s4 + $0x180] sm:$0xff]
        %v9707 = vld [vmem:[%s4 + $0x188] sm:$0xff]
        %v9708 = vld [vmem:[%s4 + $0x190] sm:$0xff]
        %v9709 = vld [vmem:[%s4 + $0x198] sm:$0xff]
        %v9710 = vld [vmem:[%s4 + $0x1a0] sm:$0xff]
        %v9711 = vld [vmem:[%s4 + $0x1a8] sm:$0xff]
        %v9712 = vld [vmem:[%s4 + $0x1e0] sm:$0xff]
        %v9713 = vld [vmem:[%s4 + $0x1e8] sm:$0xff]
        %v9714 = vld [vmem:[%s4 + $0x1f0] sm:$0xff]
        %v9715 = vld [vmem:[%s4 + $0x1f8] sm:$0xff]
        %v9716 = vld [vmem:[%s4 + $0x200] sm:$0xff]
        %v9717 = vld [vmem:[%s4 + $0x208] sm:$0xff]
        %v9718 = vld [vmem:[%s4 + $0x240] sm:$0xff]
        %v9719 = vld [vmem:[%s4 + $0x248] sm:$0xff]
        %v9720 = vld [vmem:[%s4 + $0x250] sm:$0xff]
        %v9721 = vld [vmem:[%s4 + $0x258] sm:$0xff]
        %v9722 = vld [vmem:[%s4 + $0x260] sm:$0xff]
        %v9723 = vld [vmem:[%s4 + $0x268] sm:$0xff]
        %v9724 = vld [vmem:[%s4 + $0x2a0] sm:$0xff]
        %v9725 = vld [vmem:[%s4 + $0x2a8] sm:$0xff]
        %v9726 = vld [vmem:[%s4 + $0x2b0] sm:$0xff]
        %v9727 = vld [vmem:[%s4 + $0x2b8] sm:$0xff]
        %v9728 = vld [vmem:[%s4 + $0x2c0] sm:$0xff]
        %v9729 = vld [vmem:[%s4 + $0x2c8] sm:$0xff]
        %v9730 = vld [vmem:[%s4 + $0x300] sm:$0xff]
        %v9731 = vld [vmem:[%s4 + $0x308] sm:$0xff]
        %v9732 = vld [vmem:[%s4 + $0x310] sm:$0xff]
        %v9733 = vld [vmem:[%s4 + $0x318] sm:$0xff]
        %v9734 = vld [vmem:[%s4 + $0x320] sm:$0xff]
        %v9735 = vld [vmem:[%s4 + $0x328] sm:$0xff]
        %v9736 = vld [vmem:[%s4 + $0x360] sm:$0xff]
        %v9737 = vld [vmem:[%s4 + $0x368] sm:$0xff]
        %v9738 = vld [vmem:[%s4 + $0x370] sm:$0xff]
        %v9739 = vld [vmem:[%s4 + $0x378] sm:$0xff]
        %v9740 = vld [vmem:[%s4 + $0x380] sm:$0xff]
        %v9741 = vld [vmem:[%s4 + $0x388] sm:$0xff]
        %v9742 = vld [vmem:[%s4 + $0x3c0] sm:$0xff]
        %v9743 = vld [vmem:[%s4 + $0x3c8] sm:$0xff]
        %v9744 = vld [vmem:[%s4 + $0x3d0] sm:$0xff]
        %v9745 = vld [vmem:[%s4 + $0x3d8] sm:$0xff]
        %v9746 = vld [vmem:[%s4 + $0x3e0] sm:$0xff]
        %v9747 = vld [vmem:[%s4 + $0x3e8] sm:$0xff]
        %v9748 = vld [vmem:[%s4 + $0x420] sm:$0xff]
        %v9749 = vld [vmem:[%s4 + $0x428] sm:$0xff]
        %v9750 = vld [vmem:[%s4 + $0x430] sm:$0xff]
        %v9751 = vld [vmem:[%s4 + $0x438] sm:$0xff]
        %v9752 = vld [vmem:[%s4 + $0x440] sm:$0xff]
        %v9753 = vld [vmem:[%s4 + $0x448] sm:$0xff]
        %v9754 = vld [vmem:[%s4 + $0x480] sm:$0xff]
        %v9755 = vld [vmem:[%s4 + $0x488] sm:$0xff]
        %v9756 = vld [vmem:[%s4 + $0x490] sm:$0xff]
        %v9757 = vld [vmem:[%s4 + $0x498] sm:$0xff]
        %v9758 = vld [vmem:[%s4 + $0x4a0] sm:$0xff]
        %v9759 = vld [vmem:[%s4 + $0x4a8] sm:$0xff]
        %v9760 = vld [vmem:[%s4 + $0x4e0] sm:$0xff]
        %v9761 = vld [vmem:[%s4 + $0x4e8] sm:$0xff]
        %v9762 = vld [vmem:[%s4 + $0x4f0] sm:$0xff]
        %v9763 = vld [vmem:[%s4 + $0x4f8] sm:$0xff]
        %v9764 = vld [vmem:[%s4 + $0x500] sm:$0xff]
        %v9765 = vld [vmem:[%s4 + $0x508] sm:$0xff]
        %v9766 = vld [vmem:[%s4 + $0x540] sm:$0xff]
        %v9767 = vld [vmem:[%s4 + $0x548] sm:$0xff]
        %v9768 = vld [vmem:[%s4 + $0x550] sm:$0xff]
        %v9769 = vld [vmem:[%s4 + $0x558] sm:$0xff]
        %v9770 = vld [vmem:[%s4 + $0x560] sm:$0xff]
        %v9771 = vld [vmem:[%s4 + $0x568] sm:$0xff]
        %v9772 = vld [vmem:[%s4 + $0x5a0] sm:$0xff]
        %v9773 = vld [vmem:[%s4 + $0x5a8] sm:$0xff]
        %v9774 = vld [vmem:[%s4 + $0x5b0] sm:$0xff]
        %v9775 = vld [vmem:[%s4 + $0x5b8] sm:$0xff]
        %v9776 = vld [vmem:[%s4 + $0x5c0] sm:$0xff]
        %v9777 = vld [vmem:[%s4 + $0x5c8] sm:$0xff]
        %v9778 = vld [vmem:[%s4 + $0x30] sm:$0xff]
        %v9779 = vld [vmem:[%s4 + $0x38] sm:$0xff]
        %v9780 = vld [vmem:[%s4 + $0x40] sm:$0xff]
        %v9781 = vld [vmem:[%s4 + $0x48] sm:$0xff]
        %v9782 = vld [vmem:[%s4 + $0x50] sm:$0xff]
        %v9783 = vld [vmem:[%s4 + $0x58] sm:$0xff]
        %v9784 = vld [vmem:[%s4 + $0x90] sm:$0xff]
        %v9785 = vld [vmem:[%s4 + $0x98] sm:$0xff]
        %v9786 = vld [vmem:[%s4 + $0xa0] sm:$0xff]
        %v9787 = vld [vmem:[%s4 + $0xa8] sm:$0xff]
        %v9788 = vld [vmem:[%s4 + $0xb0] sm:$0xff]
        %v9789 = vld [vmem:[%s4 + $0xb8] sm:$0xff]
        %v9790 = vld [vmem:[%s4 + $0xf0] sm:$0xff]
        %v9791 = vld [vmem:[%s4 + $0xf8] sm:$0xff]
        %v9792 = vld [vmem:[%s4 + $0x100] sm:$0xff]
        %v9793 = vld [vmem:[%s4 + $0x108] sm:$0xff]
        %v9794 = vld [vmem:[%s4 + $0x110] sm:$0xff]
        %v9795 = vld [vmem:[%s4 + $0x118] sm:$0xff]
        %v9796 = vld [vmem:[%s4 + $0x150] sm:$0xff]
        %v9797 = vld [vmem:[%s4 + $0x158] sm:$0xff]
        %v9798 = vld [vmem:[%s4 + $0x160] sm:$0xff]
        %v9799 = vld [vmem:[%s4 + $0x168] sm:$0xff]
        %v9800 = vld [vmem:[%s4 + $0x170] sm:$0xff]
        %v9801 = vld [vmem:[%s4 + $0x178] sm:$0xff]
        %v9802 = vld [vmem:[%s4 + $0x1b0] sm:$0xff]
        %v9803 = vld [vmem:[%s4 + $0x1b8] sm:$0xff]
        %v9804 = vld [vmem:[%s4 + $0x1c0] sm:$0xff]
        %v9805 = vld [vmem:[%s4 + $0x1c8] sm:$0xff]
        %v9806 = vld [vmem:[%s4 + $0x1d0] sm:$0xff]
        %v9807 = vld [vmem:[%s4 + $0x1d8] sm:$0xff]
        %v9808 = vld [vmem:[%s4 + $0x210] sm:$0xff]
        %v9809 = vld [vmem:[%s4 + $0x218] sm:$0xff]
        %v9810 = vld [vmem:[%s4 + $0x220] sm:$0xff]
        %v9811 = vld [vmem:[%s4 + $0x228] sm:$0xff]
        %v9812 = vld [vmem:[%s4 + $0x230] sm:$0xff]
        %v9813 = vld [vmem:[%s4 + $0x238] sm:$0xff]
        %v9814 = vld [vmem:[%s4 + $0x270] sm:$0xff]
        %v9815 = vld [vmem:[%s4 + $0x278] sm:$0xff]
        %v9816 = vld [vmem:[%s4 + $0x280] sm:$0xff]
        %v9817 = vld [vmem:[%s4 + $0x288] sm:$0xff]
        %v9818 = vld [vmem:[%s4 + $0x290] sm:$0xff]
        %v9819 = vld [vmem:[%s4 + $0x298] sm:$0xff]
        %v9820 = vld [vmem:[%s4 + $0x2d0] sm:$0xff]
        %v9821 = vld [vmem:[%s4 + $0x2d8] sm:$0xff]
        %v9822 = vld [vmem:[%s4 + $0x2e0] sm:$0xff]
        %v9823 = vld [vmem:[%s4 + $0x2e8] sm:$0xff]
        %v9824 = vld [vmem:[%s4 + $0x2f0] sm:$0xff]
        %v9825 = vld [vmem:[%s4 + $0x2f8] sm:$0xff]
        %v9826 = vld [vmem:[%s4 + $0x330] sm:$0xff]
        %v9827 = vld [vmem:[%s4 + $0x338] sm:$0xff]
        %v9828 = vld [vmem:[%s4 + $0x340] sm:$0xff]
        %v9829 = vld [vmem:[%s4 + $0x348] sm:$0xff]
        %v9830 = vld [vmem:[%s4 + $0x350] sm:$0xff]
        %v9831 = vld [vmem:[%s4 + $0x358] sm:$0xff]
        %v9832 = vld [vmem:[%s4 + $0x390] sm:$0xff]
        %v9833 = vld [vmem:[%s4 + $0x398] sm:$0xff]
        %v9834 = vld [vmem:[%s4 + $0x3a0] sm:$0xff]
        %v9835 = vld [vmem:[%s4 + $0x3a8] sm:$0xff]
        %v9836 = vld [vmem:[%s4 + $0x3b0] sm:$0xff]
        %v9837 = vld [vmem:[%s4 + $0x3b8] sm:$0xff]
        %v9838 = vld [vmem:[%s4 + $0x3f0] sm:$0xff]
        %v9839 = vld [vmem:[%s4 + $0x3f8] sm:$0xff]
        %v9840 = vld [vmem:[%s4 + $0x400] sm:$0xff]
        %v9841 = vld [vmem:[%s4 + $0x408] sm:$0xff]
        %v9842 = vld [vmem:[%s4 + $0x410] sm:$0xff]
        %v9843 = vld [vmem:[%s4 + $0x418] sm:$0xff]
        %v9844 = vld [vmem:[%s4 + $0x450] sm:$0xff]
        %v9845 = vld [vmem:[%s4 + $0x458] sm:$0xff]
        %v9846 = vld [vmem:[%s4 + $0x460] sm:$0xff]
        %v9847 = vld [vmem:[%s4 + $0x468] sm:$0xff]
        %v9848 = vld [vmem:[%s4 + $0x470] sm:$0xff]
        %v9849 = vld [vmem:[%s4 + $0x478] sm:$0xff]
        %v9850 = vld [vmem:[%s4 + $0x4b0] sm:$0xff]
        %v9851 = vld [vmem:[%s4 + $0x4b8] sm:$0xff]
        %v9852 = vld [vmem:[%s4 + $0x4c0] sm:$0xff]
        %v9853 = vld [vmem:[%s4 + $0x4c8] sm:$0xff]
        %v9854 = vld [vmem:[%s4 + $0x4d0] sm:$0xff]
        %v9855 = vld [vmem:[%s4 + $0x4d8] sm:$0xff]
        %v9856 = vld [vmem:[%s4 + $0x510] sm:$0xff]
        %v9857 = vld [vmem:[%s4 + $0x518] sm:$0xff]
        %v9858 = vld [vmem:[%s4 + $0x520] sm:$0xff]
        %v9859 = vld [vmem:[%s4 + $0x528] sm:$0xff]
        %v9860 = vld [vmem:[%s4 + $0x530] sm:$0xff]
        %v9861 = vld [vmem:[%s4 + $0x538] sm:$0xff]
        %v9862 = vld [vmem:[%s4 + $0x570] sm:$0xff]
        %v9863 = vld [vmem:[%s4 + $0x578] sm:$0xff]
        %v9864 = vld [vmem:[%s4 + $0x580] sm:$0xff]
        %v9865 = vld [vmem:[%s4 + $0x588] sm:$0xff]
        %v9866 = vld [vmem:[%s4 + $0x590] sm:$0xff]
        %v9867 = vld [vmem:[%s4 + $0x598] sm:$0xff]
        %v9868 = vld [vmem:[%s4 + $0x5d0] sm:$0xff]
        %v9869 = vld [vmem:[%s4 + $0x5d8] sm:$0xff]
        %v9870 = vld [vmem:[%s4 + $0x5e0] sm:$0xff]
        %v9871 = vld [vmem:[%s4 + $0x5e8] sm:$0xff]
        %v9872 = vld [vmem:[%s4 + $0x5f0] sm:$0xff]
        %v9873 = vld [vmem:[%s4 + $0x5f8] sm:$0xff]
        %9970 = vrot.lane.b32.xlu0 %v9204, 127
        %v9971 = vpop.permute.xlu0 %9970
        %9972 = vrot.lane.b32.xlu0 %v9209, 127
        %v9973 = vpop.permute.xlu0 %9972
        %9974 = vrot.lane.b32.xlu0 %v9214, 127
        %v9975 = vpop.permute.xlu0 %9974
        %9976 = vrot.lane.b32.xlu0 %v9219, 127
        %v9977 = vpop.permute.xlu0 %9976
        %9978 = vrot.lane.b32.xlu0 %v9224, 127
        %v9979 = vpop.permute.xlu0 %9978
        %9980 = vrot.lane.b32.xlu0 %v9229, 127
        %v9981 = vpop.permute.xlu0 %9980
        %9982 = vrot.lane.b32.xlu0 %v9234, 127
        %v9983 = vpop.permute.xlu0 %9982
        %9984 = vrot.lane.b32.xlu0 %v9239, 127
        %v9985 = vpop.permute.xlu0 %9984
        %9986 = vrot.lane.b32.xlu0 %v9244, 127
        %v9987 = vpop.permute.xlu0 %9986
        %9988 = vrot.lane.b32.xlu0 %v9249, 127
        %v9989 = vpop.permute.xlu0 %9988
        %9990 = vrot.lane.b32.xlu0 %v9254, 127
        %v9991 = vpop.permute.xlu0 %9990
        %9992 = vrot.lane.b32.xlu0 %v9259, 127
        %v9993 = vpop.permute.xlu0 %9992
        %9994 = vrot.lane.b32.xlu0 %v9264, 127
        %v9995 = vpop.permute.xlu0 %9994
        %9996 = vrot.lane.b32.xlu0 %v9269, 127
        %v9997 = vpop.permute.xlu0 %9996
        %9998 = vrot.lane.b32.xlu0 %v9274, 127
        %v9999 = vpop.permute.xlu0 %9998
        %10000 = vrot.lane.b32.xlu0 %v9279, 127
        %v10001 = vpop.permute.xlu0 %10000
        %10002 = vrot.lane.b32.xlu0 %v9284, 127
        %v10003 = vpop.permute.xlu0 %10002
        %10004 = vrot.lane.b32.xlu0 %v9289, 127
        %v10005 = vpop.permute.xlu0 %10004
        %10006 = vrot.lane.b32.xlu0 %v9294, 127
        %v10007 = vpop.permute.xlu0 %10006
        %10008 = vrot.lane.b32.xlu0 %v9299, 127
        %v10009 = vpop.permute.xlu0 %10008
        %10010 = vrot.lane.b32.xlu0 %v9304, 127
        %v10011 = vpop.permute.xlu0 %10010
        %10012 = vrot.lane.b32.xlu0 %v9309, 127
        %v10013 = vpop.permute.xlu0 %10012
        %10014 = vrot.lane.b32.xlu0 %v9314, 127
        %v10015 = vpop.permute.xlu0 %10014
        %10016 = vrot.lane.b32.xlu0 %v9319, 127
        %v10017 = vpop.permute.xlu0 %10016
        %10018 = vrot.lane.b32.xlu0 %v9324, 127
        %v10019 = vpop.permute.xlu0 %10018
        %10020 = vrot.lane.b32.xlu0 %v9329, 127
        %v10021 = vpop.permute.xlu0 %10020
        %10022 = vrot.lane.b32.xlu0 %v9334, 127
        %v10023 = vpop.permute.xlu0 %10022
        %10024 = vrot.lane.b32.xlu0 %v9339, 127
        %v10025 = vpop.permute.xlu0 %10024
        %10026 = vrot.lane.b32.xlu0 %v9344, 127
        %v10027 = vpop.permute.xlu0 %10026
        %10028 = vrot.lane.b32.xlu0 %v9349, 127
        %v10029 = vpop.permute.xlu0 %10028
        %10030 = vrot.lane.b32.xlu0 %v9354, 127
        %v10031 = vpop.permute.xlu0 %10030
        %10032 = vrot.lane.b32.xlu0 %v9359, 127
        %v10033 = vpop.permute.xlu0 %10032
        %10034 = vrot.lane.b32.xlu0 %v9364, 127
        %v10035 = vpop.permute.xlu0 %10034
        %10036 = vrot.lane.b32.xlu0 %v9369, 127
        %v10037 = vpop.permute.xlu0 %10036
        %10038 = vrot.lane.b32.xlu0 %v9374, 127
        %v10039 = vpop.permute.xlu0 %10038
        %10040 = vrot.lane.b32.xlu0 %v9379, 127
        %v10041 = vpop.permute.xlu0 %10040
        %10042 = vrot.lane.b32.xlu0 %v9384, 127
        %v10043 = vpop.permute.xlu0 %10042
        %10044 = vrot.lane.b32.xlu0 %v9389, 127
        %v10045 = vpop.permute.xlu0 %10044
        %10046 = vrot.lane.b32.xlu0 %v9394, 127
        %v10047 = vpop.permute.xlu0 %10046
        %10048 = vrot.lane.b32.xlu0 %v9399, 127
        %v10049 = vpop.permute.xlu0 %10048
        %10050 = vrot.lane.b32.xlu0 %v9404, 127
        %v10051 = vpop.permute.xlu0 %10050
        %10052 = vrot.lane.b32.xlu0 %v9409, 127
        %v10053 = vpop.permute.xlu0 %10052
        %10054 = vrot.lane.b32.xlu0 %v9414, 127
        %v10055 = vpop.permute.xlu0 %10054
        %10056 = vrot.lane.b32.xlu0 %v9419, 127
        %v10057 = vpop.permute.xlu0 %10056
        %10058 = vrot.lane.b32.xlu0 %v9424, 127
        %v10059 = vpop.permute.xlu0 %10058
        %10060 = vrot.lane.b32.xlu0 %v9429, 127
        %v10061 = vpop.permute.xlu0 %10060
        %10062 = vrot.lane.b32.xlu0 %v9434, 127
        %v10063 = vpop.permute.xlu0 %10062
        %10064 = vrot.lane.b32.xlu0 %v9439, 127
        %v10065 = vpop.permute.xlu0 %10064
        %10066 = vrot.lane.b32.xlu0 %v9444, 127
        %v10067 = vpop.permute.xlu0 %10066
        %10068 = vrot.lane.b32.xlu0 %v9449, 127
        %v10069 = vpop.permute.xlu0 %10068
        %10070 = vrot.lane.b32.xlu0 %v9454, 127
        %v10071 = vpop.permute.xlu0 %10070
        %10072 = vrot.lane.b32.xlu0 %v9459, 127
        %v10073 = vpop.permute.xlu0 %10072
        %10074 = vrot.lane.b32.xlu0 %v9464, 127
        %v10075 = vpop.permute.xlu0 %10074
        %10076 = vrot.lane.b32.xlu0 %v9469, 127
        %v10077 = vpop.permute.xlu0 %10076
        %10078 = vrot.lane.b32.xlu0 %v9474, 127
        %v10079 = vpop.permute.xlu0 %10078
        %10080 = vrot.lane.b32.xlu0 %v9479, 127
        %v10081 = vpop.permute.xlu0 %10080
        %10082 = vrot.lane.b32.xlu0 %v9484, 127
        %v10083 = vpop.permute.xlu0 %10082
        %10084 = vrot.lane.b32.xlu0 %v9489, 127
        %v10085 = vpop.permute.xlu0 %10084
        %10086 = vrot.lane.b32.xlu0 %v9494, 127
        %v10087 = vpop.permute.xlu0 %10086
        %10088 = vrot.lane.b32.xlu0 %v9499, 127
        %v10089 = vpop.permute.xlu0 %10088
        %10090 = vrot.lane.b32.xlu0 %v9504, 127
        %v10091 = vpop.permute.xlu0 %10090
        %10092 = vrot.lane.b32.xlu0 %v9509, 127
        %v10093 = vpop.permute.xlu0 %10092
        %10094 = vrot.lane.b32.xlu0 %v9514, 127
        %v10095 = vpop.permute.xlu0 %10094
        %10096 = vrot.lane.b32.xlu0 %v9519, 127
        %v10097 = vpop.permute.xlu0 %10096
        %10098 = vrot.lane.b32.xlu0 %v9524, 127
        %v10099 = vpop.permute.xlu0 %10098
        %10100 = vrot.lane.b32.xlu0 %v9529, 127
        %v10101 = vpop.permute.xlu0 %10100
        %10102 = vrot.lane.b32.xlu0 %v9534, 127
        %v10103 = vpop.permute.xlu0 %10102
        %10104 = vrot.lane.b32.xlu0 %v9539, 127
        %v10105 = vpop.permute.xlu0 %10104
        %10106 = vrot.lane.b32.xlu0 %v9544, 127
        %v10107 = vpop.permute.xlu0 %10106
        %10108 = vrot.lane.b32.xlu0 %v9549, 127
        %v10109 = vpop.permute.xlu0 %10108
        %10110 = vrot.lane.b32.xlu0 %v9554, 127
        %v10111 = vpop.permute.xlu0 %10110
        %10112 = vrot.lane.b32.xlu0 %v9559, 127
        %v10113 = vpop.permute.xlu0 %10112
        %10114 = vrot.lane.b32.xlu0 %v9564, 127
        %v10115 = vpop.permute.xlu0 %10114
        %10116 = vrot.lane.b32.xlu0 %v9569, 127
        %v10117 = vpop.permute.xlu0 %10116
        %10118 = vrot.lane.b32.xlu0 %v9574, 127
        %v10119 = vpop.permute.xlu0 %10118
        %10120 = vrot.lane.b32.xlu0 %v9579, 127
        %v10121 = vpop.permute.xlu0 %10120
        %10122 = vrot.lane.b32.xlu0 %v9584, 127
        %v10123 = vpop.permute.xlu0 %10122
        %10124 = vrot.lane.b32.xlu0 %v9589, 127
        %v10125 = vpop.permute.xlu0 %10124
        %10126 = vrot.lane.b32.xlu0 %v9594, 127
        %v10127 = vpop.permute.xlu0 %10126
        %10128 = vrot.lane.b32.xlu0 %v9599, 127
        %v10129 = vpop.permute.xlu0 %10128
        %10130 = vrot.lane.b32.xlu0 %v9604, 127
        %v10131 = vpop.permute.xlu0 %10130
        %10132 = vrot.lane.b32.xlu0 %v9609, 127
        %v10133 = vpop.permute.xlu0 %10132
        %10134 = vrot.lane.b32.xlu0 %v9614, 127
        %v10135 = vpop.permute.xlu0 %10134
        %10136 = vrot.lane.b32.xlu0 %v9619, 127
        %v10137 = vpop.permute.xlu0 %10136
        %10138 = vrot.lane.b32.xlu0 %v9624, 127
        %v10139 = vpop.permute.xlu0 %10138
        %10140 = vrot.lane.b32.xlu0 %v9629, 127
        %v10141 = vpop.permute.xlu0 %10140
        %10142 = vrot.lane.b32.xlu0 %v9634, 127
        %v10143 = vpop.permute.xlu0 %10142
        %10144 = vrot.lane.b32.xlu0 %v9639, 127
        %v10145 = vpop.permute.xlu0 %10144
        %10146 = vrot.lane.b32.xlu0 %v9644, 127
        %v10147 = vpop.permute.xlu0 %10146
        %10148 = vrot.lane.b32.xlu0 %v9649, 127
        %v10149 = vpop.permute.xlu0 %10148
        %10150 = vrot.lane.b32.xlu0 %v9654, 127
        %v10151 = vpop.permute.xlu0 %10150
        %10152 = vrot.lane.b32.xlu0 %v9659, 127
        %v10153 = vpop.permute.xlu0 %10152
        %10154 = vrot.lane.b32.xlu0 %v9664, 127
        %v10155 = vpop.permute.xlu0 %10154
        %10156 = vrot.lane.b32.xlu0 %v9669, 127
        %v10157 = vpop.permute.xlu0 %10156
        %10158 = vrot.lane.b32.xlu0 %v9674, 127
        %v10159 = vpop.permute.xlu0 %10158
        %10160 = vrot.lane.b32.xlu0 %v9679, 127
        %v10161 = vpop.permute.xlu0 %10160
        %10258 = vmatprep.subr.mxu0 0.0
        %10259 = vmatpush1.msra.mxu0 %v9971
        %10260 = vmatprep.subr.mxu0 0.0
        %10261 = vmatpush1.msra.mxu0 %v9973
        %10262 = vmatprep.subr.mxu0 0.0
        %10263 = vmatpush1.msra.mxu0 %v9975
        %10264 = vmatprep.subr.mxu0 0.0
        %10265 = vmatpush1.msra.mxu0 %v9977
        %10266 = vmatprep.subr.mxu0 0.0
        %10267 = vmatpush1.msra.mxu0 %v9979
        %10268 = vmatprep.subr.mxu0 0.0
        %10269 = vmatpush1.msra.mxu0 %v9981
        %10270 = vmatprep.subr.mxu0 0.0
        %10271 = vmatpush1.msra.mxu0 %v9983
        %10272 = vmatprep.subr.mxu0 0.0
        %10273 = vmatpush1.msra.mxu0 %v9985
        %10274 = vmatprep.subr.mxu0 0.0
        %10275 = vmatpush1.msra.mxu0 %v9987
        %10276 = vmatprep.subr.mxu0 0.0
        %10277 = vmatpush1.msra.mxu0 %v9989
        %10278 = vmatprep.subr.mxu0 0.0
        %10279 = vmatpush1.msra.mxu0 %v9991
        %10280 = vmatprep.subr.mxu0 0.0
        %10281 = vmatpush1.msra.mxu0 %v9993
        %10282 = vmatprep.subr.mxu0 0.0
        %10283 = vmatpush1.msra.mxu0 %v9995
        %10284 = vmatprep.subr.mxu0 0.0
        %10285 = vmatpush1.msra.mxu0 %v9997
        %10286 = vmatprep.subr.mxu0 0.0
        %10287 = vmatpush1.msra.mxu0 %v9999
        %10288 = vmatprep.subr.mxu0 0.0
        %10289 = vmatpush1.msra.mxu0 %v10001
        %10290 = vmatprep.subr.mxu0 0.0
        %10291 = vmatpush1.msra.mxu0 %v10003
        %10292 = vmatprep.subr.mxu0 0.0
        %10293 = vmatpush1.msra.mxu0 %v10005
        %10294 = vmatprep.subr.mxu0 0.0
        %10295 = vmatpush1.msra.mxu0 %v10007
        %10296 = vmatprep.subr.mxu0 0.0
        %10297 = vmatpush1.msra.mxu0 %v10009
        %10298 = vmatprep.subr.mxu0 0.0
        %10299 = vmatpush1.msra.mxu0 %v10011
        %10300 = vmatprep.subr.mxu0 0.0
        %10301 = vmatpush1.msra.mxu0 %v10013
        %10302 = vmatprep.subr.mxu0 0.0
        %10303 = vmatpush1.msra.mxu0 %v10015
        %10304 = vmatprep.subr.mxu0 0.0
        %10305 = vmatpush1.msra.mxu0 %v10017
        %10306 = vmatprep.subr.mxu0 0.0
        %10307 = vmatpush1.msra.mxu0 %v10019
        %10308 = vmatprep.subr.mxu0 0.0
        %10309 = vmatpush1.msra.mxu0 %v10021
        %10310 = vmatprep.subr.mxu0 0.0
        %10311 = vmatpush1.msra.mxu0 %v10023
        %10312 = vmatprep.subr.mxu0 0.0
        %10313 = vmatpush1.msra.mxu0 %v10025
        %10314 = vmatprep.subr.mxu0 0.0
        %10315 = vmatpush1.msra.mxu0 %v10027
        %10316 = vmatprep.subr.mxu0 0.0
        %10317 = vmatpush1.msra.mxu0 %v10029
        %10318 = vmatprep.subr.mxu0 0.0
        %10319 = vmatpush1.msra.mxu0 %v10031
        %10320 = vmatprep.subr.mxu0 0.0
        %10321 = vmatpush1.msra.mxu0 %v10033
        %10322 = vmatprep.mubr.f32.mxu0 %v9779
        %10323 = vmatmul.mubr.f32.gmra.mrb[0].mxu0 %v9778
        %v10324 = vpop.f32.mrb[0].mxu0
        %v10325 = vadd.f32 0.0, %v10324
        %v10326 = vpop.f32.mrb[0].mxu0
        %10327 = vmatprep.mubr.f32.mxu0 %v9785
        %10328 = vmatmul.mubr.f32.gmra.mrb[0].mxu0 %v9784
        %v10329 = vpop.f32.mrb[0].mxu0
        %v10330 = vadd.f32 0.0, %v10329
        %v10331 = vpop.f32.mrb[0].mxu0
        %10332 = vmatprep.mubr.f32.mxu0 %v9791
        %10333 = vmatmul.mubr.f32.gmra.mrb[0].mxu0 %v9790
        %v10334 = vpop.f32.mrb[0].mxu0
        %v10335 = vadd.f32 0.0, %v10334
        %v10336 = vpop.f32.mrb[0].mxu0
        %10337 = vmatprep.mubr.f32.mxu0 %v9797
        %10338 = vmatmul.mubr.f32.gmra.mrb[0].mxu0 %v9796
        %v10339 = vpop.f32.mrb[0].mxu0
        %v10340 = vadd.f32 0.0, %v10339
        %v10341 = vpop.f32.mrb[0].mxu0
        %10342 = vmatprep.mubr.f32.mxu0 %v9803
        %10343 = vmatmul.mubr.f32.gmra.mrb[0].mxu0 %v9802
        %v10344 = vpop.f32.mrb[0].mxu0
        %v10345 = vadd.f32 0.0, %v10344
        %v10346 = vpop.f32.mrb[0].mxu0
        %10347 = vmatprep.mubr.f32.mxu0 %v9809
        %10348 = vmatmul.mubr.f32.gmra.mrb[0].mxu0 %v9808
        %v10349 = vpop.f32.mrb[0].mxu0
        %v10350 = vadd.f32 0.0, %v10349
        %v10351 = vpop.f32.mrb[0].mxu0
        %10352 = vmatprep.mubr.f32.mxu0 %v9815
        %10353 = vmatmul.mubr.f32.gmra.mrb[0].mxu0 %v9814
        %v10354 = vpop.f32.mrb[0].mxu0
        %v10355 = vadd.f32 0.0, %v10354
        %v10356 = vpop.f32.mrb[0].mxu0
        %10357 = vmatprep.mubr.f32.mxu0 %v9821
        %10358 = vmatmul.mubr.f32.gmra.mrb[0].mxu0 %v9820
        %v10359 = vpop.f32.mrb[0].mxu0
        %v10360 = vadd.f32 0.0, %v10359
        %v10361 = vpop.f32.mrb[0].mxu0
        %10362 = vmatprep.mubr.f32.mxu0 %v9827
        %10363 = vmatmul.mubr.f32.gmra.mrb[0].mxu0 %v9826
        %v10364 = vpop.f32.mrb[0].mxu0
        %v10365 = vadd.f32 0.0, %v10364
        %v10366 = vpop.f32.mrb[0].mxu0
        %10367 = vmatprep.mubr.f32.mxu0 %v9833
        %10368 = vmatmul.mubr.f32.gmra.mrb[0].mxu0 %v9832
        %v10369 = vpop.f32.mrb[0].mxu0
        %v10370 = vadd.f32 0.0, %v10369
        %v10371 = vpop.f32.mrb[0].mxu0
        %10372 = vmatprep.mubr.f32.mxu0 %v9839
        %10373 = vmatmul.mubr.f32.gmra.mrb[0].mxu0 %v9838
        %v10374 = vpop.f32.mrb[0].mxu0
        %v10375 = vadd.f32 0.0, %v10374
        %v10376 = vpop.f32.mrb[0].mxu0
        %10377 = vmatprep.mubr.f32.mxu0 %v9845
        %10378 = vmatmul.mubr.f32.gmra.mrb[0].mxu0 %v9844
        %v10379 = vpop.f32.mrb[0].mxu0
        %v10380 = vadd.f32 0.0, %v10379
        %v10381 = vpop.f32.mrb[0].mxu0
        %10382 = vmatprep.mubr.f32.mxu0 %v9851
        %10383 = vmatmul.mubr.f32.gmra.mrb[0].mxu0 %v9850
        %v10384 = vpop.f32.mrb[0].mxu0
        %v10385 = vadd.f32 0.0, %v10384
        %v10386 = vpop.f32.mrb[0].mxu0
        %10387 = vmatprep.mubr.f32.mxu0 %v9857
        %10388 = vmatmul.mubr.f32.gmra.mrb[0].mxu0 %v9856
        %v10389 = vpop.f32.mrb[0].mxu0
        %v10390 = vadd.f32 0.0, %v10389
        %v10391 = vpop.f32.mrb[0].mxu0
        %10392 = vmatprep.mubr.f32.mxu0 %v9863
        %10393 = vmatmul.mubr.f32.gmra.mrb[0].mxu0 %v9862
        %v10394 = vpop.f32.mrb[0].mxu0
        %v10395 = vadd.f32 0.0, %v10394
        %v10396 = vpop.f32.mrb[0].mxu0
        %10397 = vmatprep.mubr.f32.mxu0 %v9869
        %10398 = vmatmul.mubr.f32.gmra.mrb[0].mxu0 %v9868
        %v10399 = vpop.f32.mrb[0].mxu0
        %v10400 = vadd.f32 0.0, %v10399
        %v10401 = vpop.f32.mrb[0].mxu0
        %10402 = vdwg.mxu0
        %10403 = vmatprep.subr.mxu0 0.0
        %10404 = vmatpush1.msra.mxu0 %v10035
        %10405 = vmatprep.subr.mxu0 0.0
        %10406 = vmatpush1.msra.mxu0 %v10037
        %10407 = vmatprep.subr.mxu0 0.0
        %10408 = vmatpush1.msra.mxu0 %v10039
        %10409 = vmatprep.subr.mxu0 0.0
        %10410 = vmatpush1.msra.mxu0 %v10041
        %10411 = vmatprep.subr.mxu0 0.0
        %10412 = vmatpush1.msra.mxu0 %v10043
        %10413 = vmatprep.subr.mxu0 0.0
        %10414 = vmatpush1.msra.mxu0 %v10045
        %10415 = vmatprep.subr.mxu0 0.0
        %10416 = vmatpush1.msra.mxu0 %v10047
        %10417 = vmatprep.subr.mxu0 0.0
        %10418 = vmatpush1.msra.mxu0 %v10049
        %10419 = vmatprep.subr.mxu0 0.0
        %10420 = vmatpush1.msra.mxu0 %v10051
        %10421 = vmatprep.subr.mxu0 0.0
        %10422 = vmatpush1.msra.mxu0 %v10053
        %10423 = vmatprep.subr.mxu0 0.0
        %10424 = vmatpush1.msra.mxu0 %v10055
        %10425 = vmatprep.subr.mxu0 0.0
        %10426 = vmatpush1.msra.mxu0 %v10057
        %10427 = vmatprep.subr.mxu0 0.0
        %10428 = vmatpush1.msra.mxu0 %v10059
        %10429 = vmatprep.subr.mxu0 0.0
        %10430 = vmatpush1.msra.mxu0 %v10061
        %10431 = vmatprep.subr.mxu0 0.0
        %10432 = vmatpush1.msra.mxu0 %v10063
        %10433 = vmatprep.subr.mxu0 0.0
        %10434 = vmatpush1.msra.mxu0 %v10065
        %10435 = vmatprep.subr.mxu0 0.0
        %10436 = vmatpush1.msra.mxu0 %v10067
        %10437 = vmatprep.subr.mxu0 0.0
        %10438 = vmatpush1.msra.mxu0 %v10069
        %10439 = vmatprep.subr.mxu0 0.0
        %10440 = vmatpush1.msra.mxu0 %v10071
        %10441 = vmatprep.subr.mxu0 0.0
        %10442 = vmatpush1.msra.mxu0 %v10073
        %10443 = vmatprep.subr.mxu0 0.0
        %10444 = vmatpush1.msra.mxu0 %v10075
        %10445 = vmatprep.subr.mxu0 0.0
        %10446 = vmatpush1.msra.mxu0 %v10077
        %10447 = vmatprep.subr.mxu0 0.0
        %10448 = vmatpush1.msra.mxu0 %v10079
        %10449 = vmatprep.subr.mxu0 0.0
        %10450 = vmatpush1.msra.mxu0 %v10081
        %10451 = vmatprep.subr.mxu0 0.0
        %10452 = vmatpush1.msra.mxu0 %v10083
        %10453 = vmatprep.subr.mxu0 0.0
        %10454 = vmatpush1.msra.mxu0 %v10085
        %10455 = vmatprep.subr.mxu0 0.0
        %10456 = vmatpush1.msra.mxu0 %v10087
        %10457 = vmatprep.subr.mxu0 0.0
        %10458 = vmatpush1.msra.mxu0 %v10089
        %10459 = vmatprep.subr.mxu0 0.0
        %10460 = vmatpush1.msra.mxu0 %v10091
        %10461 = vmatprep.subr.mxu0 0.0
        %10462 = vmatpush1.msra.mxu0 %v10093
        %10463 = vmatprep.subr.mxu0 0.0
        %10464 = vmatpush1.msra.mxu0 %v10095
        %10465 = vmatprep.subr.mxu0 0.0
        %10466 = vmatpush1.msra.mxu0 %v10097
        %10467 = vmatprep.mubr.f32.mxu0 %v9781
        %10468 = vmatmul.mubr.f32.gmra.mrb[0].mxu0 %v9780
        %v10469 = vpop.f32.mrb[0].mxu0
        %v10470 = vadd.f32 %v10325, %v10469
        %v10471 = vpop.f32.mrb[0].mxu0
        %10472 = vmatprep.mubr.f32.mxu0 %v9787
        %10473 = vmatmul.mubr.f32.gmra.mrb[0].mxu0 %v9786
        %v10474 = vpop.f32.mrb[0].mxu0
        %v10475 = vadd.f32 %v10330, %v10474
        %v10476 = vpop.f32.mrb[0].mxu0
        %10477 = vmatprep.mubr.f32.mxu0 %v9793
        %10478 = vmatmul.mubr.f32.gmra.mrb[0].mxu0 %v9792
        %v10479 = vpop.f32.mrb[0].mxu0
        %v10480 = vadd.f32 %v10335, %v10479
        %v10481 = vpop.f32.mrb[0].mxu0
        %10482 = vmatprep.mubr.f32.mxu0 %v9799
        %10483 = vmatmul.mubr.f32.gmra.mrb[0].mxu0 %v9798
        %v10484 = vpop.f32.mrb[0].mxu0
        %v10485 = vadd.f32 %v10340, %v10484
        %v10486 = vpop.f32.mrb[0].mxu0
        %10487 = vmatprep.mubr.f32.mxu0 %v9805
        %10488 = vmatmul.mubr.f32.gmra.mrb[0].mxu0 %v9804
        %v10489 = vpop.f32.mrb[0].mxu0
        %v10490 = vadd.f32 %v10345, %v10489
        %v10491 = vpop.f32.mrb[0].mxu0
        %10492 = vmatprep.mubr.f32.mxu0 %v9811
        %10493 = vmatmul.mubr.f32.gmra.mrb[0].mxu0 %v9810
        %v10494 = vpop.f32.mrb[0].mxu0
        %v10495 = vadd.f32 %v10350, %v10494
        %v10496 = vpop.f32.mrb[0].mxu0
        %10497 = vmatprep.mubr.f32.mxu0 %v9817
        %10498 = vmatmul.mubr.f32.gmra.mrb[0].mxu0 %v9816
        %v10499 = vpop.f32.mrb[0].mxu0
        %v10500 = vadd.f32 %v10355, %v10499
        %v10501 = vpop.f32.mrb[0].mxu0
        %10502 = vmatprep.mubr.f32.mxu0 %v9823
        %10503 = vmatmul.mubr.f32.gmra.mrb[0].mxu0 %v9822
        %v10504 = vpop.f32.mrb[0].mxu0
        %v10505 = vadd.f32 %v10360, %v10504
        %v10506 = vpop.f32.mrb[0].mxu0
        %10507 = vmatprep.mubr.f32.mxu0 %v9829
        %10508 = vmatmul.mubr.f32.gmra.mrb[0].mxu0 %v9828
        %v10509 = vpop.f32.mrb[0].mxu0
        %v10510 = vadd.f32 %v10365, %v10509
        %v10511 = vpop.f32.mrb[0].mxu0
        %10512 = vmatprep.mubr.f32.mxu0 %v9835
        %10513 = vmatmul.mubr.f32.gmra.mrb[0].mxu0 %v9834
        %v10514 = vpop.f32.mrb[0].mxu0
        %v10515 = vadd.f32 %v10370, %v10514
        %v10516 = vpop.f32.mrb[0].mxu0
        %10517 = vmatprep.mubr.f32.mxu0 %v9841
        %10518 = vmatmul.mubr.f32.gmra.mrb[0].mxu0 %v9840
        %v10519 = vpop.f32.mrb[0].mxu0
        %v10520 = vadd.f32 %v10375, %v10519
        %v10521 = vpop.f32.mrb[0].mxu0
        %10522 = vmatprep.mubr.f32.mxu0 %v9847
        %10523 = vmatmul.mubr.f32.gmra.mrb[0].mxu0 %v9846
        %v10524 = vpop.f32.mrb[0].mxu0
        %v10525 = vadd.f32 %v10380, %v10524
        %v10526 = vpop.f32.mrb[0].mxu0
        %10527 = vmatprep.mubr.f32.mxu0 %v9853
        %10528 = vmatmul.mubr.f32.gmra.mrb[0].mxu0 %v9852
        %v10529 = vpop.f32.mrb[0].mxu0
        %v10530 = vadd.f32 %v10385, %v10529
        %v10531 = vpop.f32.mrb[0].mxu0
        %10532 = vmatprep.mubr.f32.mxu0 %v9859
        %10533 = vmatmul.mubr.f32.gmra.mrb[0].mxu0 %v9858
        %v10534 = vpop.f32.mrb[0].mxu0
        %v10535 = vadd.f32 %v10390, %v10534
        %v10536 = vpop.f32.mrb[0].mxu0
        %10537 = vmatprep.mubr.f32.mxu0 %v9865
        %10538 = vmatmul.mubr.f32.gmra.mrb[0].mxu0 %v9864
        %v10539 = vpop.f32.mrb[0].mxu0
        %v10540 = vadd.f32 %v10395, %v10539
        %v10541 = vpop.f32.mrb[0].mxu0
        %10542 = vmatprep.mubr.f32.mxu0 %v9871
        %10543 = vmatmul.mubr.f32.gmra.mrb[0].mxu0 %v9870
        %v10544 = vpop.f32.mrb[0].mxu0
        %v10545 = vadd.f32 %v10400, %v10544
        %v10546 = vpop.f32.mrb[0].mxu0
        %10547 = vdwg.mxu0
        %10548 = vmatprep.subr.mxu0 0.0
        %10549 = vmatpush1.msra.mxu0 %v10099
        %10550 = vmatprep.subr.mxu0 0.0
        %10551 = vmatpush1.msra.mxu0 %v10101
        %10552 = vmatprep.subr.mxu0 0.0
        %10553 = vmatpush1.msra.mxu0 %v10103
        %10554 = vmatprep.subr.mxu0 0.0
        %10555 = vmatpush1.msra.mxu0 %v10105
        %10556 = vmatprep.subr.mxu0 0.0
        %10557 = vmatpush1.msra.mxu0 %v10107
        %10558 = vmatprep.subr.mxu0 0.0
        %10559 = vmatpush1.msra.mxu0 %v10109
        %10560 = vmatprep.subr.mxu0 0.0
        %10561 = vmatpush1.msra.mxu0 %v10111
        %10562 = vmatprep.subr.mxu0 0.0
        %10563 = vmatpush1.msra.mxu0 %v10113
        %10564 = vmatprep.subr.mxu0 0.0
        %10565 = vmatpush1.msra.mxu0 %v10115
        %10566 = vmatprep.subr.mxu0 0.0
        %10567 = vmatpush1.msra.mxu0 %v10117
        %10568 = vmatprep.subr.mxu0 0.0
        %10569 = vmatpush1.msra.mxu0 %v10119
        %10570 = vmatprep.subr.mxu0 0.0
        %10571 = vmatpush1.msra.mxu0 %v10121
        %10572 = vmatprep.subr.mxu0 0.0
        %10573 = vmatpush1.msra.mxu0 %v10123
        %10574 = vmatprep.subr.mxu0 0.0
        %10575 = vmatpush1.msra.mxu0 %v10125
        %10576 = vmatprep.subr.mxu0 0.0
        %10577 = vmatpush1.msra.mxu0 %v10127
        %10578 = vmatprep.subr.mxu0 0.0
        %10579 = vmatpush1.msra.mxu0 %v10129
        %10580 = vmatprep.subr.mxu0 0.0
        %10581 = vmatpush1.msra.mxu0 %v10131
        %10582 = vmatprep.subr.mxu0 0.0
        %10583 = vmatpush1.msra.mxu0 %v10133
        %10584 = vmatprep.subr.mxu0 0.0
        %10585 = vmatpush1.msra.mxu0 %v10135
        %10586 = vmatprep.subr.mxu0 0.0
        %10587 = vmatpush1.msra.mxu0 %v10137
        %10588 = vmatprep.subr.mxu0 0.0
        %10589 = vmatpush1.msra.mxu0 %v10139
        %10590 = vmatprep.subr.mxu0 0.0
        %10591 = vmatpush1.msra.mxu0 %v10141
        %10592 = vmatprep.subr.mxu0 0.0
        %10593 = vmatpush1.msra.mxu0 %v10143
        %10594 = vmatprep.subr.mxu0 0.0
        %10595 = vmatpush1.msra.mxu0 %v10145
        %10596 = vmatprep.subr.mxu0 0.0
        %10597 = vmatpush1.msra.mxu0 %v10147
        %10598 = vmatprep.subr.mxu0 0.0
        %10599 = vmatpush1.msra.mxu0 %v10149
        %10600 = vmatprep.subr.mxu0 0.0
        %10601 = vmatpush1.msra.mxu0 %v10151
        %10602 = vmatprep.subr.mxu0 0.0
        %10603 = vmatpush1.msra.mxu0 %v10153
        %10604 = vmatprep.subr.mxu0 0.0
        %10605 = vmatpush1.msra.mxu0 %v10155
        %10606 = vmatprep.subr.mxu0 0.0
        %10607 = vmatpush1.msra.mxu0 %v10157
        %10608 = vmatprep.subr.mxu0 0.0
        %10609 = vmatpush1.msra.mxu0 %v10159
        %10610 = vmatprep.subr.mxu0 0.0
        %10611 = vmatpush1.msra.mxu0 %v10161
        %10612 = vmatprep.mubr.f32.mxu0 %v9783
        %10613 = vmatmul.mubr.f32.gmra.mrb[0].mxu0 %v9782
        %v10614 = vpop.f32.mrb[0].mxu0
        %v10615 = vadd.f32 %v10470, %v10614
        %v10616 = vpop.f32.mrb[0].mxu0
        %10617 = vmatprep.mubr.f32.mxu0 %v9789
        %10618 = vmatmul.mubr.f32.gmra.mrb[0].mxu0 %v9788
        %v10619 = vpop.f32.mrb[0].mxu0
        %v10620 = vadd.f32 %v10475, %v10619
        %v10621 = vpop.f32.mrb[0].mxu0
        %10622 = vmatprep.mubr.f32.mxu0 %v9795
        %10623 = vmatmul.mubr.f32.gmra.mrb[0].mxu0 %v9794
        %v10624 = vpop.f32.mrb[0].mxu0
        %v10625 = vadd.f32 %v10480, %v10624
        %v10626 = vpop.f32.mrb[0].mxu0
        %10627 = vmatprep.mubr.f32.mxu0 %v9801
        %10628 = vmatmul.mubr.f32.gmra.mrb[0].mxu0 %v9800
        %v10629 = vpop.f32.mrb[0].mxu0
        %v10630 = vadd.f32 %v10485, %v10629
        %v10631 = vpop.f32.mrb[0].mxu0
        %10632 = vmatprep.mubr.f32.mxu0 %v9807
        %10633 = vmatmul.mubr.f32.gmra.mrb[0].mxu0 %v9806
        %v10634 = vpop.f32.mrb[0].mxu0
        %v10635 = vadd.f32 %v10490, %v10634
        %v10636 = vpop.f32.mrb[0].mxu0
        %10637 = vmatprep.mubr.f32.mxu0 %v9813
        %10638 = vmatmul.mubr.f32.gmra.mrb[0].mxu0 %v9812
        %v10639 = vpop.f32.mrb[0].mxu0
        %v10640 = vadd.f32 %v10495, %v10639
        %v10641 = vpop.f32.mrb[0].mxu0
        %10642 = vmatprep.mubr.f32.mxu0 %v9819
        %10643 = vmatmul.mubr.f32.gmra.mrb[0].mxu0 %v9818
        %v10644 = vpop.f32.mrb[0].mxu0
        %v10645 = vadd.f32 %v10500, %v10644
        %v10646 = vpop.f32.mrb[0].mxu0
        %10647 = vmatprep.mubr.f32.mxu0 %v9825
        %10648 = vmatmul.mubr.f32.gmra.mrb[0].mxu0 %v9824
        %v10649 = vpop.f32.mrb[0].mxu0
        %v10650 = vadd.f32 %v10505, %v10649
        %v10651 = vpop.f32.mrb[0].mxu0
        %10652 = vmatprep.mubr.f32.mxu0 %v9831
        %10653 = vmatmul.mubr.f32.gmra.mrb[0].mxu0 %v9830
        %v10654 = vpop.f32.mrb[0].mxu0
        %v10655 = vadd.f32 %v10510, %v10654
        %v10656 = vpop.f32.mrb[0].mxu0
        %10657 = vmatprep.mubr.f32.mxu0 %v9837
        %10658 = vmatmul.mubr.f32.gmra.mrb[0].mxu0 %v9836
        %v10659 = vpop.f32.mrb[0].mxu0
        %v10660 = vadd.f32 %v10515, %v10659
        %v10661 = vpop.f32.mrb[0].mxu0
        %10662 = vmatprep.mubr.f32.mxu0 %v9843
        %10663 = vmatmul.mubr.f32.gmra.mrb[0].mxu0 %v9842
        %v10664 = vpop.f32.mrb[0].mxu0
        %v10665 = vadd.f32 %v10520, %v10664
        %v10666 = vpop.f32.mrb[0].mxu0
        %10667 = vmatprep.mubr.f32.mxu0 %v9849
        %10668 = vmatmul.mubr.f32.gmra.mrb[0].mxu0 %v9848
        %v10669 = vpop.f32.mrb[0].mxu0
        %v10670 = vadd.f32 %v10525, %v10669
        %v10671 = vpop.f32.mrb[0].mxu0
        %10672 = vmatprep.mubr.f32.mxu0 %v9855
        %10673 = vmatmul.mubr.f32.gmra.mrb[0].mxu0 %v9854
        %v10674 = vpop.f32.mrb[0].mxu0
        %v10675 = vadd.f32 %v10530, %v10674
        %v10676 = vpop.f32.mrb[0].mxu0
        %10677 = vmatprep.mubr.f32.mxu0 %v9861
        %10678 = vmatmul.mubr.f32.gmra.mrb[0].mxu0 %v9860
        %v10679 = vpop.f32.mrb[0].mxu0
        %v10680 = vadd.f32 %v10535, %v10679
        %v10681 = vpop.f32.mrb[0].mxu0
        %10682 = vmatprep.mubr.f32.mxu0 %v9867
        %10683 = vmatmul.mubr.f32.gmra.mrb[0].mxu0 %v9866
        %v10684 = vpop.f32.mrb[0].mxu0
        %v10685 = vadd.f32 %v10540, %v10684
        %v10686 = vpop.f32.mrb[0].mxu0
        %10687 = vmatprep.mubr.f32.mxu0 %v9873
        %10688 = vmatmul.mubr.f32.gmra.mrb[0].mxu0 %v9872
        %v10689 = vpop.f32.mrb[0].mxu0
        %v10690 = vadd.f32 %v10545, %v10689
        %v10691 = vpop.f32.mrb[0].mxu0
        %10692 = vdwg.mxu0
        %10693 = vmatprep.subr.mxu0 0.0
        %10694 = vmatpush1.msra.mxu0 %v9204
        %10695 = vmatprep.subr.mxu0 0.0
        %10696 = vmatpush1.msra.mxu0 %v9209
        %10697 = vmatprep.subr.mxu0 0.0
        %10698 = vmatpush1.msra.mxu0 %v9214
        %10699 = vmatprep.subr.mxu0 0.0
        %10700 = vmatpush1.msra.mxu0 %v9219
        %10701 = vmatprep.subr.mxu0 0.0
        %10702 = vmatpush1.msra.mxu0 %v9224
        %10703 = vmatprep.subr.mxu0 0.0
        %10704 = vmatpush1.msra.mxu0 %v9229
        %10705 = vmatprep.subr.mxu0 0.0
        %10706 = vmatpush1.msra.mxu0 %v9234
        %10707 = vmatprep.subr.mxu0 0.0
        %10708 = vmatpush1.msra.mxu0 %v9239
        %10709 = vmatprep.subr.mxu0 0.0
        %10710 = vmatpush1.msra.mxu0 %v9244
        %10711 = vmatprep.subr.mxu0 0.0
        %10712 = vmatpush1.msra.mxu0 %v9249
        %10713 = vmatprep.subr.mxu0 0.0
        %10714 = vmatpush1.msra.mxu0 %v9254
        %10715 = vmatprep.subr.mxu0 0.0
        %10716 = vmatpush1.msra.mxu0 %v9259
        %10717 = vmatprep.subr.mxu0 0.0
        %10718 = vmatpush1.msra.mxu0 %v9264
        %10719 = vmatprep.subr.mxu0 0.0
        %10720 = vmatpush1.msra.mxu0 %v9269
        %10721 = vmatprep.subr.mxu0 0.0
        %10722 = vmatpush1.msra.mxu0 %v9274
        %10723 = vmatprep.subr.mxu0 0.0
        %10724 = vmatpush1.msra.mxu0 %v9279
        %10725 = vmatprep.subr.mxu0 0.0
        %10726 = vmatpush1.msra.mxu0 %v9284
        %10727 = vmatprep.subr.mxu0 0.0
        %10728 = vmatpush1.msra.mxu0 %v9289
        %10729 = vmatprep.subr.mxu0 0.0
        %10730 = vmatpush1.msra.mxu0 %v9294
        %10731 = vmatprep.subr.mxu0 0.0
        %10732 = vmatpush1.msra.mxu0 %v9299
        %10733 = vmatprep.subr.mxu0 0.0
        %10734 = vmatpush1.msra.mxu0 %v9304
        %10735 = vmatprep.subr.mxu0 0.0
        %10736 = vmatpush1.msra.mxu0 %v9309
        %10737 = vmatprep.subr.mxu0 0.0
        %10738 = vmatpush1.msra.mxu0 %v9314
        %10739 = vmatprep.subr.mxu0 0.0
        %10740 = vmatpush1.msra.mxu0 %v9319
        %10741 = vmatprep.subr.mxu0 0.0
        %10742 = vmatpush1.msra.mxu0 %v9324
        %10743 = vmatprep.subr.mxu0 0.0
        %10744 = vmatpush1.msra.mxu0 %v9329
        %10745 = vmatprep.subr.mxu0 0.0
        %10746 = vmatpush1.msra.mxu0 %v9334
        %10747 = vmatprep.subr.mxu0 0.0
        %10748 = vmatpush1.msra.mxu0 %v9339
        %10749 = vmatprep.subr.mxu0 0.0
        %10750 = vmatpush1.msra.mxu0 %v9344
        %10751 = vmatprep.subr.mxu0 0.0
        %10752 = vmatpush1.msra.mxu0 %v9349
        %10753 = vmatprep.subr.mxu0 0.0
        %10754 = vmatpush1.msra.mxu0 %v9354
        %10755 = vmatprep.subr.mxu0 0.0
        %10756 = vmatpush1.msra.mxu0 %v9359
        %10757 = vmatprep.mubr.f32.mxu0 %v9683
        %10758 = vmatmul.mubr.f32.gmra.mrb[0].mxu0 %v9682
        %v10759 = vpop.f32.mrb[0].mxu0
        %v10760 = vadd.f32 %v10615, %v10759
        %v10761 = vpop.f32.mrb[0].mxu0
        %10762 = vmatprep.mubr.f32.mxu0 %v9689
        %10763 = vmatmul.mubr.f32.gmra.mrb[0].mxu0 %v9688
        %v10764 = vpop.f32.mrb[0].mxu0
        %v10765 = vadd.f32 %v10620, %v10764
        %v10766 = vpop.f32.mrb[0].mxu0
        %10767 = vmatprep.mubr.f32.mxu0 %v9695
        %10768 = vmatmul.mubr.f32.gmra.mrb[0].mxu0 %v9694
        %v10769 = vpop.f32.mrb[0].mxu0
        %v10770 = vadd.f32 %v10625, %v10769
        %v10771 = vpop.f32.mrb[0].mxu0
        %10772 = vmatprep.mubr.f32.mxu0 %v9701
        %10773 = vmatmul.mubr.f32.gmra.mrb[0].mxu0 %v9700
        %v10774 = vpop.f32.mrb[0].mxu0
        %v10775 = vadd.f32 %v10630, %v10774
        %v10776 = vpop.f32.mrb[0].mxu0
        %10777 = vmatprep.mubr.f32.mxu0 %v9707
        %10778 = vmatmul.mubr.f32.gmra.mrb[0].mxu0 %v9706
        %v10779 = vpop.f32.mrb[0].mxu0
        %v10780 = vadd.f32 %v10635, %v10779
        %v10781 = vpop.f32.mrb[0].mxu0
        %10782 = vmatprep.mubr.f32.mxu0 %v9713
        %10783 = vmatmul.mubr.f32.gmra.mrb[0].mxu0 %v9712
        %v10784 = vpop.f32.mrb[0].mxu0
        %v10785 = vadd.f32 %v10640, %v10784
        %v10786 = vpop.f32.mrb[0].mxu0
        %10787 = vmatprep.mubr.f32.mxu0 %v9719
        %10788 = vmatmul.mubr.f32.gmra.mrb[0].mxu0 %v9718
        %v10789 = vpop.f32.mrb[0].mxu0
        %v10790 = vadd.f32 %v10645, %v10789
        %v10791 = vpop.f32.mrb[0].mxu0
        %10792 = vmatprep.mubr.f32.mxu0 %v9725
        %10793 = vmatmul.mubr.f32.gmra.mrb[0].mxu0 %v9724
        %v10794 = vpop.f32.mrb[0].mxu0
        %v10795 = vadd.f32 %v10650, %v10794
        %v10796 = vpop.f32.mrb[0].mxu0
        %10797 = vmatprep.mubr.f32.mxu0 %v9731
        %10798 = vmatmul.mubr.f32.gmra.mrb[0].mxu0 %v9730
        %v10799 = vpop.f32.mrb[0].mxu0
        %v10800 = vadd.f32 %v10655, %v10799
        %v10801 = vpop.f32.mrb[0].mxu0
        %10802 = vmatprep.mubr.f32.mxu0 %v9737
        %10803 = vmatmul.mubr.f32.gmra.mrb[0].mxu0 %v9736
        %v10804 = vpop.f32.mrb[0].mxu0
        %v10805 = vadd.f32 %v10660, %v10804
        %v10806 = vpop.f32.mrb[0].mxu0
        %10807 = vmatprep.mubr.f32.mxu0 %v9743
        %10808 = vmatmul.mubr.f32.gmra.mrb[0].mxu0 %v9742
        %v10809 = vpop.f32.mrb[0].mxu0
        %v10810 = vadd.f32 %v10665, %v10809
        %v10811 = vpop.f32.mrb[0].mxu0
        %10812 = vmatprep.mubr.f32.mxu0 %v9749
        %10813 = vmatmul.mubr.f32.gmra.mrb[0].mxu0 %v9748
        %v10814 = vpop.f32.mrb[0].mxu0
        %v10815 = vadd.f32 %v10670, %v10814
        %v10816 = vpop.f32.mrb[0].mxu0
        %10817 = vmatprep.mubr.f32.mxu0 %v9755
        %10818 = vmatmul.mubr.f32.gmra.mrb[0].mxu0 %v9754
        %v10819 = vpop.f32.mrb[0].mxu0
        %v10820 = vadd.f32 %v10675, %v10819
        %v10821 = vpop.f32.mrb[0].mxu0
        %10822 = vmatprep.mubr.f32.mxu0 %v9761
        %10823 = vmatmul.mubr.f32.gmra.mrb[0].mxu0 %v9760
        %v10824 = vpop.f32.mrb[0].mxu0
        %v10825 = vadd.f32 %v10680, %v10824
        %v10826 = vpop.f32.mrb[0].mxu0
        %10827 = vmatprep.mubr.f32.mxu0 %v9767
        %10828 = vmatmul.mubr.f32.gmra.mrb[0].mxu0 %v9766
        %v10829 = vpop.f32.mrb[0].mxu0
        %v10830 = vadd.f32 %v10685, %v10829
        %v10831 = vpop.f32.mrb[0].mxu0
        %10832 = vmatprep.mubr.f32.mxu0 %v9773
        %10833 = vmatmul.mubr.f32.gmra.mrb[0].mxu0 %v9772
        %v10834 = vpop.f32.mrb[0].mxu0
        %v10835 = vadd.f32 %v10690, %v10834
        %v10836 = vpop.f32.mrb[0].mxu0
        %10837 = vdwg.mxu0
        %10838 = vmatprep.subr.mxu0 0.0
        %10839 = vmatpush1.msra.mxu0 %v9364
        %10840 = vmatprep.subr.mxu0 0.0
        %10841 = vmatpush1.msra.mxu0 %v9369
        %10842 = vmatprep.subr.mxu0 0.0
        %10843 = vmatpush1.msra.mxu0 %v9374
        %10844 = vmatprep.subr.mxu0 0.0
        %10845 = vmatpush1.msra.mxu0 %v9379
        %10846 = vmatprep.subr.mxu0 0.0
        %10847 = vmatpush1.msra.mxu0 %v9384
        %10848 = vmatprep.subr.mxu0 0.0
        %10849 = vmatpush1.msra.mxu0 %v9389
        %10850 = vmatprep.subr.mxu0 0.0
        %10851 = vmatpush1.msra.mxu0 %v9394
        %10852 = vmatprep.subr.mxu0 0.0
        %10853 = vmatpush1.msra.mxu0 %v9399
        %10854 = vmatprep.subr.mxu0 0.0
        %10855 = vmatpush1.msra.mxu0 %v9404
        %10856 = vmatprep.subr.mxu0 0.0
        %10857 = vmatpush1.msra.mxu0 %v9409
        %10858 = vmatprep.subr.mxu0 0.0
        %10859 = vmatpush1.msra.mxu0 %v9414
        %10860 = vmatprep.subr.mxu0 0.0
        %10861 = vmatpush1.msra.mxu0 %v9419
        %10862 = vmatprep.subr.mxu0 0.0
        %10863 = vmatpush1.msra.mxu0 %v9424
        %10864 = vmatprep.subr.mxu0 0.0
        %10865 = vmatpush1.msra.mxu0 %v9429
        %10866 = vmatprep.subr.mxu0 0.0
        %10867 = vmatpush1.msra.mxu0 %v9434
        %10868 = vmatprep.subr.mxu0 0.0
        %10869 = vmatpush1.msra.mxu0 %v9439
        %10870 = vmatprep.subr.mxu0 0.0
        %10871 = vmatpush1.msra.mxu0 %v9444
        %10872 = vmatprep.subr.mxu0 0.0
        %10873 = vmatpush1.msra.mxu0 %v9449
        %10874 = vmatprep.subr.mxu0 0.0
        %10875 = vmatpush1.msra.mxu0 %v9454
        %10876 = vmatprep.subr.mxu0 0.0
        %10877 = vmatpush1.msra.mxu0 %v9459
        %10878 = vmatprep.subr.mxu0 0.0
        %10879 = vmatpush1.msra.mxu0 %v9464
        %10880 = vmatprep.subr.mxu0 0.0
        %10881 = vmatpush1.msra.mxu0 %v9469
        %10882 = vmatprep.subr.mxu0 0.0
        %10883 = vmatpush1.msra.mxu0 %v9474
        %10884 = vmatprep.subr.mxu0 0.0
        %10885 = vmatpush1.msra.mxu0 %v9479
        %10886 = vmatprep.subr.mxu0 0.0
        %10887 = vmatpush1.msra.mxu0 %v9484
        %10888 = vmatprep.subr.mxu0 0.0
        %10889 = vmatpush1.msra.mxu0 %v9489
        %10890 = vmatprep.subr.mxu0 0.0
        %10891 = vmatpush1.msra.mxu0 %v9494
        %10892 = vmatprep.subr.mxu0 0.0
        %10893 = vmatpush1.msra.mxu0 %v9499
        %10894 = vmatprep.subr.mxu0 0.0
        %10895 = vmatpush1.msra.mxu0 %v9504
        %10896 = vmatprep.subr.mxu0 0.0
        %10897 = vmatpush1.msra.mxu0 %v9509
        %10898 = vmatprep.subr.mxu0 0.0
        %10899 = vmatpush1.msra.mxu0 %v9514
        %10900 = vmatprep.subr.mxu0 0.0
        %10901 = vmatpush1.msra.mxu0 %v9519
        %10902 = vmatprep.mubr.f32.mxu0 %v9685
        %10903 = vmatmul.mubr.f32.gmra.mrb[0].mxu0 %v9684
        %v10904 = vpop.f32.mrb[0].mxu0
        %v10905 = vadd.f32 %v10760, %v10904
        %v10906 = vpop.f32.mrb[0].mxu0
        %10907 = vmatprep.mubr.f32.mxu0 %v9691
        %10908 = vmatmul.mubr.f32.gmra.mrb[0].mxu0 %v9690
        %v10909 = vpop.f32.mrb[0].mxu0
        %v10910 = vadd.f32 %v10765, %v10909
        %v10911 = vpop.f32.mrb[0].mxu0
        %10912 = vmatprep.mubr.f32.mxu0 %v9697
        %10913 = vmatmul.mubr.f32.gmra.mrb[0].mxu0 %v9696
        %v10914 = vpop.f32.mrb[0].mxu0
        %v10915 = vadd.f32 %v10770, %v10914
        %v10916 = vpop.f32.mrb[0].mxu0
        %10917 = vmatprep.mubr.f32.mxu0 %v9703
        %10918 = vmatmul.mubr.f32.gmra.mrb[0].mxu0 %v9702
        %v10919 = vpop.f32.mrb[0].mxu0
        %v10920 = vadd.f32 %v10775, %v10919
        %v10921 = vpop.f32.mrb[0].mxu0
        %10922 = vmatprep.mubr.f32.mxu0 %v9709
        %10923 = vmatmul.mubr.f32.gmra.mrb[0].mxu0 %v9708
        %v10924 = vpop.f32.mrb[0].mxu0
        %v10925 = vadd.f32 %v10780, %v10924
        %v10926 = vpop.f32.mrb[0].mxu0
        %10927 = vmatprep.mubr.f32.mxu0 %v9715
        %10928 = vmatmul.mubr.f32.gmra.mrb[0].mxu0 %v9714
        %v10929 = vpop.f32.mrb[0].mxu0
        %v10930 = vadd.f32 %v10785, %v10929
        %v10931 = vpop.f32.mrb[0].mxu0
        %10932 = vmatprep.mubr.f32.mxu0 %v9721
        %10933 = vmatmul.mubr.f32.gmra.mrb[0].mxu0 %v9720
        %v10934 = vpop.f32.mrb[0].mxu0
        %v10935 = vadd.f32 %v10790, %v10934
        %v10936 = vpop.f32.mrb[0].mxu0
        %10937 = vmatprep.mubr.f32.mxu0 %v9727
        %10938 = vmatmul.mubr.f32.gmra.mrb[0].mxu0 %v9726
        %v10939 = vpop.f32.mrb[0].mxu0
        %v10940 = vadd.f32 %v10795, %v10939
        %v10941 = vpop.f32.mrb[0].mxu0
        %10942 = vmatprep.mubr.f32.mxu0 %v9733
        %10943 = vmatmul.mubr.f32.gmra.mrb[0].mxu0 %v9732
        %v10944 = vpop.f32.mrb[0].mxu0
        %v10945 = vadd.f32 %v10800, %v10944
        %v10946 = vpop.f32.mrb[0].mxu0
        %10947 = vmatprep.mubr.f32.mxu0 %v9739
        %10948 = vmatmul.mubr.f32.gmra.mrb[0].mxu0 %v9738
        %v10949 = vpop.f32.mrb[0].mxu0
        %v10950 = vadd.f32 %v10805, %v10949
        %v10951 = vpop.f32.mrb[0].mxu0
        %10952 = vmatprep.mubr.f32.mxu0 %v9745
        %10953 = vmatmul.mubr.f32.gmra.mrb[0].mxu0 %v9744
        %v10954 = vpop.f32.mrb[0].mxu0
        %v10955 = vadd.f32 %v10810, %v10954
        %v10956 = vpop.f32.mrb[0].mxu0
        %10957 = vmatprep.mubr.f32.mxu0 %v9751
        %10958 = vmatmul.mubr.f32.gmra.mrb[0].mxu0 %v9750
        %v10959 = vpop.f32.mrb[0].mxu0
        %v10960 = vadd.f32 %v10815, %v10959
        %v10961 = vpop.f32.mrb[0].mxu0
        %10962 = vmatprep.mubr.f32.mxu0 %v9757
        %10963 = vmatmul.mubr.f32.gmra.mrb[0].mxu0 %v9756
        %v10964 = vpop.f32.mrb[0].mxu0
        %v10965 = vadd.f32 %v10820, %v10964
        %v10966 = vpop.f32.mrb[0].mxu0
        %10967 = vmatprep.mubr.f32.mxu0 %v9763
        %10968 = vmatmul.mubr.f32.gmra.mrb[0].mxu0 %v9762
        %v10969 = vpop.f32.mrb[0].mxu0
        %v10970 = vadd.f32 %v10825, %v10969
        %v10971 = vpop.f32.mrb[0].mxu0
        %10972 = vmatprep.mubr.f32.mxu0 %v9769
        %10973 = vmatmul.mubr.f32.gmra.mrb[0].mxu0 %v9768
        %v10974 = vpop.f32.mrb[0].mxu0
        %v10975 = vadd.f32 %v10830, %v10974
        %v10976 = vpop.f32.mrb[0].mxu0
        %10977 = vmatprep.mubr.f32.mxu0 %v9775
        %10978 = vmatmul.mubr.f32.gmra.mrb[0].mxu0 %v9774
        %v10979 = vpop.f32.mrb[0].mxu0
        %v10980 = vadd.f32 %v10835, %v10979
        %v10981 = vpop.f32.mrb[0].mxu0
        %10982 = vdwg.mxu0
        %10983 = vmatprep.subr.mxu0 0.0
        %10984 = vmatpush1.msra.mxu0 %v9524
        %10985 = vmatprep.subr.mxu0 0.0
        %10986 = vmatpush1.msra.mxu0 %v9529
        %10987 = vmatprep.subr.mxu0 0.0
        %10988 = vmatpush1.msra.mxu0 %v9534
        %10989 = vmatprep.subr.mxu0 0.0
        %10990 = vmatpush1.msra.mxu0 %v9539
        %10991 = vmatprep.subr.mxu0 0.0
        %10992 = vmatpush1.msra.mxu0 %v9544
        %10993 = vmatprep.subr.mxu0 0.0
        %10994 = vmatpush1.msra.mxu0 %v9549
        %10995 = vmatprep.subr.mxu0 0.0
        %10996 = vmatpush1.msra.mxu0 %v9554
        %10997 = vmatprep.subr.mxu0 0.0
        %10998 = vmatpush1.msra.mxu0 %v9559
        %10999 = vmatprep.subr.mxu0 0.0
        %11000 = vmatpush1.msra.mxu0 %v9564
        %11001 = vmatprep.subr.mxu0 0.0
        %11002 = vmatpush1.msra.mxu0 %v9569
        %11003 = vmatprep.subr.mxu0 0.0
        %11004 = vmatpush1.msra.mxu0 %v9574
        %11005 = vmatprep.subr.mxu0 0.0
        %11006 = vmatpush1.msra.mxu0 %v9579
        %11007 = vmatprep.subr.mxu0 0.0
        %11008 = vmatpush1.msra.mxu0 %v9584
        %11009 = vmatprep.subr.mxu0 0.0
        %11010 = vmatpush1.msra.mxu0 %v9589
        %11011 = vmatprep.subr.mxu0 0.0
        %11012 = vmatpush1.msra.mxu0 %v9594
        %11013 = vmatprep.subr.mxu0 0.0
        %11014 = vmatpush1.msra.mxu0 %v9599
        %11015 = vmatprep.subr.mxu0 0.0
        %11016 = vmatpush1.msra.mxu0 %v9604
        %11017 = vmatprep.subr.mxu0 0.0
        %11018 = vmatpush1.msra.mxu0 %v9609
        %11019 = vmatprep.subr.mxu0 0.0
        %11020 = vmatpush1.msra.mxu0 %v9614
        %11021 = vmatprep.subr.mxu0 0.0
        %11022 = vmatpush1.msra.mxu0 %v9619
        %11023 = vmatprep.subr.mxu0 0.0
        %11024 = vmatpush1.msra.mxu0 %v9624
        %11025 = vmatprep.subr.mxu0 0.0
        %11026 = vmatpush1.msra.mxu0 %v9629
        %11027 = vmatprep.subr.mxu0 0.0
        %11028 = vmatpush1.msra.mxu0 %v9634
        %11029 = vmatprep.subr.mxu0 0.0
        %11030 = vmatpush1.msra.mxu0 %v9639
        %11031 = vmatprep.subr.mxu0 0.0
        %11032 = vmatpush1.msra.mxu0 %v9644
        %11033 = vmatprep.subr.mxu0 0.0
        %11034 = vmatpush1.msra.mxu0 %v9649
        %11035 = vmatprep.subr.mxu0 0.0
        %11036 = vmatpush1.msra.mxu0 %v9654
        %11037 = vmatprep.subr.mxu0 0.0
        %11038 = vmatpush1.msra.mxu0 %v9659
        %11039 = vmatprep.subr.mxu0 0.0
        %11040 = vmatpush1.msra.mxu0 %v9664
        %11041 = vmatprep.subr.mxu0 0.0
        %11042 = vmatpush1.msra.mxu0 %v9669
        %11043 = vmatprep.subr.mxu0 0.0
        %11044 = vmatpush1.msra.mxu0 %v9674
        %11045 = vmatprep.subr.mxu0 0.0
        %11046 = vmatpush1.msra.mxu0 %v9679
        %11047 = vmatprep.mubr.f32.mxu0 %v9687
        %11048 = vmatmul.mubr.f32.gmra.mrb[0].mxu0 %v9686
        %v11049 = vpop.f32.mrb[0].mxu0
        %v11050 = vadd.f32 %v10905, %v11049
        %v11051 = vpop.f32.mrb[0].mxu0
        %11052 = vmatprep.mubr.f32.mxu0 %v9693
        %11053 = vmatmul.mubr.f32.gmra.mrb[0].mxu0 %v9692
        %v11054 = vpop.f32.mrb[0].mxu0
        %v11055 = vadd.f32 %v10910, %v11054
        %v11056 = vpop.f32.mrb[0].mxu0
        %11057 = vmatprep.mubr.f32.mxu0 %v9699
        %11058 = vmatmul.mubr.f32.gmra.mrb[0].mxu0 %v9698
        %v11059 = vpop.f32.mrb[0].mxu0
        %v11060 = vadd.f32 %v10915, %v11059
        %v11061 = vpop.f32.mrb[0].mxu0
        %11062 = vmatprep.mubr.f32.mxu0 %v9705
        %11063 = vmatmul.mubr.f32.gmra.mrb[0].mxu0 %v9704
        %v11064 = vpop.f32.mrb[0].mxu0
        %v11065 = vadd.f32 %v10920, %v11064
        %v11066 = vpop.f32.mrb[0].mxu0
        %11067 = vmatprep.mubr.f32.mxu0 %v9711
        %11068 = vmatmul.mubr.f32.gmra.mrb[0].mxu0 %v9710
        %v11069 = vpop.f32.mrb[0].mxu0
        %v11070 = vadd.f32 %v10925, %v11069
        %v11071 = vpop.f32.mrb[0].mxu0
        %11072 = vmatprep.mubr.f32.mxu0 %v9717
        %11073 = vmatmul.mubr.f32.gmra.mrb[0].mxu0 %v9716
        %v11074 = vpop.f32.mrb[0].mxu0
        %v11075 = vadd.f32 %v10930, %v11074
        %v11076 = vpop.f32.mrb[0].mxu0
        %11077 = vmatprep.mubr.f32.mxu0 %v9723
        %11078 = vmatmul.mubr.f32.gmra.mrb[0].mxu0 %v9722
        %v11079 = vpop.f32.mrb[0].mxu0
        %v11080 = vadd.f32 %v10935, %v11079
        %v11081 = vpop.f32.mrb[0].mxu0
        %11082 = vmatprep.mubr.f32.mxu0 %v9729
        %11083 = vmatmul.mubr.f32.gmra.mrb[0].mxu0 %v9728
        %v11084 = vpop.f32.mrb[0].mxu0
        %v11085 = vadd.f32 %v10940, %v11084
        %v11086 = vpop.f32.mrb[0].mxu0
        %11087 = vmatprep.mubr.f32.mxu0 %v9735
        %11088 = vmatmul.mubr.f32.gmra.mrb[0].mxu0 %v9734
        %v11089 = vpop.f32.mrb[0].mxu0
        %v11090 = vadd.f32 %v10945, %v11089
        %v11091 = vpop.f32.mrb[0].mxu0
        %11092 = vmatprep.mubr.f32.mxu0 %v9741
        %11093 = vmatmul.mubr.f32.gmra.mrb[0].mxu0 %v9740
        %v11094 = vpop.f32.mrb[0].mxu0
        %v11095 = vadd.f32 %v10950, %v11094
        %v11096 = vpop.f32.mrb[0].mxu0
        %11097 = vmatprep.mubr.f32.mxu0 %v9747
        %11098 = vmatmul.mubr.f32.gmra.mrb[0].mxu0 %v9746
        %v11099 = vpop.f32.mrb[0].mxu0
        %v11100 = vadd.f32 %v10955, %v11099
        %v11101 = vpop.f32.mrb[0].mxu0
        %11102 = vmatprep.mubr.f32.mxu0 %v9753
        %11103 = vmatmul.mubr.f32.gmra.mrb[0].mxu0 %v9752
        %v11104 = vpop.f32.mrb[0].mxu0
        %v11105 = vadd.f32 %v10960, %v11104
        %v11106 = vpop.f32.mrb[0].mxu0
        %11107 = vmatprep.mubr.f32.mxu0 %v9759
        %11108 = vmatmul.mubr.f32.gmra.mrb[0].mxu0 %v9758
        %v11109 = vpop.f32.mrb[0].mxu0
        %v11110 = vadd.f32 %v10965, %v11109
        %v11111 = vpop.f32.mrb[0].mxu0
        %11112 = vmatprep.mubr.f32.mxu0 %v9765
        %11113 = vmatmul.mubr.f32.gmra.mrb[0].mxu0 %v9764
        %v11114 = vpop.f32.mrb[0].mxu0
        %v11115 = vadd.f32 %v10970, %v11114
        %v11116 = vpop.f32.mrb[0].mxu0
        %11117 = vmatprep.mubr.f32.mxu0 %v9771
        %11118 = vmatmul.mubr.f32.gmra.mrb[0].mxu0 %v9770
        %v11119 = vpop.f32.mrb[0].mxu0
        %v11120 = vadd.f32 %v10975, %v11119
        %v11121 = vpop.f32.mrb[0].mxu0
        %11122 = vmatprep.mubr.f32.mxu0 %v9777
        %11123 = vmatmul.mubr.f32.gmra.mrb[0].mxu0 %v9776
        %v11124 = vpop.f32.mrb[0].mxu0
        %v11125 = vadd.f32 %v10980, %v11124
        %v11126 = vpop.f32.mrb[0].mxu0
        %11127 = vdwg.mxu0
        %v11128 = vld [vmem:[%s8] sm:$0x1]
        %v11129 = vld [vmem:[%s8 + $0x1] sm:$0x1]
        %v11130 = vmax.f32 %v11050, 0.0
        %v11131 = vmax.f32 %v11055, 0.0
        %v11132 = vmax.f32 %v11060, 0.0
        %v11133 = vmax.f32 %v11065, 0.0
        %v11134 = vmax.f32 %v11070, 0.0
        %v11135 = vmax.f32 %v11075, 0.0
        %v11136 = vmax.f32 %v11080, 0.0
        %v11137 = vmax.f32 %v11085, 0.0
        %v11138 = vmax.f32 %v11090, 0.0
        %v11139 = vmax.f32 %v11095, 0.0
        %v11140 = vmax.f32 %v11100, 0.0
        %v11141 = vmax.f32 %v11105, 0.0
        %v11142 = vmax.f32 %v11110, 0.0
        %v11143 = vmax.f32 %v11115, 0.0
        %v11144 = vmax.f32 %v11120, 0.0
        %v11145 = vmax.f32 %v11125, 0.0
        %vm11146 = vcmask 105472
        %v11147 = vsel %vm11146, %v11130, 0.0
        %11148 = vadd.xlane.f32.xlu0 %v11147
        %v11149 = vpop.xlane.xlu0 %11148
        %v11150 = vsel %vm11146, %v11131, 0.0
        %11151 = vadd.xlane.f32.xlu0 %v11150
        %v11152 = vpop.xlane.xlu0 %11151
        %v11153 = vsel %vm11146, %v11132, 0.0
        %11154 = vadd.xlane.f32.xlu0 %v11153
        %v11155 = vpop.xlane.xlu0 %11154
        %v11156 = vsel %vm11146, %v11133, 0.0
        %11157 = vadd.xlane.f32.xlu0 %v11156
        %v11158 = vpop.xlane.xlu0 %11157
        %v11159 = vsel %vm11146, %v11134, 0.0
        %11160 = vadd.xlane.f32.xlu0 %v11159
        %v11161 = vpop.xlane.xlu0 %11160
        %v11162 = vsel %vm11146, %v11135, 0.0
        %11163 = vadd.xlane.f32.xlu0 %v11162
        %v11164 = vpop.xlane.xlu0 %11163
        %v11165 = vsel %vm11146, %v11136, 0.0
        %11166 = vadd.xlane.f32.xlu0 %v11165
        %v11167 = vpop.xlane.xlu0 %11166
        %v11168 = vsel %vm11146, %v11137, 0.0
        %11169 = vadd.xlane.f32.xlu0 %v11168
        %v11170 = vpop.xlane.xlu0 %11169
        %v11171 = vsel %vm11146, %v11138, 0.0
        %11172 = vadd.xlane.f32.xlu0 %v11171
        %v11173 = vpop.xlane.xlu0 %11172
        %v11174 = vsel %vm11146, %v11139, 0.0
        %11175 = vadd.xlane.f32.xlu0 %v11174
        %v11176 = vpop.xlane.xlu0 %11175
        %v11177 = vsel %vm11146, %v11140, 0.0
        %11178 = vadd.xlane.f32.xlu0 %v11177
        %v11179 = vpop.xlane.xlu0 %11178
        %v11180 = vsel %vm11146, %v11141, 0.0
        %11181 = vadd.xlane.f32.xlu0 %v11180
        %v11182 = vpop.xlane.xlu0 %11181
        %v11183 = vsel %vm11146, %v11142, 0.0
        %11184 = vadd.xlane.f32.xlu0 %v11183
        %v11185 = vpop.xlane.xlu0 %11184
        %v11186 = vsel %vm11146, %v11143, 0.0
        %11187 = vadd.xlane.f32.xlu0 %v11186
        %v11188 = vpop.xlane.xlu0 %11187
        %v11189 = vsel %vm11146, %v11144, 0.0
        %11190 = vadd.xlane.f32.xlu0 %v11189
        %v11191 = vpop.xlane.xlu0 %11190
        %v11192 = vsel %vm11146, %v11145, 0.0
        %11193 = vadd.xlane.f32.xlu0 %v11192
        %v11194 = vpop.xlane.xlu0 %11193
        %v11195 = vrcp.pop 13.0
        %v11196 = vmul.f32 %v11149, %v11195
        %v11197 = vmul.f32 %v11152, %v11195
        %v11198 = vmul.f32 %v11155, %v11195
        %v11199 = vmul.f32 %v11158, %v11195
        %v11200 = vmul.f32 %v11161, %v11195
        %v11201 = vmul.f32 %v11164, %v11195
        %v11202 = vmul.f32 %v11167, %v11195
        %v11203 = vmul.f32 %v11170, %v11195
        %v11204 = vmul.f32 %v11173, %v11195
        %v11205 = vmul.f32 %v11176, %v11195
        %v11206 = vmul.f32 %v11179, %v11195
        %v11207 = vmul.f32 %v11182, %v11195
        %v11208 = vmul.f32 %v11185, %v11195
        %v11209 = vmul.f32 %v11188, %v11195
        %v11210 = vmul.f32 %v11191, %v11195
        %v11211 = vmul.f32 %v11194, %v11195
        %v11212 = vsub.f32 %v11130, %v11196
        %v11213 = vsub.f32 %v11131, %v11197
        %v11214 = vsub.f32 %v11132, %v11198
        %v11215 = vsub.f32 %v11133, %v11199
        %v11216 = vsub.f32 %v11134, %v11200
        %v11217 = vsub.f32 %v11135, %v11201
        %v11218 = vsub.f32 %v11136, %v11202
        %v11219 = vsub.f32 %v11137, %v11203
        %v11220 = vsub.f32 %v11138, %v11204
        %v11221 = vsub.f32 %v11139, %v11205
        %v11222 = vsub.f32 %v11140, %v11206
        %v11223 = vsub.f32 %v11141, %v11207
        %v11224 = vsub.f32 %v11142, %v11208
        %v11225 = vsub.f32 %v11143, %v11209
        %v11226 = vsub.f32 %v11144, %v11210
        %v11227 = vsub.f32 %v11145, %v11211
        %v11228 = vmul.f32 %v11212, %v11212
        %v11229 = vmul.f32 %v11213, %v11213
        %v11230 = vmul.f32 %v11214, %v11214
        %v11231 = vmul.f32 %v11215, %v11215
        %v11232 = vmul.f32 %v11216, %v11216
        %v11233 = vmul.f32 %v11217, %v11217
        %v11234 = vmul.f32 %v11218, %v11218
        %v11235 = vmul.f32 %v11219, %v11219
        %v11236 = vmul.f32 %v11220, %v11220
        %v11237 = vmul.f32 %v11221, %v11221
        %v11238 = vmul.f32 %v11222, %v11222
        %v11239 = vmul.f32 %v11223, %v11223
        %v11240 = vmul.f32 %v11224, %v11224
        %v11241 = vmul.f32 %v11225, %v11225
        %v11242 = vmul.f32 %v11226, %v11226
        %v11243 = vmul.f32 %v11227, %v11227
        %v11244 = vsel %vm11146, %v11228, 0.0
        %11245 = vadd.xlane.f32.xlu0 %v11244
        %v11246 = vpop.xlane.xlu0 %11245
        %v11247 = vsel %vm11146, %v11229, 0.0
        %11248 = vadd.xlane.f32.xlu0 %v11247
        %v11249 = vpop.xlane.xlu0 %11248
        %v11250 = vsel %vm11146, %v11230, 0.0
        %11251 = vadd.xlane.f32.xlu0 %v11250
        %v11252 = vpop.xlane.xlu0 %11251
        %v11253 = vsel %vm11146, %v11231, 0.0
        %11254 = vadd.xlane.f32.xlu0 %v11253
        %v11255 = vpop.xlane.xlu0 %11254
        %v11256 = vsel %vm11146, %v11232, 0.0
        %11257 = vadd.xlane.f32.xlu0 %v11256
        %v11258 = vpop.xlane.xlu0 %11257
        %v11259 = vsel %vm11146, %v11233, 0.0
        %11260 = vadd.xlane.f32.xlu0 %v11259
        %v11261 = vpop.xlane.xlu0 %11260
        %v11262 = vsel %vm11146, %v11234, 0.0
        %11263 = vadd.xlane.f32.xlu0 %v11262
        %v11264 = vpop.xlane.xlu0 %11263
        %v11265 = vsel %vm11146, %v11235, 0.0
        %11266 = vadd.xlane.f32.xlu0 %v11265
        %v11267 = vpop.xlane.xlu0 %11266
        %v11268 = vsel %vm11146, %v11236, 0.0
        %11269 = vadd.xlane.f32.xlu0 %v11268
        %v11270 = vpop.xlane.xlu0 %11269
        %v11271 = vsel %vm11146, %v11237, 0.0
        %11272 = vadd.xlane.f32.xlu0 %v11271
        %v11273 = vpop.xlane.xlu0 %11272
        %v11274 = vsel %vm11146, %v11238, 0.0
        %11275 = vadd.xlane.f32.xlu0 %v11274
        %v11276 = vpop.xlane.xlu0 %11275
        %v11277 = vsel %vm11146, %v11239, 0.0
        %11278 = vadd.xlane.f32.xlu0 %v11277
        %v11279 = vpop.xlane.xlu0 %11278
        %v11280 = vsel %vm11146, %v11240, 0.0
        %11281 = vadd.xlane.f32.xlu0 %v11280
        %v11282 = vpop.xlane.xlu0 %11281
        %v11283 = vsel %vm11146, %v11241, 0.0
        %11284 = vadd.xlane.f32.xlu0 %v11283
        %v11285 = vpop.xlane.xlu0 %11284
        %v11286 = vsel %vm11146, %v11242, 0.0
        %11287 = vadd.xlane.f32.xlu0 %v11286
        %v11288 = vpop.xlane.xlu0 %11287
        %v11289 = vsel %vm11146, %v11243, 0.0
        %11290 = vadd.xlane.f32.xlu0 %v11289
        %v11291 = vpop.xlane.xlu0 %11290
        %v11292 = vmul.f32 %v11246, %v11195
        %v11293 = vmul.f32 %v11249, %v11195
        %v11294 = vmul.f32 %v11252, %v11195
        %v11295 = vmul.f32 %v11255, %v11195
        %v11296 = vmul.f32 %v11258, %v11195
        %v11297 = vmul.f32 %v11261, %v11195
        %v11298 = vmul.f32 %v11264, %v11195
        %v11299 = vmul.f32 %v11267, %v11195
        %v11300 = vmul.f32 %v11270, %v11195
        %v11301 = vmul.f32 %v11273, %v11195
        %v11302 = vmul.f32 %v11276, %v11195
        %v11303 = vmul.f32 %v11279, %v11195
        %v11304 = vmul.f32 %v11282, %v11195
        %v11305 = vmul.f32 %v11285, %v11195
        %v11306 = vmul.f32 %v11288, %v11195
        %v11307 = vmul.f32 %v11291, %v11195
        %v11308 = vadd.f32 %v11292, 1e-05
        %v11309 = vadd.f32 %v11293, 1e-05
        %v11310 = vadd.f32 %v11294, 1e-05
        %v11311 = vadd.f32 %v11295, 1e-05
        %v11312 = vadd.f32 %v11296, 1e-05
        %v11313 = vadd.f32 %v11297, 1e-05
        %v11314 = vadd.f32 %v11298, 1e-05
        %v11315 = vadd.f32 %v11299, 1e-05
        %v11316 = vadd.f32 %v11300, 1e-05
        %v11317 = vadd.f32 %v11301, 1e-05
        %v11318 = vadd.f32 %v11302, 1e-05
        %v11319 = vadd.f32 %v11303, 1e-05
        %v11320 = vadd.f32 %v11304, 1e-05
        %v11321 = vadd.f32 %v11305, 1e-05
        %v11322 = vadd.f32 %v11306, 1e-05
        %v11323 = vadd.f32 %v11307, 1e-05
        %v11324 = vrsqrt.pop %v11308
        %v11325 = vrsqrt.pop %v11309
        %v11326 = vrsqrt.pop %v11310
        %v11327 = vrsqrt.pop %v11311
        %v11328 = vrsqrt.pop %v11312
        %v11329 = vrsqrt.pop %v11313
        %v11330 = vrsqrt.pop %v11314
        %v11331 = vrsqrt.pop %v11315
        %v11332 = vrsqrt.pop %v11316
        %v11333 = vrsqrt.pop %v11317
        %v11334 = vrsqrt.pop %v11318
        %v11335 = vrsqrt.pop %v11319
        %v11336 = vrsqrt.pop %v11320
        %v11337 = vrsqrt.pop %v11321
        %v11338 = vrsqrt.pop %v11322
        %v11339 = vrsqrt.pop %v11323
        %v11340 = vmul.f32 %v11212, %v11324
        %v11341 = vmul.f32 %v11213, %v11325
        %v11342 = vmul.f32 %v11214, %v11326
        %v11343 = vmul.f32 %v11215, %v11327
        %v11344 = vmul.f32 %v11216, %v11328
        %v11345 = vmul.f32 %v11217, %v11329
        %v11346 = vmul.f32 %v11218, %v11330
        %v11347 = vmul.f32 %v11219, %v11331
        %v11348 = vmul.f32 %v11220, %v11332
        %v11349 = vmul.f32 %v11221, %v11333
        %v11350 = vmul.f32 %v11222, %v11334
        %v11351 = vmul.f32 %v11223, %v11335
        %v11352 = vmul.f32 %v11224, %v11336
        %v11353 = vmul.f32 %v11225, %v11337
        %v11354 = vmul.f32 %v11226, %v11338
        %v11355 = vmul.f32 %v11227, %v11339
        %v11356 = vlaneseq
        %v11357 = vshrl.u32 %v11356, 7
        %v11358 = vsub.s32 0, %v11357
        %v11359 = vrot.slane %v11128, %v11358
        %v11360 = vmul.f32 %v11340, %v11359
        %v11361 = vmul.f32 %v11341, %v11359
        %v11362 = vmul.f32 %v11342, %v11359
        %v11363 = vmul.f32 %v11343, %v11359
        %v11364 = vmul.f32 %v11344, %v11359
        %v11365 = vmul.f32 %v11345, %v11359
        %v11366 = vmul.f32 %v11346, %v11359
        %v11367 = vmul.f32 %v11347, %v11359
        %v11368 = vmul.f32 %v11348, %v11359
        %v11369 = vmul.f32 %v11349, %v11359
        %v11370 = vmul.f32 %v11350, %v11359
        %v11371 = vmul.f32 %v11351, %v11359
        %v11372 = vmul.f32 %v11352, %v11359
        %v11373 = vmul.f32 %v11353, %v11359
        %v11374 = vmul.f32 %v11354, %v11359
        %v11375 = vmul.f32 %v11355, %v11359
        %v11376 = vlaneseq
        %v11377 = vshrl.u32 %v11376, 7
        %v11378 = vsub.s32 0, %v11377
        %v11379 = vrot.slane %v11129, %v11378
        %v11380 = vadd.f32 %v11360, %v11379
        %v11381 = vadd.f32 %v11361, %v11379
        %v11382 = vadd.f32 %v11362, %v11379
        %v11383 = vadd.f32 %v11363, %v11379
        %v11384 = vadd.f32 %v11364, %v11379
        %v11385 = vadd.f32 %v11365, %v11379
        %v11386 = vadd.f32 %v11366, %v11379
        %v11387 = vadd.f32 %v11367, %v11379
        %v11388 = vadd.f32 %v11368, %v11379
        %v11389 = vadd.f32 %v11369, %v11379
        %v11390 = vadd.f32 %v11370, %v11379
        %v11391 = vadd.f32 %v11371, %v11379
        %v11392 = vadd.f32 %v11372, %v11379
        %v11393 = vadd.f32 %v11373, %v11379
        %v11394 = vadd.f32 %v11374, %v11379
        %v11395 = vadd.f32 %v11375, %v11379
        %11396 = vst.msk [vmem:[%s369] sm:$0xff] %vm11146, %v11380
        %11397 = vst.msk [vmem:[%s369 + $0x8] sm:$0xff] %vm11146, %v11381
        %11398 = vst.msk [vmem:[%s369 + $0x10] sm:$0xff] %vm11146, %v11382
        %11399 = vst.msk [vmem:[%s369 + $0x18] sm:$0xff] %vm11146, %v11383
        %11400 = vst.msk [vmem:[%s369 + $0x20] sm:$0xff] %vm11146, %v11384
        %11401 = vst.msk [vmem:[%s369 + $0x28] sm:$0xff] %vm11146, %v11385
        %11402 = vst.msk [vmem:[%s369 + $0x30] sm:$0xff] %vm11146, %v11386
        %11403 = vst.msk [vmem:[%s369 + $0x38] sm:$0xff] %vm11146, %v11387
        %11404 = vst.msk [vmem:[%s369 + $0x40] sm:$0xff] %vm11146, %v11388
        %11405 = vst.msk [vmem:[%s369 + $0x48] sm:$0xff] %vm11146, %v11389
        %11406 = vst.msk [vmem:[%s369 + $0x50] sm:$0xff] %vm11146, %v11390
        %11407 = vst.msk [vmem:[%s369 + $0x58] sm:$0xff] %vm11146, %v11391
        %11408 = vst.msk [vmem:[%s369 + $0x60] sm:$0xff] %vm11146, %v11392
        %11409 = vst.msk [vmem:[%s369 + $0x68] sm:$0xff] %vm11146, %v11393
        %11410 = vst.msk [vmem:[%s369 + $0x70] sm:$0xff] %vm11146, %v11394
        %11411 = vst.msk [vmem:[%s369 + $0x78] sm:$0xff] %vm11146, %v11395
        %v11413 = vsel %vm11146, 1.0, 0
        %v11416 = vsel %vm11146, %v11380, 0
        %v11419 = vsel %vm11146, %v11381, 0
        %v11422 = vsel %vm11146, %v11382, 0
        %v11425 = vsel %vm11146, %v11383, 0
        %v11428 = vsel %vm11146, %v11384, 0
        %v11431 = vsel %vm11146, %v11385, 0
        %v11434 = vsel %vm11146, %v11386, 0
        %v11437 = vsel %vm11146, %v11387, 0
        %v11440 = vsel %vm11146, %v11388, 0
        %v11443 = vsel %vm11146, %v11389, 0
        %v11446 = vsel %vm11146, %v11390, 0
        %v11449 = vsel %vm11146, %v11391, 0
        %v11452 = vsel %vm11146, %v11392, 0
        %v11455 = vsel %vm11146, %v11393, 0
        %v11458 = vsel %vm11146, %v11394, 0
        %v11461 = vsel %vm11146, %v11395, 0
        %11463 = vmatprep.subr.mxu0 0.0
        %11464 = vmatpush1.xpose.msra.mxu0 %v11416
        %11465 = vmatprep.subr.mxu0 0.0
        %11466 = vmatpush1.xpose.msra.mxu0 %v11419
        %11467 = vmatprep.subr.mxu0 0.0
        %11468 = vmatpush1.xpose.msra.mxu0 %v11422
        %11469 = vmatprep.subr.mxu0 0.0
        %11470 = vmatpush1.xpose.msra.mxu0 %v11425
        %11471 = vmatprep.subr.mxu0 0.0
        %11472 = vmatpush1.xpose.msra.mxu0 %v11428
        %11473 = vmatprep.subr.mxu0 0.0
        %11474 = vmatpush1.xpose.msra.mxu0 %v11431
        %11475 = vmatprep.subr.mxu0 0.0
        %11476 = vmatpush1.xpose.msra.mxu0 %v11434
        %11477 = vmatprep.subr.mxu0 0.0
        %11478 = vmatpush1.xpose.msra.mxu0 %v11437
        %11479 = vmatprep.subr.mxu0 0.0
        %11480 = vmatpush1.xpose.msra.mxu0 %v11440
        %11481 = vmatprep.subr.mxu0 0.0
        %11482 = vmatpush1.xpose.msra.mxu0 %v11443
        %11483 = vmatprep.subr.mxu0 0.0
        %11484 = vmatpush1.xpose.msra.mxu0 %v11446
        %11485 = vmatprep.subr.mxu0 0.0
        %11486 = vmatpush1.xpose.msra.mxu0 %v11449
        %11487 = vmatprep.subr.mxu0 0.0
        %11488 = vmatpush1.xpose.msra.mxu0 %v11452
        %11489 = vmatprep.subr.mxu0 0.0
        %11490 = vmatpush1.xpose.msra.mxu0 %v11455
        %11491 = vmatprep.subr.mxu0 0.0
        %11492 = vmatpush1.xpose.msra.mxu0 %v11458
        %11493 = vmatprep.subr.mxu0 0.0
        %11494 = vmatpush1.xpose.msra.mxu0 %v11461
        %11495 = vmatprep.subr.mxu0 0.0
        %11496 = vmatpush1.xpose.msra.mxu0 0.0
        %11497 = vmatprep.subr.mxu0 0.0
        %11498 = vmatpush1.xpose.msra.mxu0 0.0
        %11499 = vmatprep.subr.mxu0 0.0
        %11500 = vmatpush1.xpose.msra.mxu0 0.0
        %11501 = vmatprep.subr.mxu0 0.0
        %11502 = vmatpush1.xpose.msra.mxu0 0.0
        %11503 = vmatprep.subr.mxu0 0.0
        %11504 = vmatpush1.xpose.msra.mxu0 0.0
        %11505 = vmatprep.subr.mxu0 0.0
        %11506 = vmatpush1.xpose.msra.mxu0 0.0
        %11507 = vmatprep.subr.mxu0 0.0
        %11508 = vmatpush1.xpose.msra.mxu0 0.0
        %11509 = vmatprep.subr.mxu0 0.0
        %11510 = vmatpush1.xpose.msra.mxu0 0.0
        %11511 = vmatprep.subr.mxu0 0.0
        %11512 = vmatpush1.xpose.msra.mxu0 0.0
        %11513 = vmatprep.subr.mxu0 0.0
        %11514 = vmatpush1.xpose.msra.mxu0 0.0
        %11515 = vmatprep.subr.mxu0 0.0
        %11516 = vmatpush1.xpose.msra.mxu0 0.0
        %11517 = vmatprep.subr.mxu0 0.0
        %11518 = vmatpush1.xpose.msra.mxu0 0.0
        %11519 = vmatprep.subr.mxu0 0.0
        %11520 = vmatpush1.xpose.msra.mxu0 0.0
        %11521 = vmatprep.subr.mxu0 0.0
        %11522 = vmatpush1.xpose.msra.mxu0 0.0
        %11523 = vmatprep.subr.mxu0 0.0
        %11524 = vmatpush1.xpose.msra.mxu0 0.0
        %11525 = vmatprep.subr.mxu0 0.0
        %11526 = vmatpush1.xpose.msra.mxu0 0.0
        %11527 = vmatprep.mubr.f32.mxu0 0.0
        %11528 = vmatmul.mubr.f32.gmra.mrb[0].mxu0 %v11413
        %v11529 = vpop.f32.mrb[0].mxu0
        %v11530 = vadd.f32 0.0, %v11529
        %v11531 = vpop.f32.mrb[0].mxu0
        %11532 = vdwg.mxu0
        %v11533 = vmul.f32 %v11530, 0.07692308
        %11534 = vst [vmem:[%s359] sm:$0x1] %v11533
        %p11535 = scmp.lt.s32.totalorder %s25, 1
        %s11536 = scalar_select %p11535, %s25, 1
        %s11537 = smul.addr %s11536, 16
        %s11538 = smul.addr %s11537, 8
        %s11539 = scalar_lea.vmem %s9, %s11538
        %s11540 = sand.u32 %s253, 1
        %s11541 = scalar_lea.sflag [#allocation3], %s11540
        %s11542 = sand.u32 %s253, 1
        %s11543 = scalar_lea.vmem [#allocation2], %s11542
        // Predicated region
        $region57: #{time_encoder_forward.1} parent=55 // pred_check
          %p11544 = pneg %p237
        $region58: #{time_encoder_forward.1} parent=55 // pred_check_branch
          %11546 = sbr.rel (%p11544) target = $region60
        $region59: #{time_encoder_forward.1} parent=55 // pred_region
          _
        $region60: #{time_encoder_forward.1} parent=55 // pred_fallthru
          _
        // Predicated region
        $region61: #{time_encoder_forward.1} parent=55 // pred_check
          %p11547 = pneg %p263
        $region62: #{time_encoder_forward.1} parent=55 // pred_check_branch
          %11549 = sbr.rel (%p11547) target = $region64
        $region63: #{time_encoder_forward.1} parent=55 // pred_region
          %s11551 = ssub.s32 16, 16
          %11552 = vsyncadd %s11541, %s11551
          %s11553 = smul.addr %s25, 16
          %s11554 = scalar_lea.hbm %s10, %s11553
          %s11556 = sshll.u32 %s11543, 4
          %s11557 = int_to_ptr.vmem [resolvable:$true] %s11556
          %11559 = dma.vmem_to_hbm [thread:$0]  %s11557, 16, %s11554, %s11541
        $region64: #{time_encoder_forward.1} parent=55 // pred_fallthru
          _
      $region56: #{time_encoder_forward.1} parent=5 // pred_fallthru
        _
      %p11560 = scmp.le.s32.totalorder 2, %s20
      // Predicated region
      $region65: #{time_encoder_forward.1} parent=5 // pred_check
        %p11561 = pneg %p11560
      $region66: #{time_encoder_forward.1} parent=5 // pred_check_branch
        %11563 = sbr.rel (%p11561) target = $region68
      $region67: #{time_encoder_forward.1} parent=5 // pred_region
        %s11564 = ssub.s32 %s20, 2
        // Predicated region
        $region69: #{time_encoder_forward.1} parent=67 // pred_check
          %p11565 = pneg %p243
        $region70: #{time_encoder_forward.1} parent=67 // pred_check_branch
          %11567 = sbr.rel (%p11565) target = $region72
        $region71: #{time_encoder_forward.1} parent=67 // pred_region
          %p11568 = scmp.lt.s32.totalorder %s26, 1
          %s11569 = scalar_select %p11568, %s26, 1
          %s11570 = smul.addr %s11569, 16
          %s11571 = smul.addr %s11570, 8
          %s11572 = scalar_lea.vmem %s9, %s11571
        $region72: #{time_encoder_forward.1} parent=67 // pred_fallthru
          _
        // Predicated region
        $region73: #{time_encoder_forward.1} parent=67 // pred_check
          %p11573 = pneg %p269
        $region74: #{time_encoder_forward.1} parent=67 // pred_check_branch
          %11575 = sbr.rel (%p11573) target = $region76
        $region75: #{time_encoder_forward.1} parent=67 // pred_region
          %s11576 = sand.u32 %s254, 1
          %s11577 = scalar_lea.sflag [#allocation3], %s11576
          %s11578 = sand.u32 %s254, 1
          %s11579 = scalar_lea.vmem [#allocation2], %s11578
          %11580 = dma.done %s11577, 16
        $region76: #{time_encoder_forward.1} parent=67 // pred_fallthru
          _
      $region68: #{time_encoder_forward.1} parent=5 // pred_fallthru
        _
    $region6: #{time_encoder_forward.1} parent=1 // loop_footer
      %s24 = sadd.s32 1, %s20
    $region7: #{time_encoder_forward.1} parent=1 // loop_footer_branch
      %19 = sbr.rel target = $region3
    $region8: #{time_encoder_forward.1} parent=1 // loop_exit
      _
    %11581 = vsyncpa [#allocation3], 1
    %s11582 = scalar_lea.sflag [#allocation3], 1
    %11583 = vsyncpa %s11582, 1

</llo_original>
